<compile_context>
chip_gen: v5e
topology: v5e:2x2
jax: 0.10.0
libtpu: 0.0.40
codegen_flags: <defaults>
</compile_context>

<pallas_src>
import jax
import jax.numpy as jnp
from jax.experimental import pallas as pl
from jax.experimental.pallas import tpu as pltpu


def _round_up(x, m):
    return ((x + m - 1) // m) * m


# ----------------------------- Pallas kernel --------------------------------
def nerf_kernel(xd_ref,        # (TM, 6) f32: pos in cols 0:3, dir in cols 3:6
                wslab_ref,     # (7, H, H) bf16: w2,w3,w4,w5h,w6,w7,w8f
                sslab_ref,     # (21, H)  f32 : w1(3),w5x(3),w9d(3),w8s(1),
                               #                b1..b7,b8f(8), b8s,b9,b10(3)
                w9slab_ref,    # (2, H, H/2) bf16: [0]=w9f, [1,:H/2,:3]=w10
                out_ref):      # (TM, 4) f32: color in cols 0:3, sigma in col 3
    f32, bf16 = jnp.float32, jnp.bfloat16
    relu = jax.nn.relu
    H = wslab_ref.shape[1]
    H2 = H // 2

    x = xd_ref[:, 0:3].astype(f32)            # (TM, 3)
    d = xd_ref[:, 3:6].astype(f32)            # (TM, 3)

    w1 = sslab_ref[0:3, :]                    # (3, H)
    w5x = sslab_ref[3:6, :]                   # (3, H)
    w9d = sslab_ref[6:9, 0:H2]                # (3, H/2)
    w8s = sslab_ref[9:10, :]                  # (1, H)
    b = sslab_ref[10:18, :]                   # (8, H): b1..b7, b8f
    b8s = sslab_ref[18:19, 0:1]               # (1, 1)
    b9 = sslab_ref[19:20, 0:H2]               # (1, H/2)
    b10 = sslab_ref[20:21, 0:3]               # (1, 3)

    def mm(h_bf16, w_bf16):
        # bf16 MXU matmul with f32 accumulation.
        return jnp.dot(h_bf16, w_bf16, preferred_element_type=f32)

    def fma3(v, w, base):
        # K=3 contraction as 3 broadcast FMAs on the VPU (an MXU pass would
        # waste almost the entire contraction dimension).
        acc = base + v[:, 0:1] * w[0]
        acc = acc + v[:, 1:2] * w[1]
        acc = acc + v[:, 2:3] * w[2]
        return acc

    # ---- block1: 4 x (Linear -> ReLU), activations kept in bf16 ----
    h = relu(fma3(x, w1, b[0])).astype(bf16)                 # Linear(3, H) on VPU
    h = relu(mm(h, wslab_ref[0]) + b[1]).astype(bf16)        # Linear(H, H)
    h = relu(mm(h, wslab_ref[1]) + b[2]).astype(bf16)
    out1 = relu(mm(h, wslab_ref[2]) + b[3]).astype(bf16)

    # ---- block2: Linear(cat([out1, x])) == out1 @ W5h + x @ W5x ----
    h = relu(fma3(x, w5x, mm(out1, wslab_ref[3]) + b[4])).astype(bf16)
    h = relu(mm(h, wslab_ref[4]) + b[5]).astype(bf16)
    h = relu(mm(h, wslab_ref[5]) + b[6]).astype(bf16)
    out2 = (mm(h, wslab_ref[6]) + b[7]).astype(bf16)         # features, no relu
    # sigma column: (H,1) "matmul" as VPU multiply + XLU lane reduction, f32.
    sigma = relu(jnp.sum(h.astype(f32) * w8s, axis=-1, keepdims=True) + b8s)

    # ---- block3: Linear(cat([out2, d])) -> ReLU ----
    w9f = w9slab_ref[0]                                      # (H, H/2)
    h3 = relu(fma3(d, w9d, mm(out2, w9f) + b9)).astype(bf16)  # (TM, H/2)

    # ---- block4: Linear -> Sigmoid ----
    w10 = w9slab_ref[1][0:H2, 0:3]                           # (H/2, 3)
    color = jax.nn.sigmoid(mm(h3, w10) + b10)                # (TM, 3)

    # Direct slice stores (no in-kernel concatenate).
    out_ref[:, 0:3] = color.astype(out_ref.dtype)
    out_ref[:, 3:4] = sigma.astype(out_ref.dtype)


# ------------------------------ wrapper --------------------------------------
def nerf_forward(pos, direction, kp, *, tm=2048, num_tensorcores=1):
    """pos, direction: (N, 3) float32.  Returns (color (N, 3), sigma (N,))."""
    N = pos.shape[0]
    H = kp["wslab"].shape[1]
    H2 = H // 2

    # Row tile: big enough to amortize per-grid-step overhead, multiple of 8,
    # never larger than the (padded) problem.
    tm = _round_up(max(8, int(tm)), 8)
    tm = min(tm, _round_up(N, 8))
    # Core-count aware cap: only split the parallel axis when there is more
    # than one TensorCore (v7x); v5e/v6e keep the full tile.
    if num_tensorcores > 1:
        tm = min(tm, _round_up(pl.cdiv(N, num_tensorcores), 8))
    tm = max(8, tm)

    n_pad = _round_up(N, tm)

    xd = jnp.concatenate([pos, direction], axis=-1)          # (N, 6)
    if n_pad != N:
        xd = jnp.pad(xd, ((0, n_pad - N), (0, 0)))

    ops = (kp["wslab"], kp["sslab"], kp["w9slab"])

    def const_spec(a):
        nd = a.ndim
        return pl.BlockSpec(a.shape, lambda i, nd=nd: (0,) * nd)

    in_specs = [pl.BlockSpec((tm, 6), lambda i: (i, 0))] + [const_spec(a) for a in ops]

    # Advisory cost estimate for XLA's scheduler.
    flops = 2 * n_pad * (7 * H * H + H * H2 + H2 * 3 + 3 * H + 3 * H + 3 * H2 + H)
    transcendentals = 3 * n_pad
    bytes_accessed = (n_pad * 6 * 4 + n_pad * 4 * 4
                      + kp["wslab"].size * 2 + kp["sslab"].size * 4
                      + kp["w9slab"].size * 2)

    out = pl.pallas_call(
        nerf_kernel,
        out_shape=jax.ShapeDtypeStruct((n_pad, 4), jnp.float32),
        grid_spec=pltpu.PrefetchScalarGridSpec(
            num_scalar_prefetch=0,
            grid=(n_pad // tm,),
            in_specs=in_specs,
            out_specs=pl.BlockSpec((tm, 4), lambda i: (i, 0)),
        ),
        compiler_params=pltpu.CompilerParams(
            dimension_semantics=("parallel",),
            vmem_limit_bytes=48 * 1024 * 1024,   # > v5e's 16 MiB default, < v7x's 64 MiB
        ),
        cost_estimate=pl.CostEstimate(
            flops=int(flops),
            transcendentals=int(transcendentals),
            bytes_accessed=int(bytes_accessed),
        ),
    )(xd, *ops)

    return out[:N, 0:3], out[:N, 3]


# ------------------------- deterministic parameters ---------------------------
def init_params(key, hidden_dim=128, input_pos=3, input_dir=3):
    """Torch-Linear-style uniform init. Weights stored as (in, out), biases 1D."""
    H = hidden_dim

    def linear(key, fan_in, fan_out):
        kw, kb = jax.random.split(key)
        bound = 1.0 / jnp.sqrt(fan_in)
        w = jax.random.uniform(kw, (fan_in, fan_out), jnp.float32, -bound, bound)
        b = jax.random.uniform(kb, (fan_out,), jnp.float32, -bound, bound)
        return w, b

    keys = jax.random.split(key, 10)
    p = {}
    p["w1"], p["b1"] = linear(keys[0], input_pos, H)
    p["w2"], p["b2"] = linear(keys[1], H, H)
    p["w3"], p["b3"] = linear(keys[2], H, H)
    p["w4"], p["b4"] = linear(keys[3], H, H)
    p["w5"], p["b5"] = linear(keys[4], H + input_pos, H)        # cat([out1, emb_x])
    p["w6"], p["b6"] = linear(keys[5], H, H)
    p["w7"], p["b7"] = linear(keys[6], H, H)
    p["w8"], p["b8"] = linear(keys[7], H, H + 1)                # last column = sigma
    p["w9"], p["b9"] = linear(keys[8], H + input_dir, H // 2)   # cat([out2, emb_d])
    p["w10"], p["b10"] = linear(keys[9], H // 2, 3)
    return p


def pack_params(p):
    """Split the concat/sigma weights and pack into the kernel's operand layout."""
    H = p["w2"].shape[0]
    H2 = H // 2
    f32, bf16 = jnp.float32, jnp.bfloat16

    w5h, w5x = p["w5"][:H], p["w5"][H:]
    w8f, w8s = p["w8"][:, :H], p["w8"][:, H:]          # (H,H), (H,1)
    b8f, b8s = p["b8"][:H], p["b8"][H:]
    w9f, w9d = p["w9"][:H], p["w9"][H:]                # (H,H/2), (3,H/2)

    # (7, H, H) bf16 slab for the MXU layers.
    wslab = jnp.stack([p["w2"], p["w3"], p["w4"], w5h,
                       p["w6"], p["w7"], w8f]).astype(bf16)

    # (21, H) f32 slab for every rank-1 weight vector and every bias.
    def row(v):
        v = jnp.asarray(v, f32).reshape(-1)
        return jnp.pad(v, (0, H - v.shape[0]))

    sslab = jnp.stack([
        p["w1"][0], p["w1"][1], p["w1"][2],            # rows 0-2  : w1
        w5x[0], w5x[1], w5x[2],                        # rows 3-5  : w5x
        row(w9d[0]), row(w9d[1]), row(w9d[2]),         # rows 6-8  : w9d (padded)
        w8s[:, 0],                                     # row  9    : sigma column
        p["b1"], p["b2"], p["b3"], p["b4"],            # rows 10-17: b1..b7, b8f
        p["b5"], p["b6"], p["b7"], b8f,
        row(b8s), row(p["b9"]), row(p["b10"]),         # rows 18-20
    ]).astype(f32)

    # (2, H, H/2) bf16 slab: [0] = w9f, [1, :H/2, :3] = w10 (rest zero).
    w9slab = jnp.zeros((2, H, H2), f32)
    w9slab = w9slab.at[0].set(w9f)
    w9slab = w9slab.at[1, :H2, :3].set(p["w10"])
    w9slab = w9slab.astype(bf16)

    return dict(wslab=wslab, sslab=sslab, w9slab=w9slab)


# ---------------------------- pure-JAX reference ------------------------------
def nerf_ref(pos, direction, p):
    """Reference with the same bf16-activation / f32-accumulate quantization."""
    H = p["w2"].shape[0]
    f32, bf16 = jnp.float32, jnp.bfloat16
    relu = jax.nn.relu

    def q(a):
        return a.astype(bf16)

    def mm(a_bf16, w):
        return jnp.dot(a_bf16, w.astype(bf16), preferred_element_type=f32)

    x, d = pos, direction
    h = q(relu(x @ p["w1"] + p["b1"]))
    h = q(relu(mm(h, p["w2"]) + p["b2"]))
    h = q(relu(mm(h, p["w3"]) + p["b3"]))
    out1 = q(relu(mm(h, p["w4"]) + p["b4"]))

    w5h, w5x = p["w5"][:H], p["w5"][H:]
    h = q(relu(mm(out1, w5h) + x @ w5x + p["b5"]))
    h = q(relu(mm(h, p["w6"]) + p["b6"]))
    h = q(relu(mm(h, p["w7"]) + p["b7"]))

    w8f, w8s = p["w8"][:, :H], p["w8"][:, H:]
    b8f, b8s = p["b8"][:H], p["b8"][H:]
    out2 = q(mm(h, w8f) + b8f)
    sigma = relu(h.astype(f32) @ w8s + b8s)[:, 0]

    w9f, w9d = p["w9"][:H], p["w9"][H:]
    h3 = q(relu(mm(out2, w9f) + d @ w9d + p["b9"]))
    color = jax.nn.sigmoid(mm(h3, p["w10"]) + p["b10"])
    return color, sigma


# --------------------------------- main ---------------------------------------
if __name__ == "__main__":
    key = jax.random.PRNGKey(0)
    k_pos, k_dir, k_param = jax.random.split(key, 3)

    N = 500          # deliberately not a multiple of 8 (exercises padding)
    HIDDEN = 128     # small, lane/MXU-aligned config (module default is 256)

    pos = jax.random.normal(k_pos, (N, 3), jnp.float32)
    direction = jax.random.normal(k_dir, (N, 3), jnp.float32)

    params = init_params(k_param, hidden_dim=HIDDEN)
    kparams = pack_params(params)

    color, sigma = nerf_forward(pos, direction, kparams)
    jax.block_until_ready((color, sigma))

    color_ref, sigma_ref = nerf_ref(pos, direction, params)
    assert color.shape == (N, 3) and sigma.shape == (N,)
    assert jnp.allclose(color, color_ref, atol=1e-3, rtol=1e-3), \
        float(jnp.max(jnp.abs(color - color_ref)))
    assert jnp.allclose(sigma, sigma_ref, atol=1e-3, rtol=1e-3), \
        float(jnp.max(jnp.abs(sigma - sigma_ref)))

    print("KERNEL_OK")
</pallas_src>

<mosaic_0001>
module attributes {stable_mosaic.version = 11 : i64} {
  func.func @nerf_kernel(%arg0: i32, %arg1: memref<504x6xf32, #tpu.memory_space<vmem>>, %arg2: memref<7x128x128xbf16, #tpu.memory_space<vmem>>, %arg3: memref<21x128xf32, #tpu.memory_space<vmem>>, %arg4: memref<2x128x64xbf16, #tpu.memory_space<vmem>>, %arg5: memref<504x4xf32, #tpu.memory_space<vmem>>) attributes {dimension_semantics = [#tpu.dimension_semantics<parallel>], iteration_bounds = array<i64: 1>, scalar_prefetch = 0 : i64, scratch_operands = 0 : i64, tpu.core_type = #tpu.core_type<tc>, window_params = [{transform_indices = @transform_0, window_bounds = array<i64: 504, 6>}, {pipeline_mode = #tpu.pipeline_mode<synchronous>, transform_indices = @transform_1, window_bounds = array<i64: 7, 128, 128>}, {pipeline_mode = #tpu.pipeline_mode<synchronous>, transform_indices = @transform_2, window_bounds = array<i64: 21, 128>}, {pipeline_mode = #tpu.pipeline_mode<synchronous>, transform_indices = @transform_3, window_bounds = array<i64: 2, 128, 64>}, {transform_indices = @transform_4, window_bounds = array<i64: 504, 4>}]} {
    %c0 = arith.constant 0 : index
    %c0_0 = arith.constant 0 : index
    %0 = vector.load %arg1[%c0, %c0_0] : memref<504x6xf32, #tpu.memory_space<vmem>>, vector<504x3xf32>
    %c0_1 = arith.constant 0 : index
    %c3 = arith.constant 3 : index
    %1 = vector.load %arg1[%c0_1, %c3] : memref<504x6xf32, #tpu.memory_space<vmem>>, vector<504x3xf32>
    %c0_2 = arith.constant 0 : index
    %c0_3 = arith.constant 0 : index
    %2 = vector.load %arg3[%c0_2, %c0_3] : memref<21x128xf32, #tpu.memory_space<vmem>>, vector<3x128xf32>
    %c3_4 = arith.constant 3 : index
    %c0_5 = arith.constant 0 : index
    %3 = vector.load %arg3[%c3_4, %c0_5] : memref<21x128xf32, #tpu.memory_space<vmem>>, vector<3x128xf32>
    %c6 = arith.constant 6 : index
    %c0_6 = arith.constant 0 : index
    %4 = vector.load %arg3[%c6, %c0_6] : memref<21x128xf32, #tpu.memory_space<vmem>>, vector<3x64xf32>
    %c9 = arith.constant 9 : index
    %c0_7 = arith.constant 0 : index
    %5 = vector.load %arg3[%c9, %c0_7] : memref<21x128xf32, #tpu.memory_space<vmem>>, vector<1x128xf32>
    %c10 = arith.constant 10 : index
    %c0_8 = arith.constant 0 : index
    %6 = vector.load %arg3[%c10, %c0_8] : memref<21x128xf32, #tpu.memory_space<vmem>>, vector<8x128xf32>
    %c18 = arith.constant 18 : index
    %c0_9 = arith.constant 0 : index
    %7 = vector.load %arg3[%c18, %c0_9] : memref<21x128xf32, #tpu.memory_space<vmem>>, vector<1x1xf32>
    %c19 = arith.constant 19 : index
    %c0_10 = arith.constant 0 : index
    %8 = vector.load %arg3[%c19, %c0_10] : memref<21x128xf32, #tpu.memory_space<vmem>>, vector<1x64xf32>
    %c20 = arith.constant 20 : index
    %c0_11 = arith.constant 0 : index
    %9 = vector.load %arg3[%c20, %c0_11] : memref<21x128xf32, #tpu.memory_space<vmem>>, vector<1x3xf32>
    %10 = vector.extract_strided_slice %6 {offsets = [0, 0], sizes = [1, 128], strides = [1, 1]} : vector<8x128xf32> to vector<1x128xf32>
    %11 = vector.shape_cast %10 : vector<1x128xf32> to vector<128xf32>
    %12 = vector.extract_strided_slice %0 {offsets = [0, 0], sizes = [504, 1], strides = [1, 1]} : vector<504x3xf32> to vector<504x1xf32>
    %13 = vector.extract_strided_slice %2 {offsets = [0, 0], sizes = [1, 128], strides = [1, 1]} : vector<3x128xf32> to vector<1x128xf32>
    %14 = vector.shape_cast %13 : vector<1x128xf32> to vector<128xf32>
    %15 = vector.shape_cast %14 : vector<128xf32> to vector<1x128xf32>
    %16 = vector.broadcast %12 : vector<504x1xf32> to vector<504x128xf32>
    %17 = vector.broadcast %15 : vector<1x128xf32> to vector<504x128xf32>
    %18 = arith.mulf %16, %17 : vector<504x128xf32>
    %19 = vector.shape_cast %11 : vector<128xf32> to vector<1x128xf32>
    %20 = vector.broadcast %19 : vector<1x128xf32> to vector<504x128xf32>
    %21 = arith.addf %20, %18 : vector<504x128xf32>
    %22 = vector.extract_strided_slice %0 {offsets = [0, 1], sizes = [504, 1], strides = [1, 1]} : vector<504x3xf32> to vector<504x1xf32>
    %23 = vector.extract_strided_slice %2 {offsets = [1, 0], sizes = [1, 128], strides = [1, 1]} : vector<3x128xf32> to vector<1x128xf32>
    %24 = vector.shape_cast %23 : vector<1x128xf32> to vector<128xf32>
    %25 = vector.shape_cast %24 : vector<128xf32> to vector<1x128xf32>
    %26 = vector.broadcast %22 : vector<504x1xf32> to vector<504x128xf32>
    %27 = vector.broadcast %25 : vector<1x128xf32> to vector<504x128xf32>
    %28 = arith.mulf %26, %27 : vector<504x128xf32>
    %29 = arith.addf %21, %28 : vector<504x128xf32>
    %30 = vector.extract_strided_slice %0 {offsets = [0, 2], sizes = [504, 1], strides = [1, 1]} : vector<504x3xf32> to vector<504x1xf32>
    %31 = vector.extract_strided_slice %2 {offsets = [2, 0], sizes = [1, 128], strides = [1, 1]} : vector<3x128xf32> to vector<1x128xf32>
    %32 = vector.shape_cast %31 : vector<1x128xf32> to vector<128xf32>
    %33 = vector.shape_cast %32 : vector<128xf32> to vector<1x128xf32>
    %34 = vector.broadcast %30 : vector<504x1xf32> to vector<504x128xf32>
    %35 = vector.broadcast %33 : vector<1x128xf32> to vector<504x128xf32>
    %36 = arith.mulf %34, %35 : vector<504x128xf32>
    %37 = arith.addf %29, %36 : vector<504x128xf32>
    %cst = arith.constant 0.000000e+00 : f32
    %38 = vector.broadcast %cst : f32 to vector<504x128xf32>
    %39 = arith.maximumf %37, %38 : vector<504x128xf32>
    %40 = arith.truncf %39 : vector<504x128xf32> to vector<504x128xbf16>
    %c0_12 = arith.constant 0 : index
    %c0_13 = arith.constant 0 : index
    %c0_14 = arith.constant 0 : index
    %41 = vector.load %arg2[%c0_12, %c0_13, %c0_14] : memref<7x128x128xbf16, #tpu.memory_space<vmem>>, vector<1x128x128xbf16>
    %42 = vector.shape_cast %41 : vector<1x128x128xbf16> to vector<128x128xbf16>
    %cst_15 = arith.constant dense<0.000000e+00> : vector<504x128xf32>
    %43 = tpu.matmul %40, %42, %cst_15 {dimension_numbers = #tpu.dot_dimension_numbers<[1], [0], [0], [1], [0, 0, 1, 1], [], []>} : vector<504x128xbf16>, vector<128x128xbf16>, vector<504x128xf32> -> vector<504x128xf32>
    %44 = vector.extract_strided_slice %6 {offsets = [1, 0], sizes = [1, 128], strides = [1, 1]} : vector<8x128xf32> to vector<1x128xf32>
    %45 = vector.shape_cast %44 : vector<1x128xf32> to vector<128xf32>
    %46 = vector.shape_cast %45 : vector<128xf32> to vector<1x128xf32>
    %47 = vector.broadcast %46 : vector<1x128xf32> to vector<504x128xf32>
    %48 = arith.addf %43, %47 : vector<504x128xf32>
    %cst_16 = arith.constant 0.000000e+00 : f32
    %49 = vector.broadcast %cst_16 : f32 to vector<504x128xf32>
    %50 = arith.maximumf %48, %49 : vector<504x128xf32>
    %51 = arith.truncf %50 : vector<504x128xf32> to vector<504x128xbf16>
    %c1 = arith.constant 1 : index
    %c0_17 = arith.constant 0 : index
    %c0_18 = arith.constant 0 : index
    %52 = vector.load %arg2[%c1, %c0_17, %c0_18] : memref<7x128x128xbf16, #tpu.memory_space<vmem>>, vector<1x128x128xbf16>
    %53 = vector.shape_cast %52 : vector<1x128x128xbf16> to vector<128x128xbf16>
    %cst_19 = arith.constant dense<0.000000e+00> : vector<504x128xf32>
    %54 = tpu.matmul %51, %53, %cst_19 {dimension_numbers = #tpu.dot_dimension_numbers<[1], [0], [0], [1], [0, 0, 1, 1], [], []>} : vector<504x128xbf16>, vector<128x128xbf16>, vector<504x128xf32> -> vector<504x128xf32>
    %55 = vector.extract_strided_slice %6 {offsets = [2, 0], sizes = [1, 128], strides = [1, 1]} : vector<8x128xf32> to vector<1x128xf32>
    %56 = vector.shape_cast %55 : vector<1x128xf32> to vector<128xf32>
    %57 = vector.shape_cast %56 : vector<128xf32> to vector<1x128xf32>
    %58 = vector.broadcast %57 : vector<1x128xf32> to vector<504x128xf32>
    %59 = arith.addf %54, %58 : vector<504x128xf32>
    %cst_20 = arith.constant 0.000000e+00 : f32
    %60 = vector.broadcast %cst_20 : f32 to vector<504x128xf32>
    %61 = arith.maximumf %59, %60 : vector<504x128xf32>
    %62 = arith.truncf %61 : vector<504x128xf32> to vector<504x128xbf16>
    %c2 = arith.constant 2 : index
    %c0_21 = arith.constant 0 : index
    %c0_22 = arith.constant 0 : index
    %63 = vector.load %arg2[%c2, %c0_21, %c0_22] : memref<7x128x128xbf16, #tpu.memory_space<vmem>>, vector<1x128x128xbf16>
    %64 = vector.shape_cast %63 : vector<1x128x128xbf16> to vector<128x128xbf16>
    %cst_23 = arith.constant dense<0.000000e+00> : vector<504x128xf32>
    %65 = tpu.matmul %62, %64, %cst_23 {dimension_numbers = #tpu.dot_dimension_numbers<[1], [0], [0], [1], [0, 0, 1, 1], [], []>} : vector<504x128xbf16>, vector<128x128xbf16>, vector<504x128xf32> -> vector<504x128xf32>
    %66 = vector.extract_strided_slice %6 {offsets = [3, 0], sizes = [1, 128], strides = [1, 1]} : vector<8x128xf32> to vector<1x128xf32>
    %67 = vector.shape_cast %66 : vector<1x128xf32> to vector<128xf32>
    %68 = vector.shape_cast %67 : vector<128xf32> to vector<1x128xf32>
    %69 = vector.broadcast %68 : vector<1x128xf32> to vector<504x128xf32>
    %70 = arith.addf %65, %69 : vector<504x128xf32>
    %cst_24 = arith.constant 0.000000e+00 : f32
    %71 = vector.broadcast %cst_24 : f32 to vector<504x128xf32>
    %72 = arith.maximumf %70, %71 : vector<504x128xf32>
    %73 = arith.truncf %72 : vector<504x128xf32> to vector<504x128xbf16>
    %c3_25 = arith.constant 3 : index
    %c0_26 = arith.constant 0 : index
    %c0_27 = arith.constant 0 : index
    %74 = vector.load %arg2[%c3_25, %c0_26, %c0_27] : memref<7x128x128xbf16, #tpu.memory_space<vmem>>, vector<1x128x128xbf16>
    %75 = vector.shape_cast %74 : vector<1x128x128xbf16> to vector<128x128xbf16>
    %cst_28 = arith.constant dense<0.000000e+00> : vector<504x128xf32>
    %76 = tpu.matmul %73, %75, %cst_28 {dimension_numbers = #tpu.dot_dimension_numbers<[1], [0], [0], [1], [0, 0, 1, 1], [], []>} : vector<504x128xbf16>, vector<128x128xbf16>, vector<504x128xf32> -> vector<504x128xf32>
    %77 = vector.extract_strided_slice %6 {offsets = [4, 0], sizes = [1, 128], strides = [1, 1]} : vector<8x128xf32> to vector<1x128xf32>
    %78 = vector.shape_cast %77 : vector<1x128xf32> to vector<128xf32>
    %79 = vector.shape_cast %78 : vector<128xf32> to vector<1x128xf32>
    %80 = vector.broadcast %79 : vector<1x128xf32> to vector<504x128xf32>
    %81 = arith.addf %76, %80 : vector<504x128xf32>
    %82 = vector.extract_strided_slice %0 {offsets = [0, 0], sizes = [504, 1], strides = [1, 1]} : vector<504x3xf32> to vector<504x1xf32>
    %83 = vector.extract_strided_slice %3 {offsets = [0, 0], sizes = [1, 128], strides = [1, 1]} : vector<3x128xf32> to vector<1x128xf32>
    %84 = vector.shape_cast %83 : vector<1x128xf32> to vector<128xf32>
    %85 = vector.shape_cast %84 : vector<128xf32> to vector<1x128xf32>
    %86 = vector.broadcast %82 : vector<504x1xf32> to vector<504x128xf32>
    %87 = vector.broadcast %85 : vector<1x128xf32> to vector<504x128xf32>
    %88 = arith.mulf %86, %87 : vector<504x128xf32>
    %89 = arith.addf %81, %88 : vector<504x128xf32>
    %90 = vector.extract_strided_slice %0 {offsets = [0, 1], sizes = [504, 1], strides = [1, 1]} : vector<504x3xf32> to vector<504x1xf32>
    %91 = vector.extract_strided_slice %3 {offsets = [1, 0], sizes = [1, 128], strides = [1, 1]} : vector<3x128xf32> to vector<1x128xf32>
    %92 = vector.shape_cast %91 : vector<1x128xf32> to vector<128xf32>
    %93 = vector.shape_cast %92 : vector<128xf32> to vector<1x128xf32>
    %94 = vector.broadcast %90 : vector<504x1xf32> to vector<504x128xf32>
    %95 = vector.broadcast %93 : vector<1x128xf32> to vector<504x128xf32>
    %96 = arith.mulf %94, %95 : vector<504x128xf32>
    %97 = arith.addf %89, %96 : vector<504x128xf32>
    %98 = vector.extract_strided_slice %0 {offsets = [0, 2], sizes = [504, 1], strides = [1, 1]} : vector<504x3xf32> to vector<504x1xf32>
    %99 = vector.extract_strided_slice %3 {offsets = [2, 0], sizes = [1, 128], strides = [1, 1]} : vector<3x128xf32> to vector<1x128xf32>
    %100 = vector.shape_cast %99 : vector<1x128xf32> to vector<128xf32>
    %101 = vector.shape_cast %100 : vector<128xf32> to vector<1x128xf32>
    %102 = vector.broadcast %98 : vector<504x1xf32> to vector<504x128xf32>
    %103 = vector.broadcast %101 : vector<1x128xf32> to vector<504x128xf32>
    %104 = arith.mulf %102, %103 : vector<504x128xf32>
    %105 = arith.addf %97, %104 : vector<504x128xf32>
    %cst_29 = arith.constant 0.000000e+00 : f32
    %106 = vector.broadcast %cst_29 : f32 to vector<504x128xf32>
    %107 = arith.maximumf %105, %106 : vector<504x128xf32>
    %108 = arith.truncf %107 : vector<504x128xf32> to vector<504x128xbf16>
    %c4 = arith.constant 4 : index
    %c0_30 = arith.constant 0 : index
    %c0_31 = arith.constant 0 : index
    %109 = vector.load %arg2[%c4, %c0_30, %c0_31] : memref<7x128x128xbf16, #tpu.memory_space<vmem>>, vector<1x128x128xbf16>
    %110 = vector.shape_cast %109 : vector<1x128x128xbf16> to vector<128x128xbf16>
    %cst_32 = arith.constant dense<0.000000e+00> : vector<504x128xf32>
    %111 = tpu.matmul %108, %110, %cst_32 {dimension_numbers = #tpu.dot_dimension_numbers<[1], [0], [0], [1], [0, 0, 1, 1], [], []>} : vector<504x128xbf16>, vector<128x128xbf16>, vector<504x128xf32> -> vector<504x128xf32>
    %112 = vector.extract_strided_slice %6 {offsets = [5, 0], sizes = [1, 128], strides = [1, 1]} : vector<8x128xf32> to vector<1x128xf32>
    %113 = vector.shape_cast %112 : vector<1x128xf32> to vector<128xf32>
    %114 = vector.shape_cast %113 : vector<128xf32> to vector<1x128xf32>
    %115 = vector.broadcast %114 : vector<1x128xf32> to vector<504x128xf32>
    %116 = arith.addf %111, %115 : vector<504x128xf32>
    %cst_33 = arith.constant 0.000000e+00 : f32
    %117 = vector.broadcast %cst_33 : f32 to vector<504x128xf32>
    %118 = arith.maximumf %116, %117 : vector<504x128xf32>
    %119 = arith.truncf %118 : vector<504x128xf32> to vector<504x128xbf16>
    %c5 = arith.constant 5 : index
    %c0_34 = arith.constant 0 : index
    %c0_35 = arith.constant 0 : index
    %120 = vector.load %arg2[%c5, %c0_34, %c0_35] : memref<7x128x128xbf16, #tpu.memory_space<vmem>>, vector<1x128x128xbf16>
    %121 = vector.shape_cast %120 : vector<1x128x128xbf16> to vector<128x128xbf16>
    %cst_36 = arith.constant dense<0.000000e+00> : vector<504x128xf32>
    %122 = tpu.matmul %119, %121, %cst_36 {dimension_numbers = #tpu.dot_dimension_numbers<[1], [0], [0], [1], [0, 0, 1, 1], [], []>} : vector<504x128xbf16>, vector<128x128xbf16>, vector<504x128xf32> -> vector<504x128xf32>
    %123 = vector.extract_strided_slice %6 {offsets = [6, 0], sizes = [1, 128], strides = [1, 1]} : vector<8x128xf32> to vector<1x128xf32>
    %124 = vector.shape_cast %123 : vector<1x128xf32> to vector<128xf32>
    %125 = vector.shape_cast %124 : vector<128xf32> to vector<1x128xf32>
    %126 = vector.broadcast %125 : vector<1x128xf32> to vector<504x128xf32>
    %127 = arith.addf %122, %126 : vector<504x128xf32>
    %cst_37 = arith.constant 0.000000e+00 : f32
    %128 = vector.broadcast %cst_37 : f32 to vector<504x128xf32>
    %129 = arith.maximumf %127, %128 : vector<504x128xf32>
    %130 = arith.truncf %129 : vector<504x128xf32> to vector<504x128xbf16>
    %c6_38 = arith.constant 6 : index
    %c0_39 = arith.constant 0 : index
    %c0_40 = arith.constant 0 : index
    %131 = vector.load %arg2[%c6_38, %c0_39, %c0_40] : memref<7x128x128xbf16, #tpu.memory_space<vmem>>, vector<1x128x128xbf16>
    %132 = vector.shape_cast %131 : vector<1x128x128xbf16> to vector<128x128xbf16>
    %cst_41 = arith.constant dense<0.000000e+00> : vector<504x128xf32>
    %133 = tpu.matmul %130, %132, %cst_41 {dimension_numbers = #tpu.dot_dimension_numbers<[1], [0], [0], [1], [0, 0, 1, 1], [], []>} : vector<504x128xbf16>, vector<128x128xbf16>, vector<504x128xf32> -> vector<504x128xf32>
    %134 = vector.extract_strided_slice %6 {offsets = [7, 0], sizes = [1, 128], strides = [1, 1]} : vector<8x128xf32> to vector<1x128xf32>
    %135 = vector.shape_cast %134 : vector<1x128xf32> to vector<128xf32>
    %136 = vector.shape_cast %135 : vector<128xf32> to vector<1x128xf32>
    %137 = vector.broadcast %136 : vector<1x128xf32> to vector<504x128xf32>
    %138 = arith.addf %133, %137 : vector<504x128xf32>
    %139 = arith.truncf %138 : vector<504x128xf32> to vector<504x128xbf16>
    %140 = arith.extf %130 : vector<504x128xbf16> to vector<504x128xf32>
    %141 = vector.broadcast %5 : vector<1x128xf32> to vector<504x128xf32>
    %142 = arith.mulf %140, %141 : vector<504x128xf32>
    %cst_42 = arith.constant dense<0.000000e+00> : vector<504xf32>
    %143 = vector.multi_reduction <add>, %142, %cst_42 [1] : vector<504x128xf32> to vector<504xf32>
    %144 = vector.shape_cast %143 : vector<504xf32> to vector<504x1xf32>
    %145 = vector.broadcast %7 : vector<1x1xf32> to vector<504x1xf32>
    %146 = arith.addf %144, %145 : vector<504x1xf32>
    %cst_43 = arith.constant 0.000000e+00 : f32
    %147 = vector.broadcast %cst_43 : f32 to vector<504x1xf32>
    %148 = arith.maximumf %146, %147 : vector<504x1xf32>
    %c0_44 = arith.constant 0 : index
    %c0_45 = arith.constant 0 : index
    %c0_46 = arith.constant 0 : index
    %149 = vector.load %arg4[%c0_44, %c0_45, %c0_46] : memref<2x128x64xbf16, #tpu.memory_space<vmem>>, vector<1x128x64xbf16>
    %150 = vector.shape_cast %149 : vector<1x128x64xbf16> to vector<128x64xbf16>
    %cst_47 = arith.constant dense<0.000000e+00> : vector<504x64xf32>
    %151 = tpu.matmul %139, %150, %cst_47 {dimension_numbers = #tpu.dot_dimension_numbers<[1], [0], [0], [1], [0, 0, 1, 1], [], []>} : vector<504x128xbf16>, vector<128x64xbf16>, vector<504x64xf32> -> vector<504x64xf32>
    %152 = vector.broadcast %8 : vector<1x64xf32> to vector<504x64xf32>
    %153 = arith.addf %151, %152 : vector<504x64xf32>
    %154 = vector.extract_strided_slice %1 {offsets = [0, 0], sizes = [504, 1], strides = [1, 1]} : vector<504x3xf32> to vector<504x1xf32>
    %155 = vector.extract_strided_slice %4 {offsets = [0, 0], sizes = [1, 64], strides = [1, 1]} : vector<3x64xf32> to vector<1x64xf32>
    %156 = vector.shape_cast %155 : vector<1x64xf32> to vector<64xf32>
    %157 = vector.shape_cast %156 : vector<64xf32> to vector<1x64xf32>
    %158 = vector.broadcast %154 : vector<504x1xf32> to vector<504x64xf32>
    %159 = vector.broadcast %157 : vector<1x64xf32> to vector<504x64xf32>
    %160 = arith.mulf %158, %159 : vector<504x64xf32>
    %161 = arith.addf %153, %160 : vector<504x64xf32>
    %162 = vector.extract_strided_slice %1 {offsets = [0, 1], sizes = [504, 1], strides = [1, 1]} : vector<504x3xf32> to vector<504x1xf32>
    %163 = vector.extract_strided_slice %4 {offsets = [1, 0], sizes = [1, 64], strides = [1, 1]} : vector<3x64xf32> to vector<1x64xf32>
    %164 = vector.shape_cast %163 : vector<1x64xf32> to vector<64xf32>
    %165 = vector.shape_cast %164 : vector<64xf32> to vector<1x64xf32>
    %166 = vector.broadcast %162 : vector<504x1xf32> to vector<504x64xf32>
    %167 = vector.broadcast %165 : vector<1x64xf32> to vector<504x64xf32>
    %168 = arith.mulf %166, %167 : vector<504x64xf32>
    %169 = arith.addf %161, %168 : vector<504x64xf32>
    %170 = vector.extract_strided_slice %1 {offsets = [0, 2], sizes = [504, 1], strides = [1, 1]} : vector<504x3xf32> to vector<504x1xf32>
    %171 = vector.extract_strided_slice %4 {offsets = [2, 0], sizes = [1, 64], strides = [1, 1]} : vector<3x64xf32> to vector<1x64xf32>
    %172 = vector.shape_cast %171 : vector<1x64xf32> to vector<64xf32>
    %173 = vector.shape_cast %172 : vector<64xf32> to vector<1x64xf32>
    %174 = vector.broadcast %170 : vector<504x1xf32> to vector<504x64xf32>
    %175 = vector.broadcast %173 : vector<1x64xf32> to vector<504x64xf32>
    %176 = arith.mulf %174, %175 : vector<504x64xf32>
    %177 = arith.addf %169, %176 : vector<504x64xf32>
    %cst_48 = arith.constant 0.000000e+00 : f32
    %178 = vector.broadcast %cst_48 : f32 to vector<504x64xf32>
    %179 = arith.maximumf %177, %178 : vector<504x64xf32>
    %180 = arith.truncf %179 : vector<504x64xf32> to vector<504x64xbf16>
    %c1_49 = arith.constant 1 : index
    %c0_50 = arith.constant 0 : index
    %c0_51 = arith.constant 0 : index
    %181 = vector.load %arg4[%c1_49, %c0_50, %c0_51] : memref<2x128x64xbf16, #tpu.memory_space<vmem>>, vector<1x128x64xbf16>
    %182 = vector.shape_cast %181 : vector<1x128x64xbf16> to vector<128x64xbf16>
    %183 = vector.extract_strided_slice %182 {offsets = [0, 0], sizes = [64, 3], strides = [1, 1]} : vector<128x64xbf16> to vector<64x3xbf16>
    %cst_52 = arith.constant dense<0.000000e+00> : vector<504x3xf32>
    %184 = tpu.matmul %180, %183, %cst_52 {dimension_numbers = #tpu.dot_dimension_numbers<[1], [0], [0], [1], [0, 0, 1, 1], [], []>} : vector<504x64xbf16>, vector<64x3xbf16>, vector<504x3xf32> -> vector<504x3xf32>
    %185 = vector.broadcast %9 : vector<1x3xf32> to vector<504x3xf32>
    %186 = arith.addf %184, %185 : vector<504x3xf32>
    %187 = arith.negf %186 : vector<504x3xf32>
    %188 = math.exp %187 : vector<504x3xf32>
    %cst_53 = arith.constant 1.000000e+00 : f32
    %189 = vector.broadcast %cst_53 : f32 to vector<504x3xf32>
    %190 = arith.addf %189, %188 : vector<504x3xf32>
    %191 = arith.divf %189, %190 : vector<504x3xf32>
    %c0_54 = arith.constant 0 : index
    %c0_55 = arith.constant 0 : index
    %192 = vector.load %arg5[%c0_54, %c0_55] : memref<504x4xf32, #tpu.memory_space<vmem>>, vector<504x3xf32>
    tpu.vector_store %arg5[%c0_54, %c0_55], %191 {strides = array<i32>} : memref<504x4xf32, #tpu.memory_space<vmem>>, vector<504x3xf32>,
    %c0_56 = arith.constant 0 : index
    %c3_57 = arith.constant 3 : index
    %193 = vector.load %arg5[%c0_56, %c3_57] : memref<504x4xf32, #tpu.memory_space<vmem>>, vector<504x1xf32>
    tpu.vector_store %arg5[%c0_56, %c3_57], %148 {strides = array<i32>} : memref<504x4xf32, #tpu.memory_space<vmem>>, vector<504x1xf32>,
    return
  }
  func.func @transform_0(%arg0: i32) -> (i32, i32) {
    %c0_i32 = arith.constant 0 : i32
    %c0_i32_0 = arith.constant 0 : i32
    return %arg0, %c0_i32 : i32, i32
  }
  func.func @transform_1(%arg0: i32) -> (i32, i32, i32) {
    %c0_i32 = arith.constant 0 : i32
    %c0_i32_0 = arith.constant 0 : i32
    %c0_i32_1 = arith.constant 0 : i32
    %c0_i32_2 = arith.constant 0 : i32
    return %c0_i32, %c0_i32_0, %c0_i32_1 : i32, i32, i32
  }
  func.func @transform_2(%arg0: i32) -> (i32, i32) {
    %c0_i32 = arith.constant 0 : i32
    %c0_i32_0 = arith.constant 0 : i32
    %c0_i32_1 = arith.constant 0 : i32
    return %c0_i32, %c0_i32_0 : i32, i32
  }
  func.func @transform_3(%arg0: i32) -> (i32, i32, i32) {
    %c0_i32 = arith.constant 0 : i32
    %c0_i32_0 = arith.constant 0 : i32
    %c0_i32_1 = arith.constant 0 : i32
    %c0_i32_2 = arith.constant 0 : i32
    return %c0_i32, %c0_i32_0, %c0_i32_1 : i32, i32, i32
  }
  func.func @transform_4(%arg0: i32) -> (i32, i32) {
    %c0_i32 = arith.constant 0 : i32
    %c0_i32_0 = arith.constant 0 : i32
    return %arg0, %c0_i32 : i32, i32
  }
}

</mosaic_0001>

<llo_original>
// kernel: tpu_custom_call.1
$region0: #{tpu_custom_call.1}
  #allocation0 [shape = 'u32[]', space=smem, size = 0x4, offset = 0x4, fixed_abs, tag = 'smem constant byte address 0x4 - core index']
  #allocation1 [shape = 'u32[72,128]{1,0:T(1,128)}', space=vmem, size = 0x9000, scoped, tag = 'internal scratch']
  %s0 = inlined_call_operand.vmem [shape: f32[504,6], index: 0, kind: input, shape index: {}]
  %s1 = inlined_call_operand.vmem [shape: bf16[7,128,128], index: 1, kind: input, shape index: {}]
  %s2 = inlined_call_operand.vmem [shape: f32[21,128], index: 2, kind: input, shape index: {}]
  %s3 = inlined_call_operand.vmem [shape: bf16[2,128,64], index: 3, kind: input, shape index: {}]
  %s4 = inlined_call_operand.vmem [shape: f32[504,4], index: 4, kind: output, shape index: {}]
  %s5 = sld [smem:[#allocation0]]
  $region26: #{tpu_custom_call.1} parent=0
    _
  %s7 = ssub.s32 1, %s5
  %s8 = scalar_select 0, %s7, %s5
  // Predicated region
  $region2: #{tpu_custom_call.1} parent=0 // pred_check
    _
  $region3: #{tpu_custom_call.1} parent=0 // pred_check_branch
    %10 = sbr.rel (0) target = $region5
  $region4: #{tpu_custom_call.1} parent=0 // pred_region
    _
  $region5: #{tpu_custom_call.1} parent=0 // pred_fallthru
    _
  // Predicated region
  $region6: #{tpu_custom_call.1} parent=0 // pred_check
    _
  $region7: #{tpu_custom_call.1} parent=0 // pred_check_branch
    %12 = sbr.rel (0) target = $region9
  $region8: #{tpu_custom_call.1} parent=0 // pred_region
    _
  $region9: #{tpu_custom_call.1} parent=0 // pred_fallthru
    _
  // Predicated region
  $region10: #{tpu_custom_call.1} parent=0 // pred_check
    _
  $region11: #{tpu_custom_call.1} parent=0 // pred_check_branch
    %14 = sbr.rel (0) target = $region13
  $region12: #{tpu_custom_call.1} parent=0 // pred_region
    _
  $region13: #{tpu_custom_call.1} parent=0 // pred_fallthru
    _
  // Predicated region
  $region14: #{tpu_custom_call.1} parent=0 // pred_check
    _
  $region15: #{tpu_custom_call.1} parent=0 // pred_check_branch
    %16 = sbr.rel (0) target = $region17
  $region16: #{tpu_custom_call.1} parent=0 // pred_region
    _
  $region17: #{tpu_custom_call.1} parent=0 // pred_fallthru
    _
  %v18 = vld [vmem:[%s0] sm:$0xff]
  %v19 = vld [vmem:[%s0 + $0x8] sm:$0xff]
  %v20 = vld [vmem:[%s0 + $0x10] sm:$0xff]
  %v21 = vld [vmem:[%s0 + $0x18] sm:$0xff]
  %v22 = vld [vmem:[%s0 + $0x20] sm:$0xff]
  %v23 = vld [vmem:[%s0 + $0x28] sm:$0xff]
  %v24 = vld [vmem:[%s0 + $0x30] sm:$0xff]
  %v25 = vld [vmem:[%s0 + $0x38] sm:$0xff]
  %v26 = vld [vmem:[%s0 + $0x40] sm:$0xff]
  %v27 = vld [vmem:[%s0 + $0x48] sm:$0xff]
  %v28 = vld [vmem:[%s0 + $0x50] sm:$0xff]
  %v29 = vld [vmem:[%s0 + $0x58] sm:$0xff]
  %v30 = vld [vmem:[%s0 + $0x60] sm:$0xff]
  %v31 = vld [vmem:[%s0 + $0x68] sm:$0xff]
  %v32 = vld [vmem:[%s0 + $0x70] sm:$0xff]
  %v33 = vld [vmem:[%s0 + $0x78] sm:$0xff]
  %v34 = vld [vmem:[%s0 + $0x80] sm:$0xff]
  %v35 = vld [vmem:[%s0 + $0x88] sm:$0xff]
  %v36 = vld [vmem:[%s0 + $0x90] sm:$0xff]
  %v37 = vld [vmem:[%s0 + $0x98] sm:$0xff]
  %v38 = vld [vmem:[%s0 + $0xa0] sm:$0xff]
  %v39 = vld [vmem:[%s0 + $0xa8] sm:$0xff]
  %v40 = vld [vmem:[%s0 + $0xb0] sm:$0xff]
  %v41 = vld [vmem:[%s0 + $0xb8] sm:$0xff]
  %v42 = vld [vmem:[%s0 + $0xc0] sm:$0xff]
  %v43 = vld [vmem:[%s0 + $0xc8] sm:$0xff]
  %v44 = vld [vmem:[%s0 + $0xd0] sm:$0xff]
  %v45 = vld [vmem:[%s0 + $0xd8] sm:$0xff]
  %v46 = vld [vmem:[%s0 + $0xe0] sm:$0xff]
  %v47 = vld [vmem:[%s0 + $0xe8] sm:$0xff]
  %v48 = vld [vmem:[%s0 + $0xf0] sm:$0xff]
  %v49 = vld [vmem:[%s0 + $0xf8] sm:$0xff]
  %v50 = vld [vmem:[%s0 + $0x100] sm:$0xff]
  %v51 = vld [vmem:[%s0 + $0x108] sm:$0xff]
  %v52 = vld [vmem:[%s0 + $0x110] sm:$0xff]
  %v53 = vld [vmem:[%s0 + $0x118] sm:$0xff]
  %v54 = vld [vmem:[%s0 + $0x120] sm:$0xff]
  %v55 = vld [vmem:[%s0 + $0x128] sm:$0xff]
  %v56 = vld [vmem:[%s0 + $0x130] sm:$0xff]
  %v57 = vld [vmem:[%s0 + $0x138] sm:$0xff]
  %v58 = vld [vmem:[%s0 + $0x140] sm:$0xff]
  %v59 = vld [vmem:[%s0 + $0x148] sm:$0xff]
  %v60 = vld [vmem:[%s0 + $0x150] sm:$0xff]
  %v61 = vld [vmem:[%s0 + $0x158] sm:$0xff]
  %v62 = vld [vmem:[%s0 + $0x160] sm:$0xff]
  %v63 = vld [vmem:[%s0 + $0x168] sm:$0xff]
  %v64 = vld [vmem:[%s0 + $0x170] sm:$0xff]
  %v65 = vld [vmem:[%s0 + $0x178] sm:$0xff]
  %v66 = vld [vmem:[%s0 + $0x180] sm:$0xff]
  %v67 = vld [vmem:[%s0 + $0x188] sm:$0xff]
  %v68 = vld [vmem:[%s0 + $0x190] sm:$0xff]
  %v69 = vld [vmem:[%s0 + $0x198] sm:$0xff]
  %v70 = vld [vmem:[%s0 + $0x1a0] sm:$0xff]
  %v71 = vld [vmem:[%s0 + $0x1a8] sm:$0xff]
  %v72 = vld [vmem:[%s0 + $0x1b0] sm:$0xff]
  %v73 = vld [vmem:[%s0 + $0x1b8] sm:$0xff]
  %v74 = vld [vmem:[%s0 + $0x1c0] sm:$0xff]
  %v75 = vld [vmem:[%s0 + $0x1c8] sm:$0xff]
  %v76 = vld [vmem:[%s0 + $0x1d0] sm:$0xff]
  %v77 = vld [vmem:[%s0 + $0x1d8] sm:$0xff]
  %v78 = vld [vmem:[%s0 + $0x1e0] sm:$0xff]
  %v79 = vld [vmem:[%s0 + $0x1e8] sm:$0xff]
  %v80 = vld [vmem:[%s0 + $0x1f0] sm:$0xff]
  %v81 = vld [vmem:[%s2] sm:$0x7]
  %v82 = vld [vmem:[%s2 + $0x3] sm:$0x7]
  %v83 = vld [vmem:[%s2 + $0x6] sm:$0x7]
  %v84 = vld [vmem:[%s2 + $0x9] sm:$0x1]
  %v85 = vld [vmem:[%s2 + $0xa] sm:$0xff]
  %v86 = vld [vmem:[%s2 + $0x12] sm:$0x1]
  %v87 = vld [vmem:[%s2 + $0x13] sm:$0x1]
  %v88 = vld [vmem:[%s2 + $0x14] sm:$0x1]
  %90 = vset.pattern.permute.xlu0 0
  %91 = vperm.xlu0 %90, %v18
  %v92 = vpop.permute.xlu0 %91
  %95 = vset.pattern.permute.xlu0 0
  %96 = vperm.xlu0 %95, %v19
  %v97 = vpop.permute.xlu0 %96
  %100 = vset.pattern.permute.xlu0 0
  %101 = vperm.xlu0 %100, %v20
  %v102 = vpop.permute.xlu0 %101
  %105 = vset.pattern.permute.xlu0 0
  %106 = vperm.xlu0 %105, %v21
  %v107 = vpop.permute.xlu0 %106
  %110 = vset.pattern.permute.xlu0 0
  %111 = vperm.xlu0 %110, %v22
  %v112 = vpop.permute.xlu0 %111
  %115 = vset.pattern.permute.xlu0 0
  %116 = vperm.xlu0 %115, %v23
  %v117 = vpop.permute.xlu0 %116
  %120 = vset.pattern.permute.xlu0 0
  %121 = vperm.xlu0 %120, %v24
  %v122 = vpop.permute.xlu0 %121
  %125 = vset.pattern.permute.xlu0 0
  %126 = vperm.xlu0 %125, %v25
  %v127 = vpop.permute.xlu0 %126
  %130 = vset.pattern.permute.xlu0 0
  %131 = vperm.xlu0 %130, %v26
  %v132 = vpop.permute.xlu0 %131
  %135 = vset.pattern.permute.xlu0 0
  %136 = vperm.xlu0 %135, %v27
  %v137 = vpop.permute.xlu0 %136
  %140 = vset.pattern.permute.xlu0 0
  %141 = vperm.xlu0 %140, %v28
  %v142 = vpop.permute.xlu0 %141
  %145 = vset.pattern.permute.xlu0 0
  %146 = vperm.xlu0 %145, %v29
  %v147 = vpop.permute.xlu0 %146
  %150 = vset.pattern.permute.xlu0 0
  %151 = vperm.xlu0 %150, %v30
  %v152 = vpop.permute.xlu0 %151
  %155 = vset.pattern.permute.xlu0 0
  %156 = vperm.xlu0 %155, %v31
  %v157 = vpop.permute.xlu0 %156
  %160 = vset.pattern.permute.xlu0 0
  %161 = vperm.xlu0 %160, %v32
  %v162 = vpop.permute.xlu0 %161
  %165 = vset.pattern.permute.xlu0 0
  %166 = vperm.xlu0 %165, %v33
  %v167 = vpop.permute.xlu0 %166
  %170 = vset.pattern.permute.xlu0 0
  %171 = vperm.xlu0 %170, %v34
  %v172 = vpop.permute.xlu0 %171
  %175 = vset.pattern.permute.xlu0 0
  %176 = vperm.xlu0 %175, %v35
  %v177 = vpop.permute.xlu0 %176
  %180 = vset.pattern.permute.xlu0 0
  %181 = vperm.xlu0 %180, %v36
  %v182 = vpop.permute.xlu0 %181
  %185 = vset.pattern.permute.xlu0 0
  %186 = vperm.xlu0 %185, %v37
  %v187 = vpop.permute.xlu0 %186
  %190 = vset.pattern.permute.xlu0 0
  %191 = vperm.xlu0 %190, %v38
  %v192 = vpop.permute.xlu0 %191
  %195 = vset.pattern.permute.xlu0 0
  %196 = vperm.xlu0 %195, %v39
  %v197 = vpop.permute.xlu0 %196
  %200 = vset.pattern.permute.xlu0 0
  %201 = vperm.xlu0 %200, %v40
  %v202 = vpop.permute.xlu0 %201
  %205 = vset.pattern.permute.xlu0 0
  %206 = vperm.xlu0 %205, %v41
  %v207 = vpop.permute.xlu0 %206
  %210 = vset.pattern.permute.xlu0 0
  %211 = vperm.xlu0 %210, %v42
  %v212 = vpop.permute.xlu0 %211
  %215 = vset.pattern.permute.xlu0 0
  %216 = vperm.xlu0 %215, %v43
  %v217 = vpop.permute.xlu0 %216
  %220 = vset.pattern.permute.xlu0 0
  %221 = vperm.xlu0 %220, %v44
  %v222 = vpop.permute.xlu0 %221
  %225 = vset.pattern.permute.xlu0 0
  %226 = vperm.xlu0 %225, %v45
  %v227 = vpop.permute.xlu0 %226
  %230 = vset.pattern.permute.xlu0 0
  %231 = vperm.xlu0 %230, %v46
  %v232 = vpop.permute.xlu0 %231
  %235 = vset.pattern.permute.xlu0 0
  %236 = vperm.xlu0 %235, %v47
  %v237 = vpop.permute.xlu0 %236
  %240 = vset.pattern.permute.xlu0 0
  %241 = vperm.xlu0 %240, %v48
  %v242 = vpop.permute.xlu0 %241
  %245 = vset.pattern.permute.xlu0 0
  %246 = vperm.xlu0 %245, %v49
  %v247 = vpop.permute.xlu0 %246
  %250 = vset.pattern.permute.xlu0 0
  %251 = vperm.xlu0 %250, %v50
  %v252 = vpop.permute.xlu0 %251
  %255 = vset.pattern.permute.xlu0 0
  %256 = vperm.xlu0 %255, %v51
  %v257 = vpop.permute.xlu0 %256
  %260 = vset.pattern.permute.xlu0 0
  %261 = vperm.xlu0 %260, %v52
  %v262 = vpop.permute.xlu0 %261
  %265 = vset.pattern.permute.xlu0 0
  %266 = vperm.xlu0 %265, %v53
  %v267 = vpop.permute.xlu0 %266
  %270 = vset.pattern.permute.xlu0 0
  %271 = vperm.xlu0 %270, %v54
  %v272 = vpop.permute.xlu0 %271
  %275 = vset.pattern.permute.xlu0 0
  %276 = vperm.xlu0 %275, %v55
  %v277 = vpop.permute.xlu0 %276
  %280 = vset.pattern.permute.xlu0 0
  %281 = vperm.xlu0 %280, %v56
  %v282 = vpop.permute.xlu0 %281
  %285 = vset.pattern.permute.xlu0 0
  %286 = vperm.xlu0 %285, %v57
  %v287 = vpop.permute.xlu0 %286
  %290 = vset.pattern.permute.xlu0 0
  %291 = vperm.xlu0 %290, %v58
  %v292 = vpop.permute.xlu0 %291
  %295 = vset.pattern.permute.xlu0 0
  %296 = vperm.xlu0 %295, %v59
  %v297 = vpop.permute.xlu0 %296
  %300 = vset.pattern.permute.xlu0 0
  %301 = vperm.xlu0 %300, %v60
  %v302 = vpop.permute.xlu0 %301
  %305 = vset.pattern.permute.xlu0 0
  %306 = vperm.xlu0 %305, %v61
  %v307 = vpop.permute.xlu0 %306
  %310 = vset.pattern.permute.xlu0 0
  %311 = vperm.xlu0 %310, %v62
  %v312 = vpop.permute.xlu0 %311
  %315 = vset.pattern.permute.xlu0 0
  %316 = vperm.xlu0 %315, %v63
  %v317 = vpop.permute.xlu0 %316
  %320 = vset.pattern.permute.xlu0 0
  %321 = vperm.xlu0 %320, %v64
  %v322 = vpop.permute.xlu0 %321
  %325 = vset.pattern.permute.xlu0 0
  %326 = vperm.xlu0 %325, %v65
  %v327 = vpop.permute.xlu0 %326
  %330 = vset.pattern.permute.xlu0 0
  %331 = vperm.xlu0 %330, %v66
  %v332 = vpop.permute.xlu0 %331
  %335 = vset.pattern.permute.xlu0 0
  %336 = vperm.xlu0 %335, %v67
  %v337 = vpop.permute.xlu0 %336
  %340 = vset.pattern.permute.xlu0 0
  %341 = vperm.xlu0 %340, %v68
  %v342 = vpop.permute.xlu0 %341
  %345 = vset.pattern.permute.xlu0 0
  %346 = vperm.xlu0 %345, %v69
  %v347 = vpop.permute.xlu0 %346
  %350 = vset.pattern.permute.xlu0 0
  %351 = vperm.xlu0 %350, %v70
  %v352 = vpop.permute.xlu0 %351
  %355 = vset.pattern.permute.xlu0 0
  %356 = vperm.xlu0 %355, %v71
  %v357 = vpop.permute.xlu0 %356
  %360 = vset.pattern.permute.xlu0 0
  %361 = vperm.xlu0 %360, %v72
  %v362 = vpop.permute.xlu0 %361
  %365 = vset.pattern.permute.xlu0 0
  %366 = vperm.xlu0 %365, %v73
  %v367 = vpop.permute.xlu0 %366
  %370 = vset.pattern.permute.xlu0 0
  %371 = vperm.xlu0 %370, %v74
  %v372 = vpop.permute.xlu0 %371
  %375 = vset.pattern.permute.xlu0 0
  %376 = vperm.xlu0 %375, %v75
  %v377 = vpop.permute.xlu0 %376
  %380 = vset.pattern.permute.xlu0 0
  %381 = vperm.xlu0 %380, %v76
  %v382 = vpop.permute.xlu0 %381
  %385 = vset.pattern.permute.xlu0 0
  %386 = vperm.xlu0 %385, %v77
  %v387 = vpop.permute.xlu0 %386
  %390 = vset.pattern.permute.xlu0 0
  %391 = vperm.xlu0 %390, %v78
  %v392 = vpop.permute.xlu0 %391
  %395 = vset.pattern.permute.xlu0 0
  %396 = vperm.xlu0 %395, %v79
  %v397 = vpop.permute.xlu0 %396
  %400 = vset.pattern.permute.xlu0 0
  %401 = vperm.xlu0 %400, %v80
  %v402 = vpop.permute.xlu0 %401
  %v404 = vperm.slane %v81, 0
  %v405 = vmul.f32 %v92, %v404
  %v406 = vmul.f32 %v97, %v404
  %v407 = vmul.f32 %v102, %v404
  %v408 = vmul.f32 %v107, %v404
  %v409 = vmul.f32 %v112, %v404
  %v410 = vmul.f32 %v117, %v404
  %v411 = vmul.f32 %v122, %v404
  %v412 = vmul.f32 %v127, %v404
  %v413 = vmul.f32 %v132, %v404
  %v414 = vmul.f32 %v137, %v404
  %v415 = vmul.f32 %v142, %v404
  %v416 = vmul.f32 %v147, %v404
  %v417 = vmul.f32 %v152, %v404
  %v418 = vmul.f32 %v157, %v404
  %v419 = vmul.f32 %v162, %v404
  %v420 = vmul.f32 %v167, %v404
  %v421 = vmul.f32 %v172, %v404
  %v422 = vmul.f32 %v177, %v404
  %v423 = vmul.f32 %v182, %v404
  %v424 = vmul.f32 %v187, %v404
  %v425 = vmul.f32 %v192, %v404
  %v426 = vmul.f32 %v197, %v404
  %v427 = vmul.f32 %v202, %v404
  %v428 = vmul.f32 %v207, %v404
  %v429 = vmul.f32 %v212, %v404
  %v430 = vmul.f32 %v217, %v404
  %v431 = vmul.f32 %v222, %v404
  %v432 = vmul.f32 %v227, %v404
  %v433 = vmul.f32 %v232, %v404
  %v434 = vmul.f32 %v237, %v404
  %v435 = vmul.f32 %v242, %v404
  %v436 = vmul.f32 %v247, %v404
  %v437 = vmul.f32 %v252, %v404
  %v438 = vmul.f32 %v257, %v404
  %v439 = vmul.f32 %v262, %v404
  %v440 = vmul.f32 %v267, %v404
  %v441 = vmul.f32 %v272, %v404
  %v442 = vmul.f32 %v277, %v404
  %v443 = vmul.f32 %v282, %v404
  %v444 = vmul.f32 %v287, %v404
  %v445 = vmul.f32 %v292, %v404
  %v446 = vmul.f32 %v297, %v404
  %v447 = vmul.f32 %v302, %v404
  %v448 = vmul.f32 %v307, %v404
  %v449 = vmul.f32 %v312, %v404
  %v450 = vmul.f32 %v317, %v404
  %v451 = vmul.f32 %v322, %v404
  %v452 = vmul.f32 %v327, %v404
  %v453 = vmul.f32 %v332, %v404
  %v454 = vmul.f32 %v337, %v404
  %v455 = vmul.f32 %v342, %v404
  %v456 = vmul.f32 %v347, %v404
  %v457 = vmul.f32 %v352, %v404
  %v458 = vmul.f32 %v357, %v404
  %v459 = vmul.f32 %v362, %v404
  %v460 = vmul.f32 %v367, %v404
  %v461 = vmul.f32 %v372, %v404
  %v462 = vmul.f32 %v377, %v404
  %v463 = vmul.f32 %v382, %v404
  %v464 = vmul.f32 %v387, %v404
  %v465 = vmul.f32 %v392, %v404
  %v466 = vmul.f32 %v397, %v404
  %v467 = vmul.f32 %v402, %v404
  %v468 = vperm.slane %v85, 0
  %v469 = vadd.f32 %v468, %v405
  %v470 = vadd.f32 %v468, %v406
  %v471 = vadd.f32 %v468, %v407
  %v472 = vadd.f32 %v468, %v408
  %v473 = vadd.f32 %v468, %v409
  %v474 = vadd.f32 %v468, %v410
  %v475 = vadd.f32 %v468, %v411
  %v476 = vadd.f32 %v468, %v412
  %v477 = vadd.f32 %v468, %v413
  %v478 = vadd.f32 %v468, %v414
  %v479 = vadd.f32 %v468, %v415
  %v480 = vadd.f32 %v468, %v416
  %v481 = vadd.f32 %v468, %v417
  %v482 = vadd.f32 %v468, %v418
  %v483 = vadd.f32 %v468, %v419
  %v484 = vadd.f32 %v468, %v420
  %v485 = vadd.f32 %v468, %v421
  %v486 = vadd.f32 %v468, %v422
  %v487 = vadd.f32 %v468, %v423
  %v488 = vadd.f32 %v468, %v424
  %v489 = vadd.f32 %v468, %v425
  %v490 = vadd.f32 %v468, %v426
  %v491 = vadd.f32 %v468, %v427
  %v492 = vadd.f32 %v468, %v428
  %v493 = vadd.f32 %v468, %v429
  %v494 = vadd.f32 %v468, %v430
  %v495 = vadd.f32 %v468, %v431
  %v496 = vadd.f32 %v468, %v432
  %v497 = vadd.f32 %v468, %v433
  %v498 = vadd.f32 %v468, %v434
  %v499 = vadd.f32 %v468, %v435
  %v500 = vadd.f32 %v468, %v436
  %v501 = vadd.f32 %v468, %v437
  %v502 = vadd.f32 %v468, %v438
  %v503 = vadd.f32 %v468, %v439
  %v504 = vadd.f32 %v468, %v440
  %v505 = vadd.f32 %v468, %v441
  %v506 = vadd.f32 %v468, %v442
  %v507 = vadd.f32 %v468, %v443
  %v508 = vadd.f32 %v468, %v444
  %v509 = vadd.f32 %v468, %v445
  %v510 = vadd.f32 %v468, %v446
  %v511 = vadd.f32 %v468, %v447
  %v512 = vadd.f32 %v468, %v448
  %v513 = vadd.f32 %v468, %v449
  %v514 = vadd.f32 %v468, %v450
  %v515 = vadd.f32 %v468, %v451
  %v516 = vadd.f32 %v468, %v452
  %v517 = vadd.f32 %v468, %v453
  %v518 = vadd.f32 %v468, %v454
  %v519 = vadd.f32 %v468, %v455
  %v520 = vadd.f32 %v468, %v456
  %v521 = vadd.f32 %v468, %v457
  %v522 = vadd.f32 %v468, %v458
  %v523 = vadd.f32 %v468, %v459
  %v524 = vadd.f32 %v468, %v460
  %v525 = vadd.f32 %v468, %v461
  %v526 = vadd.f32 %v468, %v462
  %v527 = vadd.f32 %v468, %v463
  %v528 = vadd.f32 %v468, %v464
  %v529 = vadd.f32 %v468, %v465
  %v530 = vadd.f32 %v468, %v466
  %v531 = vadd.f32 %v468, %v467
  %532 = vset.pattern.permute.xlu0 1
  %533 = vperm.xlu0 %532, %v18
  %v534 = vpop.permute.xlu0 %533
  %536 = vset.pattern.permute.xlu0 1
  %537 = vperm.xlu0 %536, %v19
  %v538 = vpop.permute.xlu0 %537
  %540 = vset.pattern.permute.xlu0 1
  %541 = vperm.xlu0 %540, %v20
  %v542 = vpop.permute.xlu0 %541
  %544 = vset.pattern.permute.xlu0 1
  %545 = vperm.xlu0 %544, %v21
  %v546 = vpop.permute.xlu0 %545
  %548 = vset.pattern.permute.xlu0 1
  %549 = vperm.xlu0 %548, %v22
  %v550 = vpop.permute.xlu0 %549
  %552 = vset.pattern.permute.xlu0 1
  %553 = vperm.xlu0 %552, %v23
  %v554 = vpop.permute.xlu0 %553
  %556 = vset.pattern.permute.xlu0 1
  %557 = vperm.xlu0 %556, %v24
  %v558 = vpop.permute.xlu0 %557
  %560 = vset.pattern.permute.xlu0 1
  %561 = vperm.xlu0 %560, %v25
  %v562 = vpop.permute.xlu0 %561
  %564 = vset.pattern.permute.xlu0 1
  %565 = vperm.xlu0 %564, %v26
  %v566 = vpop.permute.xlu0 %565
  %568 = vset.pattern.permute.xlu0 1
  %569 = vperm.xlu0 %568, %v27
  %v570 = vpop.permute.xlu0 %569
  %572 = vset.pattern.permute.xlu0 1
  %573 = vperm.xlu0 %572, %v28
  %v574 = vpop.permute.xlu0 %573
  %576 = vset.pattern.permute.xlu0 1
  %577 = vperm.xlu0 %576, %v29
  %v578 = vpop.permute.xlu0 %577
  %580 = vset.pattern.permute.xlu0 1
  %581 = vperm.xlu0 %580, %v30
  %v582 = vpop.permute.xlu0 %581
  %584 = vset.pattern.permute.xlu0 1
  %585 = vperm.xlu0 %584, %v31
  %v586 = vpop.permute.xlu0 %585
  %588 = vset.pattern.permute.xlu0 1
  %589 = vperm.xlu0 %588, %v32
  %v590 = vpop.permute.xlu0 %589
  %592 = vset.pattern.permute.xlu0 1
  %593 = vperm.xlu0 %592, %v33
  %v594 = vpop.permute.xlu0 %593
  %596 = vset.pattern.permute.xlu0 1
  %597 = vperm.xlu0 %596, %v34
  %v598 = vpop.permute.xlu0 %597
  %600 = vset.pattern.permute.xlu0 1
  %601 = vperm.xlu0 %600, %v35
  %v602 = vpop.permute.xlu0 %601
  %604 = vset.pattern.permute.xlu0 1
  %605 = vperm.xlu0 %604, %v36
  %v606 = vpop.permute.xlu0 %605
  %608 = vset.pattern.permute.xlu0 1
  %609 = vperm.xlu0 %608, %v37
  %v610 = vpop.permute.xlu0 %609
  %612 = vset.pattern.permute.xlu0 1
  %613 = vperm.xlu0 %612, %v38
  %v614 = vpop.permute.xlu0 %613
  %616 = vset.pattern.permute.xlu0 1
  %617 = vperm.xlu0 %616, %v39
  %v618 = vpop.permute.xlu0 %617
  %620 = vset.pattern.permute.xlu0 1
  %621 = vperm.xlu0 %620, %v40
  %v622 = vpop.permute.xlu0 %621
  %624 = vset.pattern.permute.xlu0 1
  %625 = vperm.xlu0 %624, %v41
  %v626 = vpop.permute.xlu0 %625
  %628 = vset.pattern.permute.xlu0 1
  %629 = vperm.xlu0 %628, %v42
  %v630 = vpop.permute.xlu0 %629
  %632 = vset.pattern.permute.xlu0 1
  %633 = vperm.xlu0 %632, %v43
  %v634 = vpop.permute.xlu0 %633
  %636 = vset.pattern.permute.xlu0 1
  %637 = vperm.xlu0 %636, %v44
  %v638 = vpop.permute.xlu0 %637
  %640 = vset.pattern.permute.xlu0 1
  %641 = vperm.xlu0 %640, %v45
  %v642 = vpop.permute.xlu0 %641
  %644 = vset.pattern.permute.xlu0 1
  %645 = vperm.xlu0 %644, %v46
  %v646 = vpop.permute.xlu0 %645
  %648 = vset.pattern.permute.xlu0 1
  %649 = vperm.xlu0 %648, %v47
  %v650 = vpop.permute.xlu0 %649
  %652 = vset.pattern.permute.xlu0 1
  %653 = vperm.xlu0 %652, %v48
  %v654 = vpop.permute.xlu0 %653
  %656 = vset.pattern.permute.xlu0 1
  %657 = vperm.xlu0 %656, %v49
  %v658 = vpop.permute.xlu0 %657
  %660 = vset.pattern.permute.xlu0 1
  %661 = vperm.xlu0 %660, %v50
  %v662 = vpop.permute.xlu0 %661
  %664 = vset.pattern.permute.xlu0 1
  %665 = vperm.xlu0 %664, %v51
  %v666 = vpop.permute.xlu0 %665
  %668 = vset.pattern.permute.xlu0 1
  %669 = vperm.xlu0 %668, %v52
  %v670 = vpop.permute.xlu0 %669
  %672 = vset.pattern.permute.xlu0 1
  %673 = vperm.xlu0 %672, %v53
  %v674 = vpop.permute.xlu0 %673
  %676 = vset.pattern.permute.xlu0 1
  %677 = vperm.xlu0 %676, %v54
  %v678 = vpop.permute.xlu0 %677
  %680 = vset.pattern.permute.xlu0 1
  %681 = vperm.xlu0 %680, %v55
  %v682 = vpop.permute.xlu0 %681
  %684 = vset.pattern.permute.xlu0 1
  %685 = vperm.xlu0 %684, %v56
  %v686 = vpop.permute.xlu0 %685
  %688 = vset.pattern.permute.xlu0 1
  %689 = vperm.xlu0 %688, %v57
  %v690 = vpop.permute.xlu0 %689
  %692 = vset.pattern.permute.xlu0 1
  %693 = vperm.xlu0 %692, %v58
  %v694 = vpop.permute.xlu0 %693
  %696 = vset.pattern.permute.xlu0 1
  %697 = vperm.xlu0 %696, %v59
  %v698 = vpop.permute.xlu0 %697
  %700 = vset.pattern.permute.xlu0 1
  %701 = vperm.xlu0 %700, %v60
  %v702 = vpop.permute.xlu0 %701
  %704 = vset.pattern.permute.xlu0 1
  %705 = vperm.xlu0 %704, %v61
  %v706 = vpop.permute.xlu0 %705
  %708 = vset.pattern.permute.xlu0 1
  %709 = vperm.xlu0 %708, %v62
  %v710 = vpop.permute.xlu0 %709
  %712 = vset.pattern.permute.xlu0 1
  %713 = vperm.xlu0 %712, %v63
  %v714 = vpop.permute.xlu0 %713
  %716 = vset.pattern.permute.xlu0 1
  %717 = vperm.xlu0 %716, %v64
  %v718 = vpop.permute.xlu0 %717
  %720 = vset.pattern.permute.xlu0 1
  %721 = vperm.xlu0 %720, %v65
  %v722 = vpop.permute.xlu0 %721
  %724 = vset.pattern.permute.xlu0 1
  %725 = vperm.xlu0 %724, %v66
  %v726 = vpop.permute.xlu0 %725
  %728 = vset.pattern.permute.xlu0 1
  %729 = vperm.xlu0 %728, %v67
  %v730 = vpop.permute.xlu0 %729
  %732 = vset.pattern.permute.xlu0 1
  %733 = vperm.xlu0 %732, %v68
  %v734 = vpop.permute.xlu0 %733
  %736 = vset.pattern.permute.xlu0 1
  %737 = vperm.xlu0 %736, %v69
  %v738 = vpop.permute.xlu0 %737
  %740 = vset.pattern.permute.xlu0 1
  %741 = vperm.xlu0 %740, %v70
  %v742 = vpop.permute.xlu0 %741
  %744 = vset.pattern.permute.xlu0 1
  %745 = vperm.xlu0 %744, %v71
  %v746 = vpop.permute.xlu0 %745
  %748 = vset.pattern.permute.xlu0 1
  %749 = vperm.xlu0 %748, %v72
  %v750 = vpop.permute.xlu0 %749
  %752 = vset.pattern.permute.xlu0 1
  %753 = vperm.xlu0 %752, %v73
  %v754 = vpop.permute.xlu0 %753
  %756 = vset.pattern.permute.xlu0 1
  %757 = vperm.xlu0 %756, %v74
  %v758 = vpop.permute.xlu0 %757
  %760 = vset.pattern.permute.xlu0 1
  %761 = vperm.xlu0 %760, %v75
  %v762 = vpop.permute.xlu0 %761
  %764 = vset.pattern.permute.xlu0 1
  %765 = vperm.xlu0 %764, %v76
  %v766 = vpop.permute.xlu0 %765
  %768 = vset.pattern.permute.xlu0 1
  %769 = vperm.xlu0 %768, %v77
  %v770 = vpop.permute.xlu0 %769
  %772 = vset.pattern.permute.xlu0 1
  %773 = vperm.xlu0 %772, %v78
  %v774 = vpop.permute.xlu0 %773
  %776 = vset.pattern.permute.xlu0 1
  %777 = vperm.xlu0 %776, %v79
  %v778 = vpop.permute.xlu0 %777
  %780 = vset.pattern.permute.xlu0 1
  %781 = vperm.xlu0 %780, %v80
  %v782 = vpop.permute.xlu0 %781
  %v784 = vperm.slane %v81, 1
  %v785 = vmul.f32 %v534, %v784
  %v786 = vmul.f32 %v538, %v784
  %v787 = vmul.f32 %v542, %v784
  %v788 = vmul.f32 %v546, %v784
  %v789 = vmul.f32 %v550, %v784
  %v790 = vmul.f32 %v554, %v784
  %v791 = vmul.f32 %v558, %v784
  %v792 = vmul.f32 %v562, %v784
  %v793 = vmul.f32 %v566, %v784
  %v794 = vmul.f32 %v570, %v784
  %v795 = vmul.f32 %v574, %v784
  %v796 = vmul.f32 %v578, %v784
  %v797 = vmul.f32 %v582, %v784
  %v798 = vmul.f32 %v586, %v784
  %v799 = vmul.f32 %v590, %v784
  %v800 = vmul.f32 %v594, %v784
  %v801 = vmul.f32 %v598, %v784
  %v802 = vmul.f32 %v602, %v784
  %v803 = vmul.f32 %v606, %v784
  %v804 = vmul.f32 %v610, %v784
  %v805 = vmul.f32 %v614, %v784
  %v806 = vmul.f32 %v618, %v784
  %v807 = vmul.f32 %v622, %v784
  %v808 = vmul.f32 %v626, %v784
  %v809 = vmul.f32 %v630, %v784
  %v810 = vmul.f32 %v634, %v784
  %v811 = vmul.f32 %v638, %v784
  %v812 = vmul.f32 %v642, %v784
  %v813 = vmul.f32 %v646, %v784
  %v814 = vmul.f32 %v650, %v784
  %v815 = vmul.f32 %v654, %v784
  %v816 = vmul.f32 %v658, %v784
  %v817 = vmul.f32 %v662, %v784
  %v818 = vmul.f32 %v666, %v784
  %v819 = vmul.f32 %v670, %v784
  %v820 = vmul.f32 %v674, %v784
  %v821 = vmul.f32 %v678, %v784
  %v822 = vmul.f32 %v682, %v784
  %v823 = vmul.f32 %v686, %v784
  %v824 = vmul.f32 %v690, %v784
  %v825 = vmul.f32 %v694, %v784
  %v826 = vmul.f32 %v698, %v784
  %v827 = vmul.f32 %v702, %v784
  %v828 = vmul.f32 %v706, %v784
  %v829 = vmul.f32 %v710, %v784
  %v830 = vmul.f32 %v714, %v784
  %v831 = vmul.f32 %v718, %v784
  %v832 = vmul.f32 %v722, %v784
  %v833 = vmul.f32 %v726, %v784
  %v834 = vmul.f32 %v730, %v784
  %v835 = vmul.f32 %v734, %v784
  %v836 = vmul.f32 %v738, %v784
  %v837 = vmul.f32 %v742, %v784
  %v838 = vmul.f32 %v746, %v784
  %v839 = vmul.f32 %v750, %v784
  %v840 = vmul.f32 %v754, %v784
  %v841 = vmul.f32 %v758, %v784
  %v842 = vmul.f32 %v762, %v784
  %v843 = vmul.f32 %v766, %v784
  %v844 = vmul.f32 %v770, %v784
  %v845 = vmul.f32 %v774, %v784
  %v846 = vmul.f32 %v778, %v784
  %v847 = vmul.f32 %v782, %v784
  %v848 = vadd.f32 %v469, %v785
  %v849 = vadd.f32 %v470, %v786
  %v850 = vadd.f32 %v471, %v787
  %v851 = vadd.f32 %v472, %v788
  %v852 = vadd.f32 %v473, %v789
  %v853 = vadd.f32 %v474, %v790
  %v854 = vadd.f32 %v475, %v791
  %v855 = vadd.f32 %v476, %v792
  %v856 = vadd.f32 %v477, %v793
  %v857 = vadd.f32 %v478, %v794
  %v858 = vadd.f32 %v479, %v795
  %v859 = vadd.f32 %v480, %v796
  %v860 = vadd.f32 %v481, %v797
  %v861 = vadd.f32 %v482, %v798
  %v862 = vadd.f32 %v483, %v799
  %v863 = vadd.f32 %v484, %v800
  %v864 = vadd.f32 %v485, %v801
  %v865 = vadd.f32 %v486, %v802
  %v866 = vadd.f32 %v487, %v803
  %v867 = vadd.f32 %v488, %v804
  %v868 = vadd.f32 %v489, %v805
  %v869 = vadd.f32 %v490, %v806
  %v870 = vadd.f32 %v491, %v807
  %v871 = vadd.f32 %v492, %v808
  %v872 = vadd.f32 %v493, %v809
  %v873 = vadd.f32 %v494, %v810
  %v874 = vadd.f32 %v495, %v811
  %v875 = vadd.f32 %v496, %v812
  %v876 = vadd.f32 %v497, %v813
  %v877 = vadd.f32 %v498, %v814
  %v878 = vadd.f32 %v499, %v815
  %v879 = vadd.f32 %v500, %v816
  %v880 = vadd.f32 %v501, %v817
  %v881 = vadd.f32 %v502, %v818
  %v882 = vadd.f32 %v503, %v819
  %v883 = vadd.f32 %v504, %v820
  %v884 = vadd.f32 %v505, %v821
  %v885 = vadd.f32 %v506, %v822
  %v886 = vadd.f32 %v507, %v823
  %v887 = vadd.f32 %v508, %v824
  %v888 = vadd.f32 %v509, %v825
  %v889 = vadd.f32 %v510, %v826
  %v890 = vadd.f32 %v511, %v827
  %v891 = vadd.f32 %v512, %v828
  %v892 = vadd.f32 %v513, %v829
  %v893 = vadd.f32 %v514, %v830
  %v894 = vadd.f32 %v515, %v831
  %v895 = vadd.f32 %v516, %v832
  %v896 = vadd.f32 %v517, %v833
  %v897 = vadd.f32 %v518, %v834
  %v898 = vadd.f32 %v519, %v835
  %v899 = vadd.f32 %v520, %v836
  %v900 = vadd.f32 %v521, %v837
  %v901 = vadd.f32 %v522, %v838
  %v902 = vadd.f32 %v523, %v839
  %v903 = vadd.f32 %v524, %v840
  %v904 = vadd.f32 %v525, %v841
  %v905 = vadd.f32 %v526, %v842
  %v906 = vadd.f32 %v527, %v843
  %v907 = vadd.f32 %v528, %v844
  %v908 = vadd.f32 %v529, %v845
  %v909 = vadd.f32 %v530, %v846
  %v910 = vadd.f32 %v531, %v847
  %911 = vset.pattern.permute.xlu0 2
  %912 = vperm.xlu0 %911, %v18
  %v913 = vpop.permute.xlu0 %912
  %915 = vset.pattern.permute.xlu0 2
  %916 = vperm.xlu0 %915, %v19
  %v917 = vpop.permute.xlu0 %916
  %919 = vset.pattern.permute.xlu0 2
  %920 = vperm.xlu0 %919, %v20
  %v921 = vpop.permute.xlu0 %920
  %923 = vset.pattern.permute.xlu0 2
  %924 = vperm.xlu0 %923, %v21
  %v925 = vpop.permute.xlu0 %924
  %927 = vset.pattern.permute.xlu0 2
  %928 = vperm.xlu0 %927, %v22
  %v929 = vpop.permute.xlu0 %928
  %931 = vset.pattern.permute.xlu0 2
  %932 = vperm.xlu0 %931, %v23
  %v933 = vpop.permute.xlu0 %932
  %935 = vset.pattern.permute.xlu0 2
  %936 = vperm.xlu0 %935, %v24
  %v937 = vpop.permute.xlu0 %936
  %939 = vset.pattern.permute.xlu0 2
  %940 = vperm.xlu0 %939, %v25
  %v941 = vpop.permute.xlu0 %940
  %943 = vset.pattern.permute.xlu0 2
  %944 = vperm.xlu0 %943, %v26
  %v945 = vpop.permute.xlu0 %944
  %947 = vset.pattern.permute.xlu0 2
  %948 = vperm.xlu0 %947, %v27
  %v949 = vpop.permute.xlu0 %948
  %951 = vset.pattern.permute.xlu0 2
  %952 = vperm.xlu0 %951, %v28
  %v953 = vpop.permute.xlu0 %952
  %955 = vset.pattern.permute.xlu0 2
  %956 = vperm.xlu0 %955, %v29
  %v957 = vpop.permute.xlu0 %956
  %959 = vset.pattern.permute.xlu0 2
  %960 = vperm.xlu0 %959, %v30
  %v961 = vpop.permute.xlu0 %960
  %963 = vset.pattern.permute.xlu0 2
  %964 = vperm.xlu0 %963, %v31
  %v965 = vpop.permute.xlu0 %964
  %967 = vset.pattern.permute.xlu0 2
  %968 = vperm.xlu0 %967, %v32
  %v969 = vpop.permute.xlu0 %968
  %971 = vset.pattern.permute.xlu0 2
  %972 = vperm.xlu0 %971, %v33
  %v973 = vpop.permute.xlu0 %972
  %975 = vset.pattern.permute.xlu0 2
  %976 = vperm.xlu0 %975, %v34
  %v977 = vpop.permute.xlu0 %976
  %979 = vset.pattern.permute.xlu0 2
  %980 = vperm.xlu0 %979, %v35
  %v981 = vpop.permute.xlu0 %980
  %983 = vset.pattern.permute.xlu0 2
  %984 = vperm.xlu0 %983, %v36
  %v985 = vpop.permute.xlu0 %984
  %987 = vset.pattern.permute.xlu0 2
  %988 = vperm.xlu0 %987, %v37
  %v989 = vpop.permute.xlu0 %988
  %991 = vset.pattern.permute.xlu0 2
  %992 = vperm.xlu0 %991, %v38
  %v993 = vpop.permute.xlu0 %992
  %995 = vset.pattern.permute.xlu0 2
  %996 = vperm.xlu0 %995, %v39
  %v997 = vpop.permute.xlu0 %996
  %999 = vset.pattern.permute.xlu0 2
  %1000 = vperm.xlu0 %999, %v40
  %v1001 = vpop.permute.xlu0 %1000
  %1003 = vset.pattern.permute.xlu0 2
  %1004 = vperm.xlu0 %1003, %v41
  %v1005 = vpop.permute.xlu0 %1004
  %1007 = vset.pattern.permute.xlu0 2
  %1008 = vperm.xlu0 %1007, %v42
  %v1009 = vpop.permute.xlu0 %1008
  %1011 = vset.pattern.permute.xlu0 2
  %1012 = vperm.xlu0 %1011, %v43
  %v1013 = vpop.permute.xlu0 %1012
  %1015 = vset.pattern.permute.xlu0 2
  %1016 = vperm.xlu0 %1015, %v44
  %v1017 = vpop.permute.xlu0 %1016
  %1019 = vset.pattern.permute.xlu0 2
  %1020 = vperm.xlu0 %1019, %v45
  %v1021 = vpop.permute.xlu0 %1020
  %1023 = vset.pattern.permute.xlu0 2
  %1024 = vperm.xlu0 %1023, %v46
  %v1025 = vpop.permute.xlu0 %1024
  %1027 = vset.pattern.permute.xlu0 2
  %1028 = vperm.xlu0 %1027, %v47
  %v1029 = vpop.permute.xlu0 %1028
  %1031 = vset.pattern.permute.xlu0 2
  %1032 = vperm.xlu0 %1031, %v48
  %v1033 = vpop.permute.xlu0 %1032
  %1035 = vset.pattern.permute.xlu0 2
  %1036 = vperm.xlu0 %1035, %v49
  %v1037 = vpop.permute.xlu0 %1036
  %1039 = vset.pattern.permute.xlu0 2
  %1040 = vperm.xlu0 %1039, %v50
  %v1041 = vpop.permute.xlu0 %1040
  %1043 = vset.pattern.permute.xlu0 2
  %1044 = vperm.xlu0 %1043, %v51
  %v1045 = vpop.permute.xlu0 %1044
  %1047 = vset.pattern.permute.xlu0 2
  %1048 = vperm.xlu0 %1047, %v52
  %v1049 = vpop.permute.xlu0 %1048
  %1051 = vset.pattern.permute.xlu0 2
  %1052 = vperm.xlu0 %1051, %v53
  %v1053 = vpop.permute.xlu0 %1052
  %1055 = vset.pattern.permute.xlu0 2
  %1056 = vperm.xlu0 %1055, %v54
  %v1057 = vpop.permute.xlu0 %1056
  %1059 = vset.pattern.permute.xlu0 2
  %1060 = vperm.xlu0 %1059, %v55
  %v1061 = vpop.permute.xlu0 %1060
  %1063 = vset.pattern.permute.xlu0 2
  %1064 = vperm.xlu0 %1063, %v56
  %v1065 = vpop.permute.xlu0 %1064
  %1067 = vset.pattern.permute.xlu0 2
  %1068 = vperm.xlu0 %1067, %v57
  %v1069 = vpop.permute.xlu0 %1068
  %1071 = vset.pattern.permute.xlu0 2
  %1072 = vperm.xlu0 %1071, %v58
  %v1073 = vpop.permute.xlu0 %1072
  %1075 = vset.pattern.permute.xlu0 2
  %1076 = vperm.xlu0 %1075, %v59
  %v1077 = vpop.permute.xlu0 %1076
  %1079 = vset.pattern.permute.xlu0 2
  %1080 = vperm.xlu0 %1079, %v60
  %v1081 = vpop.permute.xlu0 %1080
  %1083 = vset.pattern.permute.xlu0 2
  %1084 = vperm.xlu0 %1083, %v61
  %v1085 = vpop.permute.xlu0 %1084
  %1087 = vset.pattern.permute.xlu0 2
  %1088 = vperm.xlu0 %1087, %v62
  %v1089 = vpop.permute.xlu0 %1088
  %1091 = vset.pattern.permute.xlu0 2
  %1092 = vperm.xlu0 %1091, %v63
  %v1093 = vpop.permute.xlu0 %1092
  %1095 = vset.pattern.permute.xlu0 2
  %1096 = vperm.xlu0 %1095, %v64
  %v1097 = vpop.permute.xlu0 %1096
  %1099 = vset.pattern.permute.xlu0 2
  %1100 = vperm.xlu0 %1099, %v65
  %v1101 = vpop.permute.xlu0 %1100
  %1103 = vset.pattern.permute.xlu0 2
  %1104 = vperm.xlu0 %1103, %v66
  %v1105 = vpop.permute.xlu0 %1104
  %1107 = vset.pattern.permute.xlu0 2
  %1108 = vperm.xlu0 %1107, %v67
  %v1109 = vpop.permute.xlu0 %1108
  %1111 = vset.pattern.permute.xlu0 2
  %1112 = vperm.xlu0 %1111, %v68
  %v1113 = vpop.permute.xlu0 %1112
  %1115 = vset.pattern.permute.xlu0 2
  %1116 = vperm.xlu0 %1115, %v69
  %v1117 = vpop.permute.xlu0 %1116
  %1119 = vset.pattern.permute.xlu0 2
  %1120 = vperm.xlu0 %1119, %v70
  %v1121 = vpop.permute.xlu0 %1120
  %1123 = vset.pattern.permute.xlu0 2
  %1124 = vperm.xlu0 %1123, %v71
  %v1125 = vpop.permute.xlu0 %1124
  %1127 = vset.pattern.permute.xlu0 2
  %1128 = vperm.xlu0 %1127, %v72
  %v1129 = vpop.permute.xlu0 %1128
  %1131 = vset.pattern.permute.xlu0 2
  %1132 = vperm.xlu0 %1131, %v73
  %v1133 = vpop.permute.xlu0 %1132
  %1135 = vset.pattern.permute.xlu0 2
  %1136 = vperm.xlu0 %1135, %v74
  %v1137 = vpop.permute.xlu0 %1136
  %1139 = vset.pattern.permute.xlu0 2
  %1140 = vperm.xlu0 %1139, %v75
  %v1141 = vpop.permute.xlu0 %1140
  %1143 = vset.pattern.permute.xlu0 2
  %1144 = vperm.xlu0 %1143, %v76
  %v1145 = vpop.permute.xlu0 %1144
  %1147 = vset.pattern.permute.xlu0 2
  %1148 = vperm.xlu0 %1147, %v77
  %v1149 = vpop.permute.xlu0 %1148
  %1151 = vset.pattern.permute.xlu0 2
  %1152 = vperm.xlu0 %1151, %v78
  %v1153 = vpop.permute.xlu0 %1152
  %1155 = vset.pattern.permute.xlu0 2
  %1156 = vperm.xlu0 %1155, %v79
  %v1157 = vpop.permute.xlu0 %1156
  %1159 = vset.pattern.permute.xlu0 2
  %1160 = vperm.xlu0 %1159, %v80
  %v1161 = vpop.permute.xlu0 %1160
  %v1163 = vperm.slane %v81, 2
  %v1164 = vmul.f32 %v913, %v1163
  %v1165 = vmul.f32 %v917, %v1163
  %v1166 = vmul.f32 %v921, %v1163
  %v1167 = vmul.f32 %v925, %v1163
  %v1168 = vmul.f32 %v929, %v1163
  %v1169 = vmul.f32 %v933, %v1163
  %v1170 = vmul.f32 %v937, %v1163
  %v1171 = vmul.f32 %v941, %v1163
  %v1172 = vmul.f32 %v945, %v1163
  %v1173 = vmul.f32 %v949, %v1163
  %v1174 = vmul.f32 %v953, %v1163
  %v1175 = vmul.f32 %v957, %v1163
  %v1176 = vmul.f32 %v961, %v1163
  %v1177 = vmul.f32 %v965, %v1163
  %v1178 = vmul.f32 %v969, %v1163
  %v1179 = vmul.f32 %v973, %v1163
  %v1180 = vmul.f32 %v977, %v1163
  %v1181 = vmul.f32 %v981, %v1163
  %v1182 = vmul.f32 %v985, %v1163
  %v1183 = vmul.f32 %v989, %v1163
  %v1184 = vmul.f32 %v993, %v1163
  %v1185 = vmul.f32 %v997, %v1163
  %v1186 = vmul.f32 %v1001, %v1163
  %v1187 = vmul.f32 %v1005, %v1163
  %v1188 = vmul.f32 %v1009, %v1163
  %v1189 = vmul.f32 %v1013, %v1163
  %v1190 = vmul.f32 %v1017, %v1163
  %v1191 = vmul.f32 %v1021, %v1163
  %v1192 = vmul.f32 %v1025, %v1163
  %v1193 = vmul.f32 %v1029, %v1163
  %v1194 = vmul.f32 %v1033, %v1163
  %v1195 = vmul.f32 %v1037, %v1163
  %v1196 = vmul.f32 %v1041, %v1163
  %v1197 = vmul.f32 %v1045, %v1163
  %v1198 = vmul.f32 %v1049, %v1163
  %v1199 = vmul.f32 %v1053, %v1163
  %v1200 = vmul.f32 %v1057, %v1163
  %v1201 = vmul.f32 %v1061, %v1163
  %v1202 = vmul.f32 %v1065, %v1163
  %v1203 = vmul.f32 %v1069, %v1163
  %v1204 = vmul.f32 %v1073, %v1163
  %v1205 = vmul.f32 %v1077, %v1163
  %v1206 = vmul.f32 %v1081, %v1163
  %v1207 = vmul.f32 %v1085, %v1163
  %v1208 = vmul.f32 %v1089, %v1163
  %v1209 = vmul.f32 %v1093, %v1163
  %v1210 = vmul.f32 %v1097, %v1163
  %v1211 = vmul.f32 %v1101, %v1163
  %v1212 = vmul.f32 %v1105, %v1163
  %v1213 = vmul.f32 %v1109, %v1163
  %v1214 = vmul.f32 %v1113, %v1163
  %v1215 = vmul.f32 %v1117, %v1163
  %v1216 = vmul.f32 %v1121, %v1163
  %v1217 = vmul.f32 %v1125, %v1163
  %v1218 = vmul.f32 %v1129, %v1163
  %v1219 = vmul.f32 %v1133, %v1163
  %v1220 = vmul.f32 %v1137, %v1163
  %v1221 = vmul.f32 %v1141, %v1163
  %v1222 = vmul.f32 %v1145, %v1163
  %v1223 = vmul.f32 %v1149, %v1163
  %v1224 = vmul.f32 %v1153, %v1163
  %v1225 = vmul.f32 %v1157, %v1163
  %v1226 = vmul.f32 %v1161, %v1163
  %v1227 = vadd.f32 %v848, %v1164
  %v1228 = vadd.f32 %v849, %v1165
  %v1229 = vadd.f32 %v850, %v1166
  %v1230 = vadd.f32 %v851, %v1167
  %v1231 = vadd.f32 %v852, %v1168
  %v1232 = vadd.f32 %v853, %v1169
  %v1233 = vadd.f32 %v854, %v1170
  %v1234 = vadd.f32 %v855, %v1171
  %v1235 = vadd.f32 %v856, %v1172
  %v1236 = vadd.f32 %v857, %v1173
  %v1237 = vadd.f32 %v858, %v1174
  %v1238 = vadd.f32 %v859, %v1175
  %v1239 = vadd.f32 %v860, %v1176
  %v1240 = vadd.f32 %v861, %v1177
  %v1241 = vadd.f32 %v862, %v1178
  %v1242 = vadd.f32 %v863, %v1179
  %v1243 = vadd.f32 %v864, %v1180
  %v1244 = vadd.f32 %v865, %v1181
  %v1245 = vadd.f32 %v866, %v1182
  %v1246 = vadd.f32 %v867, %v1183
  %v1247 = vadd.f32 %v868, %v1184
  %v1248 = vadd.f32 %v869, %v1185
  %v1249 = vadd.f32 %v870, %v1186
  %v1250 = vadd.f32 %v871, %v1187
  %v1251 = vadd.f32 %v872, %v1188
  %v1252 = vadd.f32 %v873, %v1189
  %v1253 = vadd.f32 %v874, %v1190
  %v1254 = vadd.f32 %v875, %v1191
  %v1255 = vadd.f32 %v876, %v1192
  %v1256 = vadd.f32 %v877, %v1193
  %v1257 = vadd.f32 %v878, %v1194
  %v1258 = vadd.f32 %v879, %v1195
  %v1259 = vadd.f32 %v880, %v1196
  %v1260 = vadd.f32 %v881, %v1197
  %v1261 = vadd.f32 %v882, %v1198
  %v1262 = vadd.f32 %v883, %v1199
  %v1263 = vadd.f32 %v884, %v1200
  %v1264 = vadd.f32 %v885, %v1201
  %v1265 = vadd.f32 %v886, %v1202
  %v1266 = vadd.f32 %v887, %v1203
  %v1267 = vadd.f32 %v888, %v1204
  %v1268 = vadd.f32 %v889, %v1205
  %v1269 = vadd.f32 %v890, %v1206
  %v1270 = vadd.f32 %v891, %v1207
  %v1271 = vadd.f32 %v892, %v1208
  %v1272 = vadd.f32 %v893, %v1209
  %v1273 = vadd.f32 %v894, %v1210
  %v1274 = vadd.f32 %v895, %v1211
  %v1275 = vadd.f32 %v896, %v1212
  %v1276 = vadd.f32 %v897, %v1213
  %v1277 = vadd.f32 %v898, %v1214
  %v1278 = vadd.f32 %v899, %v1215
  %v1279 = vadd.f32 %v900, %v1216
  %v1280 = vadd.f32 %v901, %v1217
  %v1281 = vadd.f32 %v902, %v1218
  %v1282 = vadd.f32 %v903, %v1219
  %v1283 = vadd.f32 %v904, %v1220
  %v1284 = vadd.f32 %v905, %v1221
  %v1285 = vadd.f32 %v906, %v1222
  %v1286 = vadd.f32 %v907, %v1223
  %v1287 = vadd.f32 %v908, %v1224
  %v1288 = vadd.f32 %v909, %v1225
  %v1289 = vadd.f32 %v910, %v1226
  %v1290 = vmax.f32 %v1227, 0.0
  %v1291 = vmax.f32 %v1228, 0.0
  %v1292 = vmax.f32 %v1229, 0.0
  %v1293 = vmax.f32 %v1230, 0.0
  %v1294 = vmax.f32 %v1231, 0.0
  %v1295 = vmax.f32 %v1232, 0.0
  %v1296 = vmax.f32 %v1233, 0.0
  %v1297 = vmax.f32 %v1234, 0.0
  %v1298 = vmax.f32 %v1235, 0.0
  %v1299 = vmax.f32 %v1236, 0.0
  %v1300 = vmax.f32 %v1237, 0.0
  %v1301 = vmax.f32 %v1238, 0.0
  %v1302 = vmax.f32 %v1239, 0.0
  %v1303 = vmax.f32 %v1240, 0.0
  %v1304 = vmax.f32 %v1241, 0.0
  %v1305 = vmax.f32 %v1242, 0.0
  %v1306 = vmax.f32 %v1243, 0.0
  %v1307 = vmax.f32 %v1244, 0.0
  %v1308 = vmax.f32 %v1245, 0.0
  %v1309 = vmax.f32 %v1246, 0.0
  %v1310 = vmax.f32 %v1247, 0.0
  %v1311 = vmax.f32 %v1248, 0.0
  %v1312 = vmax.f32 %v1249, 0.0
  %v1313 = vmax.f32 %v1250, 0.0
  %v1314 = vmax.f32 %v1251, 0.0
  %v1315 = vmax.f32 %v1252, 0.0
  %v1316 = vmax.f32 %v1253, 0.0
  %v1317 = vmax.f32 %v1254, 0.0
  %v1318 = vmax.f32 %v1255, 0.0
  %v1319 = vmax.f32 %v1256, 0.0
  %v1320 = vmax.f32 %v1257, 0.0
  %v1321 = vmax.f32 %v1258, 0.0
  %v1322 = vmax.f32 %v1259, 0.0
  %v1323 = vmax.f32 %v1260, 0.0
  %v1324 = vmax.f32 %v1261, 0.0
  %v1325 = vmax.f32 %v1262, 0.0
  %v1326 = vmax.f32 %v1263, 0.0
  %v1327 = vmax.f32 %v1264, 0.0
  %v1328 = vmax.f32 %v1265, 0.0
  %v1329 = vmax.f32 %v1266, 0.0
  %v1330 = vmax.f32 %v1267, 0.0
  %v1331 = vmax.f32 %v1268, 0.0
  %v1332 = vmax.f32 %v1269, 0.0
  %v1333 = vmax.f32 %v1270, 0.0
  %v1334 = vmax.f32 %v1271, 0.0
  %v1335 = vmax.f32 %v1272, 0.0
  %v1336 = vmax.f32 %v1273, 0.0
  %v1337 = vmax.f32 %v1274, 0.0
  %v1338 = vmax.f32 %v1275, 0.0
  %v1339 = vmax.f32 %v1276, 0.0
  %v1340 = vmax.f32 %v1277, 0.0
  %v1341 = vmax.f32 %v1278, 0.0
  %v1342 = vmax.f32 %v1279, 0.0
  %v1343 = vmax.f32 %v1280, 0.0
  %v1344 = vmax.f32 %v1281, 0.0
  %v1345 = vmax.f32 %v1282, 0.0
  %v1346 = vmax.f32 %v1283, 0.0
  %v1347 = vmax.f32 %v1284, 0.0
  %v1348 = vmax.f32 %v1285, 0.0
  %v1349 = vmax.f32 %v1286, 0.0
  %v1350 = vmax.f32 %v1287, 0.0
  %v1351 = vmax.f32 %v1288, 0.0
  %v1352 = vmax.f32 %v1289, 0.0
  %v1353 = vpack.c.bf16 %v1291, %v1290
  %v1354 = vpack.c.bf16 %v1293, %v1292
  %v1355 = vpack.c.bf16 %v1295, %v1294
  %v1356 = vpack.c.bf16 %v1297, %v1296
  %v1357 = vpack.c.bf16 %v1299, %v1298
  %v1358 = vpack.c.bf16 %v1301, %v1300
  %v1359 = vpack.c.bf16 %v1303, %v1302
  %v1360 = vpack.c.bf16 %v1305, %v1304
  %v1361 = vpack.c.bf16 %v1307, %v1306
  %v1362 = vpack.c.bf16 %v1309, %v1308
  %v1363 = vpack.c.bf16 %v1311, %v1310
  %v1364 = vpack.c.bf16 %v1313, %v1312
  %v1365 = vpack.c.bf16 %v1315, %v1314
  %v1366 = vpack.c.bf16 %v1317, %v1316
  %v1367 = vpack.c.bf16 %v1319, %v1318
  %v1368 = vpack.c.bf16 %v1321, %v1320
  %v1369 = vpack.c.bf16 %v1323, %v1322
  %v1370 = vpack.c.bf16 %v1325, %v1324
  %v1371 = vpack.c.bf16 %v1327, %v1326
  %v1372 = vpack.c.bf16 %v1329, %v1328
  %v1373 = vpack.c.bf16 %v1331, %v1330
  %v1374 = vpack.c.bf16 %v1333, %v1332
  %v1375 = vpack.c.bf16 %v1335, %v1334
  %v1376 = vpack.c.bf16 %v1337, %v1336
  %v1377 = vpack.c.bf16 %v1339, %v1338
  %v1378 = vpack.c.bf16 %v1341, %v1340
  %v1379 = vpack.c.bf16 %v1343, %v1342
  %v1380 = vpack.c.bf16 %v1345, %v1344
  %v1381 = vpack.c.bf16 %v1347, %v1346
  %v1382 = vpack.c.bf16 %v1349, %v1348
  %v1383 = vpack.c.bf16 %v1351, %v1350
  %v1384 = vpack.c.bf16 %v1352, %v1352
  %v1385 = vld [vmem:[%s1] sm:$0xf]
  %v1386 = vld [vmem:[%s1 + $0x4] sm:$0xf]
  %v1387 = vld [vmem:[%s1 + $0x8] sm:$0xf]
  %v1388 = vld [vmem:[%s1 + $0xc] sm:$0xf]
  %v1389 = vld [vmem:[%s1 + $0x10] sm:$0xf]
  %v1390 = vld [vmem:[%s1 + $0x14] sm:$0xf]
  %v1391 = vld [vmem:[%s1 + $0x18] sm:$0xf]
  %v1392 = vld [vmem:[%s1 + $0x1c] sm:$0xf]
  %v1393 = vld [vmem:[%s1 + $0x20] sm:$0xf]
  %v1394 = vld [vmem:[%s1 + $0x24] sm:$0xf]
  %v1395 = vld [vmem:[%s1 + $0x28] sm:$0xf]
  %v1396 = vld [vmem:[%s1 + $0x2c] sm:$0xf]
  %v1397 = vld [vmem:[%s1 + $0x30] sm:$0xf]
  %v1398 = vld [vmem:[%s1 + $0x34] sm:$0xf]
  %v1399 = vld [vmem:[%s1 + $0x38] sm:$0xf]
  %v1400 = vld [vmem:[%s1 + $0x3c] sm:$0xf]
  %v1401 = vperm.slane %v85, 1
  %v1418 = vunpack.c.l.b16 %v1385
  %v1419 = vunpack.c.l.b16 %v1386
  %v1420 = vunpack.c.l.b16 %v1387
  %v1421 = vunpack.c.l.b16 %v1388
  %v1422 = vunpack.c.l.b16 %v1389
  %v1423 = vunpack.c.l.b16 %v1390
  %v1424 = vunpack.c.l.b16 %v1391
  %v1425 = vunpack.c.l.b16 %v1392
  %v1426 = vunpack.c.l.b16 %v1393
  %v1427 = vunpack.c.l.b16 %v1394
  %v1428 = vunpack.c.l.b16 %v1395
  %v1429 = vunpack.c.l.b16 %v1396
  %v1430 = vunpack.c.l.b16 %v1397
  %v1431 = vunpack.c.l.b16 %v1398
  %v1432 = vunpack.c.l.b16 %v1399
  %v1433 = vunpack.c.l.b16 %v1400
  %v1434 = vpack.c.b16 %v1419, %v1418
  %v1435 = vpack.c.b16 %v1421, %v1420
  %v1436 = vpack.c.b16 %v1423, %v1422
  %v1437 = vpack.c.b16 %v1425, %v1424
  %v1438 = vpack.c.b16 %v1427, %v1426
  %v1439 = vpack.c.b16 %v1429, %v1428
  %v1440 = vpack.c.b16 %v1431, %v1430
  %v1441 = vpack.c.b16 %v1433, %v1432
  %1450 = vmatpush.bf16.msra.mxu0 %v1441
  %1451 = vmatpush.bf16.msra.mxu0 %v1440
  %1452 = vmatpush.bf16.msra.mxu0 %v1439
  %1453 = vmatpush.bf16.msra.mxu0 %v1438
  %1454 = vmatpush.bf16.msra.mxu0 %v1437
  %1455 = vmatpush.bf16.msra.mxu0 %v1436
  %1456 = vmatpush.bf16.msra.mxu0 %v1435
  %1457 = vmatpush.bf16.msra.mxu0 %v1434
  %1458 = vmatmul.bf16.gmra.mxu0 %v1353
  %v1459 = vpop.f32.mrf.mxu0
  %v1460 = vadd.f32 %v1401, %v1459
  %v1461 = vpop.f32.mrf.mxu0
  %v1462 = vadd.f32 %v1401, %v1461
  %1463 = vmatmul.bf16.gmra.mxu0 %v1354
  %v1464 = vpop.f32.mrf.mxu0
  %v1465 = vadd.f32 %v1401, %v1464
  %v1466 = vpop.f32.mrf.mxu0
  %v1467 = vadd.f32 %v1401, %v1466
  %1468 = vmatmul.bf16.gmra.mxu0 %v1355
  %v1469 = vpop.f32.mrf.mxu0
  %v1470 = vadd.f32 %v1401, %v1469
  %v1471 = vpop.f32.mrf.mxu0
  %v1472 = vadd.f32 %v1401, %v1471
  %1473 = vmatmul.bf16.gmra.mxu0 %v1356
  %v1474 = vpop.f32.mrf.mxu0
  %v1475 = vadd.f32 %v1401, %v1474
  %v1476 = vpop.f32.mrf.mxu0
  %v1477 = vadd.f32 %v1401, %v1476
  %1478 = vmatmul.bf16.gmra.mxu0 %v1357
  %v1479 = vpop.f32.mrf.mxu0
  %v1480 = vadd.f32 %v1401, %v1479
  %v1481 = vpop.f32.mrf.mxu0
  %v1482 = vadd.f32 %v1401, %v1481
  %1483 = vmatmul.bf16.gmra.mxu0 %v1358
  %v1484 = vpop.f32.mrf.mxu0
  %v1485 = vadd.f32 %v1401, %v1484
  %v1486 = vpop.f32.mrf.mxu0
  %v1487 = vadd.f32 %v1401, %v1486
  %1488 = vmatmul.bf16.gmra.mxu0 %v1359
  %v1489 = vpop.f32.mrf.mxu0
  %v1490 = vadd.f32 %v1401, %v1489
  %v1491 = vpop.f32.mrf.mxu0
  %v1492 = vadd.f32 %v1401, %v1491
  %1493 = vmatmul.bf16.gmra.mxu0 %v1360
  %v1494 = vpop.f32.mrf.mxu0
  %v1495 = vadd.f32 %v1401, %v1494
  %v1496 = vpop.f32.mrf.mxu0
  %v1497 = vadd.f32 %v1401, %v1496
  %1498 = vmatmul.bf16.gmra.mxu0 %v1361
  %v1499 = vpop.f32.mrf.mxu0
  %v1500 = vadd.f32 %v1401, %v1499
  %v1501 = vpop.f32.mrf.mxu0
  %v1502 = vadd.f32 %v1401, %v1501
  %1503 = vmatmul.bf16.gmra.mxu0 %v1362
  %v1504 = vpop.f32.mrf.mxu0
  %v1505 = vadd.f32 %v1401, %v1504
  %v1506 = vpop.f32.mrf.mxu0
  %v1507 = vadd.f32 %v1401, %v1506
  %1508 = vmatmul.bf16.gmra.mxu0 %v1363
  %v1509 = vpop.f32.mrf.mxu0
  %v1510 = vadd.f32 %v1401, %v1509
  %v1511 = vpop.f32.mrf.mxu0
  %v1512 = vadd.f32 %v1401, %v1511
  %1513 = vmatmul.bf16.gmra.mxu0 %v1364
  %v1514 = vpop.f32.mrf.mxu0
  %v1515 = vadd.f32 %v1401, %v1514
  %v1516 = vpop.f32.mrf.mxu0
  %v1517 = vadd.f32 %v1401, %v1516
  %1518 = vmatmul.bf16.gmra.mxu0 %v1365
  %v1519 = vpop.f32.mrf.mxu0
  %v1520 = vadd.f32 %v1401, %v1519
  %v1521 = vpop.f32.mrf.mxu0
  %v1522 = vadd.f32 %v1401, %v1521
  %1523 = vmatmul.bf16.gmra.mxu0 %v1366
  %v1524 = vpop.f32.mrf.mxu0
  %v1525 = vadd.f32 %v1401, %v1524
  %v1526 = vpop.f32.mrf.mxu0
  %v1527 = vadd.f32 %v1401, %v1526
  %1528 = vmatmul.bf16.gmra.mxu0 %v1367
  %v1529 = vpop.f32.mrf.mxu0
  %v1530 = vadd.f32 %v1401, %v1529
  %v1531 = vpop.f32.mrf.mxu0
  %v1532 = vadd.f32 %v1401, %v1531
  %1533 = vmatmul.bf16.gmra.mxu0 %v1368
  %v1534 = vpop.f32.mrf.mxu0
  %v1535 = vadd.f32 %v1401, %v1534
  %v1536 = vpop.f32.mrf.mxu0
  %v1537 = vadd.f32 %v1401, %v1536
  %1538 = vmatmul.bf16.gmra.mxu0 %v1369
  %v1539 = vpop.f32.mrf.mxu0
  %v1540 = vadd.f32 %v1401, %v1539
  %v1541 = vpop.f32.mrf.mxu0
  %v1542 = vadd.f32 %v1401, %v1541
  %1543 = vmatmul.bf16.gmra.mxu0 %v1370
  %v1544 = vpop.f32.mrf.mxu0
  %v1545 = vadd.f32 %v1401, %v1544
  %v1546 = vpop.f32.mrf.mxu0
  %v1547 = vadd.f32 %v1401, %v1546
  %1548 = vmatmul.bf16.gmra.mxu0 %v1371
  %v1549 = vpop.f32.mrf.mxu0
  %v1550 = vadd.f32 %v1401, %v1549
  %v1551 = vpop.f32.mrf.mxu0
  %v1552 = vadd.f32 %v1401, %v1551
  %1553 = vmatmul.bf16.gmra.mxu0 %v1372
  %v1554 = vpop.f32.mrf.mxu0
  %v1555 = vadd.f32 %v1401, %v1554
  %v1556 = vpop.f32.mrf.mxu0
  %v1557 = vadd.f32 %v1401, %v1556
  %1558 = vmatmul.bf16.gmra.mxu0 %v1373
  %v1559 = vpop.f32.mrf.mxu0
  %v1560 = vadd.f32 %v1401, %v1559
  %v1561 = vpop.f32.mrf.mxu0
  %v1562 = vadd.f32 %v1401, %v1561
  %1563 = vmatmul.bf16.gmra.mxu0 %v1374
  %v1564 = vpop.f32.mrf.mxu0
  %v1565 = vadd.f32 %v1401, %v1564
  %v1566 = vpop.f32.mrf.mxu0
  %v1567 = vadd.f32 %v1401, %v1566
  %1568 = vmatmul.bf16.gmra.mxu0 %v1375
  %v1569 = vpop.f32.mrf.mxu0
  %v1570 = vadd.f32 %v1401, %v1569
  %v1571 = vpop.f32.mrf.mxu0
  %v1572 = vadd.f32 %v1401, %v1571
  %1573 = vmatmul.bf16.gmra.mxu0 %v1376
  %v1574 = vpop.f32.mrf.mxu0
  %v1575 = vadd.f32 %v1401, %v1574
  %v1576 = vpop.f32.mrf.mxu0
  %v1577 = vadd.f32 %v1401, %v1576
  %1578 = vmatmul.bf16.gmra.mxu0 %v1377
  %v1579 = vpop.f32.mrf.mxu0
  %v1580 = vadd.f32 %v1401, %v1579
  %v1581 = vpop.f32.mrf.mxu0
  %v1582 = vadd.f32 %v1401, %v1581
  %1583 = vmatmul.bf16.gmra.mxu0 %v1378
  %v1584 = vpop.f32.mrf.mxu0
  %v1585 = vadd.f32 %v1401, %v1584
  %v1586 = vpop.f32.mrf.mxu0
  %v1587 = vadd.f32 %v1401, %v1586
  %1588 = vmatmul.bf16.gmra.mxu0 %v1379
  %v1589 = vpop.f32.mrf.mxu0
  %v1590 = vadd.f32 %v1401, %v1589
  %v1591 = vpop.f32.mrf.mxu0
  %v1592 = vadd.f32 %v1401, %v1591
  %1593 = vmatmul.bf16.gmra.mxu0 %v1380
  %v1594 = vpop.f32.mrf.mxu0
  %v1595 = vadd.f32 %v1401, %v1594
  %v1596 = vpop.f32.mrf.mxu0
  %v1597 = vadd.f32 %v1401, %v1596
  %1598 = vmatmul.bf16.gmra.mxu0 %v1381
  %v1599 = vpop.f32.mrf.mxu0
  %v1600 = vadd.f32 %v1401, %v1599
  %v1601 = vpop.f32.mrf.mxu0
  %v1602 = vadd.f32 %v1401, %v1601
  %1603 = vmatmul.bf16.gmra.mxu0 %v1382
  %v1604 = vpop.f32.mrf.mxu0
  %v1605 = vadd.f32 %v1401, %v1604
  %v1606 = vpop.f32.mrf.mxu0
  %v1607 = vadd.f32 %v1401, %v1606
  %1608 = vmatmul.bf16.gmra.mxu0 %v1383
  %v1609 = vpop.f32.mrf.mxu0
  %v1610 = vadd.f32 %v1401, %v1609
  %v1611 = vpop.f32.mrf.mxu0
  %v1612 = vadd.f32 %v1401, %v1611
  %1613 = vmatmul.bf16.gmra.mxu0 %v1384
  %v1614 = vpop.f32.mrf.mxu0
  %v1615 = vadd.f32 %v1401, %v1614
  %v1616 = vpop.f32.mrf.mxu0
  %1617 = vdwg.mxu0
  %v1618 = vmax.f32 %v1460, 0.0
  %v1619 = vmax.f32 %v1462, 0.0
  %v1620 = vmax.f32 %v1465, 0.0
  %v1621 = vmax.f32 %v1467, 0.0
  %v1622 = vmax.f32 %v1470, 0.0
  %v1623 = vmax.f32 %v1472, 0.0
  %v1624 = vmax.f32 %v1475, 0.0
  %v1625 = vmax.f32 %v1477, 0.0
  %v1626 = vmax.f32 %v1480, 0.0
  %v1627 = vmax.f32 %v1482, 0.0
  %v1628 = vmax.f32 %v1485, 0.0
  %v1629 = vmax.f32 %v1487, 0.0
  %v1630 = vmax.f32 %v1490, 0.0
  %v1631 = vmax.f32 %v1492, 0.0
  %v1632 = vmax.f32 %v1495, 0.0
  %v1633 = vmax.f32 %v1497, 0.0
  %v1634 = vmax.f32 %v1500, 0.0
  %v1635 = vmax.f32 %v1502, 0.0
  %v1636 = vmax.f32 %v1505, 0.0
  %v1637 = vmax.f32 %v1507, 0.0
  %v1638 = vmax.f32 %v1510, 0.0
  %v1639 = vmax.f32 %v1512, 0.0
  %v1640 = vmax.f32 %v1515, 0.0
  %v1641 = vmax.f32 %v1517, 0.0
  %v1642 = vmax.f32 %v1520, 0.0
  %v1643 = vmax.f32 %v1522, 0.0
  %v1644 = vmax.f32 %v1525, 0.0
  %v1645 = vmax.f32 %v1527, 0.0
  %v1646 = vmax.f32 %v1530, 0.0
  %v1647 = vmax.f32 %v1532, 0.0
  %v1648 = vmax.f32 %v1535, 0.0
  %v1649 = vmax.f32 %v1537, 0.0
  %v1650 = vmax.f32 %v1540, 0.0
  %v1651 = vmax.f32 %v1542, 0.0
  %v1652 = vmax.f32 %v1545, 0.0
  %v1653 = vmax.f32 %v1547, 0.0
  %v1654 = vmax.f32 %v1550, 0.0
  %v1655 = vmax.f32 %v1552, 0.0
  %v1656 = vmax.f32 %v1555, 0.0
  %v1657 = vmax.f32 %v1557, 0.0
  %v1658 = vmax.f32 %v1560, 0.0
  %v1659 = vmax.f32 %v1562, 0.0
  %v1660 = vmax.f32 %v1565, 0.0
  %v1661 = vmax.f32 %v1567, 0.0
  %v1662 = vmax.f32 %v1570, 0.0
  %v1663 = vmax.f32 %v1572, 0.0
  %v1664 = vmax.f32 %v1575, 0.0
  %v1665 = vmax.f32 %v1577, 0.0
  %v1666 = vmax.f32 %v1580, 0.0
  %v1667 = vmax.f32 %v1582, 0.0
  %v1668 = vmax.f32 %v1585, 0.0
  %v1669 = vmax.f32 %v1587, 0.0
  %v1670 = vmax.f32 %v1590, 0.0
  %v1671 = vmax.f32 %v1592, 0.0
  %v1672 = vmax.f32 %v1595, 0.0
  %v1673 = vmax.f32 %v1597, 0.0
  %v1674 = vmax.f32 %v1600, 0.0
  %v1675 = vmax.f32 %v1602, 0.0
  %v1676 = vmax.f32 %v1605, 0.0
  %v1677 = vmax.f32 %v1607, 0.0
  %v1678 = vmax.f32 %v1610, 0.0
  %v1679 = vmax.f32 %v1612, 0.0
  %v1680 = vmax.f32 %v1615, 0.0
  %v1681 = vpack.c.bf16 %v1619, %v1618
  %v1682 = vpack.c.bf16 %v1621, %v1620
  %v1683 = vpack.c.bf16 %v1623, %v1622
  %v1684 = vpack.c.bf16 %v1625, %v1624
  %v1685 = vpack.c.bf16 %v1627, %v1626
  %v1686 = vpack.c.bf16 %v1629, %v1628
  %v1687 = vpack.c.bf16 %v1631, %v1630
  %v1688 = vpack.c.bf16 %v1633, %v1632
  %v1689 = vpack.c.bf16 %v1635, %v1634
  %v1690 = vpack.c.bf16 %v1637, %v1636
  %v1691 = vpack.c.bf16 %v1639, %v1638
  %v1692 = vpack.c.bf16 %v1641, %v1640
  %v1693 = vpack.c.bf16 %v1643, %v1642
  %v1694 = vpack.c.bf16 %v1645, %v1644
  %v1695 = vpack.c.bf16 %v1647, %v1646
  %v1696 = vpack.c.bf16 %v1649, %v1648
  %v1697 = vpack.c.bf16 %v1651, %v1650
  %v1698 = vpack.c.bf16 %v1653, %v1652
  %v1699 = vpack.c.bf16 %v1655, %v1654
  %v1700 = vpack.c.bf16 %v1657, %v1656
  %v1701 = vpack.c.bf16 %v1659, %v1658
  %v1702 = vpack.c.bf16 %v1661, %v1660
  %v1703 = vpack.c.bf16 %v1663, %v1662
  %v1704 = vpack.c.bf16 %v1665, %v1664
  %v1705 = vpack.c.bf16 %v1667, %v1666
  %v1706 = vpack.c.bf16 %v1669, %v1668
  %v1707 = vpack.c.bf16 %v1671, %v1670
  %v1708 = vpack.c.bf16 %v1673, %v1672
  %v1709 = vpack.c.bf16 %v1675, %v1674
  %v1710 = vpack.c.bf16 %v1677, %v1676
  %v1711 = vpack.c.bf16 %v1679, %v1678
  %v1712 = vpack.c.bf16 %v1680, %v1680
  %s1713 = scalar_lea.vmem %s1, 64
  %v1714 = vld [vmem:[%s1713] sm:$0xf]
  %v1715 = vld [vmem:[%s1713 + $0x4] sm:$0xf]
  %v1716 = vld [vmem:[%s1713 + $0x8] sm:$0xf]
  %v1717 = vld [vmem:[%s1713 + $0xc] sm:$0xf]
  %v1718 = vld [vmem:[%s1713 + $0x10] sm:$0xf]
  %v1719 = vld [vmem:[%s1713 + $0x14] sm:$0xf]
  %v1720 = vld [vmem:[%s1713 + $0x18] sm:$0xf]
  %v1721 = vld [vmem:[%s1713 + $0x1c] sm:$0xf]
  %v1722 = vld [vmem:[%s1713 + $0x20] sm:$0xf]
  %v1723 = vld [vmem:[%s1713 + $0x24] sm:$0xf]
  %v1724 = vld [vmem:[%s1713 + $0x28] sm:$0xf]
  %v1725 = vld [vmem:[%s1713 + $0x2c] sm:$0xf]
  %v1726 = vld [vmem:[%s1713 + $0x30] sm:$0xf]
  %v1727 = vld [vmem:[%s1713 + $0x34] sm:$0xf]
  %v1728 = vld [vmem:[%s1713 + $0x38] sm:$0xf]
  %v1729 = vld [vmem:[%s1713 + $0x3c] sm:$0xf]
  %v1730 = vperm.slane %v85, 2
  %v1747 = vunpack.c.l.b16 %v1714
  %v1748 = vunpack.c.l.b16 %v1715
  %v1749 = vunpack.c.l.b16 %v1716
  %v1750 = vunpack.c.l.b16 %v1717
  %v1751 = vunpack.c.l.b16 %v1718
  %v1752 = vunpack.c.l.b16 %v1719
  %v1753 = vunpack.c.l.b16 %v1720
  %v1754 = vunpack.c.l.b16 %v1721
  %v1755 = vunpack.c.l.b16 %v1722
  %v1756 = vunpack.c.l.b16 %v1723
  %v1757 = vunpack.c.l.b16 %v1724
  %v1758 = vunpack.c.l.b16 %v1725
  %v1759 = vunpack.c.l.b16 %v1726
  %v1760 = vunpack.c.l.b16 %v1727
  %v1761 = vunpack.c.l.b16 %v1728
  %v1762 = vunpack.c.l.b16 %v1729
  %v1763 = vpack.c.b16 %v1748, %v1747
  %v1764 = vpack.c.b16 %v1750, %v1749
  %v1765 = vpack.c.b16 %v1752, %v1751
  %v1766 = vpack.c.b16 %v1754, %v1753
  %v1767 = vpack.c.b16 %v1756, %v1755
  %v1768 = vpack.c.b16 %v1758, %v1757
  %v1769 = vpack.c.b16 %v1760, %v1759
  %v1770 = vpack.c.b16 %v1762, %v1761
  %1779 = vmatpush.bf16.msra.mxu0 %v1770
  %1780 = vmatpush.bf16.msra.mxu0 %v1769
  %1781 = vmatpush.bf16.msra.mxu0 %v1768
  %1782 = vmatpush.bf16.msra.mxu0 %v1767
  %1783 = vmatpush.bf16.msra.mxu0 %v1766
  %1784 = vmatpush.bf16.msra.mxu0 %v1765
  %1785 = vmatpush.bf16.msra.mxu0 %v1764
  %1786 = vmatpush.bf16.msra.mxu0 %v1763
  %1787 = vmatmul.bf16.gmra.mxu0 %v1681
  %v1788 = vpop.f32.mrf.mxu0
  %v1789 = vadd.f32 %v1730, %v1788
  %v1790 = vpop.f32.mrf.mxu0
  %v1791 = vadd.f32 %v1730, %v1790
  %1792 = vmatmul.bf16.gmra.mxu0 %v1682
  %v1793 = vpop.f32.mrf.mxu0
  %v1794 = vadd.f32 %v1730, %v1793
  %v1795 = vpop.f32.mrf.mxu0
  %v1796 = vadd.f32 %v1730, %v1795
  %1797 = vmatmul.bf16.gmra.mxu0 %v1683
  %v1798 = vpop.f32.mrf.mxu0
  %v1799 = vadd.f32 %v1730, %v1798
  %v1800 = vpop.f32.mrf.mxu0
  %v1801 = vadd.f32 %v1730, %v1800
  %1802 = vmatmul.bf16.gmra.mxu0 %v1684
  %v1803 = vpop.f32.mrf.mxu0
  %v1804 = vadd.f32 %v1730, %v1803
  %v1805 = vpop.f32.mrf.mxu0
  %v1806 = vadd.f32 %v1730, %v1805
  %1807 = vmatmul.bf16.gmra.mxu0 %v1685
  %v1808 = vpop.f32.mrf.mxu0
  %v1809 = vadd.f32 %v1730, %v1808
  %v1810 = vpop.f32.mrf.mxu0
  %v1811 = vadd.f32 %v1730, %v1810
  %1812 = vmatmul.bf16.gmra.mxu0 %v1686
  %v1813 = vpop.f32.mrf.mxu0
  %v1814 = vadd.f32 %v1730, %v1813
  %v1815 = vpop.f32.mrf.mxu0
  %v1816 = vadd.f32 %v1730, %v1815
  %1817 = vmatmul.bf16.gmra.mxu0 %v1687
  %v1818 = vpop.f32.mrf.mxu0
  %v1819 = vadd.f32 %v1730, %v1818
  %v1820 = vpop.f32.mrf.mxu0
  %v1821 = vadd.f32 %v1730, %v1820
  %1822 = vmatmul.bf16.gmra.mxu0 %v1688
  %v1823 = vpop.f32.mrf.mxu0
  %v1824 = vadd.f32 %v1730, %v1823
  %v1825 = vpop.f32.mrf.mxu0
  %v1826 = vadd.f32 %v1730, %v1825
  %1827 = vmatmul.bf16.gmra.mxu0 %v1689
  %v1828 = vpop.f32.mrf.mxu0
  %v1829 = vadd.f32 %v1730, %v1828
  %v1830 = vpop.f32.mrf.mxu0
  %v1831 = vadd.f32 %v1730, %v1830
  %1832 = vmatmul.bf16.gmra.mxu0 %v1690
  %v1833 = vpop.f32.mrf.mxu0
  %v1834 = vadd.f32 %v1730, %v1833
  %v1835 = vpop.f32.mrf.mxu0
  %v1836 = vadd.f32 %v1730, %v1835
  %1837 = vmatmul.bf16.gmra.mxu0 %v1691
  %v1838 = vpop.f32.mrf.mxu0
  %v1839 = vadd.f32 %v1730, %v1838
  %v1840 = vpop.f32.mrf.mxu0
  %v1841 = vadd.f32 %v1730, %v1840
  %1842 = vmatmul.bf16.gmra.mxu0 %v1692
  %v1843 = vpop.f32.mrf.mxu0
  %v1844 = vadd.f32 %v1730, %v1843
  %v1845 = vpop.f32.mrf.mxu0
  %v1846 = vadd.f32 %v1730, %v1845
  %1847 = vmatmul.bf16.gmra.mxu0 %v1693
  %v1848 = vpop.f32.mrf.mxu0
  %v1849 = vadd.f32 %v1730, %v1848
  %v1850 = vpop.f32.mrf.mxu0
  %v1851 = vadd.f32 %v1730, %v1850
  %1852 = vmatmul.bf16.gmra.mxu0 %v1694
  %v1853 = vpop.f32.mrf.mxu0
  %v1854 = vadd.f32 %v1730, %v1853
  %v1855 = vpop.f32.mrf.mxu0
  %v1856 = vadd.f32 %v1730, %v1855
  %1857 = vmatmul.bf16.gmra.mxu0 %v1695
  %v1858 = vpop.f32.mrf.mxu0
  %v1859 = vadd.f32 %v1730, %v1858
  %v1860 = vpop.f32.mrf.mxu0
  %v1861 = vadd.f32 %v1730, %v1860
  %1862 = vmatmul.bf16.gmra.mxu0 %v1696
  %v1863 = vpop.f32.mrf.mxu0
  %v1864 = vadd.f32 %v1730, %v1863
  %v1865 = vpop.f32.mrf.mxu0
  %v1866 = vadd.f32 %v1730, %v1865
  %1867 = vmatmul.bf16.gmra.mxu0 %v1697
  %v1868 = vpop.f32.mrf.mxu0
  %v1869 = vadd.f32 %v1730, %v1868
  %v1870 = vpop.f32.mrf.mxu0
  %v1871 = vadd.f32 %v1730, %v1870
  %1872 = vmatmul.bf16.gmra.mxu0 %v1698
  %v1873 = vpop.f32.mrf.mxu0
  %v1874 = vadd.f32 %v1730, %v1873
  %v1875 = vpop.f32.mrf.mxu0
  %v1876 = vadd.f32 %v1730, %v1875
  %1877 = vmatmul.bf16.gmra.mxu0 %v1699
  %v1878 = vpop.f32.mrf.mxu0
  %v1879 = vadd.f32 %v1730, %v1878
  %v1880 = vpop.f32.mrf.mxu0
  %v1881 = vadd.f32 %v1730, %v1880
  %1882 = vmatmul.bf16.gmra.mxu0 %v1700
  %v1883 = vpop.f32.mrf.mxu0
  %v1884 = vadd.f32 %v1730, %v1883
  %v1885 = vpop.f32.mrf.mxu0
  %v1886 = vadd.f32 %v1730, %v1885
  %1887 = vmatmul.bf16.gmra.mxu0 %v1701
  %v1888 = vpop.f32.mrf.mxu0
  %v1889 = vadd.f32 %v1730, %v1888
  %v1890 = vpop.f32.mrf.mxu0
  %v1891 = vadd.f32 %v1730, %v1890
  %1892 = vmatmul.bf16.gmra.mxu0 %v1702
  %v1893 = vpop.f32.mrf.mxu0
  %v1894 = vadd.f32 %v1730, %v1893
  %v1895 = vpop.f32.mrf.mxu0
  %v1896 = vadd.f32 %v1730, %v1895
  %1897 = vmatmul.bf16.gmra.mxu0 %v1703
  %v1898 = vpop.f32.mrf.mxu0
  %v1899 = vadd.f32 %v1730, %v1898
  %v1900 = vpop.f32.mrf.mxu0
  %v1901 = vadd.f32 %v1730, %v1900
  %1902 = vmatmul.bf16.gmra.mxu0 %v1704
  %v1903 = vpop.f32.mrf.mxu0
  %v1904 = vadd.f32 %v1730, %v1903
  %v1905 = vpop.f32.mrf.mxu0
  %v1906 = vadd.f32 %v1730, %v1905
  %1907 = vmatmul.bf16.gmra.mxu0 %v1705
  %v1908 = vpop.f32.mrf.mxu0
  %v1909 = vadd.f32 %v1730, %v1908
  %v1910 = vpop.f32.mrf.mxu0
  %v1911 = vadd.f32 %v1730, %v1910
  %1912 = vmatmul.bf16.gmra.mxu0 %v1706
  %v1913 = vpop.f32.mrf.mxu0
  %v1914 = vadd.f32 %v1730, %v1913
  %v1915 = vpop.f32.mrf.mxu0
  %v1916 = vadd.f32 %v1730, %v1915
  %1917 = vmatmul.bf16.gmra.mxu0 %v1707
  %v1918 = vpop.f32.mrf.mxu0
  %v1919 = vadd.f32 %v1730, %v1918
  %v1920 = vpop.f32.mrf.mxu0
  %v1921 = vadd.f32 %v1730, %v1920
  %1922 = vmatmul.bf16.gmra.mxu0 %v1708
  %v1923 = vpop.f32.mrf.mxu0
  %v1924 = vadd.f32 %v1730, %v1923
  %v1925 = vpop.f32.mrf.mxu0
  %v1926 = vadd.f32 %v1730, %v1925
  %1927 = vmatmul.bf16.gmra.mxu0 %v1709
  %v1928 = vpop.f32.mrf.mxu0
  %v1929 = vadd.f32 %v1730, %v1928
  %v1930 = vpop.f32.mrf.mxu0
  %v1931 = vadd.f32 %v1730, %v1930
  %1932 = vmatmul.bf16.gmra.mxu0 %v1710
  %v1933 = vpop.f32.mrf.mxu0
  %v1934 = vadd.f32 %v1730, %v1933
  %v1935 = vpop.f32.mrf.mxu0
  %v1936 = vadd.f32 %v1730, %v1935
  %1937 = vmatmul.bf16.gmra.mxu0 %v1711
  %v1938 = vpop.f32.mrf.mxu0
  %v1939 = vadd.f32 %v1730, %v1938
  %v1940 = vpop.f32.mrf.mxu0
  %v1941 = vadd.f32 %v1730, %v1940
  %1942 = vmatmul.bf16.gmra.mxu0 %v1712
  %v1943 = vpop.f32.mrf.mxu0
  %v1944 = vadd.f32 %v1730, %v1943
  %v1945 = vpop.f32.mrf.mxu0
  %1946 = vdwg.mxu0
  %v1947 = vmax.f32 %v1789, 0.0
  %v1948 = vmax.f32 %v1791, 0.0
  %v1949 = vmax.f32 %v1794, 0.0
  %v1950 = vmax.f32 %v1796, 0.0
  %v1951 = vmax.f32 %v1799, 0.0
  %v1952 = vmax.f32 %v1801, 0.0
  %v1953 = vmax.f32 %v1804, 0.0
  %v1954 = vmax.f32 %v1806, 0.0
  %v1955 = vmax.f32 %v1809, 0.0
  %v1956 = vmax.f32 %v1811, 0.0
  %v1957 = vmax.f32 %v1814, 0.0
  %v1958 = vmax.f32 %v1816, 0.0
  %v1959 = vmax.f32 %v1819, 0.0
  %v1960 = vmax.f32 %v1821, 0.0
  %v1961 = vmax.f32 %v1824, 0.0
  %v1962 = vmax.f32 %v1826, 0.0
  %v1963 = vmax.f32 %v1829, 0.0
  %v1964 = vmax.f32 %v1831, 0.0
  %v1965 = vmax.f32 %v1834, 0.0
  %v1966 = vmax.f32 %v1836, 0.0
  %v1967 = vmax.f32 %v1839, 0.0
  %v1968 = vmax.f32 %v1841, 0.0
  %v1969 = vmax.f32 %v1844, 0.0
  %v1970 = vmax.f32 %v1846, 0.0
  %v1971 = vmax.f32 %v1849, 0.0
  %v1972 = vmax.f32 %v1851, 0.0
  %v1973 = vmax.f32 %v1854, 0.0
  %v1974 = vmax.f32 %v1856, 0.0
  %v1975 = vmax.f32 %v1859, 0.0
  %v1976 = vmax.f32 %v1861, 0.0
  %v1977 = vmax.f32 %v1864, 0.0
  %v1978 = vmax.f32 %v1866, 0.0
  %v1979 = vmax.f32 %v1869, 0.0
  %v1980 = vmax.f32 %v1871, 0.0
  %v1981 = vmax.f32 %v1874, 0.0
  %v1982 = vmax.f32 %v1876, 0.0
  %v1983 = vmax.f32 %v1879, 0.0
  %v1984 = vmax.f32 %v1881, 0.0
  %v1985 = vmax.f32 %v1884, 0.0
  %v1986 = vmax.f32 %v1886, 0.0
  %v1987 = vmax.f32 %v1889, 0.0
  %v1988 = vmax.f32 %v1891, 0.0
  %v1989 = vmax.f32 %v1894, 0.0
  %v1990 = vmax.f32 %v1896, 0.0
  %v1991 = vmax.f32 %v1899, 0.0
  %v1992 = vmax.f32 %v1901, 0.0
  %v1993 = vmax.f32 %v1904, 0.0
  %v1994 = vmax.f32 %v1906, 0.0
  %v1995 = vmax.f32 %v1909, 0.0
  %v1996 = vmax.f32 %v1911, 0.0
  %v1997 = vmax.f32 %v1914, 0.0
  %v1998 = vmax.f32 %v1916, 0.0
  %v1999 = vmax.f32 %v1919, 0.0
  %v2000 = vmax.f32 %v1921, 0.0
  %v2001 = vmax.f32 %v1924, 0.0
  %v2002 = vmax.f32 %v1926, 0.0
  %v2003 = vmax.f32 %v1929, 0.0
  %v2004 = vmax.f32 %v1931, 0.0
  %v2005 = vmax.f32 %v1934, 0.0
  %v2006 = vmax.f32 %v1936, 0.0
  %v2007 = vmax.f32 %v1939, 0.0
  %v2008 = vmax.f32 %v1941, 0.0
  %v2009 = vmax.f32 %v1944, 0.0
  %v2010 = vpack.c.bf16 %v1948, %v1947
  %v2011 = vpack.c.bf16 %v1950, %v1949
  %v2012 = vpack.c.bf16 %v1952, %v1951
  %v2013 = vpack.c.bf16 %v1954, %v1953
  %v2014 = vpack.c.bf16 %v1956, %v1955
  %v2015 = vpack.c.bf16 %v1958, %v1957
  %v2016 = vpack.c.bf16 %v1960, %v1959
  %v2017 = vpack.c.bf16 %v1962, %v1961
  %v2018 = vpack.c.bf16 %v1964, %v1963
  %v2019 = vpack.c.bf16 %v1966, %v1965
  %v2020 = vpack.c.bf16 %v1968, %v1967
  %v2021 = vpack.c.bf16 %v1970, %v1969
  %v2022 = vpack.c.bf16 %v1972, %v1971
  %v2023 = vpack.c.bf16 %v1974, %v1973
  %v2024 = vpack.c.bf16 %v1976, %v1975
  %v2025 = vpack.c.bf16 %v1978, %v1977
  %v2026 = vpack.c.bf16 %v1980, %v1979
  %v2027 = vpack.c.bf16 %v1982, %v1981
  %v2028 = vpack.c.bf16 %v1984, %v1983
  %v2029 = vpack.c.bf16 %v1986, %v1985
  %v2030 = vpack.c.bf16 %v1988, %v1987
  %v2031 = vpack.c.bf16 %v1990, %v1989
  %v2032 = vpack.c.bf16 %v1992, %v1991
  %v2033 = vpack.c.bf16 %v1994, %v1993
  %v2034 = vpack.c.bf16 %v1996, %v1995
  %v2035 = vpack.c.bf16 %v1998, %v1997
  %v2036 = vpack.c.bf16 %v2000, %v1999
  %v2037 = vpack.c.bf16 %v2002, %v2001
  %v2038 = vpack.c.bf16 %v2004, %v2003
  %v2039 = vpack.c.bf16 %v2006, %v2005
  %v2040 = vpack.c.bf16 %v2008, %v2007
  %v2041 = vpack.c.bf16 %v2009, %v2009
  %s2042 = scalar_lea.vmem %s1, 128
  %v2043 = vld [vmem:[%s2042] sm:$0xf]
  %v2044 = vld [vmem:[%s2042 + $0x4] sm:$0xf]
  %v2045 = vld [vmem:[%s2042 + $0x8] sm:$0xf]
  %v2046 = vld [vmem:[%s2042 + $0xc] sm:$0xf]
  %v2047 = vld [vmem:[%s2042 + $0x10] sm:$0xf]
  %v2048 = vld [vmem:[%s2042 + $0x14] sm:$0xf]
  %v2049 = vld [vmem:[%s2042 + $0x18] sm:$0xf]
  %v2050 = vld [vmem:[%s2042 + $0x1c] sm:$0xf]
  %v2051 = vld [vmem:[%s2042 + $0x20] sm:$0xf]
  %v2052 = vld [vmem:[%s2042 + $0x24] sm:$0xf]
  %v2053 = vld [vmem:[%s2042 + $0x28] sm:$0xf]
  %v2054 = vld [vmem:[%s2042 + $0x2c] sm:$0xf]
  %v2055 = vld [vmem:[%s2042 + $0x30] sm:$0xf]
  %v2056 = vld [vmem:[%s2042 + $0x34] sm:$0xf]
  %v2057 = vld [vmem:[%s2042 + $0x38] sm:$0xf]
  %v2058 = vld [vmem:[%s2042 + $0x3c] sm:$0xf]
  %v2059 = vperm.slane %v85, 3
  %v2076 = vunpack.c.l.b16 %v2043
  %v2077 = vunpack.c.l.b16 %v2044
  %v2078 = vunpack.c.l.b16 %v2045
  %v2079 = vunpack.c.l.b16 %v2046
  %v2080 = vunpack.c.l.b16 %v2047
  %v2081 = vunpack.c.l.b16 %v2048
  %v2082 = vunpack.c.l.b16 %v2049
  %v2083 = vunpack.c.l.b16 %v2050
  %v2084 = vunpack.c.l.b16 %v2051
  %v2085 = vunpack.c.l.b16 %v2052
  %v2086 = vunpack.c.l.b16 %v2053
  %v2087 = vunpack.c.l.b16 %v2054
  %v2088 = vunpack.c.l.b16 %v2055
  %v2089 = vunpack.c.l.b16 %v2056
  %v2090 = vunpack.c.l.b16 %v2057
  %v2091 = vunpack.c.l.b16 %v2058
  %v2092 = vpack.c.b16 %v2077, %v2076
  %v2093 = vpack.c.b16 %v2079, %v2078
  %v2094 = vpack.c.b16 %v2081, %v2080
  %v2095 = vpack.c.b16 %v2083, %v2082
  %v2096 = vpack.c.b16 %v2085, %v2084
  %v2097 = vpack.c.b16 %v2087, %v2086
  %v2098 = vpack.c.b16 %v2089, %v2088
  %v2099 = vpack.c.b16 %v2091, %v2090
  %2108 = vmatpush.bf16.msra.mxu0 %v2099
  %2109 = vmatpush.bf16.msra.mxu0 %v2098
  %2110 = vmatpush.bf16.msra.mxu0 %v2097
  %2111 = vmatpush.bf16.msra.mxu0 %v2096
  %2112 = vmatpush.bf16.msra.mxu0 %v2095
  %2113 = vmatpush.bf16.msra.mxu0 %v2094
  %2114 = vmatpush.bf16.msra.mxu0 %v2093
  %2115 = vmatpush.bf16.msra.mxu0 %v2092
  %2116 = vmatmul.bf16.gmra.mxu0 %v2010
  %v2117 = vpop.f32.mrf.mxu0
  %v2118 = vadd.f32 %v2059, %v2117
  %v2119 = vpop.f32.mrf.mxu0
  %v2120 = vadd.f32 %v2059, %v2119
  %2121 = vmatmul.bf16.gmra.mxu0 %v2011
  %v2122 = vpop.f32.mrf.mxu0
  %v2123 = vadd.f32 %v2059, %v2122
  %v2124 = vpop.f32.mrf.mxu0
  %v2125 = vadd.f32 %v2059, %v2124
  %2126 = vmatmul.bf16.gmra.mxu0 %v2012
  %v2127 = vpop.f32.mrf.mxu0
  %v2128 = vadd.f32 %v2059, %v2127
  %v2129 = vpop.f32.mrf.mxu0
  %v2130 = vadd.f32 %v2059, %v2129
  %2131 = vmatmul.bf16.gmra.mxu0 %v2013
  %v2132 = vpop.f32.mrf.mxu0
  %v2133 = vadd.f32 %v2059, %v2132
  %v2134 = vpop.f32.mrf.mxu0
  %v2135 = vadd.f32 %v2059, %v2134
  %2136 = vmatmul.bf16.gmra.mxu0 %v2014
  %v2137 = vpop.f32.mrf.mxu0
  %v2138 = vadd.f32 %v2059, %v2137
  %v2139 = vpop.f32.mrf.mxu0
  %v2140 = vadd.f32 %v2059, %v2139
  %2141 = vmatmul.bf16.gmra.mxu0 %v2015
  %v2142 = vpop.f32.mrf.mxu0
  %v2143 = vadd.f32 %v2059, %v2142
  %v2144 = vpop.f32.mrf.mxu0
  %v2145 = vadd.f32 %v2059, %v2144
  %2146 = vmatmul.bf16.gmra.mxu0 %v2016
  %v2147 = vpop.f32.mrf.mxu0
  %v2148 = vadd.f32 %v2059, %v2147
  %v2149 = vpop.f32.mrf.mxu0
  %v2150 = vadd.f32 %v2059, %v2149
  %2151 = vmatmul.bf16.gmra.mxu0 %v2017
  %v2152 = vpop.f32.mrf.mxu0
  %v2153 = vadd.f32 %v2059, %v2152
  %v2154 = vpop.f32.mrf.mxu0
  %v2155 = vadd.f32 %v2059, %v2154
  %2156 = vmatmul.bf16.gmra.mxu0 %v2018
  %v2157 = vpop.f32.mrf.mxu0
  %v2158 = vadd.f32 %v2059, %v2157
  %v2159 = vpop.f32.mrf.mxu0
  %v2160 = vadd.f32 %v2059, %v2159
  %2161 = vmatmul.bf16.gmra.mxu0 %v2019
  %v2162 = vpop.f32.mrf.mxu0
  %v2163 = vadd.f32 %v2059, %v2162
  %v2164 = vpop.f32.mrf.mxu0
  %v2165 = vadd.f32 %v2059, %v2164
  %2166 = vmatmul.bf16.gmra.mxu0 %v2020
  %v2167 = vpop.f32.mrf.mxu0
  %v2168 = vadd.f32 %v2059, %v2167
  %v2169 = vpop.f32.mrf.mxu0
  %v2170 = vadd.f32 %v2059, %v2169
  %2171 = vmatmul.bf16.gmra.mxu0 %v2021
  %v2172 = vpop.f32.mrf.mxu0
  %v2173 = vadd.f32 %v2059, %v2172
  %v2174 = vpop.f32.mrf.mxu0
  %v2175 = vadd.f32 %v2059, %v2174
  %2176 = vmatmul.bf16.gmra.mxu0 %v2022
  %v2177 = vpop.f32.mrf.mxu0
  %v2178 = vadd.f32 %v2059, %v2177
  %v2179 = vpop.f32.mrf.mxu0
  %v2180 = vadd.f32 %v2059, %v2179
  %2181 = vmatmul.bf16.gmra.mxu0 %v2023
  %v2182 = vpop.f32.mrf.mxu0
  %v2183 = vadd.f32 %v2059, %v2182
  %v2184 = vpop.f32.mrf.mxu0
  %v2185 = vadd.f32 %v2059, %v2184
  %2186 = vmatmul.bf16.gmra.mxu0 %v2024
  %v2187 = vpop.f32.mrf.mxu0
  %v2188 = vadd.f32 %v2059, %v2187
  %v2189 = vpop.f32.mrf.mxu0
  %v2190 = vadd.f32 %v2059, %v2189
  %2191 = vmatmul.bf16.gmra.mxu0 %v2025
  %v2192 = vpop.f32.mrf.mxu0
  %v2193 = vadd.f32 %v2059, %v2192
  %v2194 = vpop.f32.mrf.mxu0
  %v2195 = vadd.f32 %v2059, %v2194
  %2196 = vmatmul.bf16.gmra.mxu0 %v2026
  %v2197 = vpop.f32.mrf.mxu0
  %v2198 = vadd.f32 %v2059, %v2197
  %v2199 = vpop.f32.mrf.mxu0
  %v2200 = vadd.f32 %v2059, %v2199
  %2201 = vmatmul.bf16.gmra.mxu0 %v2027
  %v2202 = vpop.f32.mrf.mxu0
  %v2203 = vadd.f32 %v2059, %v2202
  %v2204 = vpop.f32.mrf.mxu0
  %v2205 = vadd.f32 %v2059, %v2204
  %2206 = vmatmul.bf16.gmra.mxu0 %v2028
  %v2207 = vpop.f32.mrf.mxu0
  %v2208 = vadd.f32 %v2059, %v2207
  %v2209 = vpop.f32.mrf.mxu0
  %v2210 = vadd.f32 %v2059, %v2209
  %2211 = vmatmul.bf16.gmra.mxu0 %v2029
  %v2212 = vpop.f32.mrf.mxu0
  %v2213 = vadd.f32 %v2059, %v2212
  %v2214 = vpop.f32.mrf.mxu0
  %v2215 = vadd.f32 %v2059, %v2214
  %2216 = vmatmul.bf16.gmra.mxu0 %v2030
  %v2217 = vpop.f32.mrf.mxu0
  %v2218 = vadd.f32 %v2059, %v2217
  %v2219 = vpop.f32.mrf.mxu0
  %v2220 = vadd.f32 %v2059, %v2219
  %2221 = vmatmul.bf16.gmra.mxu0 %v2031
  %v2222 = vpop.f32.mrf.mxu0
  %v2223 = vadd.f32 %v2059, %v2222
  %v2224 = vpop.f32.mrf.mxu0
  %v2225 = vadd.f32 %v2059, %v2224
  %2226 = vmatmul.bf16.gmra.mxu0 %v2032
  %v2227 = vpop.f32.mrf.mxu0
  %v2228 = vadd.f32 %v2059, %v2227
  %v2229 = vpop.f32.mrf.mxu0
  %v2230 = vadd.f32 %v2059, %v2229
  %2231 = vmatmul.bf16.gmra.mxu0 %v2033
  %v2232 = vpop.f32.mrf.mxu0
  %v2233 = vadd.f32 %v2059, %v2232
  %v2234 = vpop.f32.mrf.mxu0
  %v2235 = vadd.f32 %v2059, %v2234
  %2236 = vmatmul.bf16.gmra.mxu0 %v2034
  %v2237 = vpop.f32.mrf.mxu0
  %v2238 = vadd.f32 %v2059, %v2237
  %v2239 = vpop.f32.mrf.mxu0
  %v2240 = vadd.f32 %v2059, %v2239
  %2241 = vmatmul.bf16.gmra.mxu0 %v2035
  %v2242 = vpop.f32.mrf.mxu0
  %v2243 = vadd.f32 %v2059, %v2242
  %v2244 = vpop.f32.mrf.mxu0
  %v2245 = vadd.f32 %v2059, %v2244
  %2246 = vmatmul.bf16.gmra.mxu0 %v2036
  %v2247 = vpop.f32.mrf.mxu0
  %v2248 = vadd.f32 %v2059, %v2247
  %v2249 = vpop.f32.mrf.mxu0
  %v2250 = vadd.f32 %v2059, %v2249
  %2251 = vmatmul.bf16.gmra.mxu0 %v2037
  %v2252 = vpop.f32.mrf.mxu0
  %v2253 = vadd.f32 %v2059, %v2252
  %v2254 = vpop.f32.mrf.mxu0
  %v2255 = vadd.f32 %v2059, %v2254
  %2256 = vmatmul.bf16.gmra.mxu0 %v2038
  %v2257 = vpop.f32.mrf.mxu0
  %v2258 = vadd.f32 %v2059, %v2257
  %v2259 = vpop.f32.mrf.mxu0
  %v2260 = vadd.f32 %v2059, %v2259
  %2261 = vmatmul.bf16.gmra.mxu0 %v2039
  %v2262 = vpop.f32.mrf.mxu0
  %v2263 = vadd.f32 %v2059, %v2262
  %v2264 = vpop.f32.mrf.mxu0
  %v2265 = vadd.f32 %v2059, %v2264
  %2266 = vmatmul.bf16.gmra.mxu0 %v2040
  %v2267 = vpop.f32.mrf.mxu0
  %v2268 = vadd.f32 %v2059, %v2267
  %v2269 = vpop.f32.mrf.mxu0
  %v2270 = vadd.f32 %v2059, %v2269
  %2271 = vmatmul.bf16.gmra.mxu0 %v2041
  %v2272 = vpop.f32.mrf.mxu0
  %v2273 = vadd.f32 %v2059, %v2272
  %v2274 = vpop.f32.mrf.mxu0
  %2275 = vdwg.mxu0
  %v2276 = vmax.f32 %v2118, 0.0
  %v2277 = vmax.f32 %v2120, 0.0
  %v2278 = vmax.f32 %v2123, 0.0
  %v2279 = vmax.f32 %v2125, 0.0
  %v2280 = vmax.f32 %v2128, 0.0
  %v2281 = vmax.f32 %v2130, 0.0
  %v2282 = vmax.f32 %v2133, 0.0
  %v2283 = vmax.f32 %v2135, 0.0
  %v2284 = vmax.f32 %v2138, 0.0
  %v2285 = vmax.f32 %v2140, 0.0
  %v2286 = vmax.f32 %v2143, 0.0
  %v2287 = vmax.f32 %v2145, 0.0
  %v2288 = vmax.f32 %v2148, 0.0
  %v2289 = vmax.f32 %v2150, 0.0
  %v2290 = vmax.f32 %v2153, 0.0
  %v2291 = vmax.f32 %v2155, 0.0
  %v2292 = vmax.f32 %v2158, 0.0
  %v2293 = vmax.f32 %v2160, 0.0
  %v2294 = vmax.f32 %v2163, 0.0
  %v2295 = vmax.f32 %v2165, 0.0
  %v2296 = vmax.f32 %v2168, 0.0
  %v2297 = vmax.f32 %v2170, 0.0
  %v2298 = vmax.f32 %v2173, 0.0
  %v2299 = vmax.f32 %v2175, 0.0
  %v2300 = vmax.f32 %v2178, 0.0
  %v2301 = vmax.f32 %v2180, 0.0
  %v2302 = vmax.f32 %v2183, 0.0
  %v2303 = vmax.f32 %v2185, 0.0
  %v2304 = vmax.f32 %v2188, 0.0
  %v2305 = vmax.f32 %v2190, 0.0
  %v2306 = vmax.f32 %v2193, 0.0
  %v2307 = vmax.f32 %v2195, 0.0
  %v2308 = vmax.f32 %v2198, 0.0
  %v2309 = vmax.f32 %v2200, 0.0
  %v2310 = vmax.f32 %v2203, 0.0
  %v2311 = vmax.f32 %v2205, 0.0
  %v2312 = vmax.f32 %v2208, 0.0
  %v2313 = vmax.f32 %v2210, 0.0
  %v2314 = vmax.f32 %v2213, 0.0
  %v2315 = vmax.f32 %v2215, 0.0
  %v2316 = vmax.f32 %v2218, 0.0
  %v2317 = vmax.f32 %v2220, 0.0
  %v2318 = vmax.f32 %v2223, 0.0
  %v2319 = vmax.f32 %v2225, 0.0
  %v2320 = vmax.f32 %v2228, 0.0
  %v2321 = vmax.f32 %v2230, 0.0
  %v2322 = vmax.f32 %v2233, 0.0
  %v2323 = vmax.f32 %v2235, 0.0
  %v2324 = vmax.f32 %v2238, 0.0
  %v2325 = vmax.f32 %v2240, 0.0
  %v2326 = vmax.f32 %v2243, 0.0
  %v2327 = vmax.f32 %v2245, 0.0
  %v2328 = vmax.f32 %v2248, 0.0
  %v2329 = vmax.f32 %v2250, 0.0
  %v2330 = vmax.f32 %v2253, 0.0
  %v2331 = vmax.f32 %v2255, 0.0
  %v2332 = vmax.f32 %v2258, 0.0
  %v2333 = vmax.f32 %v2260, 0.0
  %v2334 = vmax.f32 %v2263, 0.0
  %v2335 = vmax.f32 %v2265, 0.0
  %v2336 = vmax.f32 %v2268, 0.0
  %v2337 = vmax.f32 %v2270, 0.0
  %v2338 = vmax.f32 %v2273, 0.0
  %v2339 = vpack.c.bf16 %v2277, %v2276
  %v2340 = vpack.c.bf16 %v2279, %v2278
  %v2341 = vpack.c.bf16 %v2281, %v2280
  %v2342 = vpack.c.bf16 %v2283, %v2282
  %v2343 = vpack.c.bf16 %v2285, %v2284
  %v2344 = vpack.c.bf16 %v2287, %v2286
  %v2345 = vpack.c.bf16 %v2289, %v2288
  %v2346 = vpack.c.bf16 %v2291, %v2290
  %v2347 = vpack.c.bf16 %v2293, %v2292
  %v2348 = vpack.c.bf16 %v2295, %v2294
  %v2349 = vpack.c.bf16 %v2297, %v2296
  %v2350 = vpack.c.bf16 %v2299, %v2298
  %v2351 = vpack.c.bf16 %v2301, %v2300
  %v2352 = vpack.c.bf16 %v2303, %v2302
  %v2353 = vpack.c.bf16 %v2305, %v2304
  %v2354 = vpack.c.bf16 %v2307, %v2306
  %v2355 = vpack.c.bf16 %v2309, %v2308
  %v2356 = vpack.c.bf16 %v2311, %v2310
  %v2357 = vpack.c.bf16 %v2313, %v2312
  %v2358 = vpack.c.bf16 %v2315, %v2314
  %v2359 = vpack.c.bf16 %v2317, %v2316
  %v2360 = vpack.c.bf16 %v2319, %v2318
  %v2361 = vpack.c.bf16 %v2321, %v2320
  %v2362 = vpack.c.bf16 %v2323, %v2322
  %v2363 = vpack.c.bf16 %v2325, %v2324
  %v2364 = vpack.c.bf16 %v2327, %v2326
  %v2365 = vpack.c.bf16 %v2329, %v2328
  %v2366 = vpack.c.bf16 %v2331, %v2330
  %v2367 = vpack.c.bf16 %v2333, %v2332
  %v2368 = vpack.c.bf16 %v2335, %v2334
  %v2369 = vpack.c.bf16 %v2337, %v2336
  %v2370 = vpack.c.bf16 %v2338, %v2338
  %s2371 = scalar_lea.vmem %s1, 192
  %v2372 = vld [vmem:[%s2371] sm:$0xf]
  %v2373 = vld [vmem:[%s2371 + $0x4] sm:$0xf]
  %v2374 = vld [vmem:[%s2371 + $0x8] sm:$0xf]
  %v2375 = vld [vmem:[%s2371 + $0xc] sm:$0xf]
  %v2376 = vld [vmem:[%s2371 + $0x10] sm:$0xf]
  %v2377 = vld [vmem:[%s2371 + $0x14] sm:$0xf]
  %v2378 = vld [vmem:[%s2371 + $0x18] sm:$0xf]
  %v2379 = vld [vmem:[%s2371 + $0x1c] sm:$0xf]
  %v2380 = vld [vmem:[%s2371 + $0x20] sm:$0xf]
  %v2381 = vld [vmem:[%s2371 + $0x24] sm:$0xf]
  %v2382 = vld [vmem:[%s2371 + $0x28] sm:$0xf]
  %v2383 = vld [vmem:[%s2371 + $0x2c] sm:$0xf]
  %v2384 = vld [vmem:[%s2371 + $0x30] sm:$0xf]
  %v2385 = vld [vmem:[%s2371 + $0x34] sm:$0xf]
  %v2386 = vld [vmem:[%s2371 + $0x38] sm:$0xf]
  %v2387 = vld [vmem:[%s2371 + $0x3c] sm:$0xf]
  %v2388 = vperm.slane %v85, 4
  %v2405 = vunpack.c.l.b16 %v2372
  %v2406 = vunpack.c.l.b16 %v2373
  %v2407 = vunpack.c.l.b16 %v2374
  %v2408 = vunpack.c.l.b16 %v2375
  %v2409 = vunpack.c.l.b16 %v2376
  %v2410 = vunpack.c.l.b16 %v2377
  %v2411 = vunpack.c.l.b16 %v2378
  %v2412 = vunpack.c.l.b16 %v2379
  %v2413 = vunpack.c.l.b16 %v2380
  %v2414 = vunpack.c.l.b16 %v2381
  %v2415 = vunpack.c.l.b16 %v2382
  %v2416 = vunpack.c.l.b16 %v2383
  %v2417 = vunpack.c.l.b16 %v2384
  %v2418 = vunpack.c.l.b16 %v2385
  %v2419 = vunpack.c.l.b16 %v2386
  %v2420 = vunpack.c.l.b16 %v2387
  %v2421 = vpack.c.b16 %v2406, %v2405
  %v2422 = vpack.c.b16 %v2408, %v2407
  %v2423 = vpack.c.b16 %v2410, %v2409
  %v2424 = vpack.c.b16 %v2412, %v2411
  %v2425 = vpack.c.b16 %v2414, %v2413
  %v2426 = vpack.c.b16 %v2416, %v2415
  %v2427 = vpack.c.b16 %v2418, %v2417
  %v2428 = vpack.c.b16 %v2420, %v2419
  %2437 = vmatpush.bf16.msra.mxu0 %v2428
  %2438 = vmatpush.bf16.msra.mxu0 %v2427
  %2439 = vmatpush.bf16.msra.mxu0 %v2426
  %2440 = vmatpush.bf16.msra.mxu0 %v2425
  %2441 = vmatpush.bf16.msra.mxu0 %v2424
  %2442 = vmatpush.bf16.msra.mxu0 %v2423
  %2443 = vmatpush.bf16.msra.mxu0 %v2422
  %2444 = vmatpush.bf16.msra.mxu0 %v2421
  %2445 = vmatmul.bf16.gmra.mxu0 %v2339
  %v2446 = vpop.f32.mrf.mxu0
  %v2447 = vadd.f32 %v2388, %v2446
  %v2448 = vpop.f32.mrf.mxu0
  %v2449 = vadd.f32 %v2388, %v2448
  %2450 = vmatmul.bf16.gmra.mxu0 %v2340
  %v2451 = vpop.f32.mrf.mxu0
  %v2452 = vadd.f32 %v2388, %v2451
  %v2453 = vpop.f32.mrf.mxu0
  %v2454 = vadd.f32 %v2388, %v2453
  %2455 = vmatmul.bf16.gmra.mxu0 %v2341
  %v2456 = vpop.f32.mrf.mxu0
  %v2457 = vadd.f32 %v2388, %v2456
  %v2458 = vpop.f32.mrf.mxu0
  %v2459 = vadd.f32 %v2388, %v2458
  %2460 = vmatmul.bf16.gmra.mxu0 %v2342
  %v2461 = vpop.f32.mrf.mxu0
  %v2462 = vadd.f32 %v2388, %v2461
  %v2463 = vpop.f32.mrf.mxu0
  %v2464 = vadd.f32 %v2388, %v2463
  %2465 = vmatmul.bf16.gmra.mxu0 %v2343
  %v2466 = vpop.f32.mrf.mxu0
  %v2467 = vadd.f32 %v2388, %v2466
  %v2468 = vpop.f32.mrf.mxu0
  %v2469 = vadd.f32 %v2388, %v2468
  %2470 = vmatmul.bf16.gmra.mxu0 %v2344
  %v2471 = vpop.f32.mrf.mxu0
  %v2472 = vadd.f32 %v2388, %v2471
  %v2473 = vpop.f32.mrf.mxu0
  %v2474 = vadd.f32 %v2388, %v2473
  %2475 = vmatmul.bf16.gmra.mxu0 %v2345
  %v2476 = vpop.f32.mrf.mxu0
  %v2477 = vadd.f32 %v2388, %v2476
  %v2478 = vpop.f32.mrf.mxu0
  %v2479 = vadd.f32 %v2388, %v2478
  %2480 = vmatmul.bf16.gmra.mxu0 %v2346
  %v2481 = vpop.f32.mrf.mxu0
  %v2482 = vadd.f32 %v2388, %v2481
  %v2483 = vpop.f32.mrf.mxu0
  %v2484 = vadd.f32 %v2388, %v2483
  %2485 = vmatmul.bf16.gmra.mxu0 %v2347
  %v2486 = vpop.f32.mrf.mxu0
  %v2487 = vadd.f32 %v2388, %v2486
  %v2488 = vpop.f32.mrf.mxu0
  %v2489 = vadd.f32 %v2388, %v2488
  %2490 = vmatmul.bf16.gmra.mxu0 %v2348
  %v2491 = vpop.f32.mrf.mxu0
  %v2492 = vadd.f32 %v2388, %v2491
  %v2493 = vpop.f32.mrf.mxu0
  %v2494 = vadd.f32 %v2388, %v2493
  %2495 = vmatmul.bf16.gmra.mxu0 %v2349
  %v2496 = vpop.f32.mrf.mxu0
  %v2497 = vadd.f32 %v2388, %v2496
  %v2498 = vpop.f32.mrf.mxu0
  %v2499 = vadd.f32 %v2388, %v2498
  %2500 = vmatmul.bf16.gmra.mxu0 %v2350
  %v2501 = vpop.f32.mrf.mxu0
  %v2502 = vadd.f32 %v2388, %v2501
  %v2503 = vpop.f32.mrf.mxu0
  %v2504 = vadd.f32 %v2388, %v2503
  %2505 = vmatmul.bf16.gmra.mxu0 %v2351
  %v2506 = vpop.f32.mrf.mxu0
  %v2507 = vadd.f32 %v2388, %v2506
  %v2508 = vpop.f32.mrf.mxu0
  %v2509 = vadd.f32 %v2388, %v2508
  %2510 = vmatmul.bf16.gmra.mxu0 %v2352
  %v2511 = vpop.f32.mrf.mxu0
  %v2512 = vadd.f32 %v2388, %v2511
  %v2513 = vpop.f32.mrf.mxu0
  %v2514 = vadd.f32 %v2388, %v2513
  %2515 = vmatmul.bf16.gmra.mxu0 %v2353
  %v2516 = vpop.f32.mrf.mxu0
  %v2517 = vadd.f32 %v2388, %v2516
  %v2518 = vpop.f32.mrf.mxu0
  %v2519 = vadd.f32 %v2388, %v2518
  %2520 = vmatmul.bf16.gmra.mxu0 %v2354
  %v2521 = vpop.f32.mrf.mxu0
  %v2522 = vadd.f32 %v2388, %v2521
  %v2523 = vpop.f32.mrf.mxu0
  %v2524 = vadd.f32 %v2388, %v2523
  %2525 = vmatmul.bf16.gmra.mxu0 %v2355
  %v2526 = vpop.f32.mrf.mxu0
  %v2527 = vadd.f32 %v2388, %v2526
  %v2528 = vpop.f32.mrf.mxu0
  %v2529 = vadd.f32 %v2388, %v2528
  %2530 = vmatmul.bf16.gmra.mxu0 %v2356
  %v2531 = vpop.f32.mrf.mxu0
  %v2532 = vadd.f32 %v2388, %v2531
  %v2533 = vpop.f32.mrf.mxu0
  %v2534 = vadd.f32 %v2388, %v2533
  %2535 = vmatmul.bf16.gmra.mxu0 %v2357
  %v2536 = vpop.f32.mrf.mxu0
  %v2537 = vadd.f32 %v2388, %v2536
  %v2538 = vpop.f32.mrf.mxu0
  %v2539 = vadd.f32 %v2388, %v2538
  %2540 = vmatmul.bf16.gmra.mxu0 %v2358
  %v2541 = vpop.f32.mrf.mxu0
  %v2542 = vadd.f32 %v2388, %v2541
  %v2543 = vpop.f32.mrf.mxu0
  %v2544 = vadd.f32 %v2388, %v2543
  %2545 = vmatmul.bf16.gmra.mxu0 %v2359
  %v2546 = vpop.f32.mrf.mxu0
  %v2547 = vadd.f32 %v2388, %v2546
  %v2548 = vpop.f32.mrf.mxu0
  %v2549 = vadd.f32 %v2388, %v2548
  %2550 = vmatmul.bf16.gmra.mxu0 %v2360
  %v2551 = vpop.f32.mrf.mxu0
  %v2552 = vadd.f32 %v2388, %v2551
  %v2553 = vpop.f32.mrf.mxu0
  %v2554 = vadd.f32 %v2388, %v2553
  %2555 = vmatmul.bf16.gmra.mxu0 %v2361
  %v2556 = vpop.f32.mrf.mxu0
  %v2557 = vadd.f32 %v2388, %v2556
  %v2558 = vpop.f32.mrf.mxu0
  %v2559 = vadd.f32 %v2388, %v2558
  %2560 = vmatmul.bf16.gmra.mxu0 %v2362
  %v2561 = vpop.f32.mrf.mxu0
  %v2562 = vadd.f32 %v2388, %v2561
  %v2563 = vpop.f32.mrf.mxu0
  %v2564 = vadd.f32 %v2388, %v2563
  %2565 = vmatmul.bf16.gmra.mxu0 %v2363
  %v2566 = vpop.f32.mrf.mxu0
  %v2567 = vadd.f32 %v2388, %v2566
  %v2568 = vpop.f32.mrf.mxu0
  %v2569 = vadd.f32 %v2388, %v2568
  %2570 = vmatmul.bf16.gmra.mxu0 %v2364
  %v2571 = vpop.f32.mrf.mxu0
  %v2572 = vadd.f32 %v2388, %v2571
  %v2573 = vpop.f32.mrf.mxu0
  %v2574 = vadd.f32 %v2388, %v2573
  %2575 = vmatmul.bf16.gmra.mxu0 %v2365
  %v2576 = vpop.f32.mrf.mxu0
  %v2577 = vadd.f32 %v2388, %v2576
  %v2578 = vpop.f32.mrf.mxu0
  %v2579 = vadd.f32 %v2388, %v2578
  %2580 = vmatmul.bf16.gmra.mxu0 %v2366
  %v2581 = vpop.f32.mrf.mxu0
  %v2582 = vadd.f32 %v2388, %v2581
  %v2583 = vpop.f32.mrf.mxu0
  %v2584 = vadd.f32 %v2388, %v2583
  %2585 = vmatmul.bf16.gmra.mxu0 %v2367
  %v2586 = vpop.f32.mrf.mxu0
  %v2587 = vadd.f32 %v2388, %v2586
  %v2588 = vpop.f32.mrf.mxu0
  %v2589 = vadd.f32 %v2388, %v2588
  %2590 = vmatmul.bf16.gmra.mxu0 %v2368
  %v2591 = vpop.f32.mrf.mxu0
  %v2592 = vadd.f32 %v2388, %v2591
  %v2593 = vpop.f32.mrf.mxu0
  %v2594 = vadd.f32 %v2388, %v2593
  %2595 = vmatmul.bf16.gmra.mxu0 %v2369
  %v2596 = vpop.f32.mrf.mxu0
  %v2597 = vadd.f32 %v2388, %v2596
  %v2598 = vpop.f32.mrf.mxu0
  %v2599 = vadd.f32 %v2388, %v2598
  %2600 = vmatmul.bf16.gmra.mxu0 %v2370
  %v2601 = vpop.f32.mrf.mxu0
  %v2602 = vadd.f32 %v2388, %v2601
  %v2603 = vpop.f32.mrf.mxu0
  %2604 = vdwg.mxu0
  %v2605 = vperm.slane %v82, 0
  %v2606 = vmul.f32 %v92, %v2605
  %v2607 = vmul.f32 %v97, %v2605
  %v2608 = vmul.f32 %v102, %v2605
  %v2609 = vmul.f32 %v107, %v2605
  %v2610 = vmul.f32 %v112, %v2605
  %v2611 = vmul.f32 %v117, %v2605
  %v2612 = vmul.f32 %v122, %v2605
  %v2613 = vmul.f32 %v127, %v2605
  %v2614 = vmul.f32 %v132, %v2605
  %v2615 = vmul.f32 %v137, %v2605
  %v2616 = vmul.f32 %v142, %v2605
  %v2617 = vmul.f32 %v147, %v2605
  %v2618 = vmul.f32 %v152, %v2605
  %v2619 = vmul.f32 %v157, %v2605
  %v2620 = vmul.f32 %v162, %v2605
  %v2621 = vmul.f32 %v167, %v2605
  %v2622 = vmul.f32 %v172, %v2605
  %v2623 = vmul.f32 %v177, %v2605
  %v2624 = vmul.f32 %v182, %v2605
  %v2625 = vmul.f32 %v187, %v2605
  %v2626 = vmul.f32 %v192, %v2605
  %v2627 = vmul.f32 %v197, %v2605
  %v2628 = vmul.f32 %v202, %v2605
  %v2629 = vmul.f32 %v207, %v2605
  %v2630 = vmul.f32 %v212, %v2605
  %v2631 = vmul.f32 %v217, %v2605
  %v2632 = vmul.f32 %v222, %v2605
  %v2633 = vmul.f32 %v227, %v2605
  %v2634 = vmul.f32 %v232, %v2605
  %v2635 = vmul.f32 %v237, %v2605
  %v2636 = vmul.f32 %v242, %v2605
  %v2637 = vmul.f32 %v247, %v2605
  %v2638 = vmul.f32 %v252, %v2605
  %v2639 = vmul.f32 %v257, %v2605
  %v2640 = vmul.f32 %v262, %v2605
  %v2641 = vmul.f32 %v267, %v2605
  %v2642 = vmul.f32 %v272, %v2605
  %v2643 = vmul.f32 %v277, %v2605
  %v2644 = vmul.f32 %v282, %v2605
  %v2645 = vmul.f32 %v287, %v2605
  %v2646 = vmul.f32 %v292, %v2605
  %v2647 = vmul.f32 %v297, %v2605
  %v2648 = vmul.f32 %v302, %v2605
  %v2649 = vmul.f32 %v307, %v2605
  %v2650 = vmul.f32 %v312, %v2605
  %v2651 = vmul.f32 %v317, %v2605
  %v2652 = vmul.f32 %v322, %v2605
  %v2653 = vmul.f32 %v327, %v2605
  %v2654 = vmul.f32 %v332, %v2605
  %v2655 = vmul.f32 %v337, %v2605
  %v2656 = vmul.f32 %v342, %v2605
  %v2657 = vmul.f32 %v347, %v2605
  %v2658 = vmul.f32 %v352, %v2605
  %v2659 = vmul.f32 %v357, %v2605
  %v2660 = vmul.f32 %v362, %v2605
  %v2661 = vmul.f32 %v367, %v2605
  %v2662 = vmul.f32 %v372, %v2605
  %v2663 = vmul.f32 %v377, %v2605
  %v2664 = vmul.f32 %v382, %v2605
  %v2665 = vmul.f32 %v387, %v2605
  %v2666 = vmul.f32 %v392, %v2605
  %v2667 = vmul.f32 %v397, %v2605
  %v2668 = vmul.f32 %v402, %v2605
  %v2669 = vadd.f32 %v2447, %v2606
  %v2670 = vadd.f32 %v2449, %v2607
  %v2671 = vadd.f32 %v2452, %v2608
  %v2672 = vadd.f32 %v2454, %v2609
  %v2673 = vadd.f32 %v2457, %v2610
  %v2674 = vadd.f32 %v2459, %v2611
  %v2675 = vadd.f32 %v2462, %v2612
  %v2676 = vadd.f32 %v2464, %v2613
  %v2677 = vadd.f32 %v2467, %v2614
  %v2678 = vadd.f32 %v2469, %v2615
  %v2679 = vadd.f32 %v2472, %v2616
  %v2680 = vadd.f32 %v2474, %v2617
  %v2681 = vadd.f32 %v2477, %v2618
  %v2682 = vadd.f32 %v2479, %v2619
  %v2683 = vadd.f32 %v2482, %v2620
  %v2684 = vadd.f32 %v2484, %v2621
  %v2685 = vadd.f32 %v2487, %v2622
  %v2686 = vadd.f32 %v2489, %v2623
  %v2687 = vadd.f32 %v2492, %v2624
  %v2688 = vadd.f32 %v2494, %v2625
  %v2689 = vadd.f32 %v2497, %v2626
  %v2690 = vadd.f32 %v2499, %v2627
  %v2691 = vadd.f32 %v2502, %v2628
  %v2692 = vadd.f32 %v2504, %v2629
  %v2693 = vadd.f32 %v2507, %v2630
  %v2694 = vadd.f32 %v2509, %v2631
  %v2695 = vadd.f32 %v2512, %v2632
  %v2696 = vadd.f32 %v2514, %v2633
  %v2697 = vadd.f32 %v2517, %v2634
  %v2698 = vadd.f32 %v2519, %v2635
  %v2699 = vadd.f32 %v2522, %v2636
  %v2700 = vadd.f32 %v2524, %v2637
  %v2701 = vadd.f32 %v2527, %v2638
  %v2702 = vadd.f32 %v2529, %v2639
  %v2703 = vadd.f32 %v2532, %v2640
  %v2704 = vadd.f32 %v2534, %v2641
  %v2705 = vadd.f32 %v2537, %v2642
  %v2706 = vadd.f32 %v2539, %v2643
  %v2707 = vadd.f32 %v2542, %v2644
  %v2708 = vadd.f32 %v2544, %v2645
  %v2709 = vadd.f32 %v2547, %v2646
  %v2710 = vadd.f32 %v2549, %v2647
  %v2711 = vadd.f32 %v2552, %v2648
  %v2712 = vadd.f32 %v2554, %v2649
  %v2713 = vadd.f32 %v2557, %v2650
  %v2714 = vadd.f32 %v2559, %v2651
  %v2715 = vadd.f32 %v2562, %v2652
  %v2716 = vadd.f32 %v2564, %v2653
  %v2717 = vadd.f32 %v2567, %v2654
  %v2718 = vadd.f32 %v2569, %v2655
  %v2719 = vadd.f32 %v2572, %v2656
  %v2720 = vadd.f32 %v2574, %v2657
  %v2721 = vadd.f32 %v2577, %v2658
  %v2722 = vadd.f32 %v2579, %v2659
  %v2723 = vadd.f32 %v2582, %v2660
  %v2724 = vadd.f32 %v2584, %v2661
  %v2725 = vadd.f32 %v2587, %v2662
  %v2726 = vadd.f32 %v2589, %v2663
  %v2727 = vadd.f32 %v2592, %v2664
  %v2728 = vadd.f32 %v2594, %v2665
  %v2729 = vadd.f32 %v2597, %v2666
  %v2730 = vadd.f32 %v2599, %v2667
  %v2731 = vadd.f32 %v2602, %v2668
  %v2732 = vperm.slane %v82, 1
  %v2733 = vmul.f32 %v534, %v2732
  %v2734 = vmul.f32 %v538, %v2732
  %v2735 = vmul.f32 %v542, %v2732
  %v2736 = vmul.f32 %v546, %v2732
  %v2737 = vmul.f32 %v550, %v2732
  %v2738 = vmul.f32 %v554, %v2732
  %v2739 = vmul.f32 %v558, %v2732
  %v2740 = vmul.f32 %v562, %v2732
  %v2741 = vmul.f32 %v566, %v2732
  %v2742 = vmul.f32 %v570, %v2732
  %v2743 = vmul.f32 %v574, %v2732
  %v2744 = vmul.f32 %v578, %v2732
  %v2745 = vmul.f32 %v582, %v2732
  %v2746 = vmul.f32 %v586, %v2732
  %v2747 = vmul.f32 %v590, %v2732
  %v2748 = vmul.f32 %v594, %v2732
  %v2749 = vmul.f32 %v598, %v2732
  %v2750 = vmul.f32 %v602, %v2732
  %v2751 = vmul.f32 %v606, %v2732
  %v2752 = vmul.f32 %v610, %v2732
  %v2753 = vmul.f32 %v614, %v2732
  %v2754 = vmul.f32 %v618, %v2732
  %v2755 = vmul.f32 %v622, %v2732
  %v2756 = vmul.f32 %v626, %v2732
  %v2757 = vmul.f32 %v630, %v2732
  %v2758 = vmul.f32 %v634, %v2732
  %v2759 = vmul.f32 %v638, %v2732
  %v2760 = vmul.f32 %v642, %v2732
  %v2761 = vmul.f32 %v646, %v2732
  %v2762 = vmul.f32 %v650, %v2732
  %v2763 = vmul.f32 %v654, %v2732
  %v2764 = vmul.f32 %v658, %v2732
  %v2765 = vmul.f32 %v662, %v2732
  %v2766 = vmul.f32 %v666, %v2732
  %v2767 = vmul.f32 %v670, %v2732
  %v2768 = vmul.f32 %v674, %v2732
  %v2769 = vmul.f32 %v678, %v2732
  %v2770 = vmul.f32 %v682, %v2732
  %v2771 = vmul.f32 %v686, %v2732
  %v2772 = vmul.f32 %v690, %v2732
  %v2773 = vmul.f32 %v694, %v2732
  %v2774 = vmul.f32 %v698, %v2732
  %v2775 = vmul.f32 %v702, %v2732
  %v2776 = vmul.f32 %v706, %v2732
  %v2777 = vmul.f32 %v710, %v2732
  %v2778 = vmul.f32 %v714, %v2732
  %v2779 = vmul.f32 %v718, %v2732
  %v2780 = vmul.f32 %v722, %v2732
  %v2781 = vmul.f32 %v726, %v2732
  %v2782 = vmul.f32 %v730, %v2732
  %v2783 = vmul.f32 %v734, %v2732
  %v2784 = vmul.f32 %v738, %v2732
  %v2785 = vmul.f32 %v742, %v2732
  %v2786 = vmul.f32 %v746, %v2732
  %v2787 = vmul.f32 %v750, %v2732
  %v2788 = vmul.f32 %v754, %v2732
  %v2789 = vmul.f32 %v758, %v2732
  %v2790 = vmul.f32 %v762, %v2732
  %v2791 = vmul.f32 %v766, %v2732
  %v2792 = vmul.f32 %v770, %v2732
  %v2793 = vmul.f32 %v774, %v2732
  %v2794 = vmul.f32 %v778, %v2732
  %v2795 = vmul.f32 %v782, %v2732
  %v2796 = vadd.f32 %v2669, %v2733
  %v2797 = vadd.f32 %v2670, %v2734
  %v2798 = vadd.f32 %v2671, %v2735
  %v2799 = vadd.f32 %v2672, %v2736
  %v2800 = vadd.f32 %v2673, %v2737
  %v2801 = vadd.f32 %v2674, %v2738
  %v2802 = vadd.f32 %v2675, %v2739
  %v2803 = vadd.f32 %v2676, %v2740
  %v2804 = vadd.f32 %v2677, %v2741
  %v2805 = vadd.f32 %v2678, %v2742
  %v2806 = vadd.f32 %v2679, %v2743
  %v2807 = vadd.f32 %v2680, %v2744
  %v2808 = vadd.f32 %v2681, %v2745
  %v2809 = vadd.f32 %v2682, %v2746
  %v2810 = vadd.f32 %v2683, %v2747
  %v2811 = vadd.f32 %v2684, %v2748
  %v2812 = vadd.f32 %v2685, %v2749
  %v2813 = vadd.f32 %v2686, %v2750
  %v2814 = vadd.f32 %v2687, %v2751
  %v2815 = vadd.f32 %v2688, %v2752
  %v2816 = vadd.f32 %v2689, %v2753
  %v2817 = vadd.f32 %v2690, %v2754
  %v2818 = vadd.f32 %v2691, %v2755
  %v2819 = vadd.f32 %v2692, %v2756
  %v2820 = vadd.f32 %v2693, %v2757
  %v2821 = vadd.f32 %v2694, %v2758
  %v2822 = vadd.f32 %v2695, %v2759
  %v2823 = vadd.f32 %v2696, %v2760
  %v2824 = vadd.f32 %v2697, %v2761
  %v2825 = vadd.f32 %v2698, %v2762
  %v2826 = vadd.f32 %v2699, %v2763
  %v2827 = vadd.f32 %v2700, %v2764
  %v2828 = vadd.f32 %v2701, %v2765
  %v2829 = vadd.f32 %v2702, %v2766
  %v2830 = vadd.f32 %v2703, %v2767
  %v2831 = vadd.f32 %v2704, %v2768
  %v2832 = vadd.f32 %v2705, %v2769
  %v2833 = vadd.f32 %v2706, %v2770
  %v2834 = vadd.f32 %v2707, %v2771
  %v2835 = vadd.f32 %v2708, %v2772
  %v2836 = vadd.f32 %v2709, %v2773
  %v2837 = vadd.f32 %v2710, %v2774
  %v2838 = vadd.f32 %v2711, %v2775
  %v2839 = vadd.f32 %v2712, %v2776
  %v2840 = vadd.f32 %v2713, %v2777
  %v2841 = vadd.f32 %v2714, %v2778
  %v2842 = vadd.f32 %v2715, %v2779
  %v2843 = vadd.f32 %v2716, %v2780
  %v2844 = vadd.f32 %v2717, %v2781
  %v2845 = vadd.f32 %v2718, %v2782
  %v2846 = vadd.f32 %v2719, %v2783
  %v2847 = vadd.f32 %v2720, %v2784
  %v2848 = vadd.f32 %v2721, %v2785
  %v2849 = vadd.f32 %v2722, %v2786
  %v2850 = vadd.f32 %v2723, %v2787
  %v2851 = vadd.f32 %v2724, %v2788
  %v2852 = vadd.f32 %v2725, %v2789
  %v2853 = vadd.f32 %v2726, %v2790
  %v2854 = vadd.f32 %v2727, %v2791
  %v2855 = vadd.f32 %v2728, %v2792
  %v2856 = vadd.f32 %v2729, %v2793
  %v2857 = vadd.f32 %v2730, %v2794
  %v2858 = vadd.f32 %v2731, %v2795
  %v2859 = vperm.slane %v82, 2
  %v2860 = vmul.f32 %v913, %v2859
  %v2861 = vmul.f32 %v917, %v2859
  %v2862 = vmul.f32 %v921, %v2859
  %v2863 = vmul.f32 %v925, %v2859
  %v2864 = vmul.f32 %v929, %v2859
  %v2865 = vmul.f32 %v933, %v2859
  %v2866 = vmul.f32 %v937, %v2859
  %v2867 = vmul.f32 %v941, %v2859
  %v2868 = vmul.f32 %v945, %v2859
  %v2869 = vmul.f32 %v949, %v2859
  %v2870 = vmul.f32 %v953, %v2859
  %v2871 = vmul.f32 %v957, %v2859
  %v2872 = vmul.f32 %v961, %v2859
  %v2873 = vmul.f32 %v965, %v2859
  %v2874 = vmul.f32 %v969, %v2859
  %v2875 = vmul.f32 %v973, %v2859
  %v2876 = vmul.f32 %v977, %v2859
  %v2877 = vmul.f32 %v981, %v2859
  %v2878 = vmul.f32 %v985, %v2859
  %v2879 = vmul.f32 %v989, %v2859
  %v2880 = vmul.f32 %v993, %v2859
  %v2881 = vmul.f32 %v997, %v2859
  %v2882 = vmul.f32 %v1001, %v2859
  %v2883 = vmul.f32 %v1005, %v2859
  %v2884 = vmul.f32 %v1009, %v2859
  %v2885 = vmul.f32 %v1013, %v2859
  %v2886 = vmul.f32 %v1017, %v2859
  %v2887 = vmul.f32 %v1021, %v2859
  %v2888 = vmul.f32 %v1025, %v2859
  %v2889 = vmul.f32 %v1029, %v2859
  %v2890 = vmul.f32 %v1033, %v2859
  %v2891 = vmul.f32 %v1037, %v2859
  %v2892 = vmul.f32 %v1041, %v2859
  %v2893 = vmul.f32 %v1045, %v2859
  %v2894 = vmul.f32 %v1049, %v2859
  %v2895 = vmul.f32 %v1053, %v2859
  %v2896 = vmul.f32 %v1057, %v2859
  %v2897 = vmul.f32 %v1061, %v2859
  %v2898 = vmul.f32 %v1065, %v2859
  %v2899 = vmul.f32 %v1069, %v2859
  %v2900 = vmul.f32 %v1073, %v2859
  %v2901 = vmul.f32 %v1077, %v2859
  %v2902 = vmul.f32 %v1081, %v2859
  %v2903 = vmul.f32 %v1085, %v2859
  %v2904 = vmul.f32 %v1089, %v2859
  %v2905 = vmul.f32 %v1093, %v2859
  %v2906 = vmul.f32 %v1097, %v2859
  %v2907 = vmul.f32 %v1101, %v2859
  %v2908 = vmul.f32 %v1105, %v2859
  %v2909 = vmul.f32 %v1109, %v2859
  %v2910 = vmul.f32 %v1113, %v2859
  %v2911 = vmul.f32 %v1117, %v2859
  %v2912 = vmul.f32 %v1121, %v2859
  %v2913 = vmul.f32 %v1125, %v2859
  %v2914 = vmul.f32 %v1129, %v2859
  %v2915 = vmul.f32 %v1133, %v2859
  %v2916 = vmul.f32 %v1137, %v2859
  %v2917 = vmul.f32 %v1141, %v2859
  %v2918 = vmul.f32 %v1145, %v2859
  %v2919 = vmul.f32 %v1149, %v2859
  %v2920 = vmul.f32 %v1153, %v2859
  %v2921 = vmul.f32 %v1157, %v2859
  %v2922 = vmul.f32 %v1161, %v2859
  %v2923 = vadd.f32 %v2796, %v2860
  %v2924 = vadd.f32 %v2797, %v2861
  %v2925 = vadd.f32 %v2798, %v2862
  %v2926 = vadd.f32 %v2799, %v2863
  %v2927 = vadd.f32 %v2800, %v2864
  %v2928 = vadd.f32 %v2801, %v2865
  %v2929 = vadd.f32 %v2802, %v2866
  %v2930 = vadd.f32 %v2803, %v2867
  %v2931 = vadd.f32 %v2804, %v2868
  %v2932 = vadd.f32 %v2805, %v2869
  %v2933 = vadd.f32 %v2806, %v2870
  %v2934 = vadd.f32 %v2807, %v2871
  %v2935 = vadd.f32 %v2808, %v2872
  %v2936 = vadd.f32 %v2809, %v2873
  %v2937 = vadd.f32 %v2810, %v2874
  %v2938 = vadd.f32 %v2811, %v2875
  %v2939 = vadd.f32 %v2812, %v2876
  %v2940 = vadd.f32 %v2813, %v2877
  %v2941 = vadd.f32 %v2814, %v2878
  %v2942 = vadd.f32 %v2815, %v2879
  %v2943 = vadd.f32 %v2816, %v2880
  %v2944 = vadd.f32 %v2817, %v2881
  %v2945 = vadd.f32 %v2818, %v2882
  %v2946 = vadd.f32 %v2819, %v2883
  %v2947 = vadd.f32 %v2820, %v2884
  %v2948 = vadd.f32 %v2821, %v2885
  %v2949 = vadd.f32 %v2822, %v2886
  %v2950 = vadd.f32 %v2823, %v2887
  %v2951 = vadd.f32 %v2824, %v2888
  %v2952 = vadd.f32 %v2825, %v2889
  %v2953 = vadd.f32 %v2826, %v2890
  %v2954 = vadd.f32 %v2827, %v2891
  %v2955 = vadd.f32 %v2828, %v2892
  %v2956 = vadd.f32 %v2829, %v2893
  %v2957 = vadd.f32 %v2830, %v2894
  %v2958 = vadd.f32 %v2831, %v2895
  %v2959 = vadd.f32 %v2832, %v2896
  %v2960 = vadd.f32 %v2833, %v2897
  %v2961 = vadd.f32 %v2834, %v2898
  %v2962 = vadd.f32 %v2835, %v2899
  %v2963 = vadd.f32 %v2836, %v2900
  %v2964 = vadd.f32 %v2837, %v2901
  %v2965 = vadd.f32 %v2838, %v2902
  %v2966 = vadd.f32 %v2839, %v2903
  %v2967 = vadd.f32 %v2840, %v2904
  %v2968 = vadd.f32 %v2841, %v2905
  %v2969 = vadd.f32 %v2842, %v2906
  %v2970 = vadd.f32 %v2843, %v2907
  %v2971 = vadd.f32 %v2844, %v2908
  %v2972 = vadd.f32 %v2845, %v2909
  %v2973 = vadd.f32 %v2846, %v2910
  %v2974 = vadd.f32 %v2847, %v2911
  %v2975 = vadd.f32 %v2848, %v2912
  %v2976 = vadd.f32 %v2849, %v2913
  %v2977 = vadd.f32 %v2850, %v2914
  %v2978 = vadd.f32 %v2851, %v2915
  %v2979 = vadd.f32 %v2852, %v2916
  %v2980 = vadd.f32 %v2853, %v2917
  %v2981 = vadd.f32 %v2854, %v2918
  %v2982 = vadd.f32 %v2855, %v2919
  %v2983 = vadd.f32 %v2856, %v2920
  %v2984 = vadd.f32 %v2857, %v2921
  %v2985 = vadd.f32 %v2858, %v2922
  %v2986 = vmax.f32 %v2923, 0.0
  %v2987 = vmax.f32 %v2924, 0.0
  %v2988 = vmax.f32 %v2925, 0.0
  %v2989 = vmax.f32 %v2926, 0.0
  %v2990 = vmax.f32 %v2927, 0.0
  %v2991 = vmax.f32 %v2928, 0.0
  %v2992 = vmax.f32 %v2929, 0.0
  %v2993 = vmax.f32 %v2930, 0.0
  %v2994 = vmax.f32 %v2931, 0.0
  %v2995 = vmax.f32 %v2932, 0.0
  %v2996 = vmax.f32 %v2933, 0.0
  %v2997 = vmax.f32 %v2934, 0.0
  %v2998 = vmax.f32 %v2935, 0.0
  %v2999 = vmax.f32 %v2936, 0.0
  %v3000 = vmax.f32 %v2937, 0.0
  %v3001 = vmax.f32 %v2938, 0.0
  %v3002 = vmax.f32 %v2939, 0.0
  %v3003 = vmax.f32 %v2940, 0.0
  %v3004 = vmax.f32 %v2941, 0.0
  %v3005 = vmax.f32 %v2942, 0.0
  %v3006 = vmax.f32 %v2943, 0.0
  %v3007 = vmax.f32 %v2944, 0.0
  %v3008 = vmax.f32 %v2945, 0.0
  %v3009 = vmax.f32 %v2946, 0.0
  %v3010 = vmax.f32 %v2947, 0.0
  %v3011 = vmax.f32 %v2948, 0.0
  %v3012 = vmax.f32 %v2949, 0.0
  %v3013 = vmax.f32 %v2950, 0.0
  %v3014 = vmax.f32 %v2951, 0.0
  %v3015 = vmax.f32 %v2952, 0.0
  %v3016 = vmax.f32 %v2953, 0.0
  %v3017 = vmax.f32 %v2954, 0.0
  %v3018 = vmax.f32 %v2955, 0.0
  %v3019 = vmax.f32 %v2956, 0.0
  %v3020 = vmax.f32 %v2957, 0.0
  %v3021 = vmax.f32 %v2958, 0.0
  %v3022 = vmax.f32 %v2959, 0.0
  %v3023 = vmax.f32 %v2960, 0.0
  %v3024 = vmax.f32 %v2961, 0.0
  %v3025 = vmax.f32 %v2962, 0.0
  %v3026 = vmax.f32 %v2963, 0.0
  %v3027 = vmax.f32 %v2964, 0.0
  %v3028 = vmax.f32 %v2965, 0.0
  %v3029 = vmax.f32 %v2966, 0.0
  %v3030 = vmax.f32 %v2967, 0.0
  %v3031 = vmax.f32 %v2968, 0.0
  %v3032 = vmax.f32 %v2969, 0.0
  %v3033 = vmax.f32 %v2970, 0.0
  %v3034 = vmax.f32 %v2971, 0.0
  %v3035 = vmax.f32 %v2972, 0.0
  %v3036 = vmax.f32 %v2973, 0.0
  %v3037 = vmax.f32 %v2974, 0.0
  %v3038 = vmax.f32 %v2975, 0.0
  %v3039 = vmax.f32 %v2976, 0.0
  %v3040 = vmax.f32 %v2977, 0.0
  %v3041 = vmax.f32 %v2978, 0.0
  %v3042 = vmax.f32 %v2979, 0.0
  %v3043 = vmax.f32 %v2980, 0.0
  %v3044 = vmax.f32 %v2981, 0.0
  %v3045 = vmax.f32 %v2982, 0.0
  %v3046 = vmax.f32 %v2983, 0.0
  %v3047 = vmax.f32 %v2984, 0.0
  %v3048 = vmax.f32 %v2985, 0.0
  %v3049 = vpack.c.bf16 %v2987, %v2986
  %v3050 = vpack.c.bf16 %v2989, %v2988
  %v3051 = vpack.c.bf16 %v2991, %v2990
  %v3052 = vpack.c.bf16 %v2993, %v2992
  %v3053 = vpack.c.bf16 %v2995, %v2994
  %v3054 = vpack.c.bf16 %v2997, %v2996
  %v3055 = vpack.c.bf16 %v2999, %v2998
  %v3056 = vpack.c.bf16 %v3001, %v3000
  %v3057 = vpack.c.bf16 %v3003, %v3002
  %v3058 = vpack.c.bf16 %v3005, %v3004
  %v3059 = vpack.c.bf16 %v3007, %v3006
  %v3060 = vpack.c.bf16 %v3009, %v3008
  %v3061 = vpack.c.bf16 %v3011, %v3010
  %v3062 = vpack.c.bf16 %v3013, %v3012
  %v3063 = vpack.c.bf16 %v3015, %v3014
  %v3064 = vpack.c.bf16 %v3017, %v3016
  %v3065 = vpack.c.bf16 %v3019, %v3018
  %v3066 = vpack.c.bf16 %v3021, %v3020
  %v3067 = vpack.c.bf16 %v3023, %v3022
  %v3068 = vpack.c.bf16 %v3025, %v3024
  %v3069 = vpack.c.bf16 %v3027, %v3026
  %v3070 = vpack.c.bf16 %v3029, %v3028
  %v3071 = vpack.c.bf16 %v3031, %v3030
  %v3072 = vpack.c.bf16 %v3033, %v3032
  %v3073 = vpack.c.bf16 %v3035, %v3034
  %v3074 = vpack.c.bf16 %v3037, %v3036
  %v3075 = vpack.c.bf16 %v3039, %v3038
  %v3076 = vpack.c.bf16 %v3041, %v3040
  %v3077 = vpack.c.bf16 %v3043, %v3042
  %v3078 = vpack.c.bf16 %v3045, %v3044
  %v3079 = vpack.c.bf16 %v3047, %v3046
  %v3080 = vpack.c.bf16 %v3048, %v3048
  %s3081 = scalar_lea.vmem %s1, 256
  %v3082 = vld [vmem:[%s3081] sm:$0xf]
  %v3083 = vld [vmem:[%s3081 + $0x4] sm:$0xf]
  %v3084 = vld [vmem:[%s3081 + $0x8] sm:$0xf]
  %v3085 = vld [vmem:[%s3081 + $0xc] sm:$0xf]
  %v3086 = vld [vmem:[%s3081 + $0x10] sm:$0xf]
  %v3087 = vld [vmem:[%s3081 + $0x14] sm:$0xf]
  %v3088 = vld [vmem:[%s3081 + $0x18] sm:$0xf]
  %v3089 = vld [vmem:[%s3081 + $0x1c] sm:$0xf]
  %v3090 = vld [vmem:[%s3081 + $0x20] sm:$0xf]
  %v3091 = vld [vmem:[%s3081 + $0x24] sm:$0xf]
  %v3092 = vld [vmem:[%s3081 + $0x28] sm:$0xf]
  %v3093 = vld [vmem:[%s3081 + $0x2c] sm:$0xf]
  %v3094 = vld [vmem:[%s3081 + $0x30] sm:$0xf]
  %v3095 = vld [vmem:[%s3081 + $0x34] sm:$0xf]
  %v3096 = vld [vmem:[%s3081 + $0x38] sm:$0xf]
  %v3097 = vld [vmem:[%s3081 + $0x3c] sm:$0xf]
  %v3098 = vperm.slane %v85, 5
  %v3115 = vunpack.c.l.b16 %v3082
  %v3116 = vunpack.c.l.b16 %v3083
  %v3117 = vunpack.c.l.b16 %v3084
  %v3118 = vunpack.c.l.b16 %v3085
  %v3119 = vunpack.c.l.b16 %v3086
  %v3120 = vunpack.c.l.b16 %v3087
  %v3121 = vunpack.c.l.b16 %v3088
  %v3122 = vunpack.c.l.b16 %v3089
  %v3123 = vunpack.c.l.b16 %v3090
  %v3124 = vunpack.c.l.b16 %v3091
  %v3125 = vunpack.c.l.b16 %v3092
  %v3126 = vunpack.c.l.b16 %v3093
  %v3127 = vunpack.c.l.b16 %v3094
  %v3128 = vunpack.c.l.b16 %v3095
  %v3129 = vunpack.c.l.b16 %v3096
  %v3130 = vunpack.c.l.b16 %v3097
  %v3131 = vpack.c.b16 %v3116, %v3115
  %v3132 = vpack.c.b16 %v3118, %v3117
  %v3133 = vpack.c.b16 %v3120, %v3119
  %v3134 = vpack.c.b16 %v3122, %v3121
  %v3135 = vpack.c.b16 %v3124, %v3123
  %v3136 = vpack.c.b16 %v3126, %v3125
  %v3137 = vpack.c.b16 %v3128, %v3127
  %v3138 = vpack.c.b16 %v3130, %v3129
  %3147 = vmatpush.bf16.msra.mxu0 %v3138
  %3148 = vmatpush.bf16.msra.mxu0 %v3137
  %3149 = vmatpush.bf16.msra.mxu0 %v3136
  %3150 = vmatpush.bf16.msra.mxu0 %v3135
  %3151 = vmatpush.bf16.msra.mxu0 %v3134
  %3152 = vmatpush.bf16.msra.mxu0 %v3133
  %3153 = vmatpush.bf16.msra.mxu0 %v3132
  %3154 = vmatpush.bf16.msra.mxu0 %v3131
  %3155 = vmatmul.bf16.gmra.mxu0 %v3049
  %v3156 = vpop.f32.mrf.mxu0
  %v3157 = vadd.f32 %v3098, %v3156
  %v3158 = vpop.f32.mrf.mxu0
  %v3159 = vadd.f32 %v3098, %v3158
  %3160 = vmatmul.bf16.gmra.mxu0 %v3050
  %v3161 = vpop.f32.mrf.mxu0
  %v3162 = vadd.f32 %v3098, %v3161
  %v3163 = vpop.f32.mrf.mxu0
  %v3164 = vadd.f32 %v3098, %v3163
  %3165 = vmatmul.bf16.gmra.mxu0 %v3051
  %v3166 = vpop.f32.mrf.mxu0
  %v3167 = vadd.f32 %v3098, %v3166
  %v3168 = vpop.f32.mrf.mxu0
  %v3169 = vadd.f32 %v3098, %v3168
  %3170 = vmatmul.bf16.gmra.mxu0 %v3052
  %v3171 = vpop.f32.mrf.mxu0
  %v3172 = vadd.f32 %v3098, %v3171
  %v3173 = vpop.f32.mrf.mxu0
  %v3174 = vadd.f32 %v3098, %v3173
  %3175 = vmatmul.bf16.gmra.mxu0 %v3053
  %v3176 = vpop.f32.mrf.mxu0
  %v3177 = vadd.f32 %v3098, %v3176
  %v3178 = vpop.f32.mrf.mxu0
  %v3179 = vadd.f32 %v3098, %v3178
  %3180 = vmatmul.bf16.gmra.mxu0 %v3054
  %v3181 = vpop.f32.mrf.mxu0
  %v3182 = vadd.f32 %v3098, %v3181
  %v3183 = vpop.f32.mrf.mxu0
  %v3184 = vadd.f32 %v3098, %v3183
  %3185 = vmatmul.bf16.gmra.mxu0 %v3055
  %v3186 = vpop.f32.mrf.mxu0
  %v3187 = vadd.f32 %v3098, %v3186
  %v3188 = vpop.f32.mrf.mxu0
  %v3189 = vadd.f32 %v3098, %v3188
  %3190 = vmatmul.bf16.gmra.mxu0 %v3056
  %v3191 = vpop.f32.mrf.mxu0
  %v3192 = vadd.f32 %v3098, %v3191
  %v3193 = vpop.f32.mrf.mxu0
  %v3194 = vadd.f32 %v3098, %v3193
  %3195 = vmatmul.bf16.gmra.mxu0 %v3057
  %v3196 = vpop.f32.mrf.mxu0
  %v3197 = vadd.f32 %v3098, %v3196
  %v3198 = vpop.f32.mrf.mxu0
  %v3199 = vadd.f32 %v3098, %v3198
  %3200 = vmatmul.bf16.gmra.mxu0 %v3058
  %v3201 = vpop.f32.mrf.mxu0
  %v3202 = vadd.f32 %v3098, %v3201
  %v3203 = vpop.f32.mrf.mxu0
  %v3204 = vadd.f32 %v3098, %v3203
  %3205 = vmatmul.bf16.gmra.mxu0 %v3059
  %v3206 = vpop.f32.mrf.mxu0
  %v3207 = vadd.f32 %v3098, %v3206
  %v3208 = vpop.f32.mrf.mxu0
  %v3209 = vadd.f32 %v3098, %v3208
  %3210 = vmatmul.bf16.gmra.mxu0 %v3060
  %v3211 = vpop.f32.mrf.mxu0
  %v3212 = vadd.f32 %v3098, %v3211
  %v3213 = vpop.f32.mrf.mxu0
  %v3214 = vadd.f32 %v3098, %v3213
  %3215 = vmatmul.bf16.gmra.mxu0 %v3061
  %v3216 = vpop.f32.mrf.mxu0
  %v3217 = vadd.f32 %v3098, %v3216
  %v3218 = vpop.f32.mrf.mxu0
  %v3219 = vadd.f32 %v3098, %v3218
  %3220 = vmatmul.bf16.gmra.mxu0 %v3062
  %v3221 = vpop.f32.mrf.mxu0
  %v3222 = vadd.f32 %v3098, %v3221
  %v3223 = vpop.f32.mrf.mxu0
  %v3224 = vadd.f32 %v3098, %v3223
  %3225 = vmatmul.bf16.gmra.mxu0 %v3063
  %v3226 = vpop.f32.mrf.mxu0
  %v3227 = vadd.f32 %v3098, %v3226
  %v3228 = vpop.f32.mrf.mxu0
  %v3229 = vadd.f32 %v3098, %v3228
  %3230 = vmatmul.bf16.gmra.mxu0 %v3064
  %v3231 = vpop.f32.mrf.mxu0
  %v3232 = vadd.f32 %v3098, %v3231
  %v3233 = vpop.f32.mrf.mxu0
  %v3234 = vadd.f32 %v3098, %v3233
  %3235 = vmatmul.bf16.gmra.mxu0 %v3065
  %v3236 = vpop.f32.mrf.mxu0
  %v3237 = vadd.f32 %v3098, %v3236
  %v3238 = vpop.f32.mrf.mxu0
  %v3239 = vadd.f32 %v3098, %v3238
  %3240 = vmatmul.bf16.gmra.mxu0 %v3066
  %v3241 = vpop.f32.mrf.mxu0
  %v3242 = vadd.f32 %v3098, %v3241
  %v3243 = vpop.f32.mrf.mxu0
  %v3244 = vadd.f32 %v3098, %v3243
  %3245 = vmatmul.bf16.gmra.mxu0 %v3067
  %v3246 = vpop.f32.mrf.mxu0
  %v3247 = vadd.f32 %v3098, %v3246
  %v3248 = vpop.f32.mrf.mxu0
  %v3249 = vadd.f32 %v3098, %v3248
  %3250 = vmatmul.bf16.gmra.mxu0 %v3068
  %v3251 = vpop.f32.mrf.mxu0
  %v3252 = vadd.f32 %v3098, %v3251
  %v3253 = vpop.f32.mrf.mxu0
  %v3254 = vadd.f32 %v3098, %v3253
  %3255 = vmatmul.bf16.gmra.mxu0 %v3069
  %v3256 = vpop.f32.mrf.mxu0
  %v3257 = vadd.f32 %v3098, %v3256
  %v3258 = vpop.f32.mrf.mxu0
  %v3259 = vadd.f32 %v3098, %v3258
  %3260 = vmatmul.bf16.gmra.mxu0 %v3070
  %v3261 = vpop.f32.mrf.mxu0
  %v3262 = vadd.f32 %v3098, %v3261
  %v3263 = vpop.f32.mrf.mxu0
  %v3264 = vadd.f32 %v3098, %v3263
  %3265 = vmatmul.bf16.gmra.mxu0 %v3071
  %v3266 = vpop.f32.mrf.mxu0
  %v3267 = vadd.f32 %v3098, %v3266
  %v3268 = vpop.f32.mrf.mxu0
  %v3269 = vadd.f32 %v3098, %v3268
  %3270 = vmatmul.bf16.gmra.mxu0 %v3072
  %v3271 = vpop.f32.mrf.mxu0
  %v3272 = vadd.f32 %v3098, %v3271
  %v3273 = vpop.f32.mrf.mxu0
  %v3274 = vadd.f32 %v3098, %v3273
  %3275 = vmatmul.bf16.gmra.mxu0 %v3073
  %v3276 = vpop.f32.mrf.mxu0
  %v3277 = vadd.f32 %v3098, %v3276
  %v3278 = vpop.f32.mrf.mxu0
  %v3279 = vadd.f32 %v3098, %v3278
  %3280 = vmatmul.bf16.gmra.mxu0 %v3074
  %v3281 = vpop.f32.mrf.mxu0
  %v3282 = vadd.f32 %v3098, %v3281
  %v3283 = vpop.f32.mrf.mxu0
  %v3284 = vadd.f32 %v3098, %v3283
  %3285 = vmatmul.bf16.gmra.mxu0 %v3075
  %v3286 = vpop.f32.mrf.mxu0
  %v3287 = vadd.f32 %v3098, %v3286
  %v3288 = vpop.f32.mrf.mxu0
  %v3289 = vadd.f32 %v3098, %v3288
  %3290 = vmatmul.bf16.gmra.mxu0 %v3076
  %v3291 = vpop.f32.mrf.mxu0
  %v3292 = vadd.f32 %v3098, %v3291
  %v3293 = vpop.f32.mrf.mxu0
  %v3294 = vadd.f32 %v3098, %v3293
  %3295 = vmatmul.bf16.gmra.mxu0 %v3077
  %v3296 = vpop.f32.mrf.mxu0
  %v3297 = vadd.f32 %v3098, %v3296
  %v3298 = vpop.f32.mrf.mxu0
  %v3299 = vadd.f32 %v3098, %v3298
  %3300 = vmatmul.bf16.gmra.mxu0 %v3078
  %v3301 = vpop.f32.mrf.mxu0
  %v3302 = vadd.f32 %v3098, %v3301
  %v3303 = vpop.f32.mrf.mxu0
  %v3304 = vadd.f32 %v3098, %v3303
  %3305 = vmatmul.bf16.gmra.mxu0 %v3079
  %v3306 = vpop.f32.mrf.mxu0
  %v3307 = vadd.f32 %v3098, %v3306
  %v3308 = vpop.f32.mrf.mxu0
  %v3309 = vadd.f32 %v3098, %v3308
  %3310 = vmatmul.bf16.gmra.mxu0 %v3080
  %v3311 = vpop.f32.mrf.mxu0
  %v3312 = vadd.f32 %v3098, %v3311
  %v3313 = vpop.f32.mrf.mxu0
  %3314 = vdwg.mxu0
  %v3315 = vmax.f32 %v3157, 0.0
  %v3316 = vmax.f32 %v3159, 0.0
  %v3317 = vmax.f32 %v3162, 0.0
  %v3318 = vmax.f32 %v3164, 0.0
  %v3319 = vmax.f32 %v3167, 0.0
  %v3320 = vmax.f32 %v3169, 0.0
  %v3321 = vmax.f32 %v3172, 0.0
  %v3322 = vmax.f32 %v3174, 0.0
  %v3323 = vmax.f32 %v3177, 0.0
  %v3324 = vmax.f32 %v3179, 0.0
  %v3325 = vmax.f32 %v3182, 0.0
  %v3326 = vmax.f32 %v3184, 0.0
  %v3327 = vmax.f32 %v3187, 0.0
  %v3328 = vmax.f32 %v3189, 0.0
  %v3329 = vmax.f32 %v3192, 0.0
  %v3330 = vmax.f32 %v3194, 0.0
  %v3331 = vmax.f32 %v3197, 0.0
  %v3332 = vmax.f32 %v3199, 0.0
  %v3333 = vmax.f32 %v3202, 0.0
  %v3334 = vmax.f32 %v3204, 0.0
  %v3335 = vmax.f32 %v3207, 0.0
  %v3336 = vmax.f32 %v3209, 0.0
  %v3337 = vmax.f32 %v3212, 0.0
  %v3338 = vmax.f32 %v3214, 0.0
  %v3339 = vmax.f32 %v3217, 0.0
  %v3340 = vmax.f32 %v3219, 0.0
  %v3341 = vmax.f32 %v3222, 0.0
  %v3342 = vmax.f32 %v3224, 0.0
  %v3343 = vmax.f32 %v3227, 0.0
  %v3344 = vmax.f32 %v3229, 0.0
  %v3345 = vmax.f32 %v3232, 0.0
  %v3346 = vmax.f32 %v3234, 0.0
  %v3347 = vmax.f32 %v3237, 0.0
  %v3348 = vmax.f32 %v3239, 0.0
  %v3349 = vmax.f32 %v3242, 0.0
  %v3350 = vmax.f32 %v3244, 0.0
  %v3351 = vmax.f32 %v3247, 0.0
  %v3352 = vmax.f32 %v3249, 0.0
  %v3353 = vmax.f32 %v3252, 0.0
  %v3354 = vmax.f32 %v3254, 0.0
  %v3355 = vmax.f32 %v3257, 0.0
  %v3356 = vmax.f32 %v3259, 0.0
  %v3357 = vmax.f32 %v3262, 0.0
  %v3358 = vmax.f32 %v3264, 0.0
  %v3359 = vmax.f32 %v3267, 0.0
  %v3360 = vmax.f32 %v3269, 0.0
  %v3361 = vmax.f32 %v3272, 0.0
  %v3362 = vmax.f32 %v3274, 0.0
  %v3363 = vmax.f32 %v3277, 0.0
  %v3364 = vmax.f32 %v3279, 0.0
  %v3365 = vmax.f32 %v3282, 0.0
  %v3366 = vmax.f32 %v3284, 0.0
  %v3367 = vmax.f32 %v3287, 0.0
  %v3368 = vmax.f32 %v3289, 0.0
  %v3369 = vmax.f32 %v3292, 0.0
  %v3370 = vmax.f32 %v3294, 0.0
  %v3371 = vmax.f32 %v3297, 0.0
  %v3372 = vmax.f32 %v3299, 0.0
  %v3373 = vmax.f32 %v3302, 0.0
  %v3374 = vmax.f32 %v3304, 0.0
  %v3375 = vmax.f32 %v3307, 0.0
  %v3376 = vmax.f32 %v3309, 0.0
  %v3377 = vmax.f32 %v3312, 0.0
  %v3378 = vpack.c.bf16 %v3316, %v3315
  %v3379 = vpack.c.bf16 %v3318, %v3317
  %v3380 = vpack.c.bf16 %v3320, %v3319
  %v3381 = vpack.c.bf16 %v3322, %v3321
  %v3382 = vpack.c.bf16 %v3324, %v3323
  %v3383 = vpack.c.bf16 %v3326, %v3325
  %v3384 = vpack.c.bf16 %v3328, %v3327
  %v3385 = vpack.c.bf16 %v3330, %v3329
  %v3386 = vpack.c.bf16 %v3332, %v3331
  %v3387 = vpack.c.bf16 %v3334, %v3333
  %v3388 = vpack.c.bf16 %v3336, %v3335
  %v3389 = vpack.c.bf16 %v3338, %v3337
  %v3390 = vpack.c.bf16 %v3340, %v3339
  %v3391 = vpack.c.bf16 %v3342, %v3341
  %v3392 = vpack.c.bf16 %v3344, %v3343
  %v3393 = vpack.c.bf16 %v3346, %v3345
  %v3394 = vpack.c.bf16 %v3348, %v3347
  %v3395 = vpack.c.bf16 %v3350, %v3349
  %v3396 = vpack.c.bf16 %v3352, %v3351
  %v3397 = vpack.c.bf16 %v3354, %v3353
  %v3398 = vpack.c.bf16 %v3356, %v3355
  %v3399 = vpack.c.bf16 %v3358, %v3357
  %v3400 = vpack.c.bf16 %v3360, %v3359
  %v3401 = vpack.c.bf16 %v3362, %v3361
  %v3402 = vpack.c.bf16 %v3364, %v3363
  %v3403 = vpack.c.bf16 %v3366, %v3365
  %v3404 = vpack.c.bf16 %v3368, %v3367
  %v3405 = vpack.c.bf16 %v3370, %v3369
  %v3406 = vpack.c.bf16 %v3372, %v3371
  %v3407 = vpack.c.bf16 %v3374, %v3373
  %v3408 = vpack.c.bf16 %v3376, %v3375
  %v3409 = vpack.c.bf16 %v3377, %v3377
  %s3410 = scalar_lea.vmem %s1, 320
  %v3411 = vld [vmem:[%s3410] sm:$0xf]
  %v3412 = vld [vmem:[%s3410 + $0x4] sm:$0xf]
  %v3413 = vld [vmem:[%s3410 + $0x8] sm:$0xf]
  %v3414 = vld [vmem:[%s3410 + $0xc] sm:$0xf]
  %v3415 = vld [vmem:[%s3410 + $0x10] sm:$0xf]
  %v3416 = vld [vmem:[%s3410 + $0x14] sm:$0xf]
  %v3417 = vld [vmem:[%s3410 + $0x18] sm:$0xf]
  %v3418 = vld [vmem:[%s3410 + $0x1c] sm:$0xf]
  %v3419 = vld [vmem:[%s3410 + $0x20] sm:$0xf]
  %v3420 = vld [vmem:[%s3410 + $0x24] sm:$0xf]
  %v3421 = vld [vmem:[%s3410 + $0x28] sm:$0xf]
  %v3422 = vld [vmem:[%s3410 + $0x2c] sm:$0xf]
  %v3423 = vld [vmem:[%s3410 + $0x30] sm:$0xf]
  %v3424 = vld [vmem:[%s3410 + $0x34] sm:$0xf]
  %v3425 = vld [vmem:[%s3410 + $0x38] sm:$0xf]
  %v3426 = vld [vmem:[%s3410 + $0x3c] sm:$0xf]
  %v3427 = vperm.slane %v85, 6
  %v3444 = vunpack.c.l.b16 %v3411
  %v3445 = vunpack.c.l.b16 %v3412
  %v3446 = vunpack.c.l.b16 %v3413
  %v3447 = vunpack.c.l.b16 %v3414
  %v3448 = vunpack.c.l.b16 %v3415
  %v3449 = vunpack.c.l.b16 %v3416
  %v3450 = vunpack.c.l.b16 %v3417
  %v3451 = vunpack.c.l.b16 %v3418
  %v3452 = vunpack.c.l.b16 %v3419
  %v3453 = vunpack.c.l.b16 %v3420
  %v3454 = vunpack.c.l.b16 %v3421
  %v3455 = vunpack.c.l.b16 %v3422
  %v3456 = vunpack.c.l.b16 %v3423
  %v3457 = vunpack.c.l.b16 %v3424
  %v3458 = vunpack.c.l.b16 %v3425
  %v3459 = vunpack.c.l.b16 %v3426
  %v3460 = vpack.c.b16 %v3445, %v3444
  %v3461 = vpack.c.b16 %v3447, %v3446
  %v3462 = vpack.c.b16 %v3449, %v3448
  %v3463 = vpack.c.b16 %v3451, %v3450
  %v3464 = vpack.c.b16 %v3453, %v3452
  %v3465 = vpack.c.b16 %v3455, %v3454
  %v3466 = vpack.c.b16 %v3457, %v3456
  %v3467 = vpack.c.b16 %v3459, %v3458
  %3476 = vmatpush.bf16.msra.mxu0 %v3467
  %3477 = vmatpush.bf16.msra.mxu0 %v3466
  %3478 = vmatpush.bf16.msra.mxu0 %v3465
  %3479 = vmatpush.bf16.msra.mxu0 %v3464
  %3480 = vmatpush.bf16.msra.mxu0 %v3463
  %3481 = vmatpush.bf16.msra.mxu0 %v3462
  %3482 = vmatpush.bf16.msra.mxu0 %v3461
  %3483 = vmatpush.bf16.msra.mxu0 %v3460
  %3484 = vmatmul.bf16.gmra.mxu0 %v3378
  %v3485 = vpop.f32.mrf.mxu0
  %v3486 = vadd.f32 %v3427, %v3485
  %v3487 = vpop.f32.mrf.mxu0
  %v3488 = vadd.f32 %v3427, %v3487
  %3489 = vmatmul.bf16.gmra.mxu0 %v3379
  %v3490 = vpop.f32.mrf.mxu0
  %v3491 = vadd.f32 %v3427, %v3490
  %v3492 = vpop.f32.mrf.mxu0
  %v3493 = vadd.f32 %v3427, %v3492
  %3494 = vmatmul.bf16.gmra.mxu0 %v3380
  %v3495 = vpop.f32.mrf.mxu0
  %v3496 = vadd.f32 %v3427, %v3495
  %v3497 = vpop.f32.mrf.mxu0
  %v3498 = vadd.f32 %v3427, %v3497
  %3499 = vmatmul.bf16.gmra.mxu0 %v3381
  %v3500 = vpop.f32.mrf.mxu0
  %v3501 = vadd.f32 %v3427, %v3500
  %v3502 = vpop.f32.mrf.mxu0
  %v3503 = vadd.f32 %v3427, %v3502
  %3504 = vmatmul.bf16.gmra.mxu0 %v3382
  %v3505 = vpop.f32.mrf.mxu0
  %v3506 = vadd.f32 %v3427, %v3505
  %v3507 = vpop.f32.mrf.mxu0
  %v3508 = vadd.f32 %v3427, %v3507
  %3509 = vmatmul.bf16.gmra.mxu0 %v3383
  %v3510 = vpop.f32.mrf.mxu0
  %v3511 = vadd.f32 %v3427, %v3510
  %v3512 = vpop.f32.mrf.mxu0
  %v3513 = vadd.f32 %v3427, %v3512
  %3514 = vmatmul.bf16.gmra.mxu0 %v3384
  %v3515 = vpop.f32.mrf.mxu0
  %v3516 = vadd.f32 %v3427, %v3515
  %v3517 = vpop.f32.mrf.mxu0
  %v3518 = vadd.f32 %v3427, %v3517
  %3519 = vmatmul.bf16.gmra.mxu0 %v3385
  %v3520 = vpop.f32.mrf.mxu0
  %v3521 = vadd.f32 %v3427, %v3520
  %v3522 = vpop.f32.mrf.mxu0
  %v3523 = vadd.f32 %v3427, %v3522
  %3524 = vmatmul.bf16.gmra.mxu0 %v3386
  %v3525 = vpop.f32.mrf.mxu0
  %v3526 = vadd.f32 %v3427, %v3525
  %v3527 = vpop.f32.mrf.mxu0
  %v3528 = vadd.f32 %v3427, %v3527
  %3529 = vmatmul.bf16.gmra.mxu0 %v3387
  %v3530 = vpop.f32.mrf.mxu0
  %v3531 = vadd.f32 %v3427, %v3530
  %v3532 = vpop.f32.mrf.mxu0
  %v3533 = vadd.f32 %v3427, %v3532
  %3534 = vmatmul.bf16.gmra.mxu0 %v3388
  %v3535 = vpop.f32.mrf.mxu0
  %v3536 = vadd.f32 %v3427, %v3535
  %v3537 = vpop.f32.mrf.mxu0
  %v3538 = vadd.f32 %v3427, %v3537
  %3539 = vmatmul.bf16.gmra.mxu0 %v3389
  %v3540 = vpop.f32.mrf.mxu0
  %v3541 = vadd.f32 %v3427, %v3540
  %v3542 = vpop.f32.mrf.mxu0
  %v3543 = vadd.f32 %v3427, %v3542
  %3544 = vmatmul.bf16.gmra.mxu0 %v3390
  %v3545 = vpop.f32.mrf.mxu0
  %v3546 = vadd.f32 %v3427, %v3545
  %v3547 = vpop.f32.mrf.mxu0
  %v3548 = vadd.f32 %v3427, %v3547
  %3549 = vmatmul.bf16.gmra.mxu0 %v3391
  %v3550 = vpop.f32.mrf.mxu0
  %v3551 = vadd.f32 %v3427, %v3550
  %v3552 = vpop.f32.mrf.mxu0
  %v3553 = vadd.f32 %v3427, %v3552
  %3554 = vmatmul.bf16.gmra.mxu0 %v3392
  %v3555 = vpop.f32.mrf.mxu0
  %v3556 = vadd.f32 %v3427, %v3555
  %v3557 = vpop.f32.mrf.mxu0
  %v3558 = vadd.f32 %v3427, %v3557
  %3559 = vmatmul.bf16.gmra.mxu0 %v3393
  %v3560 = vpop.f32.mrf.mxu0
  %v3561 = vadd.f32 %v3427, %v3560
  %v3562 = vpop.f32.mrf.mxu0
  %v3563 = vadd.f32 %v3427, %v3562
  %3564 = vmatmul.bf16.gmra.mxu0 %v3394
  %v3565 = vpop.f32.mrf.mxu0
  %v3566 = vadd.f32 %v3427, %v3565
  %v3567 = vpop.f32.mrf.mxu0
  %v3568 = vadd.f32 %v3427, %v3567
  %3569 = vmatmul.bf16.gmra.mxu0 %v3395
  %v3570 = vpop.f32.mrf.mxu0
  %v3571 = vadd.f32 %v3427, %v3570
  %v3572 = vpop.f32.mrf.mxu0
  %v3573 = vadd.f32 %v3427, %v3572
  %3574 = vmatmul.bf16.gmra.mxu0 %v3396
  %v3575 = vpop.f32.mrf.mxu0
  %v3576 = vadd.f32 %v3427, %v3575
  %v3577 = vpop.f32.mrf.mxu0
  %v3578 = vadd.f32 %v3427, %v3577
  %3579 = vmatmul.bf16.gmra.mxu0 %v3397
  %v3580 = vpop.f32.mrf.mxu0
  %v3581 = vadd.f32 %v3427, %v3580
  %v3582 = vpop.f32.mrf.mxu0
  %v3583 = vadd.f32 %v3427, %v3582
  %3584 = vmatmul.bf16.gmra.mxu0 %v3398
  %v3585 = vpop.f32.mrf.mxu0
  %v3586 = vadd.f32 %v3427, %v3585
  %v3587 = vpop.f32.mrf.mxu0
  %v3588 = vadd.f32 %v3427, %v3587
  %3589 = vmatmul.bf16.gmra.mxu0 %v3399
  %v3590 = vpop.f32.mrf.mxu0
  %v3591 = vadd.f32 %v3427, %v3590
  %v3592 = vpop.f32.mrf.mxu0
  %v3593 = vadd.f32 %v3427, %v3592
  %3594 = vmatmul.bf16.gmra.mxu0 %v3400
  %v3595 = vpop.f32.mrf.mxu0
  %v3596 = vadd.f32 %v3427, %v3595
  %v3597 = vpop.f32.mrf.mxu0
  %v3598 = vadd.f32 %v3427, %v3597
  %3599 = vmatmul.bf16.gmra.mxu0 %v3401
  %v3600 = vpop.f32.mrf.mxu0
  %v3601 = vadd.f32 %v3427, %v3600
  %v3602 = vpop.f32.mrf.mxu0
  %v3603 = vadd.f32 %v3427, %v3602
  %3604 = vmatmul.bf16.gmra.mxu0 %v3402
  %v3605 = vpop.f32.mrf.mxu0
  %v3606 = vadd.f32 %v3427, %v3605
  %v3607 = vpop.f32.mrf.mxu0
  %v3608 = vadd.f32 %v3427, %v3607
  %3609 = vmatmul.bf16.gmra.mxu0 %v3403
  %v3610 = vpop.f32.mrf.mxu0
  %v3611 = vadd.f32 %v3427, %v3610
  %v3612 = vpop.f32.mrf.mxu0
  %v3613 = vadd.f32 %v3427, %v3612
  %3614 = vmatmul.bf16.gmra.mxu0 %v3404
  %v3615 = vpop.f32.mrf.mxu0
  %v3616 = vadd.f32 %v3427, %v3615
  %v3617 = vpop.f32.mrf.mxu0
  %v3618 = vadd.f32 %v3427, %v3617
  %3619 = vmatmul.bf16.gmra.mxu0 %v3405
  %v3620 = vpop.f32.mrf.mxu0
  %v3621 = vadd.f32 %v3427, %v3620
  %v3622 = vpop.f32.mrf.mxu0
  %v3623 = vadd.f32 %v3427, %v3622
  %3624 = vmatmul.bf16.gmra.mxu0 %v3406
  %v3625 = vpop.f32.mrf.mxu0
  %v3626 = vadd.f32 %v3427, %v3625
  %v3627 = vpop.f32.mrf.mxu0
  %v3628 = vadd.f32 %v3427, %v3627
  %3629 = vmatmul.bf16.gmra.mxu0 %v3407
  %v3630 = vpop.f32.mrf.mxu0
  %v3631 = vadd.f32 %v3427, %v3630
  %v3632 = vpop.f32.mrf.mxu0
  %v3633 = vadd.f32 %v3427, %v3632
  %3634 = vmatmul.bf16.gmra.mxu0 %v3408
  %v3635 = vpop.f32.mrf.mxu0
  %v3636 = vadd.f32 %v3427, %v3635
  %v3637 = vpop.f32.mrf.mxu0
  %v3638 = vadd.f32 %v3427, %v3637
  %3639 = vmatmul.bf16.gmra.mxu0 %v3409
  %v3640 = vpop.f32.mrf.mxu0
  %v3641 = vadd.f32 %v3427, %v3640
  %v3642 = vpop.f32.mrf.mxu0
  %3643 = vdwg.mxu0
  %v3644 = vmax.f32 %v3486, 0.0
  %v3645 = vmax.f32 %v3488, 0.0
  %v3646 = vmax.f32 %v3491, 0.0
  %v3647 = vmax.f32 %v3493, 0.0
  %v3648 = vmax.f32 %v3496, 0.0
  %v3649 = vmax.f32 %v3498, 0.0
  %v3650 = vmax.f32 %v3501, 0.0
  %v3651 = vmax.f32 %v3503, 0.0
  %v3652 = vmax.f32 %v3506, 0.0
  %v3653 = vmax.f32 %v3508, 0.0
  %v3654 = vmax.f32 %v3511, 0.0
  %v3655 = vmax.f32 %v3513, 0.0
  %v3656 = vmax.f32 %v3516, 0.0
  %v3657 = vmax.f32 %v3518, 0.0
  %v3658 = vmax.f32 %v3521, 0.0
  %v3659 = vmax.f32 %v3523, 0.0
  %v3660 = vmax.f32 %v3526, 0.0
  %v3661 = vmax.f32 %v3528, 0.0
  %v3662 = vmax.f32 %v3531, 0.0
  %v3663 = vmax.f32 %v3533, 0.0
  %v3664 = vmax.f32 %v3536, 0.0
  %v3665 = vmax.f32 %v3538, 0.0
  %v3666 = vmax.f32 %v3541, 0.0
  %v3667 = vmax.f32 %v3543, 0.0
  %v3668 = vmax.f32 %v3546, 0.0
  %v3669 = vmax.f32 %v3548, 0.0
  %v3670 = vmax.f32 %v3551, 0.0
  %v3671 = vmax.f32 %v3553, 0.0
  %v3672 = vmax.f32 %v3556, 0.0
  %v3673 = vmax.f32 %v3558, 0.0
  %v3674 = vmax.f32 %v3561, 0.0
  %v3675 = vmax.f32 %v3563, 0.0
  %v3676 = vmax.f32 %v3566, 0.0
  %v3677 = vmax.f32 %v3568, 0.0
  %v3678 = vmax.f32 %v3571, 0.0
  %v3679 = vmax.f32 %v3573, 0.0
  %v3680 = vmax.f32 %v3576, 0.0
  %v3681 = vmax.f32 %v3578, 0.0
  %v3682 = vmax.f32 %v3581, 0.0
  %v3683 = vmax.f32 %v3583, 0.0
  %v3684 = vmax.f32 %v3586, 0.0
  %v3685 = vmax.f32 %v3588, 0.0
  %v3686 = vmax.f32 %v3591, 0.0
  %v3687 = vmax.f32 %v3593, 0.0
  %v3688 = vmax.f32 %v3596, 0.0
  %v3689 = vmax.f32 %v3598, 0.0
  %v3690 = vmax.f32 %v3601, 0.0
  %v3691 = vmax.f32 %v3603, 0.0
  %v3692 = vmax.f32 %v3606, 0.0
  %v3693 = vmax.f32 %v3608, 0.0
  %v3694 = vmax.f32 %v3611, 0.0
  %v3695 = vmax.f32 %v3613, 0.0
  %v3696 = vmax.f32 %v3616, 0.0
  %v3697 = vmax.f32 %v3618, 0.0
  %v3698 = vmax.f32 %v3621, 0.0
  %v3699 = vmax.f32 %v3623, 0.0
  %v3700 = vmax.f32 %v3626, 0.0
  %v3701 = vmax.f32 %v3628, 0.0
  %v3702 = vmax.f32 %v3631, 0.0
  %v3703 = vmax.f32 %v3633, 0.0
  %v3704 = vmax.f32 %v3636, 0.0
  %v3705 = vmax.f32 %v3638, 0.0
  %v3706 = vmax.f32 %v3641, 0.0
  %v3707 = vpack.c.bf16 %v3644, %v3644
  %v3708 = vpack.c.bf16 %v3645, %v3645
  %v3709 = vpack.c.bf16 %v3646, %v3646
  %v3710 = vpack.c.bf16 %v3647, %v3647
  %v3711 = vpack.c.bf16 %v3648, %v3648
  %v3712 = vpack.c.bf16 %v3649, %v3649
  %v3713 = vpack.c.bf16 %v3650, %v3650
  %v3714 = vpack.c.bf16 %v3651, %v3651
  %v3715 = vpack.c.bf16 %v3652, %v3652
  %v3716 = vpack.c.bf16 %v3653, %v3653
  %v3717 = vpack.c.bf16 %v3654, %v3654
  %v3718 = vpack.c.bf16 %v3655, %v3655
  %v3719 = vpack.c.bf16 %v3656, %v3656
  %v3720 = vpack.c.bf16 %v3657, %v3657
  %v3721 = vpack.c.bf16 %v3658, %v3658
  %v3722 = vpack.c.bf16 %v3659, %v3659
  %v3723 = vpack.c.bf16 %v3660, %v3660
  %v3724 = vpack.c.bf16 %v3661, %v3661
  %v3725 = vpack.c.bf16 %v3662, %v3662
  %v3726 = vpack.c.bf16 %v3663, %v3663
  %v3727 = vpack.c.bf16 %v3664, %v3664
  %v3728 = vpack.c.bf16 %v3665, %v3665
  %v3729 = vpack.c.bf16 %v3666, %v3666
  %v3730 = vpack.c.bf16 %v3667, %v3667
  %v3731 = vpack.c.bf16 %v3668, %v3668
  %v3732 = vpack.c.bf16 %v3669, %v3669
  %v3733 = vpack.c.bf16 %v3670, %v3670
  %v3734 = vpack.c.bf16 %v3671, %v3671
  %v3735 = vpack.c.bf16 %v3672, %v3672
  %v3736 = vpack.c.bf16 %v3673, %v3673
  %v3737 = vpack.c.bf16 %v3674, %v3674
  %v3738 = vpack.c.bf16 %v3675, %v3675
  %v3739 = vpack.c.bf16 %v3676, %v3676
  %v3740 = vpack.c.bf16 %v3677, %v3677
  %v3741 = vpack.c.bf16 %v3678, %v3678
  %v3742 = vpack.c.bf16 %v3679, %v3679
  %v3743 = vpack.c.bf16 %v3680, %v3680
  %v3744 = vpack.c.bf16 %v3681, %v3681
  %v3745 = vpack.c.bf16 %v3682, %v3682
  %v3746 = vpack.c.bf16 %v3683, %v3683
  %v3747 = vpack.c.bf16 %v3684, %v3684
  %v3748 = vpack.c.bf16 %v3685, %v3685
  %v3749 = vpack.c.bf16 %v3686, %v3686
  %v3750 = vpack.c.bf16 %v3687, %v3687
  %v3751 = vpack.c.bf16 %v3688, %v3688
  %v3752 = vpack.c.bf16 %v3689, %v3689
  %v3753 = vpack.c.bf16 %v3690, %v3690
  %v3754 = vpack.c.bf16 %v3691, %v3691
  %v3755 = vpack.c.bf16 %v3692, %v3692
  %v3756 = vpack.c.bf16 %v3693, %v3693
  %v3757 = vpack.c.bf16 %v3694, %v3694
  %v3758 = vpack.c.bf16 %v3695, %v3695
  %v3759 = vpack.c.bf16 %v3696, %v3696
  %v3760 = vpack.c.bf16 %v3697, %v3697
  %v3761 = vpack.c.bf16 %v3698, %v3698
  %v3762 = vpack.c.bf16 %v3699, %v3699
  %v3763 = vpack.c.bf16 %v3700, %v3700
  %v3764 = vpack.c.bf16 %v3701, %v3701
  %v3765 = vpack.c.bf16 %v3702, %v3702
  %v3766 = vpack.c.bf16 %v3703, %v3703
  %v3767 = vpack.c.bf16 %v3704, %v3704
  %v3768 = vpack.c.bf16 %v3705, %v3705
  %v3769 = vpack.c.bf16 %v3706, %v3706
  %s3770 = scalar_lea.vmem %s1, 384
  %v3771 = vld [vmem:[%s3770] sm:$0xf]
  %v3772 = vld [vmem:[%s3770 + $0x4] sm:$0xf]
  %v3773 = vld [vmem:[%s3770 + $0x8] sm:$0xf]
  %v3774 = vld [vmem:[%s3770 + $0xc] sm:$0xf]
  %v3775 = vld [vmem:[%s3770 + $0x10] sm:$0xf]
  %v3776 = vld [vmem:[%s3770 + $0x14] sm:$0xf]
  %v3777 = vld [vmem:[%s3770 + $0x18] sm:$0xf]
  %v3778 = vld [vmem:[%s3770 + $0x1c] sm:$0xf]
  %v3779 = vld [vmem:[%s3770 + $0x20] sm:$0xf]
  %v3780 = vld [vmem:[%s3770 + $0x24] sm:$0xf]
  %v3781 = vld [vmem:[%s3770 + $0x28] sm:$0xf]
  %v3782 = vld [vmem:[%s3770 + $0x2c] sm:$0xf]
  %v3783 = vld [vmem:[%s3770 + $0x30] sm:$0xf]
  %v3784 = vld [vmem:[%s3770 + $0x34] sm:$0xf]
  %v3785 = vld [vmem:[%s3770 + $0x38] sm:$0xf]
  %v3786 = vld [vmem:[%s3770 + $0x3c] sm:$0xf]
  %v3787 = vperm.slane %v85, 7
  %v3851 = vunpack.c.l.b16 %v3707
  %v3852 = vunpack.c.l.b16 %v3708
  %v3853 = vunpack.c.l.b16 %v3709
  %v3854 = vunpack.c.l.b16 %v3710
  %v3855 = vunpack.c.l.b16 %v3711
  %v3856 = vunpack.c.l.b16 %v3712
  %v3857 = vunpack.c.l.b16 %v3713
  %v3858 = vunpack.c.l.b16 %v3714
  %v3859 = vunpack.c.l.b16 %v3715
  %v3860 = vunpack.c.l.b16 %v3716
  %v3861 = vunpack.c.l.b16 %v3717
  %v3862 = vunpack.c.l.b16 %v3718
  %v3863 = vunpack.c.l.b16 %v3719
  %v3864 = vunpack.c.l.b16 %v3720
  %v3865 = vunpack.c.l.b16 %v3721
  %v3866 = vunpack.c.l.b16 %v3722
  %v3867 = vunpack.c.l.b16 %v3723
  %v3868 = vunpack.c.l.b16 %v3724
  %v3869 = vunpack.c.l.b16 %v3725
  %v3870 = vunpack.c.l.b16 %v3726
  %v3871 = vunpack.c.l.b16 %v3727
  %v3872 = vunpack.c.l.b16 %v3728
  %v3873 = vunpack.c.l.b16 %v3729
  %v3874 = vunpack.c.l.b16 %v3730
  %v3875 = vunpack.c.l.b16 %v3731
  %v3876 = vunpack.c.l.b16 %v3732
  %v3877 = vunpack.c.l.b16 %v3733
  %v3878 = vunpack.c.l.b16 %v3734
  %v3879 = vunpack.c.l.b16 %v3735
  %v3880 = vunpack.c.l.b16 %v3736
  %v3881 = vunpack.c.l.b16 %v3737
  %v3882 = vunpack.c.l.b16 %v3738
  %v3883 = vunpack.c.l.b16 %v3739
  %v3884 = vunpack.c.l.b16 %v3740
  %v3885 = vunpack.c.l.b16 %v3741
  %v3886 = vunpack.c.l.b16 %v3742
  %v3887 = vunpack.c.l.b16 %v3743
  %v3888 = vunpack.c.l.b16 %v3744
  %v3889 = vunpack.c.l.b16 %v3745
  %v3890 = vunpack.c.l.b16 %v3746
  %v3891 = vunpack.c.l.b16 %v3747
  %v3892 = vunpack.c.l.b16 %v3748
  %v3893 = vunpack.c.l.b16 %v3749
  %v3894 = vunpack.c.l.b16 %v3750
  %v3895 = vunpack.c.l.b16 %v3751
  %v3896 = vunpack.c.l.b16 %v3752
  %v3897 = vunpack.c.l.b16 %v3753
  %v3898 = vunpack.c.l.b16 %v3754
  %v3899 = vunpack.c.l.b16 %v3755
  %v3900 = vunpack.c.l.b16 %v3756
  %v3901 = vunpack.c.l.b16 %v3757
  %v3902 = vunpack.c.l.b16 %v3758
  %v3903 = vunpack.c.l.b16 %v3759
  %v3904 = vunpack.c.l.b16 %v3760
  %v3905 = vunpack.c.l.b16 %v3761
  %v3906 = vunpack.c.l.b16 %v3762
  %v3907 = vunpack.c.l.b16 %v3763
  %v3908 = vunpack.c.l.b16 %v3764
  %v3909 = vunpack.c.l.b16 %v3765
  %v3910 = vunpack.c.l.b16 %v3766
  %v3911 = vunpack.c.l.b16 %v3767
  %v3912 = vunpack.c.l.b16 %v3768
  %v3913 = vunpack.c.l.b16 %v3769
  %v3914 = vpack.c.b16 %v3852, %v3851
  %v3915 = vpack.c.b16 %v3854, %v3853
  %v3916 = vpack.c.b16 %v3856, %v3855
  %v3917 = vpack.c.b16 %v3858, %v3857
  %v3918 = vpack.c.b16 %v3860, %v3859
  %v3919 = vpack.c.b16 %v3862, %v3861
  %v3920 = vpack.c.b16 %v3864, %v3863
  %v3921 = vpack.c.b16 %v3866, %v3865
  %v3922 = vpack.c.b16 %v3868, %v3867
  %v3923 = vpack.c.b16 %v3870, %v3869
  %v3924 = vpack.c.b16 %v3872, %v3871
  %v3925 = vpack.c.b16 %v3874, %v3873
  %v3926 = vpack.c.b16 %v3876, %v3875
  %v3927 = vpack.c.b16 %v3878, %v3877
  %v3928 = vpack.c.b16 %v3880, %v3879
  %v3929 = vpack.c.b16 %v3882, %v3881
  %v3930 = vpack.c.b16 %v3884, %v3883
  %v3931 = vpack.c.b16 %v3886, %v3885
  %v3932 = vpack.c.b16 %v3888, %v3887
  %v3933 = vpack.c.b16 %v3890, %v3889
  %v3934 = vpack.c.b16 %v3892, %v3891
  %v3935 = vpack.c.b16 %v3894, %v3893
  %v3936 = vpack.c.b16 %v3896, %v3895
  %v3937 = vpack.c.b16 %v3898, %v3897
  %v3938 = vpack.c.b16 %v3900, %v3899
  %v3939 = vpack.c.b16 %v3902, %v3901
  %v3940 = vpack.c.b16 %v3904, %v3903
  %v3941 = vpack.c.b16 %v3906, %v3905
  %v3942 = vpack.c.b16 %v3908, %v3907
  %v3943 = vpack.c.b16 %v3910, %v3909
  %v3944 = vpack.c.b16 %v3912, %v3911
  %v3945 = vpack.c.b16 %v3913, %v3913
  %v3994 = vunpack.c.l.b16 %v3771
  %v3995 = vunpack.c.l.b16 %v3772
  %v3996 = vunpack.c.l.b16 %v3773
  %v3997 = vunpack.c.l.b16 %v3774
  %v3998 = vunpack.c.l.b16 %v3775
  %v3999 = vunpack.c.l.b16 %v3776
  %v4000 = vunpack.c.l.b16 %v3777
  %v4001 = vunpack.c.l.b16 %v3778
  %v4002 = vunpack.c.l.b16 %v3779
  %v4003 = vunpack.c.l.b16 %v3780
  %v4004 = vunpack.c.l.b16 %v3781
  %v4005 = vunpack.c.l.b16 %v3782
  %v4006 = vunpack.c.l.b16 %v3783
  %v4007 = vunpack.c.l.b16 %v3784
  %v4008 = vunpack.c.l.b16 %v3785
  %v4009 = vunpack.c.l.b16 %v3786
  %v4010 = vpack.c.b16 %v3995, %v3994
  %v4011 = vpack.c.b16 %v3997, %v3996
  %v4012 = vpack.c.b16 %v3999, %v3998
  %v4013 = vpack.c.b16 %v4001, %v4000
  %v4014 = vpack.c.b16 %v4003, %v4002
  %v4015 = vpack.c.b16 %v4005, %v4004
  %v4016 = vpack.c.b16 %v4007, %v4006
  %v4017 = vpack.c.b16 %v4009, %v4008
  %4026 = vmatpush.bf16.msra.mxu0 %v4017
  %4027 = vmatpush.bf16.msra.mxu0 %v4016
  %4028 = vmatpush.bf16.msra.mxu0 %v4015
  %4029 = vmatpush.bf16.msra.mxu0 %v4014
  %4030 = vmatpush.bf16.msra.mxu0 %v4013
  %4031 = vmatpush.bf16.msra.mxu0 %v4012
  %4032 = vmatpush.bf16.msra.mxu0 %v4011
  %4033 = vmatpush.bf16.msra.mxu0 %v4010
  %4034 = vmatmul.bf16.gmra.mxu0 %v3914
  %v4035 = vpop.f32.mrf.mxu0
  %v4036 = vadd.f32 %v3787, %v4035
  %v4037 = vpop.f32.mrf.mxu0
  %v4038 = vadd.f32 %v3787, %v4037
  %4039 = vmatmul.bf16.gmra.mxu0 %v3915
  %v4040 = vpop.f32.mrf.mxu0
  %v4041 = vadd.f32 %v3787, %v4040
  %v4042 = vpop.f32.mrf.mxu0
  %v4043 = vadd.f32 %v3787, %v4042
  %4044 = vmatmul.bf16.gmra.mxu0 %v3916
  %v4045 = vpop.f32.mrf.mxu0
  %v4046 = vadd.f32 %v3787, %v4045
  %v4047 = vpop.f32.mrf.mxu0
  %v4048 = vadd.f32 %v3787, %v4047
  %4049 = vmatmul.bf16.gmra.mxu0 %v3917
  %v4050 = vpop.f32.mrf.mxu0
  %v4051 = vadd.f32 %v3787, %v4050
  %v4052 = vpop.f32.mrf.mxu0
  %v4053 = vadd.f32 %v3787, %v4052
  %4054 = vmatmul.bf16.gmra.mxu0 %v3918
  %v4055 = vpop.f32.mrf.mxu0
  %v4056 = vadd.f32 %v3787, %v4055
  %v4057 = vpop.f32.mrf.mxu0
  %v4058 = vadd.f32 %v3787, %v4057
  %4059 = vmatmul.bf16.gmra.mxu0 %v3919
  %v4060 = vpop.f32.mrf.mxu0
  %v4061 = vadd.f32 %v3787, %v4060
  %v4062 = vpop.f32.mrf.mxu0
  %v4063 = vadd.f32 %v3787, %v4062
  %4064 = vmatmul.bf16.gmra.mxu0 %v3920
  %v4065 = vpop.f32.mrf.mxu0
  %v4066 = vadd.f32 %v3787, %v4065
  %v4067 = vpop.f32.mrf.mxu0
  %v4068 = vadd.f32 %v3787, %v4067
  %4069 = vmatmul.bf16.gmra.mxu0 %v3921
  %v4070 = vpop.f32.mrf.mxu0
  %v4071 = vadd.f32 %v3787, %v4070
  %v4072 = vpop.f32.mrf.mxu0
  %v4073 = vadd.f32 %v3787, %v4072
  %4074 = vmatmul.bf16.gmra.mxu0 %v3922
  %v4075 = vpop.f32.mrf.mxu0
  %v4076 = vadd.f32 %v3787, %v4075
  %v4077 = vpop.f32.mrf.mxu0
  %v4078 = vadd.f32 %v3787, %v4077
  %4079 = vmatmul.bf16.gmra.mxu0 %v3923
  %v4080 = vpop.f32.mrf.mxu0
  %v4081 = vadd.f32 %v3787, %v4080
  %v4082 = vpop.f32.mrf.mxu0
  %v4083 = vadd.f32 %v3787, %v4082
  %4084 = vmatmul.bf16.gmra.mxu0 %v3924
  %v4085 = vpop.f32.mrf.mxu0
  %v4086 = vadd.f32 %v3787, %v4085
  %v4087 = vpop.f32.mrf.mxu0
  %v4088 = vadd.f32 %v3787, %v4087
  %4089 = vmatmul.bf16.gmra.mxu0 %v3925
  %v4090 = vpop.f32.mrf.mxu0
  %v4091 = vadd.f32 %v3787, %v4090
  %v4092 = vpop.f32.mrf.mxu0
  %v4093 = vadd.f32 %v3787, %v4092
  %4094 = vmatmul.bf16.gmra.mxu0 %v3926
  %v4095 = vpop.f32.mrf.mxu0
  %v4096 = vadd.f32 %v3787, %v4095
  %v4097 = vpop.f32.mrf.mxu0
  %v4098 = vadd.f32 %v3787, %v4097
  %4099 = vmatmul.bf16.gmra.mxu0 %v3927
  %v4100 = vpop.f32.mrf.mxu0
  %v4101 = vadd.f32 %v3787, %v4100
  %v4102 = vpop.f32.mrf.mxu0
  %v4103 = vadd.f32 %v3787, %v4102
  %4104 = vmatmul.bf16.gmra.mxu0 %v3928
  %v4105 = vpop.f32.mrf.mxu0
  %v4106 = vadd.f32 %v3787, %v4105
  %v4107 = vpop.f32.mrf.mxu0
  %v4108 = vadd.f32 %v3787, %v4107
  %4109 = vmatmul.bf16.gmra.mxu0 %v3929
  %v4110 = vpop.f32.mrf.mxu0
  %v4111 = vadd.f32 %v3787, %v4110
  %v4112 = vpop.f32.mrf.mxu0
  %v4113 = vadd.f32 %v3787, %v4112
  %4114 = vmatmul.bf16.gmra.mxu0 %v3930
  %v4115 = vpop.f32.mrf.mxu0
  %v4116 = vadd.f32 %v3787, %v4115
  %v4117 = vpop.f32.mrf.mxu0
  %v4118 = vadd.f32 %v3787, %v4117
  %4119 = vmatmul.bf16.gmra.mxu0 %v3931
  %v4120 = vpop.f32.mrf.mxu0
  %v4121 = vadd.f32 %v3787, %v4120
  %v4122 = vpop.f32.mrf.mxu0
  %v4123 = vadd.f32 %v3787, %v4122
  %4124 = vmatmul.bf16.gmra.mxu0 %v3932
  %v4125 = vpop.f32.mrf.mxu0
  %v4126 = vadd.f32 %v3787, %v4125
  %v4127 = vpop.f32.mrf.mxu0
  %v4128 = vadd.f32 %v3787, %v4127
  %4129 = vmatmul.bf16.gmra.mxu0 %v3933
  %v4130 = vpop.f32.mrf.mxu0
  %v4131 = vadd.f32 %v3787, %v4130
  %v4132 = vpop.f32.mrf.mxu0
  %v4133 = vadd.f32 %v3787, %v4132
  %4134 = vmatmul.bf16.gmra.mxu0 %v3934
  %v4135 = vpop.f32.mrf.mxu0
  %v4136 = vadd.f32 %v3787, %v4135
  %v4137 = vpop.f32.mrf.mxu0
  %v4138 = vadd.f32 %v3787, %v4137
  %4139 = vmatmul.bf16.gmra.mxu0 %v3935
  %v4140 = vpop.f32.mrf.mxu0
  %v4141 = vadd.f32 %v3787, %v4140
  %v4142 = vpop.f32.mrf.mxu0
  %v4143 = vadd.f32 %v3787, %v4142
  %4144 = vmatmul.bf16.gmra.mxu0 %v3936
  %v4145 = vpop.f32.mrf.mxu0
  %v4146 = vadd.f32 %v3787, %v4145
  %v4147 = vpop.f32.mrf.mxu0
  %v4148 = vadd.f32 %v3787, %v4147
  %4149 = vmatmul.bf16.gmra.mxu0 %v3937
  %v4150 = vpop.f32.mrf.mxu0
  %v4151 = vadd.f32 %v3787, %v4150
  %v4152 = vpop.f32.mrf.mxu0
  %v4153 = vadd.f32 %v3787, %v4152
  %4154 = vmatmul.bf16.gmra.mxu0 %v3938
  %v4155 = vpop.f32.mrf.mxu0
  %v4156 = vadd.f32 %v3787, %v4155
  %v4157 = vpop.f32.mrf.mxu0
  %v4158 = vadd.f32 %v3787, %v4157
  %4159 = vmatmul.bf16.gmra.mxu0 %v3939
  %v4160 = vpop.f32.mrf.mxu0
  %v4161 = vadd.f32 %v3787, %v4160
  %v4162 = vpop.f32.mrf.mxu0
  %v4163 = vadd.f32 %v3787, %v4162
  %4164 = vmatmul.bf16.gmra.mxu0 %v3940
  %v4165 = vpop.f32.mrf.mxu0
  %v4166 = vadd.f32 %v3787, %v4165
  %v4167 = vpop.f32.mrf.mxu0
  %v4168 = vadd.f32 %v3787, %v4167
  %4169 = vmatmul.bf16.gmra.mxu0 %v3941
  %v4170 = vpop.f32.mrf.mxu0
  %v4171 = vadd.f32 %v3787, %v4170
  %v4172 = vpop.f32.mrf.mxu0
  %v4173 = vadd.f32 %v3787, %v4172
  %4174 = vmatmul.bf16.gmra.mxu0 %v3942
  %v4175 = vpop.f32.mrf.mxu0
  %v4176 = vadd.f32 %v3787, %v4175
  %v4177 = vpop.f32.mrf.mxu0
  %v4178 = vadd.f32 %v3787, %v4177
  %4179 = vmatmul.bf16.gmra.mxu0 %v3943
  %v4180 = vpop.f32.mrf.mxu0
  %v4181 = vadd.f32 %v3787, %v4180
  %v4182 = vpop.f32.mrf.mxu0
  %v4183 = vadd.f32 %v3787, %v4182
  %4184 = vmatmul.bf16.gmra.mxu0 %v3944
  %v4185 = vpop.f32.mrf.mxu0
  %v4186 = vadd.f32 %v3787, %v4185
  %v4187 = vpop.f32.mrf.mxu0
  %v4188 = vadd.f32 %v3787, %v4187
  %4189 = vmatmul.bf16.gmra.mxu0 %v3945
  %v4190 = vpop.f32.mrf.mxu0
  %v4191 = vadd.f32 %v3787, %v4190
  %v4192 = vpop.f32.mrf.mxu0
  %4193 = vdwg.mxu0
  %v4194 = vpack.c.bf16 %v4038, %v4036
  %v4195 = vpack.c.bf16 %v4043, %v4041
  %v4196 = vpack.c.bf16 %v4048, %v4046
  %v4197 = vpack.c.bf16 %v4053, %v4051
  %v4198 = vpack.c.bf16 %v4058, %v4056
  %v4199 = vpack.c.bf16 %v4063, %v4061
  %v4200 = vpack.c.bf16 %v4068, %v4066
  %v4201 = vpack.c.bf16 %v4073, %v4071
  %v4202 = vpack.c.bf16 %v4078, %v4076
  %v4203 = vpack.c.bf16 %v4083, %v4081
  %v4204 = vpack.c.bf16 %v4088, %v4086
  %v4205 = vpack.c.bf16 %v4093, %v4091
  %v4206 = vpack.c.bf16 %v4098, %v4096
  %v4207 = vpack.c.bf16 %v4103, %v4101
  %v4208 = vpack.c.bf16 %v4108, %v4106
  %v4209 = vpack.c.bf16 %v4113, %v4111
  %v4210 = vpack.c.bf16 %v4118, %v4116
  %v4211 = vpack.c.bf16 %v4123, %v4121
  %v4212 = vpack.c.bf16 %v4128, %v4126
  %v4213 = vpack.c.bf16 %v4133, %v4131
  %v4214 = vpack.c.bf16 %v4138, %v4136
  %v4215 = vpack.c.bf16 %v4143, %v4141
  %v4216 = vpack.c.bf16 %v4148, %v4146
  %v4217 = vpack.c.bf16 %v4153, %v4151
  %v4218 = vpack.c.bf16 %v4158, %v4156
  %v4219 = vpack.c.bf16 %v4163, %v4161
  %v4220 = vpack.c.bf16 %v4168, %v4166
  %v4221 = vpack.c.bf16 %v4173, %v4171
  %v4222 = vpack.c.bf16 %v4178, %v4176
  %v4223 = vpack.c.bf16 %v4183, %v4181
  %v4224 = vpack.c.bf16 %v4188, %v4186
  %v4225 = vpack.c.bf16 %v4191, %v4191
  %v4226 = vunpack.c.l.bf16 %v3707
  %v4227 = vunpack.c.l.bf16 %v3708
  %v4228 = vunpack.c.l.bf16 %v3709
  %v4229 = vunpack.c.l.bf16 %v3710
  %v4230 = vunpack.c.l.bf16 %v3711
  %v4231 = vunpack.c.l.bf16 %v3712
  %v4232 = vunpack.c.l.bf16 %v3713
  %v4233 = vunpack.c.l.bf16 %v3714
  %v4234 = vunpack.c.l.bf16 %v3715
  %v4235 = vunpack.c.l.bf16 %v3716
  %v4236 = vunpack.c.l.bf16 %v3717
  %v4237 = vunpack.c.l.bf16 %v3718
  %v4238 = vunpack.c.l.bf16 %v3719
  %v4239 = vunpack.c.l.bf16 %v3720
  %v4240 = vunpack.c.l.bf16 %v3721
  %v4241 = vunpack.c.l.bf16 %v3722
  %v4242 = vunpack.c.l.bf16 %v3723
  %v4243 = vunpack.c.l.bf16 %v3724
  %v4244 = vunpack.c.l.bf16 %v3725
  %v4245 = vunpack.c.l.bf16 %v3726
  %v4246 = vunpack.c.l.bf16 %v3727
  %v4247 = vunpack.c.l.bf16 %v3728
  %v4248 = vunpack.c.l.bf16 %v3729
  %v4249 = vunpack.c.l.bf16 %v3730
  %v4250 = vunpack.c.l.bf16 %v3731
  %v4251 = vunpack.c.l.bf16 %v3732
  %v4252 = vunpack.c.l.bf16 %v3733
  %v4253 = vunpack.c.l.bf16 %v3734
  %v4254 = vunpack.c.l.bf16 %v3735
  %v4255 = vunpack.c.l.bf16 %v3736
  %v4256 = vunpack.c.l.bf16 %v3737
  %v4257 = vunpack.c.l.bf16 %v3738
  %v4258 = vunpack.c.l.bf16 %v3739
  %v4259 = vunpack.c.l.bf16 %v3740
  %v4260 = vunpack.c.l.bf16 %v3741
  %v4261 = vunpack.c.l.bf16 %v3742
  %v4262 = vunpack.c.l.bf16 %v3743
  %v4263 = vunpack.c.l.bf16 %v3744
  %v4264 = vunpack.c.l.bf16 %v3745
  %v4265 = vunpack.c.l.bf16 %v3746
  %v4266 = vunpack.c.l.bf16 %v3747
  %v4267 = vunpack.c.l.bf16 %v3748
  %v4268 = vunpack.c.l.bf16 %v3749
  %v4269 = vunpack.c.l.bf16 %v3750
  %v4270 = vunpack.c.l.bf16 %v3751
  %v4271 = vunpack.c.l.bf16 %v3752
  %v4272 = vunpack.c.l.bf16 %v3753
  %v4273 = vunpack.c.l.bf16 %v3754
  %v4274 = vunpack.c.l.bf16 %v3755
  %v4275 = vunpack.c.l.bf16 %v3756
  %v4276 = vunpack.c.l.bf16 %v3757
  %v4277 = vunpack.c.l.bf16 %v3758
  %v4278 = vunpack.c.l.bf16 %v3759
  %v4279 = vunpack.c.l.bf16 %v3760
  %v4280 = vunpack.c.l.bf16 %v3761
  %v4281 = vunpack.c.l.bf16 %v3762
  %v4282 = vunpack.c.l.bf16 %v3763
  %v4283 = vunpack.c.l.bf16 %v3764
  %v4284 = vunpack.c.l.bf16 %v3765
  %v4285 = vunpack.c.l.bf16 %v3766
  %v4286 = vunpack.c.l.bf16 %v3767
  %v4287 = vunpack.c.l.bf16 %v3768
  %v4288 = vunpack.c.l.bf16 %v3769
  %v4289 = vperm.slane %v84, 0
  %v4290 = vmul.f32 %v4226, %v4289
  %v4291 = vmul.f32 %v4227, %v4289
  %v4292 = vmul.f32 %v4228, %v4289
  %v4293 = vmul.f32 %v4229, %v4289
  %v4294 = vmul.f32 %v4230, %v4289
  %v4295 = vmul.f32 %v4231, %v4289
  %v4296 = vmul.f32 %v4232, %v4289
  %v4297 = vmul.f32 %v4233, %v4289
  %v4298 = vmul.f32 %v4234, %v4289
  %v4299 = vmul.f32 %v4235, %v4289
  %v4300 = vmul.f32 %v4236, %v4289
  %v4301 = vmul.f32 %v4237, %v4289
  %v4302 = vmul.f32 %v4238, %v4289
  %v4303 = vmul.f32 %v4239, %v4289
  %v4304 = vmul.f32 %v4240, %v4289
  %v4305 = vmul.f32 %v4241, %v4289
  %v4306 = vmul.f32 %v4242, %v4289
  %v4307 = vmul.f32 %v4243, %v4289
  %v4308 = vmul.f32 %v4244, %v4289
  %v4309 = vmul.f32 %v4245, %v4289
  %v4310 = vmul.f32 %v4246, %v4289
  %v4311 = vmul.f32 %v4247, %v4289
  %v4312 = vmul.f32 %v4248, %v4289
  %v4313 = vmul.f32 %v4249, %v4289
  %v4314 = vmul.f32 %v4250, %v4289
  %v4315 = vmul.f32 %v4251, %v4289
  %v4316 = vmul.f32 %v4252, %v4289
  %v4317 = vmul.f32 %v4253, %v4289
  %v4318 = vmul.f32 %v4254, %v4289
  %v4319 = vmul.f32 %v4255, %v4289
  %v4320 = vmul.f32 %v4256, %v4289
  %v4321 = vmul.f32 %v4257, %v4289
  %v4322 = vmul.f32 %v4258, %v4289
  %v4323 = vmul.f32 %v4259, %v4289
  %v4324 = vmul.f32 %v4260, %v4289
  %v4325 = vmul.f32 %v4261, %v4289
  %v4326 = vmul.f32 %v4262, %v4289
  %v4327 = vmul.f32 %v4263, %v4289
  %v4328 = vmul.f32 %v4264, %v4289
  %v4329 = vmul.f32 %v4265, %v4289
  %v4330 = vmul.f32 %v4266, %v4289
  %v4331 = vmul.f32 %v4267, %v4289
  %v4332 = vmul.f32 %v4268, %v4289
  %v4333 = vmul.f32 %v4269, %v4289
  %v4334 = vmul.f32 %v4270, %v4289
  %v4335 = vmul.f32 %v4271, %v4289
  %v4336 = vmul.f32 %v4272, %v4289
  %v4337 = vmul.f32 %v4273, %v4289
  %v4338 = vmul.f32 %v4274, %v4289
  %v4339 = vmul.f32 %v4275, %v4289
  %v4340 = vmul.f32 %v4276, %v4289
  %v4341 = vmul.f32 %v4277, %v4289
  %v4342 = vmul.f32 %v4278, %v4289
  %v4343 = vmul.f32 %v4279, %v4289
  %v4344 = vmul.f32 %v4280, %v4289
  %v4345 = vmul.f32 %v4281, %v4289
  %v4346 = vmul.f32 %v4282, %v4289
  %v4347 = vmul.f32 %v4283, %v4289
  %v4348 = vmul.f32 %v4284, %v4289
  %v4349 = vmul.f32 %v4285, %v4289
  %v4350 = vmul.f32 %v4286, %v4289
  %v4351 = vmul.f32 %v4287, %v4289
  %v4352 = vmul.f32 %v4288, %v4289
  %4353 = vadd.xlane.f32.xlu0 %v4290
  %v4354 = vpop.xlane.xlu0 %4353
  %4355 = vadd.xlane.f32.xlu0 %v4291
  %v4356 = vpop.xlane.xlu0 %4355
  %4357 = vadd.xlane.f32.xlu0 %v4292
  %v4358 = vpop.xlane.xlu0 %4357
  %4359 = vadd.xlane.f32.xlu0 %v4293
  %v4360 = vpop.xlane.xlu0 %4359
  %4361 = vadd.xlane.f32.xlu0 %v4294
  %v4362 = vpop.xlane.xlu0 %4361
  %4363 = vadd.xlane.f32.xlu0 %v4295
  %v4364 = vpop.xlane.xlu0 %4363
  %4365 = vadd.xlane.f32.xlu0 %v4296
  %v4366 = vpop.xlane.xlu0 %4365
  %4367 = vadd.xlane.f32.xlu0 %v4297
  %v4368 = vpop.xlane.xlu0 %4367
  %4369 = vadd.xlane.f32.xlu0 %v4298
  %v4370 = vpop.xlane.xlu0 %4369
  %4371 = vadd.xlane.f32.xlu0 %v4299
  %v4372 = vpop.xlane.xlu0 %4371
  %4373 = vadd.xlane.f32.xlu0 %v4300
  %v4374 = vpop.xlane.xlu0 %4373
  %4375 = vadd.xlane.f32.xlu0 %v4301
  %v4376 = vpop.xlane.xlu0 %4375
  %4377 = vadd.xlane.f32.xlu0 %v4302
  %v4378 = vpop.xlane.xlu0 %4377
  %4379 = vadd.xlane.f32.xlu0 %v4303
  %v4380 = vpop.xlane.xlu0 %4379
  %4381 = vadd.xlane.f32.xlu0 %v4304
  %v4382 = vpop.xlane.xlu0 %4381
  %4383 = vadd.xlane.f32.xlu0 %v4305
  %v4384 = vpop.xlane.xlu0 %4383
  %4385 = vadd.xlane.f32.xlu0 %v4306
  %v4386 = vpop.xlane.xlu0 %4385
  %4387 = vadd.xlane.f32.xlu0 %v4307
  %v4388 = vpop.xlane.xlu0 %4387
  %4389 = vadd.xlane.f32.xlu0 %v4308
  %v4390 = vpop.xlane.xlu0 %4389
  %4391 = vadd.xlane.f32.xlu0 %v4309
  %v4392 = vpop.xlane.xlu0 %4391
  %4393 = vadd.xlane.f32.xlu0 %v4310
  %v4394 = vpop.xlane.xlu0 %4393
  %4395 = vadd.xlane.f32.xlu0 %v4311
  %v4396 = vpop.xlane.xlu0 %4395
  %4397 = vadd.xlane.f32.xlu0 %v4312
  %v4398 = vpop.xlane.xlu0 %4397
  %4399 = vadd.xlane.f32.xlu0 %v4313
  %v4400 = vpop.xlane.xlu0 %4399
  %4401 = vadd.xlane.f32.xlu0 %v4314
  %v4402 = vpop.xlane.xlu0 %4401
  %4403 = vadd.xlane.f32.xlu0 %v4315
  %v4404 = vpop.xlane.xlu0 %4403
  %4405 = vadd.xlane.f32.xlu0 %v4316
  %v4406 = vpop.xlane.xlu0 %4405
  %4407 = vadd.xlane.f32.xlu0 %v4317
  %v4408 = vpop.xlane.xlu0 %4407
  %4409 = vadd.xlane.f32.xlu0 %v4318
  %v4410 = vpop.xlane.xlu0 %4409
  %4411 = vadd.xlane.f32.xlu0 %v4319
  %v4412 = vpop.xlane.xlu0 %4411
  %4413 = vadd.xlane.f32.xlu0 %v4320
  %v4414 = vpop.xlane.xlu0 %4413
  %4415 = vadd.xlane.f32.xlu0 %v4321
  %v4416 = vpop.xlane.xlu0 %4415
  %4417 = vadd.xlane.f32.xlu0 %v4322
  %v4418 = vpop.xlane.xlu0 %4417
  %4419 = vadd.xlane.f32.xlu0 %v4323
  %v4420 = vpop.xlane.xlu0 %4419
  %4421 = vadd.xlane.f32.xlu0 %v4324
  %v4422 = vpop.xlane.xlu0 %4421
  %4423 = vadd.xlane.f32.xlu0 %v4325
  %v4424 = vpop.xlane.xlu0 %4423
  %4425 = vadd.xlane.f32.xlu0 %v4326
  %v4426 = vpop.xlane.xlu0 %4425
  %4427 = vadd.xlane.f32.xlu0 %v4327
  %v4428 = vpop.xlane.xlu0 %4427
  %4429 = vadd.xlane.f32.xlu0 %v4328
  %v4430 = vpop.xlane.xlu0 %4429
  %4431 = vadd.xlane.f32.xlu0 %v4329
  %v4432 = vpop.xlane.xlu0 %4431
  %4433 = vadd.xlane.f32.xlu0 %v4330
  %v4434 = vpop.xlane.xlu0 %4433
  %4435 = vadd.xlane.f32.xlu0 %v4331
  %v4436 = vpop.xlane.xlu0 %4435
  %4437 = vadd.xlane.f32.xlu0 %v4332
  %v4438 = vpop.xlane.xlu0 %4437
  %4439 = vadd.xlane.f32.xlu0 %v4333
  %v4440 = vpop.xlane.xlu0 %4439
  %4441 = vadd.xlane.f32.xlu0 %v4334
  %v4442 = vpop.xlane.xlu0 %4441
  %4443 = vadd.xlane.f32.xlu0 %v4335
  %v4444 = vpop.xlane.xlu0 %4443
  %4445 = vadd.xlane.f32.xlu0 %v4336
  %v4446 = vpop.xlane.xlu0 %4445
  %4447 = vadd.xlane.f32.xlu0 %v4337
  %v4448 = vpop.xlane.xlu0 %4447
  %4449 = vadd.xlane.f32.xlu0 %v4338
  %v4450 = vpop.xlane.xlu0 %4449
  %4451 = vadd.xlane.f32.xlu0 %v4339
  %v4452 = vpop.xlane.xlu0 %4451
  %4453 = vadd.xlane.f32.xlu0 %v4340
  %v4454 = vpop.xlane.xlu0 %4453
  %4455 = vadd.xlane.f32.xlu0 %v4341
  %v4456 = vpop.xlane.xlu0 %4455
  %4457 = vadd.xlane.f32.xlu0 %v4342
  %v4458 = vpop.xlane.xlu0 %4457
  %4459 = vadd.xlane.f32.xlu0 %v4343
  %v4460 = vpop.xlane.xlu0 %4459
  %4461 = vadd.xlane.f32.xlu0 %v4344
  %v4462 = vpop.xlane.xlu0 %4461
  %4463 = vadd.xlane.f32.xlu0 %v4345
  %v4464 = vpop.xlane.xlu0 %4463
  %4465 = vadd.xlane.f32.xlu0 %v4346
  %v4466 = vpop.xlane.xlu0 %4465
  %4467 = vadd.xlane.f32.xlu0 %v4347
  %v4468 = vpop.xlane.xlu0 %4467
  %4469 = vadd.xlane.f32.xlu0 %v4348
  %v4470 = vpop.xlane.xlu0 %4469
  %4471 = vadd.xlane.f32.xlu0 %v4349
  %v4472 = vpop.xlane.xlu0 %4471
  %4473 = vadd.xlane.f32.xlu0 %v4350
  %v4474 = vpop.xlane.xlu0 %4473
  %4475 = vadd.xlane.f32.xlu0 %v4351
  %v4476 = vpop.xlane.xlu0 %4475
  %4477 = vadd.xlane.f32.xlu0 %v4352
  %v4478 = vpop.xlane.xlu0 %4477
  %v4479 = vperm.slane %v86, 0
  %v4480 = vadd.f32 %v4354, %v4479
  %v4481 = vadd.f32 %v4356, %v4479
  %v4482 = vadd.f32 %v4358, %v4479
  %v4483 = vadd.f32 %v4360, %v4479
  %v4484 = vadd.f32 %v4362, %v4479
  %v4485 = vadd.f32 %v4364, %v4479
  %v4486 = vadd.f32 %v4366, %v4479
  %v4487 = vadd.f32 %v4368, %v4479
  %v4488 = vadd.f32 %v4370, %v4479
  %v4489 = vadd.f32 %v4372, %v4479
  %v4490 = vadd.f32 %v4374, %v4479
  %v4491 = vadd.f32 %v4376, %v4479
  %v4492 = vadd.f32 %v4378, %v4479
  %v4493 = vadd.f32 %v4380, %v4479
  %v4494 = vadd.f32 %v4382, %v4479
  %v4495 = vadd.f32 %v4384, %v4479
  %v4496 = vadd.f32 %v4386, %v4479
  %v4497 = vadd.f32 %v4388, %v4479
  %v4498 = vadd.f32 %v4390, %v4479
  %v4499 = vadd.f32 %v4392, %v4479
  %v4500 = vadd.f32 %v4394, %v4479
  %v4501 = vadd.f32 %v4396, %v4479
  %v4502 = vadd.f32 %v4398, %v4479
  %v4503 = vadd.f32 %v4400, %v4479
  %v4504 = vadd.f32 %v4402, %v4479
  %v4505 = vadd.f32 %v4404, %v4479
  %v4506 = vadd.f32 %v4406, %v4479
  %v4507 = vadd.f32 %v4408, %v4479
  %v4508 = vadd.f32 %v4410, %v4479
  %v4509 = vadd.f32 %v4412, %v4479
  %v4510 = vadd.f32 %v4414, %v4479
  %v4511 = vadd.f32 %v4416, %v4479
  %v4512 = vadd.f32 %v4418, %v4479
  %v4513 = vadd.f32 %v4420, %v4479
  %v4514 = vadd.f32 %v4422, %v4479
  %v4515 = vadd.f32 %v4424, %v4479
  %v4516 = vadd.f32 %v4426, %v4479
  %v4517 = vadd.f32 %v4428, %v4479
  %v4518 = vadd.f32 %v4430, %v4479
  %v4519 = vadd.f32 %v4432, %v4479
  %v4520 = vadd.f32 %v4434, %v4479
  %v4521 = vadd.f32 %v4436, %v4479
  %v4522 = vadd.f32 %v4438, %v4479
  %v4523 = vadd.f32 %v4440, %v4479
  %v4524 = vadd.f32 %v4442, %v4479
  %v4525 = vadd.f32 %v4444, %v4479
  %v4526 = vadd.f32 %v4446, %v4479
  %v4527 = vadd.f32 %v4448, %v4479
  %v4528 = vadd.f32 %v4450, %v4479
  %v4529 = vadd.f32 %v4452, %v4479
  %v4530 = vadd.f32 %v4454, %v4479
  %v4531 = vadd.f32 %v4456, %v4479
  %v4532 = vadd.f32 %v4458, %v4479
  %v4533 = vadd.f32 %v4460, %v4479
  %v4534 = vadd.f32 %v4462, %v4479
  %v4535 = vadd.f32 %v4464, %v4479
  %v4536 = vadd.f32 %v4466, %v4479
  %v4537 = vadd.f32 %v4468, %v4479
  %v4538 = vadd.f32 %v4470, %v4479
  %v4539 = vadd.f32 %v4472, %v4479
  %v4540 = vadd.f32 %v4474, %v4479
  %v4541 = vadd.f32 %v4476, %v4479
  %v4542 = vadd.f32 %v4478, %v4479
  %v4543 = vmax.f32 %v4480, 0.0
  %v4544 = vmax.f32 %v4481, 0.0
  %v4545 = vmax.f32 %v4482, 0.0
  %v4546 = vmax.f32 %v4483, 0.0
  %v4547 = vmax.f32 %v4484, 0.0
  %v4548 = vmax.f32 %v4485, 0.0
  %v4549 = vmax.f32 %v4486, 0.0
  %v4550 = vmax.f32 %v4487, 0.0
  %v4551 = vmax.f32 %v4488, 0.0
  %v4552 = vmax.f32 %v4489, 0.0
  %v4553 = vmax.f32 %v4490, 0.0
  %v4554 = vmax.f32 %v4491, 0.0
  %v4555 = vmax.f32 %v4492, 0.0
  %v4556 = vmax.f32 %v4493, 0.0
  %v4557 = vmax.f32 %v4494, 0.0
  %v4558 = vmax.f32 %v4495, 0.0
  %v4559 = vmax.f32 %v4496, 0.0
  %v4560 = vmax.f32 %v4497, 0.0
  %v4561 = vmax.f32 %v4498, 0.0
  %v4562 = vmax.f32 %v4499, 0.0
  %v4563 = vmax.f32 %v4500, 0.0
  %v4564 = vmax.f32 %v4501, 0.0
  %v4565 = vmax.f32 %v4502, 0.0
  %v4566 = vmax.f32 %v4503, 0.0
  %v4567 = vmax.f32 %v4504, 0.0
  %v4568 = vmax.f32 %v4505, 0.0
  %v4569 = vmax.f32 %v4506, 0.0
  %v4570 = vmax.f32 %v4507, 0.0
  %v4571 = vmax.f32 %v4508, 0.0
  %v4572 = vmax.f32 %v4509, 0.0
  %v4573 = vmax.f32 %v4510, 0.0
  %v4574 = vmax.f32 %v4511, 0.0
  %v4575 = vmax.f32 %v4512, 0.0
  %v4576 = vmax.f32 %v4513, 0.0
  %v4577 = vmax.f32 %v4514, 0.0
  %v4578 = vmax.f32 %v4515, 0.0
  %v4579 = vmax.f32 %v4516, 0.0
  %v4580 = vmax.f32 %v4517, 0.0
  %v4581 = vmax.f32 %v4518, 0.0
  %v4582 = vmax.f32 %v4519, 0.0
  %v4583 = vmax.f32 %v4520, 0.0
  %v4584 = vmax.f32 %v4521, 0.0
  %v4585 = vmax.f32 %v4522, 0.0
  %v4586 = vmax.f32 %v4523, 0.0
  %v4587 = vmax.f32 %v4524, 0.0
  %v4588 = vmax.f32 %v4525, 0.0
  %v4589 = vmax.f32 %v4526, 0.0
  %v4590 = vmax.f32 %v4527, 0.0
  %v4591 = vmax.f32 %v4528, 0.0
  %v4592 = vmax.f32 %v4529, 0.0
  %v4593 = vmax.f32 %v4530, 0.0
  %v4594 = vmax.f32 %v4531, 0.0
  %v4595 = vmax.f32 %v4532, 0.0
  %v4596 = vmax.f32 %v4533, 0.0
  %v4597 = vmax.f32 %v4534, 0.0
  %v4598 = vmax.f32 %v4535, 0.0
  %v4599 = vmax.f32 %v4536, 0.0
  %v4600 = vmax.f32 %v4537, 0.0
  %v4601 = vmax.f32 %v4538, 0.0
  %v4602 = vmax.f32 %v4539, 0.0
  %v4603 = vmax.f32 %v4540, 0.0
  %v4604 = vmax.f32 %v4541, 0.0
  %v4605 = vmax.f32 %v4542, 0.0
  %v4606 = vld [vmem:[%s3] sm:$0xf]
  %v4607 = vld [vmem:[%s3 + $0x4] sm:$0xf]
  %v4608 = vld [vmem:[%s3 + $0x8] sm:$0xf]
  %v4609 = vld [vmem:[%s3 + $0xc] sm:$0xf]
  %v4610 = vld [vmem:[%s3 + $0x10] sm:$0xf]
  %v4611 = vld [vmem:[%s3 + $0x14] sm:$0xf]
  %v4612 = vld [vmem:[%s3 + $0x18] sm:$0xf]
  %v4613 = vld [vmem:[%s3 + $0x1c] sm:$0xf]
  %v4614 = vld [vmem:[%s3 + $0x20] sm:$0xf]
  %v4615 = vld [vmem:[%s3 + $0x24] sm:$0xf]
  %v4616 = vld [vmem:[%s3 + $0x28] sm:$0xf]
  %v4617 = vld [vmem:[%s3 + $0x2c] sm:$0xf]
  %v4618 = vld [vmem:[%s3 + $0x30] sm:$0xf]
  %v4619 = vld [vmem:[%s3 + $0x34] sm:$0xf]
  %v4620 = vld [vmem:[%s3 + $0x38] sm:$0xf]
  %v4621 = vld [vmem:[%s3 + $0x3c] sm:$0xf]
  %v4622 = vperm.slane %v87, 0
  %v4639 = vunpack.c.l.b16 %v4606
  %v4640 = vunpack.c.l.b16 %v4607
  %v4641 = vunpack.c.l.b16 %v4608
  %v4642 = vunpack.c.l.b16 %v4609
  %v4643 = vunpack.c.l.b16 %v4610
  %v4644 = vunpack.c.l.b16 %v4611
  %v4645 = vunpack.c.l.b16 %v4612
  %v4646 = vunpack.c.l.b16 %v4613
  %v4647 = vunpack.c.l.b16 %v4614
  %v4648 = vunpack.c.l.b16 %v4615
  %v4649 = vunpack.c.l.b16 %v4616
  %v4650 = vunpack.c.l.b16 %v4617
  %v4651 = vunpack.c.l.b16 %v4618
  %v4652 = vunpack.c.l.b16 %v4619
  %v4653 = vunpack.c.l.b16 %v4620
  %v4654 = vunpack.c.l.b16 %v4621
  %v4655 = vpack.c.b16 %v4640, %v4639
  %v4656 = vpack.c.b16 %v4642, %v4641
  %v4657 = vpack.c.b16 %v4644, %v4643
  %v4658 = vpack.c.b16 %v4646, %v4645
  %v4659 = vpack.c.b16 %v4648, %v4647
  %v4660 = vpack.c.b16 %v4650, %v4649
  %v4661 = vpack.c.b16 %v4652, %v4651
  %v4662 = vpack.c.b16 %v4654, %v4653
  %4671 = vmatpush.bf16.msra.mxu0 %v4662
  %4672 = vmatpush.bf16.msra.mxu0 %v4661
  %4673 = vmatpush.bf16.msra.mxu0 %v4660
  %4674 = vmatpush.bf16.msra.mxu0 %v4659
  %4675 = vmatpush.bf16.msra.mxu0 %v4658
  %4676 = vmatpush.bf16.msra.mxu0 %v4657
  %4677 = vmatpush.bf16.msra.mxu0 %v4656
  %4678 = vmatpush.bf16.msra.mxu0 %v4655
  %4679 = vmatmul.bf16.gmra.mxu0 %v4194
  %v4680 = vpop.f32.mrf.mxu0
  %v4681 = vadd.f32 %v4622, %v4680
  %v4682 = vpop.f32.mrf.mxu0
  %v4683 = vadd.f32 %v4622, %v4682
  %4684 = vmatmul.bf16.gmra.mxu0 %v4195
  %v4685 = vpop.f32.mrf.mxu0
  %v4686 = vadd.f32 %v4622, %v4685
  %v4687 = vpop.f32.mrf.mxu0
  %v4688 = vadd.f32 %v4622, %v4687
  %4689 = vmatmul.bf16.gmra.mxu0 %v4196
  %v4690 = vpop.f32.mrf.mxu0
  %v4691 = vadd.f32 %v4622, %v4690
  %v4692 = vpop.f32.mrf.mxu0
  %v4693 = vadd.f32 %v4622, %v4692
  %4694 = vmatmul.bf16.gmra.mxu0 %v4197
  %v4695 = vpop.f32.mrf.mxu0
  %v4696 = vadd.f32 %v4622, %v4695
  %v4697 = vpop.f32.mrf.mxu0
  %v4698 = vadd.f32 %v4622, %v4697
  %4699 = vmatmul.bf16.gmra.mxu0 %v4198
  %v4700 = vpop.f32.mrf.mxu0
  %v4701 = vadd.f32 %v4622, %v4700
  %v4702 = vpop.f32.mrf.mxu0
  %v4703 = vadd.f32 %v4622, %v4702
  %4704 = vmatmul.bf16.gmra.mxu0 %v4199
  %v4705 = vpop.f32.mrf.mxu0
  %v4706 = vadd.f32 %v4622, %v4705
  %v4707 = vpop.f32.mrf.mxu0
  %v4708 = vadd.f32 %v4622, %v4707
  %4709 = vmatmul.bf16.gmra.mxu0 %v4200
  %v4710 = vpop.f32.mrf.mxu0
  %v4711 = vadd.f32 %v4622, %v4710
  %v4712 = vpop.f32.mrf.mxu0
  %v4713 = vadd.f32 %v4622, %v4712
  %4714 = vmatmul.bf16.gmra.mxu0 %v4201
  %v4715 = vpop.f32.mrf.mxu0
  %v4716 = vadd.f32 %v4622, %v4715
  %v4717 = vpop.f32.mrf.mxu0
  %v4718 = vadd.f32 %v4622, %v4717
  %4719 = vmatmul.bf16.gmra.mxu0 %v4202
  %v4720 = vpop.f32.mrf.mxu0
  %v4721 = vadd.f32 %v4622, %v4720
  %v4722 = vpop.f32.mrf.mxu0
  %v4723 = vadd.f32 %v4622, %v4722
  %4724 = vmatmul.bf16.gmra.mxu0 %v4203
  %v4725 = vpop.f32.mrf.mxu0
  %v4726 = vadd.f32 %v4622, %v4725
  %v4727 = vpop.f32.mrf.mxu0
  %v4728 = vadd.f32 %v4622, %v4727
  %4729 = vmatmul.bf16.gmra.mxu0 %v4204
  %v4730 = vpop.f32.mrf.mxu0
  %v4731 = vadd.f32 %v4622, %v4730
  %v4732 = vpop.f32.mrf.mxu0
  %v4733 = vadd.f32 %v4622, %v4732
  %4734 = vmatmul.bf16.gmra.mxu0 %v4205
  %v4735 = vpop.f32.mrf.mxu0
  %v4736 = vadd.f32 %v4622, %v4735
  %v4737 = vpop.f32.mrf.mxu0
  %v4738 = vadd.f32 %v4622, %v4737
  %4739 = vmatmul.bf16.gmra.mxu0 %v4206
  %v4740 = vpop.f32.mrf.mxu0
  %v4741 = vadd.f32 %v4622, %v4740
  %v4742 = vpop.f32.mrf.mxu0
  %v4743 = vadd.f32 %v4622, %v4742
  %4744 = vmatmul.bf16.gmra.mxu0 %v4207
  %v4745 = vpop.f32.mrf.mxu0
  %v4746 = vadd.f32 %v4622, %v4745
  %v4747 = vpop.f32.mrf.mxu0
  %v4748 = vadd.f32 %v4622, %v4747
  %4749 = vmatmul.bf16.gmra.mxu0 %v4208
  %v4750 = vpop.f32.mrf.mxu0
  %v4751 = vadd.f32 %v4622, %v4750
  %v4752 = vpop.f32.mrf.mxu0
  %v4753 = vadd.f32 %v4622, %v4752
  %4754 = vmatmul.bf16.gmra.mxu0 %v4209
  %v4755 = vpop.f32.mrf.mxu0
  %v4756 = vadd.f32 %v4622, %v4755
  %v4757 = vpop.f32.mrf.mxu0
  %v4758 = vadd.f32 %v4622, %v4757
  %4759 = vmatmul.bf16.gmra.mxu0 %v4210
  %v4760 = vpop.f32.mrf.mxu0
  %v4761 = vadd.f32 %v4622, %v4760
  %v4762 = vpop.f32.mrf.mxu0
  %v4763 = vadd.f32 %v4622, %v4762
  %4764 = vmatmul.bf16.gmra.mxu0 %v4211
  %v4765 = vpop.f32.mrf.mxu0
  %v4766 = vadd.f32 %v4622, %v4765
  %v4767 = vpop.f32.mrf.mxu0
  %v4768 = vadd.f32 %v4622, %v4767
  %4769 = vmatmul.bf16.gmra.mxu0 %v4212
  %v4770 = vpop.f32.mrf.mxu0
  %v4771 = vadd.f32 %v4622, %v4770
  %v4772 = vpop.f32.mrf.mxu0
  %v4773 = vadd.f32 %v4622, %v4772
  %4774 = vmatmul.bf16.gmra.mxu0 %v4213
  %v4775 = vpop.f32.mrf.mxu0
  %v4776 = vadd.f32 %v4622, %v4775
  %v4777 = vpop.f32.mrf.mxu0
  %v4778 = vadd.f32 %v4622, %v4777
  %4779 = vmatmul.bf16.gmra.mxu0 %v4214
  %v4780 = vpop.f32.mrf.mxu0
  %v4781 = vadd.f32 %v4622, %v4780
  %v4782 = vpop.f32.mrf.mxu0
  %v4783 = vadd.f32 %v4622, %v4782
  %4784 = vmatmul.bf16.gmra.mxu0 %v4215
  %v4785 = vpop.f32.mrf.mxu0
  %v4786 = vadd.f32 %v4622, %v4785
  %v4787 = vpop.f32.mrf.mxu0
  %v4788 = vadd.f32 %v4622, %v4787
  %4789 = vmatmul.bf16.gmra.mxu0 %v4216
  %v4790 = vpop.f32.mrf.mxu0
  %v4791 = vadd.f32 %v4622, %v4790
  %v4792 = vpop.f32.mrf.mxu0
  %v4793 = vadd.f32 %v4622, %v4792
  %4794 = vmatmul.bf16.gmra.mxu0 %v4217
  %v4795 = vpop.f32.mrf.mxu0
  %v4796 = vadd.f32 %v4622, %v4795
  %v4797 = vpop.f32.mrf.mxu0
  %v4798 = vadd.f32 %v4622, %v4797
  %4799 = vmatmul.bf16.gmra.mxu0 %v4218
  %v4800 = vpop.f32.mrf.mxu0
  %v4801 = vadd.f32 %v4622, %v4800
  %v4802 = vpop.f32.mrf.mxu0
  %v4803 = vadd.f32 %v4622, %v4802
  %4804 = vmatmul.bf16.gmra.mxu0 %v4219
  %v4805 = vpop.f32.mrf.mxu0
  %v4806 = vadd.f32 %v4622, %v4805
  %v4807 = vpop.f32.mrf.mxu0
  %v4808 = vadd.f32 %v4622, %v4807
  %4809 = vmatmul.bf16.gmra.mxu0 %v4220
  %v4810 = vpop.f32.mrf.mxu0
  %v4811 = vadd.f32 %v4622, %v4810
  %v4812 = vpop.f32.mrf.mxu0
  %v4813 = vadd.f32 %v4622, %v4812
  %4814 = vmatmul.bf16.gmra.mxu0 %v4221
  %v4815 = vpop.f32.mrf.mxu0
  %v4816 = vadd.f32 %v4622, %v4815
  %v4817 = vpop.f32.mrf.mxu0
  %v4818 = vadd.f32 %v4622, %v4817
  %4819 = vmatmul.bf16.gmra.mxu0 %v4222
  %v4820 = vpop.f32.mrf.mxu0
  %v4821 = vadd.f32 %v4622, %v4820
  %v4822 = vpop.f32.mrf.mxu0
  %v4823 = vadd.f32 %v4622, %v4822
  %4824 = vmatmul.bf16.gmra.mxu0 %v4223
  %v4825 = vpop.f32.mrf.mxu0
  %v4826 = vadd.f32 %v4622, %v4825
  %v4827 = vpop.f32.mrf.mxu0
  %v4828 = vadd.f32 %v4622, %v4827
  %4829 = vmatmul.bf16.gmra.mxu0 %v4224
  %v4830 = vpop.f32.mrf.mxu0
  %v4831 = vadd.f32 %v4622, %v4830
  %v4832 = vpop.f32.mrf.mxu0
  %v4833 = vadd.f32 %v4622, %v4832
  %4834 = vmatmul.bf16.gmra.mxu0 %v4225
  %v4835 = vpop.f32.mrf.mxu0
  %v4836 = vadd.f32 %v4622, %v4835
  %v4837 = vpop.f32.mrf.mxu0
  %4838 = vdwg.mxu0
  %4839 = vset.pattern.permute.xlu0 3
  %4840 = vperm.xlu0 %4839, %v18
  %v4841 = vpop.permute.xlu0 %4840
  %4843 = vset.pattern.permute.xlu0 3
  %4844 = vperm.xlu0 %4843, %v19
  %v4845 = vpop.permute.xlu0 %4844
  %4847 = vset.pattern.permute.xlu0 3
  %4848 = vperm.xlu0 %4847, %v20
  %v4849 = vpop.permute.xlu0 %4848
  %4851 = vset.pattern.permute.xlu0 3
  %4852 = vperm.xlu0 %4851, %v21
  %v4853 = vpop.permute.xlu0 %4852
  %4855 = vset.pattern.permute.xlu0 3
  %4856 = vperm.xlu0 %4855, %v22
  %v4857 = vpop.permute.xlu0 %4856
  %4859 = vset.pattern.permute.xlu0 3
  %4860 = vperm.xlu0 %4859, %v23
  %v4861 = vpop.permute.xlu0 %4860
  %4863 = vset.pattern.permute.xlu0 3
  %4864 = vperm.xlu0 %4863, %v24
  %v4865 = vpop.permute.xlu0 %4864
  %4867 = vset.pattern.permute.xlu0 3
  %4868 = vperm.xlu0 %4867, %v25
  %v4869 = vpop.permute.xlu0 %4868
  %4871 = vset.pattern.permute.xlu0 3
  %4872 = vperm.xlu0 %4871, %v26
  %v4873 = vpop.permute.xlu0 %4872
  %4875 = vset.pattern.permute.xlu0 3
  %4876 = vperm.xlu0 %4875, %v27
  %v4877 = vpop.permute.xlu0 %4876
  %4879 = vset.pattern.permute.xlu0 3
  %4880 = vperm.xlu0 %4879, %v28
  %v4881 = vpop.permute.xlu0 %4880
  %4883 = vset.pattern.permute.xlu0 3
  %4884 = vperm.xlu0 %4883, %v29
  %v4885 = vpop.permute.xlu0 %4884
  %4887 = vset.pattern.permute.xlu0 3
  %4888 = vperm.xlu0 %4887, %v30
  %v4889 = vpop.permute.xlu0 %4888
  %4891 = vset.pattern.permute.xlu0 3
  %4892 = vperm.xlu0 %4891, %v31
  %v4893 = vpop.permute.xlu0 %4892
  %4895 = vset.pattern.permute.xlu0 3
  %4896 = vperm.xlu0 %4895, %v32
  %v4897 = vpop.permute.xlu0 %4896
  %4899 = vset.pattern.permute.xlu0 3
  %4900 = vperm.xlu0 %4899, %v33
  %v4901 = vpop.permute.xlu0 %4900
  %4903 = vset.pattern.permute.xlu0 3
  %4904 = vperm.xlu0 %4903, %v34
  %v4905 = vpop.permute.xlu0 %4904
  %4907 = vset.pattern.permute.xlu0 3
  %4908 = vperm.xlu0 %4907, %v35
  %v4909 = vpop.permute.xlu0 %4908
  %4911 = vset.pattern.permute.xlu0 3
  %4912 = vperm.xlu0 %4911, %v36
  %v4913 = vpop.permute.xlu0 %4912
  %4915 = vset.pattern.permute.xlu0 3
  %4916 = vperm.xlu0 %4915, %v37
  %v4917 = vpop.permute.xlu0 %4916
  %4919 = vset.pattern.permute.xlu0 3
  %4920 = vperm.xlu0 %4919, %v38
  %v4921 = vpop.permute.xlu0 %4920
  %4923 = vset.pattern.permute.xlu0 3
  %4924 = vperm.xlu0 %4923, %v39
  %v4925 = vpop.permute.xlu0 %4924
  %4927 = vset.pattern.permute.xlu0 3
  %4928 = vperm.xlu0 %4927, %v40
  %v4929 = vpop.permute.xlu0 %4928
  %4931 = vset.pattern.permute.xlu0 3
  %4932 = vperm.xlu0 %4931, %v41
  %v4933 = vpop.permute.xlu0 %4932
  %4935 = vset.pattern.permute.xlu0 3
  %4936 = vperm.xlu0 %4935, %v42
  %v4937 = vpop.permute.xlu0 %4936
  %4939 = vset.pattern.permute.xlu0 3
  %4940 = vperm.xlu0 %4939, %v43
  %v4941 = vpop.permute.xlu0 %4940
  %4943 = vset.pattern.permute.xlu0 3
  %4944 = vperm.xlu0 %4943, %v44
  %v4945 = vpop.permute.xlu0 %4944
  %4947 = vset.pattern.permute.xlu0 3
  %4948 = vperm.xlu0 %4947, %v45
  %v4949 = vpop.permute.xlu0 %4948
  %4951 = vset.pattern.permute.xlu0 3
  %4952 = vperm.xlu0 %4951, %v46
  %v4953 = vpop.permute.xlu0 %4952
  %4955 = vset.pattern.permute.xlu0 3
  %4956 = vperm.xlu0 %4955, %v47
  %v4957 = vpop.permute.xlu0 %4956
  %4959 = vset.pattern.permute.xlu0 3
  %4960 = vperm.xlu0 %4959, %v48
  %v4961 = vpop.permute.xlu0 %4960
  %4963 = vset.pattern.permute.xlu0 3
  %4964 = vperm.xlu0 %4963, %v49
  %v4965 = vpop.permute.xlu0 %4964
  %4967 = vset.pattern.permute.xlu0 3
  %4968 = vperm.xlu0 %4967, %v50
  %v4969 = vpop.permute.xlu0 %4968
  %4971 = vset.pattern.permute.xlu0 3
  %4972 = vperm.xlu0 %4971, %v51
  %v4973 = vpop.permute.xlu0 %4972
  %4975 = vset.pattern.permute.xlu0 3
  %4976 = vperm.xlu0 %4975, %v52
  %v4977 = vpop.permute.xlu0 %4976
  %4979 = vset.pattern.permute.xlu0 3
  %4980 = vperm.xlu0 %4979, %v53
  %v4981 = vpop.permute.xlu0 %4980
  %4983 = vset.pattern.permute.xlu0 3
  %4984 = vperm.xlu0 %4983, %v54
  %v4985 = vpop.permute.xlu0 %4984
  %4987 = vset.pattern.permute.xlu0 3
  %4988 = vperm.xlu0 %4987, %v55
  %v4989 = vpop.permute.xlu0 %4988
  %4991 = vset.pattern.permute.xlu0 3
  %4992 = vperm.xlu0 %4991, %v56
  %v4993 = vpop.permute.xlu0 %4992
  %4995 = vset.pattern.permute.xlu0 3
  %4996 = vperm.xlu0 %4995, %v57
  %v4997 = vpop.permute.xlu0 %4996
  %4999 = vset.pattern.permute.xlu0 3
  %5000 = vperm.xlu0 %4999, %v58
  %v5001 = vpop.permute.xlu0 %5000
  %5003 = vset.pattern.permute.xlu0 3
  %5004 = vperm.xlu0 %5003, %v59
  %v5005 = vpop.permute.xlu0 %5004
  %5007 = vset.pattern.permute.xlu0 3
  %5008 = vperm.xlu0 %5007, %v60
  %v5009 = vpop.permute.xlu0 %5008
  %5011 = vset.pattern.permute.xlu0 3
  %5012 = vperm.xlu0 %5011, %v61
  %v5013 = vpop.permute.xlu0 %5012
  %5015 = vset.pattern.permute.xlu0 3
  %5016 = vperm.xlu0 %5015, %v62
  %v5017 = vpop.permute.xlu0 %5016
  %5019 = vset.pattern.permute.xlu0 3
  %5020 = vperm.xlu0 %5019, %v63
  %v5021 = vpop.permute.xlu0 %5020
  %5023 = vset.pattern.permute.xlu0 3
  %5024 = vperm.xlu0 %5023, %v64
  %v5025 = vpop.permute.xlu0 %5024
  %5027 = vset.pattern.permute.xlu0 3
  %5028 = vperm.xlu0 %5027, %v65
  %v5029 = vpop.permute.xlu0 %5028
  %5031 = vset.pattern.permute.xlu0 3
  %5032 = vperm.xlu0 %5031, %v66
  %v5033 = vpop.permute.xlu0 %5032
  %5035 = vset.pattern.permute.xlu0 3
  %5036 = vperm.xlu0 %5035, %v67
  %v5037 = vpop.permute.xlu0 %5036
  %5039 = vset.pattern.permute.xlu0 3
  %5040 = vperm.xlu0 %5039, %v68
  %v5041 = vpop.permute.xlu0 %5040
  %5043 = vset.pattern.permute.xlu0 3
  %5044 = vperm.xlu0 %5043, %v69
  %v5045 = vpop.permute.xlu0 %5044
  %5047 = vset.pattern.permute.xlu0 3
  %5048 = vperm.xlu0 %5047, %v70
  %v5049 = vpop.permute.xlu0 %5048
  %5051 = vset.pattern.permute.xlu0 3
  %5052 = vperm.xlu0 %5051, %v71
  %v5053 = vpop.permute.xlu0 %5052
  %5055 = vset.pattern.permute.xlu0 3
  %5056 = vperm.xlu0 %5055, %v72
  %v5057 = vpop.permute.xlu0 %5056
  %5059 = vset.pattern.permute.xlu0 3
  %5060 = vperm.xlu0 %5059, %v73
  %v5061 = vpop.permute.xlu0 %5060
  %5063 = vset.pattern.permute.xlu0 3
  %5064 = vperm.xlu0 %5063, %v74
  %v5065 = vpop.permute.xlu0 %5064
  %5067 = vset.pattern.permute.xlu0 3
  %5068 = vperm.xlu0 %5067, %v75
  %v5069 = vpop.permute.xlu0 %5068
  %5071 = vset.pattern.permute.xlu0 3
  %5072 = vperm.xlu0 %5071, %v76
  %v5073 = vpop.permute.xlu0 %5072
  %5075 = vset.pattern.permute.xlu0 3
  %5076 = vperm.xlu0 %5075, %v77
  %v5077 = vpop.permute.xlu0 %5076
  %5079 = vset.pattern.permute.xlu0 3
  %5080 = vperm.xlu0 %5079, %v78
  %v5081 = vpop.permute.xlu0 %5080
  %5083 = vset.pattern.permute.xlu0 3
  %5084 = vperm.xlu0 %5083, %v79
  %v5085 = vpop.permute.xlu0 %5084
  %5087 = vset.pattern.permute.xlu0 3
  %5088 = vperm.xlu0 %5087, %v80
  %v5089 = vpop.permute.xlu0 %5088
  %v5091 = vperm.slane %v83, 0
  %v5092 = vmul.f32 %v4841, %v5091
  %v5093 = vmul.f32 %v4845, %v5091
  %v5094 = vmul.f32 %v4849, %v5091
  %v5095 = vmul.f32 %v4853, %v5091
  %v5096 = vmul.f32 %v4857, %v5091
  %v5097 = vmul.f32 %v4861, %v5091
  %v5098 = vmul.f32 %v4865, %v5091
  %v5099 = vmul.f32 %v4869, %v5091
  %v5100 = vmul.f32 %v4873, %v5091
  %v5101 = vmul.f32 %v4877, %v5091
  %v5102 = vmul.f32 %v4881, %v5091
  %v5103 = vmul.f32 %v4885, %v5091
  %v5104 = vmul.f32 %v4889, %v5091
  %v5105 = vmul.f32 %v4893, %v5091
  %v5106 = vmul.f32 %v4897, %v5091
  %v5107 = vmul.f32 %v4901, %v5091
  %v5108 = vmul.f32 %v4905, %v5091
  %v5109 = vmul.f32 %v4909, %v5091
  %v5110 = vmul.f32 %v4913, %v5091
  %v5111 = vmul.f32 %v4917, %v5091
  %v5112 = vmul.f32 %v4921, %v5091
  %v5113 = vmul.f32 %v4925, %v5091
  %v5114 = vmul.f32 %v4929, %v5091
  %v5115 = vmul.f32 %v4933, %v5091
  %v5116 = vmul.f32 %v4937, %v5091
  %v5117 = vmul.f32 %v4941, %v5091
  %v5118 = vmul.f32 %v4945, %v5091
  %v5119 = vmul.f32 %v4949, %v5091
  %v5120 = vmul.f32 %v4953, %v5091
  %v5121 = vmul.f32 %v4957, %v5091
  %v5122 = vmul.f32 %v4961, %v5091
  %v5123 = vmul.f32 %v4965, %v5091
  %v5124 = vmul.f32 %v4969, %v5091
  %v5125 = vmul.f32 %v4973, %v5091
  %v5126 = vmul.f32 %v4977, %v5091
  %v5127 = vmul.f32 %v4981, %v5091
  %v5128 = vmul.f32 %v4985, %v5091
  %v5129 = vmul.f32 %v4989, %v5091
  %v5130 = vmul.f32 %v4993, %v5091
  %v5131 = vmul.f32 %v4997, %v5091
  %v5132 = vmul.f32 %v5001, %v5091
  %v5133 = vmul.f32 %v5005, %v5091
  %v5134 = vmul.f32 %v5009, %v5091
  %v5135 = vmul.f32 %v5013, %v5091
  %v5136 = vmul.f32 %v5017, %v5091
  %v5137 = vmul.f32 %v5021, %v5091
  %v5138 = vmul.f32 %v5025, %v5091
  %v5139 = vmul.f32 %v5029, %v5091
  %v5140 = vmul.f32 %v5033, %v5091
  %v5141 = vmul.f32 %v5037, %v5091
  %v5142 = vmul.f32 %v5041, %v5091
  %v5143 = vmul.f32 %v5045, %v5091
  %v5144 = vmul.f32 %v5049, %v5091
  %v5145 = vmul.f32 %v5053, %v5091
  %v5146 = vmul.f32 %v5057, %v5091
  %v5147 = vmul.f32 %v5061, %v5091
  %v5148 = vmul.f32 %v5065, %v5091
  %v5149 = vmul.f32 %v5069, %v5091
  %v5150 = vmul.f32 %v5073, %v5091
  %v5151 = vmul.f32 %v5077, %v5091
  %v5152 = vmul.f32 %v5081, %v5091
  %v5153 = vmul.f32 %v5085, %v5091
  %v5154 = vmul.f32 %v5089, %v5091
  %v5155 = vadd.f32 %v4681, %v5092
  %v5156 = vadd.f32 %v4683, %v5093
  %v5157 = vadd.f32 %v4686, %v5094
  %v5158 = vadd.f32 %v4688, %v5095
  %v5159 = vadd.f32 %v4691, %v5096
  %v5160 = vadd.f32 %v4693, %v5097
  %v5161 = vadd.f32 %v4696, %v5098
  %v5162 = vadd.f32 %v4698, %v5099
  %v5163 = vadd.f32 %v4701, %v5100
  %v5164 = vadd.f32 %v4703, %v5101
  %v5165 = vadd.f32 %v4706, %v5102
  %v5166 = vadd.f32 %v4708, %v5103
  %v5167 = vadd.f32 %v4711, %v5104
  %v5168 = vadd.f32 %v4713, %v5105
  %v5169 = vadd.f32 %v4716, %v5106
  %v5170 = vadd.f32 %v4718, %v5107
  %v5171 = vadd.f32 %v4721, %v5108
  %v5172 = vadd.f32 %v4723, %v5109
  %v5173 = vadd.f32 %v4726, %v5110
  %v5174 = vadd.f32 %v4728, %v5111
  %v5175 = vadd.f32 %v4731, %v5112
  %v5176 = vadd.f32 %v4733, %v5113
  %v5177 = vadd.f32 %v4736, %v5114
  %v5178 = vadd.f32 %v4738, %v5115
  %v5179 = vadd.f32 %v4741, %v5116
  %v5180 = vadd.f32 %v4743, %v5117
  %v5181 = vadd.f32 %v4746, %v5118
  %v5182 = vadd.f32 %v4748, %v5119
  %v5183 = vadd.f32 %v4751, %v5120
  %v5184 = vadd.f32 %v4753, %v5121
  %v5185 = vadd.f32 %v4756, %v5122
  %v5186 = vadd.f32 %v4758, %v5123
  %v5187 = vadd.f32 %v4761, %v5124
  %v5188 = vadd.f32 %v4763, %v5125
  %v5189 = vadd.f32 %v4766, %v5126
  %v5190 = vadd.f32 %v4768, %v5127
  %v5191 = vadd.f32 %v4771, %v5128
  %v5192 = vadd.f32 %v4773, %v5129
  %v5193 = vadd.f32 %v4776, %v5130
  %v5194 = vadd.f32 %v4778, %v5131
  %v5195 = vadd.f32 %v4781, %v5132
  %v5196 = vadd.f32 %v4783, %v5133
  %v5197 = vadd.f32 %v4786, %v5134
  %v5198 = vadd.f32 %v4788, %v5135
  %v5199 = vadd.f32 %v4791, %v5136
  %v5200 = vadd.f32 %v4793, %v5137
  %v5201 = vadd.f32 %v4796, %v5138
  %v5202 = vadd.f32 %v4798, %v5139
  %v5203 = vadd.f32 %v4801, %v5140
  %v5204 = vadd.f32 %v4803, %v5141
  %v5205 = vadd.f32 %v4806, %v5142
  %v5206 = vadd.f32 %v4808, %v5143
  %v5207 = vadd.f32 %v4811, %v5144
  %v5208 = vadd.f32 %v4813, %v5145
  %v5209 = vadd.f32 %v4816, %v5146
  %v5210 = vadd.f32 %v4818, %v5147
  %v5211 = vadd.f32 %v4821, %v5148
  %v5212 = vadd.f32 %v4823, %v5149
  %v5213 = vadd.f32 %v4826, %v5150
  %v5214 = vadd.f32 %v4828, %v5151
  %v5215 = vadd.f32 %v4831, %v5152
  %v5216 = vadd.f32 %v4833, %v5153
  %v5217 = vadd.f32 %v4836, %v5154
  %5218 = vset.pattern.permute.xlu0 4
  %5219 = vperm.xlu0 %5218, %v18
  %v5220 = vpop.permute.xlu0 %5219
  %5222 = vset.pattern.permute.xlu0 4
  %5223 = vperm.xlu0 %5222, %v19
  %v5224 = vpop.permute.xlu0 %5223
  %5226 = vset.pattern.permute.xlu0 4
  %5227 = vperm.xlu0 %5226, %v20
  %v5228 = vpop.permute.xlu0 %5227
  %5230 = vset.pattern.permute.xlu0 4
  %5231 = vperm.xlu0 %5230, %v21
  %v5232 = vpop.permute.xlu0 %5231
  %5234 = vset.pattern.permute.xlu0 4
  %5235 = vperm.xlu0 %5234, %v22
  %v5236 = vpop.permute.xlu0 %5235
  %5238 = vset.pattern.permute.xlu0 4
  %5239 = vperm.xlu0 %5238, %v23
  %v5240 = vpop.permute.xlu0 %5239
  %5242 = vset.pattern.permute.xlu0 4
  %5243 = vperm.xlu0 %5242, %v24
  %v5244 = vpop.permute.xlu0 %5243
  %5246 = vset.pattern.permute.xlu0 4
  %5247 = vperm.xlu0 %5246, %v25
  %v5248 = vpop.permute.xlu0 %5247
  %5250 = vset.pattern.permute.xlu0 4
  %5251 = vperm.xlu0 %5250, %v26
  %v5252 = vpop.permute.xlu0 %5251
  %5254 = vset.pattern.permute.xlu0 4
  %5255 = vperm.xlu0 %5254, %v27
  %v5256 = vpop.permute.xlu0 %5255
  %5258 = vset.pattern.permute.xlu0 4
  %5259 = vperm.xlu0 %5258, %v28
  %v5260 = vpop.permute.xlu0 %5259
  %5262 = vset.pattern.permute.xlu0 4
  %5263 = vperm.xlu0 %5262, %v29
  %v5264 = vpop.permute.xlu0 %5263
  %5266 = vset.pattern.permute.xlu0 4
  %5267 = vperm.xlu0 %5266, %v30
  %v5268 = vpop.permute.xlu0 %5267
  %5270 = vset.pattern.permute.xlu0 4
  %5271 = vperm.xlu0 %5270, %v31
  %v5272 = vpop.permute.xlu0 %5271
  %5274 = vset.pattern.permute.xlu0 4
  %5275 = vperm.xlu0 %5274, %v32
  %v5276 = vpop.permute.xlu0 %5275
  %5278 = vset.pattern.permute.xlu0 4
  %5279 = vperm.xlu0 %5278, %v33
  %v5280 = vpop.permute.xlu0 %5279
  %5282 = vset.pattern.permute.xlu0 4
  %5283 = vperm.xlu0 %5282, %v34
  %v5284 = vpop.permute.xlu0 %5283
  %5286 = vset.pattern.permute.xlu0 4
  %5287 = vperm.xlu0 %5286, %v35
  %v5288 = vpop.permute.xlu0 %5287
  %5290 = vset.pattern.permute.xlu0 4
  %5291 = vperm.xlu0 %5290, %v36
  %v5292 = vpop.permute.xlu0 %5291
  %5294 = vset.pattern.permute.xlu0 4
  %5295 = vperm.xlu0 %5294, %v37
  %v5296 = vpop.permute.xlu0 %5295
  %5298 = vset.pattern.permute.xlu0 4
  %5299 = vperm.xlu0 %5298, %v38
  %v5300 = vpop.permute.xlu0 %5299
  %5302 = vset.pattern.permute.xlu0 4
  %5303 = vperm.xlu0 %5302, %v39
  %v5304 = vpop.permute.xlu0 %5303
  %5306 = vset.pattern.permute.xlu0 4
  %5307 = vperm.xlu0 %5306, %v40
  %v5308 = vpop.permute.xlu0 %5307
  %5310 = vset.pattern.permute.xlu0 4
  %5311 = vperm.xlu0 %5310, %v41
  %v5312 = vpop.permute.xlu0 %5311
  %5314 = vset.pattern.permute.xlu0 4
  %5315 = vperm.xlu0 %5314, %v42
  %v5316 = vpop.permute.xlu0 %5315
  %5318 = vset.pattern.permute.xlu0 4
  %5319 = vperm.xlu0 %5318, %v43
  %v5320 = vpop.permute.xlu0 %5319
  %5322 = vset.pattern.permute.xlu0 4
  %5323 = vperm.xlu0 %5322, %v44
  %v5324 = vpop.permute.xlu0 %5323
  %5326 = vset.pattern.permute.xlu0 4
  %5327 = vperm.xlu0 %5326, %v45
  %v5328 = vpop.permute.xlu0 %5327
  %5330 = vset.pattern.permute.xlu0 4
  %5331 = vperm.xlu0 %5330, %v46
  %v5332 = vpop.permute.xlu0 %5331
  %5334 = vset.pattern.permute.xlu0 4
  %5335 = vperm.xlu0 %5334, %v47
  %v5336 = vpop.permute.xlu0 %5335
  %5338 = vset.pattern.permute.xlu0 4
  %5339 = vperm.xlu0 %5338, %v48
  %v5340 = vpop.permute.xlu0 %5339
  %5342 = vset.pattern.permute.xlu0 4
  %5343 = vperm.xlu0 %5342, %v49
  %v5344 = vpop.permute.xlu0 %5343
  %5346 = vset.pattern.permute.xlu0 4
  %5347 = vperm.xlu0 %5346, %v50
  %v5348 = vpop.permute.xlu0 %5347
  %5350 = vset.pattern.permute.xlu0 4
  %5351 = vperm.xlu0 %5350, %v51
  %v5352 = vpop.permute.xlu0 %5351
  %5354 = vset.pattern.permute.xlu0 4
  %5355 = vperm.xlu0 %5354, %v52
  %v5356 = vpop.permute.xlu0 %5355
  %5358 = vset.pattern.permute.xlu0 4
  %5359 = vperm.xlu0 %5358, %v53
  %v5360 = vpop.permute.xlu0 %5359
  %5362 = vset.pattern.permute.xlu0 4
  %5363 = vperm.xlu0 %5362, %v54
  %v5364 = vpop.permute.xlu0 %5363
  %5366 = vset.pattern.permute.xlu0 4
  %5367 = vperm.xlu0 %5366, %v55
  %v5368 = vpop.permute.xlu0 %5367
  %5370 = vset.pattern.permute.xlu0 4
  %5371 = vperm.xlu0 %5370, %v56
  %v5372 = vpop.permute.xlu0 %5371
  %5374 = vset.pattern.permute.xlu0 4
  %5375 = vperm.xlu0 %5374, %v57
  %v5376 = vpop.permute.xlu0 %5375
  %5378 = vset.pattern.permute.xlu0 4
  %5379 = vperm.xlu0 %5378, %v58
  %v5380 = vpop.permute.xlu0 %5379
  %5382 = vset.pattern.permute.xlu0 4
  %5383 = vperm.xlu0 %5382, %v59
  %v5384 = vpop.permute.xlu0 %5383
  %5386 = vset.pattern.permute.xlu0 4
  %5387 = vperm.xlu0 %5386, %v60
  %v5388 = vpop.permute.xlu0 %5387
  %5390 = vset.pattern.permute.xlu0 4
  %5391 = vperm.xlu0 %5390, %v61
  %v5392 = vpop.permute.xlu0 %5391
  %5394 = vset.pattern.permute.xlu0 4
  %5395 = vperm.xlu0 %5394, %v62
  %v5396 = vpop.permute.xlu0 %5395
  %5398 = vset.pattern.permute.xlu0 4
  %5399 = vperm.xlu0 %5398, %v63
  %v5400 = vpop.permute.xlu0 %5399
  %5402 = vset.pattern.permute.xlu0 4
  %5403 = vperm.xlu0 %5402, %v64
  %v5404 = vpop.permute.xlu0 %5403
  %5406 = vset.pattern.permute.xlu0 4
  %5407 = vperm.xlu0 %5406, %v65
  %v5408 = vpop.permute.xlu0 %5407
  %5410 = vset.pattern.permute.xlu0 4
  %5411 = vperm.xlu0 %5410, %v66
  %v5412 = vpop.permute.xlu0 %5411
  %5414 = vset.pattern.permute.xlu0 4
  %5415 = vperm.xlu0 %5414, %v67
  %v5416 = vpop.permute.xlu0 %5415
  %5418 = vset.pattern.permute.xlu0 4
  %5419 = vperm.xlu0 %5418, %v68
  %v5420 = vpop.permute.xlu0 %5419
  %5422 = vset.pattern.permute.xlu0 4
  %5423 = vperm.xlu0 %5422, %v69
  %v5424 = vpop.permute.xlu0 %5423
  %5426 = vset.pattern.permute.xlu0 4
  %5427 = vperm.xlu0 %5426, %v70
  %v5428 = vpop.permute.xlu0 %5427
  %5430 = vset.pattern.permute.xlu0 4
  %5431 = vperm.xlu0 %5430, %v71
  %v5432 = vpop.permute.xlu0 %5431
  %5434 = vset.pattern.permute.xlu0 4
  %5435 = vperm.xlu0 %5434, %v72
  %v5436 = vpop.permute.xlu0 %5435
  %5438 = vset.pattern.permute.xlu0 4
  %5439 = vperm.xlu0 %5438, %v73
  %v5440 = vpop.permute.xlu0 %5439
  %5442 = vset.pattern.permute.xlu0 4
  %5443 = vperm.xlu0 %5442, %v74
  %v5444 = vpop.permute.xlu0 %5443
  %5446 = vset.pattern.permute.xlu0 4
  %5447 = vperm.xlu0 %5446, %v75
  %v5448 = vpop.permute.xlu0 %5447
  %5450 = vset.pattern.permute.xlu0 4
  %5451 = vperm.xlu0 %5450, %v76
  %v5452 = vpop.permute.xlu0 %5451
  %5454 = vset.pattern.permute.xlu0 4
  %5455 = vperm.xlu0 %5454, %v77
  %v5456 = vpop.permute.xlu0 %5455
  %5458 = vset.pattern.permute.xlu0 4
  %5459 = vperm.xlu0 %5458, %v78
  %v5460 = vpop.permute.xlu0 %5459
  %5462 = vset.pattern.permute.xlu0 4
  %5463 = vperm.xlu0 %5462, %v79
  %v5464 = vpop.permute.xlu0 %5463
  %5466 = vset.pattern.permute.xlu0 4
  %5467 = vperm.xlu0 %5466, %v80
  %v5468 = vpop.permute.xlu0 %5467
  %v5470 = vperm.slane %v83, 1
  %v5471 = vmul.f32 %v5220, %v5470
  %v5472 = vmul.f32 %v5224, %v5470
  %v5473 = vmul.f32 %v5228, %v5470
  %v5474 = vmul.f32 %v5232, %v5470
  %v5475 = vmul.f32 %v5236, %v5470
  %v5476 = vmul.f32 %v5240, %v5470
  %v5477 = vmul.f32 %v5244, %v5470
  %v5478 = vmul.f32 %v5248, %v5470
  %v5479 = vmul.f32 %v5252, %v5470
  %v5480 = vmul.f32 %v5256, %v5470
  %v5481 = vmul.f32 %v5260, %v5470
  %v5482 = vmul.f32 %v5264, %v5470
  %v5483 = vmul.f32 %v5268, %v5470
  %v5484 = vmul.f32 %v5272, %v5470
  %v5485 = vmul.f32 %v5276, %v5470
  %v5486 = vmul.f32 %v5280, %v5470
  %v5487 = vmul.f32 %v5284, %v5470
  %v5488 = vmul.f32 %v5288, %v5470
  %v5489 = vmul.f32 %v5292, %v5470
  %v5490 = vmul.f32 %v5296, %v5470
  %v5491 = vmul.f32 %v5300, %v5470
  %v5492 = vmul.f32 %v5304, %v5470
  %v5493 = vmul.f32 %v5308, %v5470
  %v5494 = vmul.f32 %v5312, %v5470
  %v5495 = vmul.f32 %v5316, %v5470
  %v5496 = vmul.f32 %v5320, %v5470
  %v5497 = vmul.f32 %v5324, %v5470
  %v5498 = vmul.f32 %v5328, %v5470
  %v5499 = vmul.f32 %v5332, %v5470
  %v5500 = vmul.f32 %v5336, %v5470
  %v5501 = vmul.f32 %v5340, %v5470
  %v5502 = vmul.f32 %v5344, %v5470
  %v5503 = vmul.f32 %v5348, %v5470
  %v5504 = vmul.f32 %v5352, %v5470
  %v5505 = vmul.f32 %v5356, %v5470
  %v5506 = vmul.f32 %v5360, %v5470
  %v5507 = vmul.f32 %v5364, %v5470
  %v5508 = vmul.f32 %v5368, %v5470
  %v5509 = vmul.f32 %v5372, %v5470
  %v5510 = vmul.f32 %v5376, %v5470
  %v5511 = vmul.f32 %v5380, %v5470
  %v5512 = vmul.f32 %v5384, %v5470
  %v5513 = vmul.f32 %v5388, %v5470
  %v5514 = vmul.f32 %v5392, %v5470
  %v5515 = vmul.f32 %v5396, %v5470
  %v5516 = vmul.f32 %v5400, %v5470
  %v5517 = vmul.f32 %v5404, %v5470
  %v5518 = vmul.f32 %v5408, %v5470
  %v5519 = vmul.f32 %v5412, %v5470
  %v5520 = vmul.f32 %v5416, %v5470
  %v5521 = vmul.f32 %v5420, %v5470
  %v5522 = vmul.f32 %v5424, %v5470
  %v5523 = vmul.f32 %v5428, %v5470
  %v5524 = vmul.f32 %v5432, %v5470
  %v5525 = vmul.f32 %v5436, %v5470
  %v5526 = vmul.f32 %v5440, %v5470
  %v5527 = vmul.f32 %v5444, %v5470
  %v5528 = vmul.f32 %v5448, %v5470
  %v5529 = vmul.f32 %v5452, %v5470
  %v5530 = vmul.f32 %v5456, %v5470
  %v5531 = vmul.f32 %v5460, %v5470
  %v5532 = vmul.f32 %v5464, %v5470
  %v5533 = vmul.f32 %v5468, %v5470
  %v5534 = vadd.f32 %v5155, %v5471
  %v5535 = vadd.f32 %v5156, %v5472
  %v5536 = vadd.f32 %v5157, %v5473
  %v5537 = vadd.f32 %v5158, %v5474
  %v5538 = vadd.f32 %v5159, %v5475
  %v5539 = vadd.f32 %v5160, %v5476
  %v5540 = vadd.f32 %v5161, %v5477
  %v5541 = vadd.f32 %v5162, %v5478
  %v5542 = vadd.f32 %v5163, %v5479
  %v5543 = vadd.f32 %v5164, %v5480
  %v5544 = vadd.f32 %v5165, %v5481
  %v5545 = vadd.f32 %v5166, %v5482
  %v5546 = vadd.f32 %v5167, %v5483
  %v5547 = vadd.f32 %v5168, %v5484
  %v5548 = vadd.f32 %v5169, %v5485
  %v5549 = vadd.f32 %v5170, %v5486
  %v5550 = vadd.f32 %v5171, %v5487
  %v5551 = vadd.f32 %v5172, %v5488
  %v5552 = vadd.f32 %v5173, %v5489
  %v5553 = vadd.f32 %v5174, %v5490
  %v5554 = vadd.f32 %v5175, %v5491
  %v5555 = vadd.f32 %v5176, %v5492
  %v5556 = vadd.f32 %v5177, %v5493
  %v5557 = vadd.f32 %v5178, %v5494
  %v5558 = vadd.f32 %v5179, %v5495
  %v5559 = vadd.f32 %v5180, %v5496
  %v5560 = vadd.f32 %v5181, %v5497
  %v5561 = vadd.f32 %v5182, %v5498
  %v5562 = vadd.f32 %v5183, %v5499
  %v5563 = vadd.f32 %v5184, %v5500
  %v5564 = vadd.f32 %v5185, %v5501
  %v5565 = vadd.f32 %v5186, %v5502
  %v5566 = vadd.f32 %v5187, %v5503
  %v5567 = vadd.f32 %v5188, %v5504
  %v5568 = vadd.f32 %v5189, %v5505
  %v5569 = vadd.f32 %v5190, %v5506
  %v5570 = vadd.f32 %v5191, %v5507
  %v5571 = vadd.f32 %v5192, %v5508
  %v5572 = vadd.f32 %v5193, %v5509
  %v5573 = vadd.f32 %v5194, %v5510
  %v5574 = vadd.f32 %v5195, %v5511
  %v5575 = vadd.f32 %v5196, %v5512
  %v5576 = vadd.f32 %v5197, %v5513
  %v5577 = vadd.f32 %v5198, %v5514
  %v5578 = vadd.f32 %v5199, %v5515
  %v5579 = vadd.f32 %v5200, %v5516
  %v5580 = vadd.f32 %v5201, %v5517
  %v5581 = vadd.f32 %v5202, %v5518
  %v5582 = vadd.f32 %v5203, %v5519
  %v5583 = vadd.f32 %v5204, %v5520
  %v5584 = vadd.f32 %v5205, %v5521
  %v5585 = vadd.f32 %v5206, %v5522
  %v5586 = vadd.f32 %v5207, %v5523
  %v5587 = vadd.f32 %v5208, %v5524
  %v5588 = vadd.f32 %v5209, %v5525
  %v5589 = vadd.f32 %v5210, %v5526
  %v5590 = vadd.f32 %v5211, %v5527
  %v5591 = vadd.f32 %v5212, %v5528
  %v5592 = vadd.f32 %v5213, %v5529
  %v5593 = vadd.f32 %v5214, %v5530
  %v5594 = vadd.f32 %v5215, %v5531
  %v5595 = vadd.f32 %v5216, %v5532
  %v5596 = vadd.f32 %v5217, %v5533
  %5597 = vset.pattern.permute.xlu0 5
  %5598 = vperm.xlu0 %5597, %v18
  %v5599 = vpop.permute.xlu0 %5598
  %5601 = vset.pattern.permute.xlu0 5
  %5602 = vperm.xlu0 %5601, %v19
  %v5603 = vpop.permute.xlu0 %5602
  %5605 = vset.pattern.permute.xlu0 5
  %5606 = vperm.xlu0 %5605, %v20
  %v5607 = vpop.permute.xlu0 %5606
  %5609 = vset.pattern.permute.xlu0 5
  %5610 = vperm.xlu0 %5609, %v21
  %v5611 = vpop.permute.xlu0 %5610
  %5613 = vset.pattern.permute.xlu0 5
  %5614 = vperm.xlu0 %5613, %v22
  %v5615 = vpop.permute.xlu0 %5614
  %5617 = vset.pattern.permute.xlu0 5
  %5618 = vperm.xlu0 %5617, %v23
  %v5619 = vpop.permute.xlu0 %5618
  %5621 = vset.pattern.permute.xlu0 5
  %5622 = vperm.xlu0 %5621, %v24
  %v5623 = vpop.permute.xlu0 %5622
  %5625 = vset.pattern.permute.xlu0 5
  %5626 = vperm.xlu0 %5625, %v25
  %v5627 = vpop.permute.xlu0 %5626
  %5629 = vset.pattern.permute.xlu0 5
  %5630 = vperm.xlu0 %5629, %v26
  %v5631 = vpop.permute.xlu0 %5630
  %5633 = vset.pattern.permute.xlu0 5
  %5634 = vperm.xlu0 %5633, %v27
  %v5635 = vpop.permute.xlu0 %5634
  %5637 = vset.pattern.permute.xlu0 5
  %5638 = vperm.xlu0 %5637, %v28
  %v5639 = vpop.permute.xlu0 %5638
  %5641 = vset.pattern.permute.xlu0 5
  %5642 = vperm.xlu0 %5641, %v29
  %v5643 = vpop.permute.xlu0 %5642
  %5645 = vset.pattern.permute.xlu0 5
  %5646 = vperm.xlu0 %5645, %v30
  %v5647 = vpop.permute.xlu0 %5646
  %5649 = vset.pattern.permute.xlu0 5
  %5650 = vperm.xlu0 %5649, %v31
  %v5651 = vpop.permute.xlu0 %5650
  %5653 = vset.pattern.permute.xlu0 5
  %5654 = vperm.xlu0 %5653, %v32
  %v5655 = vpop.permute.xlu0 %5654
  %5657 = vset.pattern.permute.xlu0 5
  %5658 = vperm.xlu0 %5657, %v33
  %v5659 = vpop.permute.xlu0 %5658
  %5661 = vset.pattern.permute.xlu0 5
  %5662 = vperm.xlu0 %5661, %v34
  %v5663 = vpop.permute.xlu0 %5662
  %5665 = vset.pattern.permute.xlu0 5
  %5666 = vperm.xlu0 %5665, %v35
  %v5667 = vpop.permute.xlu0 %5666
  %5669 = vset.pattern.permute.xlu0 5
  %5670 = vperm.xlu0 %5669, %v36
  %v5671 = vpop.permute.xlu0 %5670
  %5673 = vset.pattern.permute.xlu0 5
  %5674 = vperm.xlu0 %5673, %v37
  %v5675 = vpop.permute.xlu0 %5674
  %5677 = vset.pattern.permute.xlu0 5
  %5678 = vperm.xlu0 %5677, %v38
  %v5679 = vpop.permute.xlu0 %5678
  %5681 = vset.pattern.permute.xlu0 5
  %5682 = vperm.xlu0 %5681, %v39
  %v5683 = vpop.permute.xlu0 %5682
  %5685 = vset.pattern.permute.xlu0 5
  %5686 = vperm.xlu0 %5685, %v40
  %v5687 = vpop.permute.xlu0 %5686
  %5689 = vset.pattern.permute.xlu0 5
  %5690 = vperm.xlu0 %5689, %v41
  %v5691 = vpop.permute.xlu0 %5690
  %5693 = vset.pattern.permute.xlu0 5
  %5694 = vperm.xlu0 %5693, %v42
  %v5695 = vpop.permute.xlu0 %5694
  %5697 = vset.pattern.permute.xlu0 5
  %5698 = vperm.xlu0 %5697, %v43
  %v5699 = vpop.permute.xlu0 %5698
  %5701 = vset.pattern.permute.xlu0 5
  %5702 = vperm.xlu0 %5701, %v44
  %v5703 = vpop.permute.xlu0 %5702
  %5705 = vset.pattern.permute.xlu0 5
  %5706 = vperm.xlu0 %5705, %v45
  %v5707 = vpop.permute.xlu0 %5706
  %5709 = vset.pattern.permute.xlu0 5
  %5710 = vperm.xlu0 %5709, %v46
  %v5711 = vpop.permute.xlu0 %5710
  %5713 = vset.pattern.permute.xlu0 5
  %5714 = vperm.xlu0 %5713, %v47
  %v5715 = vpop.permute.xlu0 %5714
  %5717 = vset.pattern.permute.xlu0 5
  %5718 = vperm.xlu0 %5717, %v48
  %v5719 = vpop.permute.xlu0 %5718
  %5721 = vset.pattern.permute.xlu0 5
  %5722 = vperm.xlu0 %5721, %v49
  %v5723 = vpop.permute.xlu0 %5722
  %5725 = vset.pattern.permute.xlu0 5
  %5726 = vperm.xlu0 %5725, %v50
  %v5727 = vpop.permute.xlu0 %5726
  %5729 = vset.pattern.permute.xlu0 5
  %5730 = vperm.xlu0 %5729, %v51
  %v5731 = vpop.permute.xlu0 %5730
  %5733 = vset.pattern.permute.xlu0 5
  %5734 = vperm.xlu0 %5733, %v52
  %v5735 = vpop.permute.xlu0 %5734
  %5737 = vset.pattern.permute.xlu0 5
  %5738 = vperm.xlu0 %5737, %v53
  %v5739 = vpop.permute.xlu0 %5738
  %5741 = vset.pattern.permute.xlu0 5
  %5742 = vperm.xlu0 %5741, %v54
  %v5743 = vpop.permute.xlu0 %5742
  %5745 = vset.pattern.permute.xlu0 5
  %5746 = vperm.xlu0 %5745, %v55
  %v5747 = vpop.permute.xlu0 %5746
  %5749 = vset.pattern.permute.xlu0 5
  %5750 = vperm.xlu0 %5749, %v56
  %v5751 = vpop.permute.xlu0 %5750
  %5753 = vset.pattern.permute.xlu0 5
  %5754 = vperm.xlu0 %5753, %v57
  %v5755 = vpop.permute.xlu0 %5754
  %5757 = vset.pattern.permute.xlu0 5
  %5758 = vperm.xlu0 %5757, %v58
  %v5759 = vpop.permute.xlu0 %5758
  %5761 = vset.pattern.permute.xlu0 5
  %5762 = vperm.xlu0 %5761, %v59
  %v5763 = vpop.permute.xlu0 %5762
  %5765 = vset.pattern.permute.xlu0 5
  %5766 = vperm.xlu0 %5765, %v60
  %v5767 = vpop.permute.xlu0 %5766
  %5769 = vset.pattern.permute.xlu0 5
  %5770 = vperm.xlu0 %5769, %v61
  %v5771 = vpop.permute.xlu0 %5770
  %5773 = vset.pattern.permute.xlu0 5
  %5774 = vperm.xlu0 %5773, %v62
  %v5775 = vpop.permute.xlu0 %5774
  %5777 = vset.pattern.permute.xlu0 5
  %5778 = vperm.xlu0 %5777, %v63
  %v5779 = vpop.permute.xlu0 %5778
  %5781 = vset.pattern.permute.xlu0 5
  %5782 = vperm.xlu0 %5781, %v64
  %v5783 = vpop.permute.xlu0 %5782
  %5785 = vset.pattern.permute.xlu0 5
  %5786 = vperm.xlu0 %5785, %v65
  %v5787 = vpop.permute.xlu0 %5786
  %5789 = vset.pattern.permute.xlu0 5
  %5790 = vperm.xlu0 %5789, %v66
  %v5791 = vpop.permute.xlu0 %5790
  %5793 = vset.pattern.permute.xlu0 5
  %5794 = vperm.xlu0 %5793, %v67
  %v5795 = vpop.permute.xlu0 %5794
  %5797 = vset.pattern.permute.xlu0 5
  %5798 = vperm.xlu0 %5797, %v68
  %v5799 = vpop.permute.xlu0 %5798
  %5801 = vset.pattern.permute.xlu0 5
  %5802 = vperm.xlu0 %5801, %v69
  %v5803 = vpop.permute.xlu0 %5802
  %5805 = vset.pattern.permute.xlu0 5
  %5806 = vperm.xlu0 %5805, %v70
  %v5807 = vpop.permute.xlu0 %5806
  %5809 = vset.pattern.permute.xlu0 5
  %5810 = vperm.xlu0 %5809, %v71
  %v5811 = vpop.permute.xlu0 %5810
  %5813 = vset.pattern.permute.xlu0 5
  %5814 = vperm.xlu0 %5813, %v72
  %v5815 = vpop.permute.xlu0 %5814
  %5817 = vset.pattern.permute.xlu0 5
  %5818 = vperm.xlu0 %5817, %v73
  %v5819 = vpop.permute.xlu0 %5818
  %5821 = vset.pattern.permute.xlu0 5
  %5822 = vperm.xlu0 %5821, %v74
  %v5823 = vpop.permute.xlu0 %5822
  %5825 = vset.pattern.permute.xlu0 5
  %5826 = vperm.xlu0 %5825, %v75
  %v5827 = vpop.permute.xlu0 %5826
  %5829 = vset.pattern.permute.xlu0 5
  %5830 = vperm.xlu0 %5829, %v76
  %v5831 = vpop.permute.xlu0 %5830
  %5833 = vset.pattern.permute.xlu0 5
  %5834 = vperm.xlu0 %5833, %v77
  %v5835 = vpop.permute.xlu0 %5834
  %5837 = vset.pattern.permute.xlu0 5
  %5838 = vperm.xlu0 %5837, %v78
  %v5839 = vpop.permute.xlu0 %5838
  %5841 = vset.pattern.permute.xlu0 5
  %5842 = vperm.xlu0 %5841, %v79
  %v5843 = vpop.permute.xlu0 %5842
  %5845 = vset.pattern.permute.xlu0 5
  %5846 = vperm.xlu0 %5845, %v80
  %v5847 = vpop.permute.xlu0 %5846
  %v5849 = vperm.slane %v83, 2
  %v5850 = vmul.f32 %v5599, %v5849
  %v5851 = vmul.f32 %v5603, %v5849
  %v5852 = vmul.f32 %v5607, %v5849
  %v5853 = vmul.f32 %v5611, %v5849
  %v5854 = vmul.f32 %v5615, %v5849
  %v5855 = vmul.f32 %v5619, %v5849
  %v5856 = vmul.f32 %v5623, %v5849
  %v5857 = vmul.f32 %v5627, %v5849
  %v5858 = vmul.f32 %v5631, %v5849
  %v5859 = vmul.f32 %v5635, %v5849
  %v5860 = vmul.f32 %v5639, %v5849
  %v5861 = vmul.f32 %v5643, %v5849
  %v5862 = vmul.f32 %v5647, %v5849
  %v5863 = vmul.f32 %v5651, %v5849
  %v5864 = vmul.f32 %v5655, %v5849
  %v5865 = vmul.f32 %v5659, %v5849
  %v5866 = vmul.f32 %v5663, %v5849
  %v5867 = vmul.f32 %v5667, %v5849
  %v5868 = vmul.f32 %v5671, %v5849
  %v5869 = vmul.f32 %v5675, %v5849
  %v5870 = vmul.f32 %v5679, %v5849
  %v5871 = vmul.f32 %v5683, %v5849
  %v5872 = vmul.f32 %v5687, %v5849
  %v5873 = vmul.f32 %v5691, %v5849
  %v5874 = vmul.f32 %v5695, %v5849
  %v5875 = vmul.f32 %v5699, %v5849
  %v5876 = vmul.f32 %v5703, %v5849
  %v5877 = vmul.f32 %v5707, %v5849
  %v5878 = vmul.f32 %v5711, %v5849
  %v5879 = vmul.f32 %v5715, %v5849
  %v5880 = vmul.f32 %v5719, %v5849
  %v5881 = vmul.f32 %v5723, %v5849
  %v5882 = vmul.f32 %v5727, %v5849
  %v5883 = vmul.f32 %v5731, %v5849
  %v5884 = vmul.f32 %v5735, %v5849
  %v5885 = vmul.f32 %v5739, %v5849
  %v5886 = vmul.f32 %v5743, %v5849
  %v5887 = vmul.f32 %v5747, %v5849
  %v5888 = vmul.f32 %v5751, %v5849
  %v5889 = vmul.f32 %v5755, %v5849
  %v5890 = vmul.f32 %v5759, %v5849
  %v5891 = vmul.f32 %v5763, %v5849
  %v5892 = vmul.f32 %v5767, %v5849
  %v5893 = vmul.f32 %v5771, %v5849
  %v5894 = vmul.f32 %v5775, %v5849
  %v5895 = vmul.f32 %v5779, %v5849
  %v5896 = vmul.f32 %v5783, %v5849
  %v5897 = vmul.f32 %v5787, %v5849
  %v5898 = vmul.f32 %v5791, %v5849
  %v5899 = vmul.f32 %v5795, %v5849
  %v5900 = vmul.f32 %v5799, %v5849
  %v5901 = vmul.f32 %v5803, %v5849
  %v5902 = vmul.f32 %v5807, %v5849
  %v5903 = vmul.f32 %v5811, %v5849
  %v5904 = vmul.f32 %v5815, %v5849
  %v5905 = vmul.f32 %v5819, %v5849
  %v5906 = vmul.f32 %v5823, %v5849
  %v5907 = vmul.f32 %v5827, %v5849
  %v5908 = vmul.f32 %v5831, %v5849
  %v5909 = vmul.f32 %v5835, %v5849
  %v5910 = vmul.f32 %v5839, %v5849
  %v5911 = vmul.f32 %v5843, %v5849
  %v5912 = vmul.f32 %v5847, %v5849
  %v5913 = vadd.f32 %v5534, %v5850
  %v5914 = vadd.f32 %v5535, %v5851
  %v5915 = vadd.f32 %v5536, %v5852
  %v5916 = vadd.f32 %v5537, %v5853
  %v5917 = vadd.f32 %v5538, %v5854
  %v5918 = vadd.f32 %v5539, %v5855
  %v5919 = vadd.f32 %v5540, %v5856
  %v5920 = vadd.f32 %v5541, %v5857
  %v5921 = vadd.f32 %v5542, %v5858
  %v5922 = vadd.f32 %v5543, %v5859
  %v5923 = vadd.f32 %v5544, %v5860
  %v5924 = vadd.f32 %v5545, %v5861
  %v5925 = vadd.f32 %v5546, %v5862
  %v5926 = vadd.f32 %v5547, %v5863
  %v5927 = vadd.f32 %v5548, %v5864
  %v5928 = vadd.f32 %v5549, %v5865
  %v5929 = vadd.f32 %v5550, %v5866
  %v5930 = vadd.f32 %v5551, %v5867
  %v5931 = vadd.f32 %v5552, %v5868
  %v5932 = vadd.f32 %v5553, %v5869
  %v5933 = vadd.f32 %v5554, %v5870
  %v5934 = vadd.f32 %v5555, %v5871
  %v5935 = vadd.f32 %v5556, %v5872
  %v5936 = vadd.f32 %v5557, %v5873
  %v5937 = vadd.f32 %v5558, %v5874
  %v5938 = vadd.f32 %v5559, %v5875
  %v5939 = vadd.f32 %v5560, %v5876
  %v5940 = vadd.f32 %v5561, %v5877
  %v5941 = vadd.f32 %v5562, %v5878
  %v5942 = vadd.f32 %v5563, %v5879
  %v5943 = vadd.f32 %v5564, %v5880
  %v5944 = vadd.f32 %v5565, %v5881
  %v5945 = vadd.f32 %v5566, %v5882
  %v5946 = vadd.f32 %v5567, %v5883
  %v5947 = vadd.f32 %v5568, %v5884
  %v5948 = vadd.f32 %v5569, %v5885
  %v5949 = vadd.f32 %v5570, %v5886
  %v5950 = vadd.f32 %v5571, %v5887
  %v5951 = vadd.f32 %v5572, %v5888
  %v5952 = vadd.f32 %v5573, %v5889
  %v5953 = vadd.f32 %v5574, %v5890
  %v5954 = vadd.f32 %v5575, %v5891
  %v5955 = vadd.f32 %v5576, %v5892
  %v5956 = vadd.f32 %v5577, %v5893
  %v5957 = vadd.f32 %v5578, %v5894
  %v5958 = vadd.f32 %v5579, %v5895
  %v5959 = vadd.f32 %v5580, %v5896
  %v5960 = vadd.f32 %v5581, %v5897
  %v5961 = vadd.f32 %v5582, %v5898
  %v5962 = vadd.f32 %v5583, %v5899
  %v5963 = vadd.f32 %v5584, %v5900
  %v5964 = vadd.f32 %v5585, %v5901
  %v5965 = vadd.f32 %v5586, %v5902
  %v5966 = vadd.f32 %v5587, %v5903
  %v5967 = vadd.f32 %v5588, %v5904
  %v5968 = vadd.f32 %v5589, %v5905
  %v5969 = vadd.f32 %v5590, %v5906
  %v5970 = vadd.f32 %v5591, %v5907
  %v5971 = vadd.f32 %v5592, %v5908
  %v5972 = vadd.f32 %v5593, %v5909
  %v5973 = vadd.f32 %v5594, %v5910
  %v5974 = vadd.f32 %v5595, %v5911
  %v5975 = vadd.f32 %v5596, %v5912
  %v5976 = vmax.f32 %v5913, 0.0
  %v5977 = vmax.f32 %v5914, 0.0
  %v5978 = vmax.f32 %v5915, 0.0
  %v5979 = vmax.f32 %v5916, 0.0
  %v5980 = vmax.f32 %v5917, 0.0
  %v5981 = vmax.f32 %v5918, 0.0
  %v5982 = vmax.f32 %v5919, 0.0
  %v5983 = vmax.f32 %v5920, 0.0
  %v5984 = vmax.f32 %v5921, 0.0
  %v5985 = vmax.f32 %v5922, 0.0
  %v5986 = vmax.f32 %v5923, 0.0
  %v5987 = vmax.f32 %v5924, 0.0
  %v5988 = vmax.f32 %v5925, 0.0
  %v5989 = vmax.f32 %v5926, 0.0
  %v5990 = vmax.f32 %v5927, 0.0
  %v5991 = vmax.f32 %v5928, 0.0
  %v5992 = vmax.f32 %v5929, 0.0
  %v5993 = vmax.f32 %v5930, 0.0
  %v5994 = vmax.f32 %v5931, 0.0
  %v5995 = vmax.f32 %v5932, 0.0
  %v5996 = vmax.f32 %v5933, 0.0
  %v5997 = vmax.f32 %v5934, 0.0
  %v5998 = vmax.f32 %v5935, 0.0
  %v5999 = vmax.f32 %v5936, 0.0
  %v6000 = vmax.f32 %v5937, 0.0
  %v6001 = vmax.f32 %v5938, 0.0
  %v6002 = vmax.f32 %v5939, 0.0
  %v6003 = vmax.f32 %v5940, 0.0
  %v6004 = vmax.f32 %v5941, 0.0
  %v6005 = vmax.f32 %v5942, 0.0
  %v6006 = vmax.f32 %v5943, 0.0
  %v6007 = vmax.f32 %v5944, 0.0
  %v6008 = vmax.f32 %v5945, 0.0
  %v6009 = vmax.f32 %v5946, 0.0
  %v6010 = vmax.f32 %v5947, 0.0
  %v6011 = vmax.f32 %v5948, 0.0
  %v6012 = vmax.f32 %v5949, 0.0
  %v6013 = vmax.f32 %v5950, 0.0
  %v6014 = vmax.f32 %v5951, 0.0
  %v6015 = vmax.f32 %v5952, 0.0
  %v6016 = vmax.f32 %v5953, 0.0
  %v6017 = vmax.f32 %v5954, 0.0
  %v6018 = vmax.f32 %v5955, 0.0
  %v6019 = vmax.f32 %v5956, 0.0
  %v6020 = vmax.f32 %v5957, 0.0
  %v6021 = vmax.f32 %v5958, 0.0
  %v6022 = vmax.f32 %v5959, 0.0
  %v6023 = vmax.f32 %v5960, 0.0
  %v6024 = vmax.f32 %v5961, 0.0
  %v6025 = vmax.f32 %v5962, 0.0
  %v6026 = vmax.f32 %v5963, 0.0
  %v6027 = vmax.f32 %v5964, 0.0
  %v6028 = vmax.f32 %v5965, 0.0
  %v6029 = vmax.f32 %v5966, 0.0
  %v6030 = vmax.f32 %v5967, 0.0
  %v6031 = vmax.f32 %v5968, 0.0
  %v6032 = vmax.f32 %v5969, 0.0
  %v6033 = vmax.f32 %v5970, 0.0
  %v6034 = vmax.f32 %v5971, 0.0
  %v6035 = vmax.f32 %v5972, 0.0
  %v6036 = vmax.f32 %v5973, 0.0
  %v6037 = vmax.f32 %v5974, 0.0
  %v6038 = vmax.f32 %v5975, 0.0
  %v6039 = vpack.c.bf16 %v5977, %v5976
  %v6040 = vpack.c.bf16 %v5979, %v5978
  %v6041 = vpack.c.bf16 %v5981, %v5980
  %v6042 = vpack.c.bf16 %v5983, %v5982
  %v6043 = vpack.c.bf16 %v5985, %v5984
  %v6044 = vpack.c.bf16 %v5987, %v5986
  %v6045 = vpack.c.bf16 %v5989, %v5988
  %v6046 = vpack.c.bf16 %v5991, %v5990
  %v6047 = vpack.c.bf16 %v5993, %v5992
  %v6048 = vpack.c.bf16 %v5995, %v5994
  %v6049 = vpack.c.bf16 %v5997, %v5996
  %v6050 = vpack.c.bf16 %v5999, %v5998
  %v6051 = vpack.c.bf16 %v6001, %v6000
  %v6052 = vpack.c.bf16 %v6003, %v6002
  %v6053 = vpack.c.bf16 %v6005, %v6004
  %v6054 = vpack.c.bf16 %v6007, %v6006
  %v6055 = vpack.c.bf16 %v6009, %v6008
  %v6056 = vpack.c.bf16 %v6011, %v6010
  %v6057 = vpack.c.bf16 %v6013, %v6012
  %v6058 = vpack.c.bf16 %v6015, %v6014
  %v6059 = vpack.c.bf16 %v6017, %v6016
  %v6060 = vpack.c.bf16 %v6019, %v6018
  %v6061 = vpack.c.bf16 %v6021, %v6020
  %v6062 = vpack.c.bf16 %v6023, %v6022
  %v6063 = vpack.c.bf16 %v6025, %v6024
  %v6064 = vpack.c.bf16 %v6027, %v6026
  %v6065 = vpack.c.bf16 %v6029, %v6028
  %v6066 = vpack.c.bf16 %v6031, %v6030
  %v6067 = vpack.c.bf16 %v6033, %v6032
  %v6068 = vpack.c.bf16 %v6035, %v6034
  %v6069 = vpack.c.bf16 %v6037, %v6036
  %v6070 = vpack.c.bf16 %v6038, %v6038
  %s6071 = scalar_lea.vmem %s3, 64
  %v6072 = vld [vmem:[%s6071] sm:$0xf]
  %v6073 = vld [vmem:[%s6071 + $0x4] sm:$0xf]
  %v6074 = vld [vmem:[%s6071 + $0x8] sm:$0xf]
  %v6075 = vld [vmem:[%s6071 + $0xc] sm:$0xf]
  %v6076 = vld [vmem:[%s6071 + $0x10] sm:$0xf]
  %v6077 = vld [vmem:[%s6071 + $0x14] sm:$0xf]
  %v6078 = vld [vmem:[%s6071 + $0x18] sm:$0xf]
  %v6079 = vld [vmem:[%s6071 + $0x1c] sm:$0xf]
  %v6080 = vperm.slane %v88, 0
  %v6089 = vunpack.c.l.b16 %v6072
  %v6090 = vunpack.c.l.b16 %v6073
  %v6091 = vunpack.c.l.b16 %v6074
  %v6092 = vunpack.c.l.b16 %v6075
  %v6093 = vunpack.c.l.b16 %v6076
  %v6094 = vunpack.c.l.b16 %v6077
  %v6095 = vunpack.c.l.b16 %v6078
  %v6096 = vunpack.c.l.b16 %v6079
  %v6097 = vpack.c.b16 %v6090, %v6089
  %v6098 = vpack.c.b16 %v6092, %v6091
  %v6099 = vpack.c.b16 %v6094, %v6093
  %v6100 = vpack.c.b16 %v6096, %v6095
  %vm6105 = vcmask 523264
  %v6107 = vsel %vm6105, %v6039, 0
  %v6110 = vsel %vm6105, %v6040, 0
  %v6113 = vsel %vm6105, %v6041, 0
  %v6116 = vsel %vm6105, %v6042, 0
  %v6119 = vsel %vm6105, %v6043, 0
  %v6122 = vsel %vm6105, %v6044, 0
  %v6125 = vsel %vm6105, %v6045, 0
  %v6128 = vsel %vm6105, %v6046, 0
  %v6131 = vsel %vm6105, %v6047, 0
  %v6134 = vsel %vm6105, %v6048, 0
  %v6137 = vsel %vm6105, %v6049, 0
  %v6140 = vsel %vm6105, %v6050, 0
  %v6143 = vsel %vm6105, %v6051, 0
  %v6146 = vsel %vm6105, %v6052, 0
  %v6149 = vsel %vm6105, %v6053, 0
  %v6152 = vsel %vm6105, %v6054, 0
  %v6155 = vsel %vm6105, %v6055, 0
  %v6158 = vsel %vm6105, %v6056, 0
  %v6161 = vsel %vm6105, %v6057, 0
  %v6164 = vsel %vm6105, %v6058, 0
  %v6167 = vsel %vm6105, %v6059, 0
  %v6170 = vsel %vm6105, %v6060, 0
  %v6173 = vsel %vm6105, %v6061, 0
  %v6176 = vsel %vm6105, %v6062, 0
  %v6179 = vsel %vm6105, %v6063, 0
  %v6182 = vsel %vm6105, %v6064, 0
  %v6185 = vsel %vm6105, %v6065, 0
  %v6188 = vsel %vm6105, %v6066, 0
  %v6191 = vsel %vm6105, %v6067, 0
  %v6194 = vsel %vm6105, %v6068, 0
  %v6197 = vsel %vm6105, %v6069, 0
  %v6200 = vsel %vm6105, %v6070, 0
  %6202 = vmatpush.bf16.msra.mxu0 0
  %6203 = vmatpush.bf16.msra.mxu0 0
  %6204 = vmatpush.bf16.msra.mxu0 0
  %6205 = vmatpush.bf16.msra.mxu0 0
  %6206 = vmatpush.bf16.msra.mxu0 %v6100
  %6207 = vmatpush.bf16.msra.mxu0 %v6099
  %6208 = vmatpush.bf16.msra.mxu0 %v6098
  %6209 = vmatpush.bf16.msra.mxu0 %v6097
  %6210 = vmatmul.bf16.gmra.mxu0 %v6107
  %v6211 = vpop.f32.mrf.mxu0
  %v6212 = vadd.f32 %v6080, %v6211
  %v6213 = vpop.f32.mrf.mxu0
  %v6214 = vadd.f32 %v6080, %v6213
  %6215 = vmatmul.bf16.gmra.mxu0 %v6110
  %v6216 = vpop.f32.mrf.mxu0
  %v6217 = vadd.f32 %v6080, %v6216
  %v6218 = vpop.f32.mrf.mxu0
  %v6219 = vadd.f32 %v6080, %v6218
  %6220 = vmatmul.bf16.gmra.mxu0 %v6113
  %v6221 = vpop.f32.mrf.mxu0
  %v6222 = vadd.f32 %v6080, %v6221
  %v6223 = vpop.f32.mrf.mxu0
  %v6224 = vadd.f32 %v6080, %v6223
  %6225 = vmatmul.bf16.gmra.mxu0 %v6116
  %v6226 = vpop.f32.mrf.mxu0
  %v6227 = vadd.f32 %v6080, %v6226
  %v6228 = vpop.f32.mrf.mxu0
  %v6229 = vadd.f32 %v6080, %v6228
  %6230 = vmatmul.bf16.gmra.mxu0 %v6119
  %v6231 = vpop.f32.mrf.mxu0
  %v6232 = vadd.f32 %v6080, %v6231
  %v6233 = vpop.f32.mrf.mxu0
  %v6234 = vadd.f32 %v6080, %v6233
  %6235 = vmatmul.bf16.gmra.mxu0 %v6122
  %v6236 = vpop.f32.mrf.mxu0
  %v6237 = vadd.f32 %v6080, %v6236
  %v6238 = vpop.f32.mrf.mxu0
  %v6239 = vadd.f32 %v6080, %v6238
  %6240 = vmatmul.bf16.gmra.mxu0 %v6125
  %v6241 = vpop.f32.mrf.mxu0
  %v6242 = vadd.f32 %v6080, %v6241
  %v6243 = vpop.f32.mrf.mxu0
  %v6244 = vadd.f32 %v6080, %v6243
  %6245 = vmatmul.bf16.gmra.mxu0 %v6128
  %v6246 = vpop.f32.mrf.mxu0
  %v6247 = vadd.f32 %v6080, %v6246
  %v6248 = vpop.f32.mrf.mxu0
  %v6249 = vadd.f32 %v6080, %v6248
  %6250 = vmatmul.bf16.gmra.mxu0 %v6131
  %v6251 = vpop.f32.mrf.mxu0
  %v6252 = vadd.f32 %v6080, %v6251
  %v6253 = vpop.f32.mrf.mxu0
  %v6254 = vadd.f32 %v6080, %v6253
  %6255 = vmatmul.bf16.gmra.mxu0 %v6134
  %v6256 = vpop.f32.mrf.mxu0
  %v6257 = vadd.f32 %v6080, %v6256
  %v6258 = vpop.f32.mrf.mxu0
  %v6259 = vadd.f32 %v6080, %v6258
  %6260 = vmatmul.bf16.gmra.mxu0 %v6137
  %v6261 = vpop.f32.mrf.mxu0
  %v6262 = vadd.f32 %v6080, %v6261
  %v6263 = vpop.f32.mrf.mxu0
  %v6264 = vadd.f32 %v6080, %v6263
  %6265 = vmatmul.bf16.gmra.mxu0 %v6140
  %v6266 = vpop.f32.mrf.mxu0
  %v6267 = vadd.f32 %v6080, %v6266
  %v6268 = vpop.f32.mrf.mxu0
  %v6269 = vadd.f32 %v6080, %v6268
  %6270 = vmatmul.bf16.gmra.mxu0 %v6143
  %v6271 = vpop.f32.mrf.mxu0
  %v6272 = vadd.f32 %v6080, %v6271
  %v6273 = vpop.f32.mrf.mxu0
  %v6274 = vadd.f32 %v6080, %v6273
  %6275 = vmatmul.bf16.gmra.mxu0 %v6146
  %v6276 = vpop.f32.mrf.mxu0
  %v6277 = vadd.f32 %v6080, %v6276
  %v6278 = vpop.f32.mrf.mxu0
  %v6279 = vadd.f32 %v6080, %v6278
  %6280 = vmatmul.bf16.gmra.mxu0 %v6149
  %v6281 = vpop.f32.mrf.mxu0
  %v6282 = vadd.f32 %v6080, %v6281
  %v6283 = vpop.f32.mrf.mxu0
  %v6284 = vadd.f32 %v6080, %v6283
  %6285 = vmatmul.bf16.gmra.mxu0 %v6152
  %v6286 = vpop.f32.mrf.mxu0
  %v6287 = vadd.f32 %v6080, %v6286
  %v6288 = vpop.f32.mrf.mxu0
  %v6289 = vadd.f32 %v6080, %v6288
  %6290 = vmatmul.bf16.gmra.mxu0 %v6155
  %v6291 = vpop.f32.mrf.mxu0
  %v6292 = vadd.f32 %v6080, %v6291
  %v6293 = vpop.f32.mrf.mxu0
  %v6294 = vadd.f32 %v6080, %v6293
  %6295 = vmatmul.bf16.gmra.mxu0 %v6158
  %v6296 = vpop.f32.mrf.mxu0
  %v6297 = vadd.f32 %v6080, %v6296
  %v6298 = vpop.f32.mrf.mxu0
  %v6299 = vadd.f32 %v6080, %v6298
  %6300 = vmatmul.bf16.gmra.mxu0 %v6161
  %v6301 = vpop.f32.mrf.mxu0
  %v6302 = vadd.f32 %v6080, %v6301
  %v6303 = vpop.f32.mrf.mxu0
  %v6304 = vadd.f32 %v6080, %v6303
  %6305 = vmatmul.bf16.gmra.mxu0 %v6164
  %v6306 = vpop.f32.mrf.mxu0
  %v6307 = vadd.f32 %v6080, %v6306
  %v6308 = vpop.f32.mrf.mxu0
  %v6309 = vadd.f32 %v6080, %v6308
  %6310 = vmatmul.bf16.gmra.mxu0 %v6167
  %v6311 = vpop.f32.mrf.mxu0
  %v6312 = vadd.f32 %v6080, %v6311
  %v6313 = vpop.f32.mrf.mxu0
  %v6314 = vadd.f32 %v6080, %v6313
  %6315 = vmatmul.bf16.gmra.mxu0 %v6170
  %v6316 = vpop.f32.mrf.mxu0
  %v6317 = vadd.f32 %v6080, %v6316
  %v6318 = vpop.f32.mrf.mxu0
  %v6319 = vadd.f32 %v6080, %v6318
  %6320 = vmatmul.bf16.gmra.mxu0 %v6173
  %v6321 = vpop.f32.mrf.mxu0
  %v6322 = vadd.f32 %v6080, %v6321
  %v6323 = vpop.f32.mrf.mxu0
  %v6324 = vadd.f32 %v6080, %v6323
  %6325 = vmatmul.bf16.gmra.mxu0 %v6176
  %v6326 = vpop.f32.mrf.mxu0
  %v6327 = vadd.f32 %v6080, %v6326
  %v6328 = vpop.f32.mrf.mxu0
  %v6329 = vadd.f32 %v6080, %v6328
  %6330 = vmatmul.bf16.gmra.mxu0 %v6179
  %v6331 = vpop.f32.mrf.mxu0
  %v6332 = vadd.f32 %v6080, %v6331
  %v6333 = vpop.f32.mrf.mxu0
  %v6334 = vadd.f32 %v6080, %v6333
  %6335 = vmatmul.bf16.gmra.mxu0 %v6182
  %v6336 = vpop.f32.mrf.mxu0
  %v6337 = vadd.f32 %v6080, %v6336
  %v6338 = vpop.f32.mrf.mxu0
  %v6339 = vadd.f32 %v6080, %v6338
  %6340 = vmatmul.bf16.gmra.mxu0 %v6185
  %v6341 = vpop.f32.mrf.mxu0
  %v6342 = vadd.f32 %v6080, %v6341
  %v6343 = vpop.f32.mrf.mxu0
  %v6344 = vadd.f32 %v6080, %v6343
  %6345 = vmatmul.bf16.gmra.mxu0 %v6188
  %v6346 = vpop.f32.mrf.mxu0
  %v6347 = vadd.f32 %v6080, %v6346
  %v6348 = vpop.f32.mrf.mxu0
  %v6349 = vadd.f32 %v6080, %v6348
  %6350 = vmatmul.bf16.gmra.mxu0 %v6191
  %v6351 = vpop.f32.mrf.mxu0
  %v6352 = vadd.f32 %v6080, %v6351
  %v6353 = vpop.f32.mrf.mxu0
  %v6354 = vadd.f32 %v6080, %v6353
  %6355 = vmatmul.bf16.gmra.mxu0 %v6194
  %v6356 = vpop.f32.mrf.mxu0
  %v6357 = vadd.f32 %v6080, %v6356
  %v6358 = vpop.f32.mrf.mxu0
  %v6359 = vadd.f32 %v6080, %v6358
  %6360 = vmatmul.bf16.gmra.mxu0 %v6197
  %v6361 = vpop.f32.mrf.mxu0
  %v6362 = vadd.f32 %v6080, %v6361
  %v6363 = vpop.f32.mrf.mxu0
  %v6364 = vadd.f32 %v6080, %v6363
  %6365 = vmatmul.bf16.gmra.mxu0 %v6200
  %v6366 = vpop.f32.mrf.mxu0
  %v6367 = vadd.f32 %v6080, %v6366
  %v6368 = vpop.f32.mrf.mxu0
  %6369 = vdwg.mxu0
  %v6370 = vxor.u32 %v6212, 2147483648
  %v6371 = vxor.u32 %v6214, 2147483648
  %v6372 = vxor.u32 %v6217, 2147483648
  %v6373 = vxor.u32 %v6219, 2147483648
  %v6374 = vxor.u32 %v6222, 2147483648
  %v6375 = vxor.u32 %v6224, 2147483648
  %v6376 = vxor.u32 %v6227, 2147483648
  %v6377 = vxor.u32 %v6229, 2147483648
  %v6378 = vxor.u32 %v6232, 2147483648
  %v6379 = vxor.u32 %v6234, 2147483648
  %v6380 = vxor.u32 %v6237, 2147483648
  %v6381 = vxor.u32 %v6239, 2147483648
  %v6382 = vxor.u32 %v6242, 2147483648
  %v6383 = vxor.u32 %v6244, 2147483648
  %v6384 = vxor.u32 %v6247, 2147483648
  %v6385 = vxor.u32 %v6249, 2147483648
  %v6386 = vxor.u32 %v6252, 2147483648
  %v6387 = vxor.u32 %v6254, 2147483648
  %v6388 = vxor.u32 %v6257, 2147483648
  %v6389 = vxor.u32 %v6259, 2147483648
  %v6390 = vxor.u32 %v6262, 2147483648
  %v6391 = vxor.u32 %v6264, 2147483648
  %v6392 = vxor.u32 %v6267, 2147483648
  %v6393 = vxor.u32 %v6269, 2147483648
  %v6394 = vxor.u32 %v6272, 2147483648
  %v6395 = vxor.u32 %v6274, 2147483648
  %v6396 = vxor.u32 %v6277, 2147483648
  %v6397 = vxor.u32 %v6279, 2147483648
  %v6398 = vxor.u32 %v6282, 2147483648
  %v6399 = vxor.u32 %v6284, 2147483648
  %v6400 = vxor.u32 %v6287, 2147483648
  %v6401 = vxor.u32 %v6289, 2147483648
  %v6402 = vxor.u32 %v6292, 2147483648
  %v6403 = vxor.u32 %v6294, 2147483648
  %v6404 = vxor.u32 %v6297, 2147483648
  %v6405 = vxor.u32 %v6299, 2147483648
  %v6406 = vxor.u32 %v6302, 2147483648
  %v6407 = vxor.u32 %v6304, 2147483648
  %v6408 = vxor.u32 %v6307, 2147483648
  %v6409 = vxor.u32 %v6309, 2147483648
  %v6410 = vxor.u32 %v6312, 2147483648
  %v6411 = vxor.u32 %v6314, 2147483648
  %v6412 = vxor.u32 %v6317, 2147483648
  %v6413 = vxor.u32 %v6319, 2147483648
  %v6414 = vxor.u32 %v6322, 2147483648
  %v6415 = vxor.u32 %v6324, 2147483648
  %v6416 = vxor.u32 %v6327, 2147483648
  %v6417 = vxor.u32 %v6329, 2147483648
  %v6418 = vxor.u32 %v6332, 2147483648
  %v6419 = vxor.u32 %v6334, 2147483648
  %v6420 = vxor.u32 %v6337, 2147483648
  %v6421 = vxor.u32 %v6339, 2147483648
  %v6422 = vxor.u32 %v6342, 2147483648
  %v6423 = vxor.u32 %v6344, 2147483648
  %v6424 = vxor.u32 %v6347, 2147483648
  %v6425 = vxor.u32 %v6349, 2147483648
  %v6426 = vxor.u32 %v6352, 2147483648
  %v6427 = vxor.u32 %v6354, 2147483648
  %v6428 = vxor.u32 %v6357, 2147483648
  %v6429 = vxor.u32 %v6359, 2147483648
  %v6430 = vxor.u32 %v6362, 2147483648
  %v6431 = vxor.u32 %v6364, 2147483648
  %v6432 = vxor.u32 %v6367, 2147483648
  %v6433 = vmul.f32 %v6370, 1.442695
  %v6434 = vpow.pop %v6433
  %v6435 = vmul.f32 %v6371, 1.442695
  %v6436 = vpow.pop %v6435
  %v6437 = vmul.f32 %v6372, 1.442695
  %v6438 = vpow.pop %v6437
  %v6439 = vmul.f32 %v6373, 1.442695
  %v6440 = vpow.pop %v6439
  %v6441 = vmul.f32 %v6374, 1.442695
  %v6442 = vpow.pop %v6441
  %v6443 = vmul.f32 %v6375, 1.442695
  %v6444 = vpow.pop %v6443
  %v6445 = vmul.f32 %v6376, 1.442695
  %v6446 = vpow.pop %v6445
  %v6447 = vmul.f32 %v6377, 1.442695
  %v6448 = vpow.pop %v6447
  %v6449 = vmul.f32 %v6378, 1.442695
  %v6450 = vpow.pop %v6449
  %v6451 = vmul.f32 %v6379, 1.442695
  %v6452 = vpow.pop %v6451
  %v6453 = vmul.f32 %v6380, 1.442695
  %v6454 = vpow.pop %v6453
  %v6455 = vmul.f32 %v6381, 1.442695
  %v6456 = vpow.pop %v6455
  %v6457 = vmul.f32 %v6382, 1.442695
  %v6458 = vpow.pop %v6457
  %v6459 = vmul.f32 %v6383, 1.442695
  %v6460 = vpow.pop %v6459
  %v6461 = vmul.f32 %v6384, 1.442695
  %v6462 = vpow.pop %v6461
  %v6463 = vmul.f32 %v6385, 1.442695
  %v6464 = vpow.pop %v6463
  %v6465 = vmul.f32 %v6386, 1.442695
  %v6466 = vpow.pop %v6465
  %v6467 = vmul.f32 %v6387, 1.442695
  %v6468 = vpow.pop %v6467
  %v6469 = vmul.f32 %v6388, 1.442695
  %v6470 = vpow.pop %v6469
  %v6471 = vmul.f32 %v6389, 1.442695
  %v6472 = vpow.pop %v6471
  %v6473 = vmul.f32 %v6390, 1.442695
  %v6474 = vpow.pop %v6473
  %v6475 = vmul.f32 %v6391, 1.442695
  %v6476 = vpow.pop %v6475
  %v6477 = vmul.f32 %v6392, 1.442695
  %v6478 = vpow.pop %v6477
  %v6479 = vmul.f32 %v6393, 1.442695
  %v6480 = vpow.pop %v6479
  %v6481 = vmul.f32 %v6394, 1.442695
  %v6482 = vpow.pop %v6481
  %v6483 = vmul.f32 %v6395, 1.442695
  %v6484 = vpow.pop %v6483
  %v6485 = vmul.f32 %v6396, 1.442695
  %v6486 = vpow.pop %v6485
  %v6487 = vmul.f32 %v6397, 1.442695
  %v6488 = vpow.pop %v6487
  %v6489 = vmul.f32 %v6398, 1.442695
  %v6490 = vpow.pop %v6489
  %v6491 = vmul.f32 %v6399, 1.442695
  %v6492 = vpow.pop %v6491
  %v6493 = vmul.f32 %v6400, 1.442695
  %v6494 = vpow.pop %v6493
  %v6495 = vmul.f32 %v6401, 1.442695
  %v6496 = vpow.pop %v6495
  %v6497 = vmul.f32 %v6402, 1.442695
  %v6498 = vpow.pop %v6497
  %v6499 = vmul.f32 %v6403, 1.442695
  %v6500 = vpow.pop %v6499
  %v6501 = vmul.f32 %v6404, 1.442695
  %v6502 = vpow.pop %v6501
  %v6503 = vmul.f32 %v6405, 1.442695
  %v6504 = vpow.pop %v6503
  %v6505 = vmul.f32 %v6406, 1.442695
  %v6506 = vpow.pop %v6505
  %v6507 = vmul.f32 %v6407, 1.442695
  %v6508 = vpow.pop %v6507
  %v6509 = vmul.f32 %v6408, 1.442695
  %v6510 = vpow.pop %v6509
  %v6511 = vmul.f32 %v6409, 1.442695
  %v6512 = vpow.pop %v6511
  %v6513 = vmul.f32 %v6410, 1.442695
  %v6514 = vpow.pop %v6513
  %v6515 = vmul.f32 %v6411, 1.442695
  %v6516 = vpow.pop %v6515
  %v6517 = vmul.f32 %v6412, 1.442695
  %v6518 = vpow.pop %v6517
  %v6519 = vmul.f32 %v6413, 1.442695
  %v6520 = vpow.pop %v6519
  %v6521 = vmul.f32 %v6414, 1.442695
  %v6522 = vpow.pop %v6521
  %v6523 = vmul.f32 %v6415, 1.442695
  %v6524 = vpow.pop %v6523
  %v6525 = vmul.f32 %v6416, 1.442695
  %v6526 = vpow.pop %v6525
  %v6527 = vmul.f32 %v6417, 1.442695
  %v6528 = vpow.pop %v6527
  %v6529 = vmul.f32 %v6418, 1.442695
  %v6530 = vpow.pop %v6529
  %v6531 = vmul.f32 %v6419, 1.442695
  %v6532 = vpow.pop %v6531
  %v6533 = vmul.f32 %v6420, 1.442695
  %v6534 = vpow.pop %v6533
  %v6535 = vmul.f32 %v6421, 1.442695
  %v6536 = vpow.pop %v6535
  %v6537 = vmul.f32 %v6422, 1.442695
  %v6538 = vpow.pop %v6537
  %v6539 = vmul.f32 %v6423, 1.442695
  %v6540 = vpow.pop %v6539
  %v6541 = vmul.f32 %v6424, 1.442695
  %v6542 = vpow.pop %v6541
  %v6543 = vmul.f32 %v6425, 1.442695
  %v6544 = vpow.pop %v6543
  %v6545 = vmul.f32 %v6426, 1.442695
  %v6546 = vpow.pop %v6545
  %v6547 = vmul.f32 %v6427, 1.442695
  %v6548 = vpow.pop %v6547
  %v6549 = vmul.f32 %v6428, 1.442695
  %v6550 = vpow.pop %v6549
  %v6551 = vmul.f32 %v6429, 1.442695
  %v6552 = vpow.pop %v6551
  %v6553 = vmul.f32 %v6430, 1.442695
  %v6554 = vpow.pop %v6553
  %v6555 = vmul.f32 %v6431, 1.442695
  %v6556 = vpow.pop %v6555
  %v6557 = vmul.f32 %v6432, 1.442695
  %v6558 = vpow.pop %v6557
  %v6559 = vadd.f32 %v6434, 1.0
  %v6560 = vadd.f32 %v6436, 1.0
  %v6561 = vadd.f32 %v6438, 1.0
  %v6562 = vadd.f32 %v6440, 1.0
  %v6563 = vadd.f32 %v6442, 1.0
  %v6564 = vadd.f32 %v6444, 1.0
  %v6565 = vadd.f32 %v6446, 1.0
  %v6566 = vadd.f32 %v6448, 1.0
  %v6567 = vadd.f32 %v6450, 1.0
  %v6568 = vadd.f32 %v6452, 1.0
  %v6569 = vadd.f32 %v6454, 1.0
  %v6570 = vadd.f32 %v6456, 1.0
  %v6571 = vadd.f32 %v6458, 1.0
  %v6572 = vadd.f32 %v6460, 1.0
  %v6573 = vadd.f32 %v6462, 1.0
  %v6574 = vadd.f32 %v6464, 1.0
  %v6575 = vadd.f32 %v6466, 1.0
  %v6576 = vadd.f32 %v6468, 1.0
  %v6577 = vadd.f32 %v6470, 1.0
  %v6578 = vadd.f32 %v6472, 1.0
  %v6579 = vadd.f32 %v6474, 1.0
  %v6580 = vadd.f32 %v6476, 1.0
  %v6581 = vadd.f32 %v6478, 1.0
  %v6582 = vadd.f32 %v6480, 1.0
  %v6583 = vadd.f32 %v6482, 1.0
  %v6584 = vadd.f32 %v6484, 1.0
  %v6585 = vadd.f32 %v6486, 1.0
  %v6586 = vadd.f32 %v6488, 1.0
  %v6587 = vadd.f32 %v6490, 1.0
  %v6588 = vadd.f32 %v6492, 1.0
  %v6589 = vadd.f32 %v6494, 1.0
  %v6590 = vadd.f32 %v6496, 1.0
  %v6591 = vadd.f32 %v6498, 1.0
  %v6592 = vadd.f32 %v6500, 1.0
  %v6593 = vadd.f32 %v6502, 1.0
  %v6594 = vadd.f32 %v6504, 1.0
  %v6595 = vadd.f32 %v6506, 1.0
  %v6596 = vadd.f32 %v6508, 1.0
  %v6597 = vadd.f32 %v6510, 1.0
  %v6598 = vadd.f32 %v6512, 1.0
  %v6599 = vadd.f32 %v6514, 1.0
  %v6600 = vadd.f32 %v6516, 1.0
  %v6601 = vadd.f32 %v6518, 1.0
  %v6602 = vadd.f32 %v6520, 1.0
  %v6603 = vadd.f32 %v6522, 1.0
  %v6604 = vadd.f32 %v6524, 1.0
  %v6605 = vadd.f32 %v6526, 1.0
  %v6606 = vadd.f32 %v6528, 1.0
  %v6607 = vadd.f32 %v6530, 1.0
  %v6608 = vadd.f32 %v6532, 1.0
  %v6609 = vadd.f32 %v6534, 1.0
  %v6610 = vadd.f32 %v6536, 1.0
  %v6611 = vadd.f32 %v6538, 1.0
  %v6612 = vadd.f32 %v6540, 1.0
  %v6613 = vadd.f32 %v6542, 1.0
  %v6614 = vadd.f32 %v6544, 1.0
  %v6615 = vadd.f32 %v6546, 1.0
  %v6616 = vadd.f32 %v6548, 1.0
  %v6617 = vadd.f32 %v6550, 1.0
  %v6618 = vadd.f32 %v6552, 1.0
  %v6619 = vadd.f32 %v6554, 1.0
  %v6620 = vadd.f32 %v6556, 1.0
  %v6621 = vadd.f32 %v6558, 1.0
  %v6622 = vrcp.pop %v6559
  %v6623 = vmul.f32 %v6559, %v6622
  %v6624 = vsub.f32 1.0, %v6623
  %v6625 = vmul.f32 %v6622, %v6624
  %v6626 = vadd.f32 %v6622, %v6625
  %vm6627 = vweird.f32 %v6559
  %vm6628 = vweird.f32 %v6622
  %vm6629 = vmor %vm6627, %vm6628
  %v6630 = vsel %vm6629, %v6622, %v6626
  %v6631 = vand.u32 2147483647, %v6559
  %vm6632 = vcmp.eq.f32.partialorder %v6631, 8.507059e+37
  %v6633 = vand.u32 %v6559, 2147483648
  %v6634 = vor.u32 1.1754944e-38, %v6633
  %v6635 = vsel %vm6632, %v6634, %v6630
  %v6636 = vmul.f32 1.0, %v6635
  %v6637 = vrcp.pop %v6560
  %v6638 = vmul.f32 %v6560, %v6637
  %v6639 = vsub.f32 1.0, %v6638
  %v6640 = vmul.f32 %v6637, %v6639
  %v6641 = vadd.f32 %v6637, %v6640
  %vm6642 = vweird.f32 %v6560
  %vm6643 = vweird.f32 %v6637
  %vm6644 = vmor %vm6642, %vm6643
  %v6645 = vsel %vm6644, %v6637, %v6641
  %v6646 = vand.u32 2147483647, %v6560
  %vm6647 = vcmp.eq.f32.partialorder %v6646, 8.507059e+37
  %v6648 = vand.u32 %v6560, 2147483648
  %v6649 = vor.u32 1.1754944e-38, %v6648
  %v6650 = vsel %vm6647, %v6649, %v6645
  %v6651 = vmul.f32 1.0, %v6650
  %v6652 = vrcp.pop %v6561
  %v6653 = vmul.f32 %v6561, %v6652
  %v6654 = vsub.f32 1.0, %v6653
  %v6655 = vmul.f32 %v6652, %v6654
  %v6656 = vadd.f32 %v6652, %v6655
  %vm6657 = vweird.f32 %v6561
  %vm6658 = vweird.f32 %v6652
  %vm6659 = vmor %vm6657, %vm6658
  %v6660 = vsel %vm6659, %v6652, %v6656
  %v6661 = vand.u32 2147483647, %v6561
  %vm6662 = vcmp.eq.f32.partialorder %v6661, 8.507059e+37
  %v6663 = vand.u32 %v6561, 2147483648
  %v6664 = vor.u32 1.1754944e-38, %v6663
  %v6665 = vsel %vm6662, %v6664, %v6660
  %v6666 = vmul.f32 1.0, %v6665
  %v6667 = vrcp.pop %v6562
  %v6668 = vmul.f32 %v6562, %v6667
  %v6669 = vsub.f32 1.0, %v6668
  %v6670 = vmul.f32 %v6667, %v6669
  %v6671 = vadd.f32 %v6667, %v6670
  %vm6672 = vweird.f32 %v6562
  %vm6673 = vweird.f32 %v6667
  %vm6674 = vmor %vm6672, %vm6673
  %v6675 = vsel %vm6674, %v6667, %v6671
  %v6676 = vand.u32 2147483647, %v6562
  %vm6677 = vcmp.eq.f32.partialorder %v6676, 8.507059e+37
  %v6678 = vand.u32 %v6562, 2147483648
  %v6679 = vor.u32 1.1754944e-38, %v6678
  %v6680 = vsel %vm6677, %v6679, %v6675
  %v6681 = vmul.f32 1.0, %v6680
  %v6682 = vrcp.pop %v6563
  %v6683 = vmul.f32 %v6563, %v6682
  %v6684 = vsub.f32 1.0, %v6683
  %v6685 = vmul.f32 %v6682, %v6684
  %v6686 = vadd.f32 %v6682, %v6685
  %vm6687 = vweird.f32 %v6563
  %vm6688 = vweird.f32 %v6682
  %vm6689 = vmor %vm6687, %vm6688
  %v6690 = vsel %vm6689, %v6682, %v6686
  %v6691 = vand.u32 2147483647, %v6563
  %vm6692 = vcmp.eq.f32.partialorder %v6691, 8.507059e+37
  %v6693 = vand.u32 %v6563, 2147483648
  %v6694 = vor.u32 1.1754944e-38, %v6693
  %v6695 = vsel %vm6692, %v6694, %v6690
  %v6696 = vmul.f32 1.0, %v6695
  %v6697 = vrcp.pop %v6564
  %v6698 = vmul.f32 %v6564, %v6697
  %v6699 = vsub.f32 1.0, %v6698
  %v6700 = vmul.f32 %v6697, %v6699
  %v6701 = vadd.f32 %v6697, %v6700
  %vm6702 = vweird.f32 %v6564
  %vm6703 = vweird.f32 %v6697
  %vm6704 = vmor %vm6702, %vm6703
  %v6705 = vsel %vm6704, %v6697, %v6701
  %v6706 = vand.u32 2147483647, %v6564
  %vm6707 = vcmp.eq.f32.partialorder %v6706, 8.507059e+37
  %v6708 = vand.u32 %v6564, 2147483648
  %v6709 = vor.u32 1.1754944e-38, %v6708
  %v6710 = vsel %vm6707, %v6709, %v6705
  %v6711 = vmul.f32 1.0, %v6710
  %v6712 = vrcp.pop %v6565
  %v6713 = vmul.f32 %v6565, %v6712
  %v6714 = vsub.f32 1.0, %v6713
  %v6715 = vmul.f32 %v6712, %v6714
  %v6716 = vadd.f32 %v6712, %v6715
  %vm6717 = vweird.f32 %v6565
  %vm6718 = vweird.f32 %v6712
  %vm6719 = vmor %vm6717, %vm6718
  %v6720 = vsel %vm6719, %v6712, %v6716
  %v6721 = vand.u32 2147483647, %v6565
  %vm6722 = vcmp.eq.f32.partialorder %v6721, 8.507059e+37
  %v6723 = vand.u32 %v6565, 2147483648
  %v6724 = vor.u32 1.1754944e-38, %v6723
  %v6725 = vsel %vm6722, %v6724, %v6720
  %v6726 = vmul.f32 1.0, %v6725
  %v6727 = vrcp.pop %v6566
  %v6728 = vmul.f32 %v6566, %v6727
  %v6729 = vsub.f32 1.0, %v6728
  %v6730 = vmul.f32 %v6727, %v6729
  %v6731 = vadd.f32 %v6727, %v6730
  %vm6732 = vweird.f32 %v6566
  %vm6733 = vweird.f32 %v6727
  %vm6734 = vmor %vm6732, %vm6733
  %v6735 = vsel %vm6734, %v6727, %v6731
  %v6736 = vand.u32 2147483647, %v6566
  %vm6737 = vcmp.eq.f32.partialorder %v6736, 8.507059e+37
  %v6738 = vand.u32 %v6566, 2147483648
  %v6739 = vor.u32 1.1754944e-38, %v6738
  %v6740 = vsel %vm6737, %v6739, %v6735
  %v6741 = vmul.f32 1.0, %v6740
  %v6742 = vrcp.pop %v6567
  %v6743 = vmul.f32 %v6567, %v6742
  %v6744 = vsub.f32 1.0, %v6743
  %v6745 = vmul.f32 %v6742, %v6744
  %v6746 = vadd.f32 %v6742, %v6745
  %vm6747 = vweird.f32 %v6567
  %vm6748 = vweird.f32 %v6742
  %vm6749 = vmor %vm6747, %vm6748
  %v6750 = vsel %vm6749, %v6742, %v6746
  %v6751 = vand.u32 2147483647, %v6567
  %vm6752 = vcmp.eq.f32.partialorder %v6751, 8.507059e+37
  %v6753 = vand.u32 %v6567, 2147483648
  %v6754 = vor.u32 1.1754944e-38, %v6753
  %v6755 = vsel %vm6752, %v6754, %v6750
  %v6756 = vmul.f32 1.0, %v6755
  %v6757 = vrcp.pop %v6568
  %v6758 = vmul.f32 %v6568, %v6757
  %v6759 = vsub.f32 1.0, %v6758
  %v6760 = vmul.f32 %v6757, %v6759
  %v6761 = vadd.f32 %v6757, %v6760
  %vm6762 = vweird.f32 %v6568
  %vm6763 = vweird.f32 %v6757
  %vm6764 = vmor %vm6762, %vm6763
  %v6765 = vsel %vm6764, %v6757, %v6761
  %v6766 = vand.u32 2147483647, %v6568
  %vm6767 = vcmp.eq.f32.partialorder %v6766, 8.507059e+37
  %v6768 = vand.u32 %v6568, 2147483648
  %v6769 = vor.u32 1.1754944e-38, %v6768
  %v6770 = vsel %vm6767, %v6769, %v6765
  %v6771 = vmul.f32 1.0, %v6770
  %v6772 = vrcp.pop %v6569
  %v6773 = vmul.f32 %v6569, %v6772
  %v6774 = vsub.f32 1.0, %v6773
  %v6775 = vmul.f32 %v6772, %v6774
  %v6776 = vadd.f32 %v6772, %v6775
  %vm6777 = vweird.f32 %v6569
  %vm6778 = vweird.f32 %v6772
  %vm6779 = vmor %vm6777, %vm6778
  %v6780 = vsel %vm6779, %v6772, %v6776
  %v6781 = vand.u32 2147483647, %v6569
  %vm6782 = vcmp.eq.f32.partialorder %v6781, 8.507059e+37
  %v6783 = vand.u32 %v6569, 2147483648
  %v6784 = vor.u32 1.1754944e-38, %v6783
  %v6785 = vsel %vm6782, %v6784, %v6780
  %v6786 = vmul.f32 1.0, %v6785
  %v6787 = vrcp.pop %v6570
  %v6788 = vmul.f32 %v6570, %v6787
  %v6789 = vsub.f32 1.0, %v6788
  %v6790 = vmul.f32 %v6787, %v6789
  %v6791 = vadd.f32 %v6787, %v6790
  %vm6792 = vweird.f32 %v6570
  %vm6793 = vweird.f32 %v6787
  %vm6794 = vmor %vm6792, %vm6793
  %v6795 = vsel %vm6794, %v6787, %v6791
  %v6796 = vand.u32 2147483647, %v6570
  %vm6797 = vcmp.eq.f32.partialorder %v6796, 8.507059e+37
  %v6798 = vand.u32 %v6570, 2147483648
  %v6799 = vor.u32 1.1754944e-38, %v6798
  %v6800 = vsel %vm6797, %v6799, %v6795
  %v6801 = vmul.f32 1.0, %v6800
  %v6802 = vrcp.pop %v6571
  %v6803 = vmul.f32 %v6571, %v6802
  %v6804 = vsub.f32 1.0, %v6803
  %v6805 = vmul.f32 %v6802, %v6804
  %v6806 = vadd.f32 %v6802, %v6805
  %vm6807 = vweird.f32 %v6571
  %vm6808 = vweird.f32 %v6802
  %vm6809 = vmor %vm6807, %vm6808
  %v6810 = vsel %vm6809, %v6802, %v6806
  %v6811 = vand.u32 2147483647, %v6571
  %vm6812 = vcmp.eq.f32.partialorder %v6811, 8.507059e+37
  %v6813 = vand.u32 %v6571, 2147483648
  %v6814 = vor.u32 1.1754944e-38, %v6813
  %v6815 = vsel %vm6812, %v6814, %v6810
  %v6816 = vmul.f32 1.0, %v6815
  %v6817 = vrcp.pop %v6572
  %v6818 = vmul.f32 %v6572, %v6817
  %v6819 = vsub.f32 1.0, %v6818
  %v6820 = vmul.f32 %v6817, %v6819
  %v6821 = vadd.f32 %v6817, %v6820
  %vm6822 = vweird.f32 %v6572
  %vm6823 = vweird.f32 %v6817
  %vm6824 = vmor %vm6822, %vm6823
  %v6825 = vsel %vm6824, %v6817, %v6821
  %v6826 = vand.u32 2147483647, %v6572
  %vm6827 = vcmp.eq.f32.partialorder %v6826, 8.507059e+37
  %v6828 = vand.u32 %v6572, 2147483648
  %v6829 = vor.u32 1.1754944e-38, %v6828
  %v6830 = vsel %vm6827, %v6829, %v6825
  %v6831 = vmul.f32 1.0, %v6830
  %v6832 = vrcp.pop %v6573
  %v6833 = vmul.f32 %v6573, %v6832
  %v6834 = vsub.f32 1.0, %v6833
  %v6835 = vmul.f32 %v6832, %v6834
  %v6836 = vadd.f32 %v6832, %v6835
  %vm6837 = vweird.f32 %v6573
  %vm6838 = vweird.f32 %v6832
  %vm6839 = vmor %vm6837, %vm6838
  %v6840 = vsel %vm6839, %v6832, %v6836
  %v6841 = vand.u32 2147483647, %v6573
  %vm6842 = vcmp.eq.f32.partialorder %v6841, 8.507059e+37
  %v6843 = vand.u32 %v6573, 2147483648
  %v6844 = vor.u32 1.1754944e-38, %v6843
  %v6845 = vsel %vm6842, %v6844, %v6840
  %v6846 = vmul.f32 1.0, %v6845
  %v6847 = vrcp.pop %v6574
  %v6848 = vmul.f32 %v6574, %v6847
  %v6849 = vsub.f32 1.0, %v6848
  %v6850 = vmul.f32 %v6847, %v6849
  %v6851 = vadd.f32 %v6847, %v6850
  %vm6852 = vweird.f32 %v6574
  %vm6853 = vweird.f32 %v6847
  %vm6854 = vmor %vm6852, %vm6853
  %v6855 = vsel %vm6854, %v6847, %v6851
  %v6856 = vand.u32 2147483647, %v6574
  %vm6857 = vcmp.eq.f32.partialorder %v6856, 8.507059e+37
  %v6858 = vand.u32 %v6574, 2147483648
  %v6859 = vor.u32 1.1754944e-38, %v6858
  %v6860 = vsel %vm6857, %v6859, %v6855
  %v6861 = vmul.f32 1.0, %v6860
  %v6862 = vrcp.pop %v6575
  %v6863 = vmul.f32 %v6575, %v6862
  %v6864 = vsub.f32 1.0, %v6863
  %v6865 = vmul.f32 %v6862, %v6864
  %v6866 = vadd.f32 %v6862, %v6865
  %vm6867 = vweird.f32 %v6575
  %vm6868 = vweird.f32 %v6862
  %vm6869 = vmor %vm6867, %vm6868
  %v6870 = vsel %vm6869, %v6862, %v6866
  %v6871 = vand.u32 2147483647, %v6575
  %vm6872 = vcmp.eq.f32.partialorder %v6871, 8.507059e+37
  %v6873 = vand.u32 %v6575, 2147483648
  %v6874 = vor.u32 1.1754944e-38, %v6873
  %v6875 = vsel %vm6872, %v6874, %v6870
  %v6876 = vmul.f32 1.0, %v6875
  %v6877 = vrcp.pop %v6576
  %v6878 = vmul.f32 %v6576, %v6877
  %v6879 = vsub.f32 1.0, %v6878
  %v6880 = vmul.f32 %v6877, %v6879
  %v6881 = vadd.f32 %v6877, %v6880
  %vm6882 = vweird.f32 %v6576
  %vm6883 = vweird.f32 %v6877
  %vm6884 = vmor %vm6882, %vm6883
  %v6885 = vsel %vm6884, %v6877, %v6881
  %v6886 = vand.u32 2147483647, %v6576
  %vm6887 = vcmp.eq.f32.partialorder %v6886, 8.507059e+37
  %v6888 = vand.u32 %v6576, 2147483648
  %v6889 = vor.u32 1.1754944e-38, %v6888
  %v6890 = vsel %vm6887, %v6889, %v6885
  %v6891 = vmul.f32 1.0, %v6890
  %v6892 = vrcp.pop %v6577
  %v6893 = vmul.f32 %v6577, %v6892
  %v6894 = vsub.f32 1.0, %v6893
  %v6895 = vmul.f32 %v6892, %v6894
  %v6896 = vadd.f32 %v6892, %v6895
  %vm6897 = vweird.f32 %v6577
  %vm6898 = vweird.f32 %v6892
  %vm6899 = vmor %vm6897, %vm6898
  %v6900 = vsel %vm6899, %v6892, %v6896
  %v6901 = vand.u32 2147483647, %v6577
  %vm6902 = vcmp.eq.f32.partialorder %v6901, 8.507059e+37
  %v6903 = vand.u32 %v6577, 2147483648
  %v6904 = vor.u32 1.1754944e-38, %v6903
  %v6905 = vsel %vm6902, %v6904, %v6900
  %v6906 = vmul.f32 1.0, %v6905
  %v6907 = vrcp.pop %v6578
  %v6908 = vmul.f32 %v6578, %v6907
  %v6909 = vsub.f32 1.0, %v6908
  %v6910 = vmul.f32 %v6907, %v6909
  %v6911 = vadd.f32 %v6907, %v6910
  %vm6912 = vweird.f32 %v6578
  %vm6913 = vweird.f32 %v6907
  %vm6914 = vmor %vm6912, %vm6913
  %v6915 = vsel %vm6914, %v6907, %v6911
  %v6916 = vand.u32 2147483647, %v6578
  %vm6917 = vcmp.eq.f32.partialorder %v6916, 8.507059e+37
  %v6918 = vand.u32 %v6578, 2147483648
  %v6919 = vor.u32 1.1754944e-38, %v6918
  %v6920 = vsel %vm6917, %v6919, %v6915
  %v6921 = vmul.f32 1.0, %v6920
  %v6922 = vrcp.pop %v6579
  %v6923 = vmul.f32 %v6579, %v6922
  %v6924 = vsub.f32 1.0, %v6923
  %v6925 = vmul.f32 %v6922, %v6924
  %v6926 = vadd.f32 %v6922, %v6925
  %vm6927 = vweird.f32 %v6579
  %vm6928 = vweird.f32 %v6922
  %vm6929 = vmor %vm6927, %vm6928
  %v6930 = vsel %vm6929, %v6922, %v6926
  %v6931 = vand.u32 2147483647, %v6579
  %vm6932 = vcmp.eq.f32.partialorder %v6931, 8.507059e+37
  %v6933 = vand.u32 %v6579, 2147483648
  %v6934 = vor.u32 1.1754944e-38, %v6933
  %v6935 = vsel %vm6932, %v6934, %v6930
  %v6936 = vmul.f32 1.0, %v6935
  %v6937 = vrcp.pop %v6580
  %v6938 = vmul.f32 %v6580, %v6937
  %v6939 = vsub.f32 1.0, %v6938
  %v6940 = vmul.f32 %v6937, %v6939
  %v6941 = vadd.f32 %v6937, %v6940
  %vm6942 = vweird.f32 %v6580
  %vm6943 = vweird.f32 %v6937
  %vm6944 = vmor %vm6942, %vm6943
  %v6945 = vsel %vm6944, %v6937, %v6941
  %v6946 = vand.u32 2147483647, %v6580
  %vm6947 = vcmp.eq.f32.partialorder %v6946, 8.507059e+37
  %v6948 = vand.u32 %v6580, 2147483648
  %v6949 = vor.u32 1.1754944e-38, %v6948
  %v6950 = vsel %vm6947, %v6949, %v6945
  %v6951 = vmul.f32 1.0, %v6950
  %v6952 = vrcp.pop %v6581
  %v6953 = vmul.f32 %v6581, %v6952
  %v6954 = vsub.f32 1.0, %v6953
  %v6955 = vmul.f32 %v6952, %v6954
  %v6956 = vadd.f32 %v6952, %v6955
  %vm6957 = vweird.f32 %v6581
  %vm6958 = vweird.f32 %v6952
  %vm6959 = vmor %vm6957, %vm6958
  %v6960 = vsel %vm6959, %v6952, %v6956
  %v6961 = vand.u32 2147483647, %v6581
  %vm6962 = vcmp.eq.f32.partialorder %v6961, 8.507059e+37
  %v6963 = vand.u32 %v6581, 2147483648
  %v6964 = vor.u32 1.1754944e-38, %v6963
  %v6965 = vsel %vm6962, %v6964, %v6960
  %v6966 = vmul.f32 1.0, %v6965
  %v6967 = vrcp.pop %v6582
  %v6968 = vmul.f32 %v6582, %v6967
  %v6969 = vsub.f32 1.0, %v6968
  %v6970 = vmul.f32 %v6967, %v6969
  %v6971 = vadd.f32 %v6967, %v6970
  %vm6972 = vweird.f32 %v6582
  %vm6973 = vweird.f32 %v6967
  %vm6974 = vmor %vm6972, %vm6973
  %v6975 = vsel %vm6974, %v6967, %v6971
  %v6976 = vand.u32 2147483647, %v6582
  %vm6977 = vcmp.eq.f32.partialorder %v6976, 8.507059e+37
  %v6978 = vand.u32 %v6582, 2147483648
  %v6979 = vor.u32 1.1754944e-38, %v6978
  %v6980 = vsel %vm6977, %v6979, %v6975
  %v6981 = vmul.f32 1.0, %v6980
  %v6982 = vrcp.pop %v6583
  %v6983 = vmul.f32 %v6583, %v6982
  %v6984 = vsub.f32 1.0, %v6983
  %v6985 = vmul.f32 %v6982, %v6984
  %v6986 = vadd.f32 %v6982, %v6985
  %vm6987 = vweird.f32 %v6583
  %vm6988 = vweird.f32 %v6982
  %vm6989 = vmor %vm6987, %vm6988
  %v6990 = vsel %vm6989, %v6982, %v6986
  %v6991 = vand.u32 2147483647, %v6583
  %vm6992 = vcmp.eq.f32.partialorder %v6991, 8.507059e+37
  %v6993 = vand.u32 %v6583, 2147483648
  %v6994 = vor.u32 1.1754944e-38, %v6993
  %v6995 = vsel %vm6992, %v6994, %v6990
  %v6996 = vmul.f32 1.0, %v6995
  %v6997 = vrcp.pop %v6584
  %v6998 = vmul.f32 %v6584, %v6997
  %v6999 = vsub.f32 1.0, %v6998
  %v7000 = vmul.f32 %v6997, %v6999
  %v7001 = vadd.f32 %v6997, %v7000
  %vm7002 = vweird.f32 %v6584
  %vm7003 = vweird.f32 %v6997
  %vm7004 = vmor %vm7002, %vm7003
  %v7005 = vsel %vm7004, %v6997, %v7001
  %v7006 = vand.u32 2147483647, %v6584
  %vm7007 = vcmp.eq.f32.partialorder %v7006, 8.507059e+37
  %v7008 = vand.u32 %v6584, 2147483648
  %v7009 = vor.u32 1.1754944e-38, %v7008
  %v7010 = vsel %vm7007, %v7009, %v7005
  %v7011 = vmul.f32 1.0, %v7010
  %v7012 = vrcp.pop %v6585
  %v7013 = vmul.f32 %v6585, %v7012
  %v7014 = vsub.f32 1.0, %v7013
  %v7015 = vmul.f32 %v7012, %v7014
  %v7016 = vadd.f32 %v7012, %v7015
  %vm7017 = vweird.f32 %v6585
  %vm7018 = vweird.f32 %v7012
  %vm7019 = vmor %vm7017, %vm7018
  %v7020 = vsel %vm7019, %v7012, %v7016
  %v7021 = vand.u32 2147483647, %v6585
  %vm7022 = vcmp.eq.f32.partialorder %v7021, 8.507059e+37
  %v7023 = vand.u32 %v6585, 2147483648
  %v7024 = vor.u32 1.1754944e-38, %v7023
  %v7025 = vsel %vm7022, %v7024, %v7020
  %v7026 = vmul.f32 1.0, %v7025
  %v7027 = vrcp.pop %v6586
  %v7028 = vmul.f32 %v6586, %v7027
  %v7029 = vsub.f32 1.0, %v7028
  %v7030 = vmul.f32 %v7027, %v7029
  %v7031 = vadd.f32 %v7027, %v7030
  %vm7032 = vweird.f32 %v6586
  %vm7033 = vweird.f32 %v7027
  %vm7034 = vmor %vm7032, %vm7033
  %v7035 = vsel %vm7034, %v7027, %v7031
  %v7036 = vand.u32 2147483647, %v6586
  %vm7037 = vcmp.eq.f32.partialorder %v7036, 8.507059e+37
  %v7038 = vand.u32 %v6586, 2147483648
  %v7039 = vor.u32 1.1754944e-38, %v7038
  %v7040 = vsel %vm7037, %v7039, %v7035
  %v7041 = vmul.f32 1.0, %v7040
  %v7042 = vrcp.pop %v6587
  %v7043 = vmul.f32 %v6587, %v7042
  %v7044 = vsub.f32 1.0, %v7043
  %v7045 = vmul.f32 %v7042, %v7044
  %v7046 = vadd.f32 %v7042, %v7045
  %vm7047 = vweird.f32 %v6587
  %vm7048 = vweird.f32 %v7042
  %vm7049 = vmor %vm7047, %vm7048
  %v7050 = vsel %vm7049, %v7042, %v7046
  %v7051 = vand.u32 2147483647, %v6587
  %vm7052 = vcmp.eq.f32.partialorder %v7051, 8.507059e+37
  %v7053 = vand.u32 %v6587, 2147483648
  %v7054 = vor.u32 1.1754944e-38, %v7053
  %v7055 = vsel %vm7052, %v7054, %v7050
  %v7056 = vmul.f32 1.0, %v7055
  %v7057 = vrcp.pop %v6588
  %v7058 = vmul.f32 %v6588, %v7057
  %v7059 = vsub.f32 1.0, %v7058
  %v7060 = vmul.f32 %v7057, %v7059
  %v7061 = vadd.f32 %v7057, %v7060
  %vm7062 = vweird.f32 %v6588
  %vm7063 = vweird.f32 %v7057
  %vm7064 = vmor %vm7062, %vm7063
  %v7065 = vsel %vm7064, %v7057, %v7061
  %v7066 = vand.u32 2147483647, %v6588
  %vm7067 = vcmp.eq.f32.partialorder %v7066, 8.507059e+37
  %v7068 = vand.u32 %v6588, 2147483648
  %v7069 = vor.u32 1.1754944e-38, %v7068
  %v7070 = vsel %vm7067, %v7069, %v7065
  %v7071 = vmul.f32 1.0, %v7070
  %v7072 = vrcp.pop %v6589
  %v7073 = vmul.f32 %v6589, %v7072
  %v7074 = vsub.f32 1.0, %v7073
  %v7075 = vmul.f32 %v7072, %v7074
  %v7076 = vadd.f32 %v7072, %v7075
  %vm7077 = vweird.f32 %v6589
  %vm7078 = vweird.f32 %v7072
  %vm7079 = vmor %vm7077, %vm7078
  %v7080 = vsel %vm7079, %v7072, %v7076
  %v7081 = vand.u32 2147483647, %v6589
  %vm7082 = vcmp.eq.f32.partialorder %v7081, 8.507059e+37
  %v7083 = vand.u32 %v6589, 2147483648
  %v7084 = vor.u32 1.1754944e-38, %v7083
  %v7085 = vsel %vm7082, %v7084, %v7080
  %v7086 = vmul.f32 1.0, %v7085
  %v7087 = vrcp.pop %v6590
  %v7088 = vmul.f32 %v6590, %v7087
  %v7089 = vsub.f32 1.0, %v7088
  %v7090 = vmul.f32 %v7087, %v7089
  %v7091 = vadd.f32 %v7087, %v7090
  %vm7092 = vweird.f32 %v6590
  %vm7093 = vweird.f32 %v7087
  %vm7094 = vmor %vm7092, %vm7093
  %v7095 = vsel %vm7094, %v7087, %v7091
  %v7096 = vand.u32 2147483647, %v6590
  %vm7097 = vcmp.eq.f32.partialorder %v7096, 8.507059e+37
  %v7098 = vand.u32 %v6590, 2147483648
  %v7099 = vor.u32 1.1754944e-38, %v7098
  %v7100 = vsel %vm7097, %v7099, %v7095
  %v7101 = vmul.f32 1.0, %v7100
  %v7102 = vrcp.pop %v6591
  %v7103 = vmul.f32 %v6591, %v7102
  %v7104 = vsub.f32 1.0, %v7103
  %v7105 = vmul.f32 %v7102, %v7104
  %v7106 = vadd.f32 %v7102, %v7105
  %vm7107 = vweird.f32 %v6591
  %vm7108 = vweird.f32 %v7102
  %vm7109 = vmor %vm7107, %vm7108
  %v7110 = vsel %vm7109, %v7102, %v7106
  %v7111 = vand.u32 2147483647, %v6591
  %vm7112 = vcmp.eq.f32.partialorder %v7111, 8.507059e+37
  %v7113 = vand.u32 %v6591, 2147483648
  %v7114 = vor.u32 1.1754944e-38, %v7113
  %v7115 = vsel %vm7112, %v7114, %v7110
  %v7116 = vmul.f32 1.0, %v7115
  %v7117 = vrcp.pop %v6592
  %v7118 = vmul.f32 %v6592, %v7117
  %v7119 = vsub.f32 1.0, %v7118
  %v7120 = vmul.f32 %v7117, %v7119
  %v7121 = vadd.f32 %v7117, %v7120
  %vm7122 = vweird.f32 %v6592
  %vm7123 = vweird.f32 %v7117
  %vm7124 = vmor %vm7122, %vm7123
  %v7125 = vsel %vm7124, %v7117, %v7121
  %v7126 = vand.u32 2147483647, %v6592
  %vm7127 = vcmp.eq.f32.partialorder %v7126, 8.507059e+37
  %v7128 = vand.u32 %v6592, 2147483648
  %v7129 = vor.u32 1.1754944e-38, %v7128
  %v7130 = vsel %vm7127, %v7129, %v7125
  %v7131 = vmul.f32 1.0, %v7130
  %v7132 = vrcp.pop %v6593
  %v7133 = vmul.f32 %v6593, %v7132
  %v7134 = vsub.f32 1.0, %v7133
  %v7135 = vmul.f32 %v7132, %v7134
  %v7136 = vadd.f32 %v7132, %v7135
  %vm7137 = vweird.f32 %v6593
  %vm7138 = vweird.f32 %v7132
  %vm7139 = vmor %vm7137, %vm7138
  %v7140 = vsel %vm7139, %v7132, %v7136
  %v7141 = vand.u32 2147483647, %v6593
  %vm7142 = vcmp.eq.f32.partialorder %v7141, 8.507059e+37
  %v7143 = vand.u32 %v6593, 2147483648
  %v7144 = vor.u32 1.1754944e-38, %v7143
  %v7145 = vsel %vm7142, %v7144, %v7140
  %v7146 = vmul.f32 1.0, %v7145
  %v7147 = vrcp.pop %v6594
  %v7148 = vmul.f32 %v6594, %v7147
  %v7149 = vsub.f32 1.0, %v7148
  %v7150 = vmul.f32 %v7147, %v7149
  %v7151 = vadd.f32 %v7147, %v7150
  %vm7152 = vweird.f32 %v6594
  %vm7153 = vweird.f32 %v7147
  %vm7154 = vmor %vm7152, %vm7153
  %v7155 = vsel %vm7154, %v7147, %v7151
  %v7156 = vand.u32 2147483647, %v6594
  %vm7157 = vcmp.eq.f32.partialorder %v7156, 8.507059e+37
  %v7158 = vand.u32 %v6594, 2147483648
  %v7159 = vor.u32 1.1754944e-38, %v7158
  %v7160 = vsel %vm7157, %v7159, %v7155
  %v7161 = vmul.f32 1.0, %v7160
  %v7162 = vrcp.pop %v6595
  %v7163 = vmul.f32 %v6595, %v7162
  %v7164 = vsub.f32 1.0, %v7163
  %v7165 = vmul.f32 %v7162, %v7164
  %v7166 = vadd.f32 %v7162, %v7165
  %vm7167 = vweird.f32 %v6595
  %vm7168 = vweird.f32 %v7162
  %vm7169 = vmor %vm7167, %vm7168
  %v7170 = vsel %vm7169, %v7162, %v7166
  %v7171 = vand.u32 2147483647, %v6595
  %vm7172 = vcmp.eq.f32.partialorder %v7171, 8.507059e+37
  %v7173 = vand.u32 %v6595, 2147483648
  %v7174 = vor.u32 1.1754944e-38, %v7173
  %v7175 = vsel %vm7172, %v7174, %v7170
  %v7176 = vmul.f32 1.0, %v7175
  %v7177 = vrcp.pop %v6596
  %v7178 = vmul.f32 %v6596, %v7177
  %v7179 = vsub.f32 1.0, %v7178
  %v7180 = vmul.f32 %v7177, %v7179
  %v7181 = vadd.f32 %v7177, %v7180
  %vm7182 = vweird.f32 %v6596
  %vm7183 = vweird.f32 %v7177
  %vm7184 = vmor %vm7182, %vm7183
  %v7185 = vsel %vm7184, %v7177, %v7181
  %v7186 = vand.u32 2147483647, %v6596
  %vm7187 = vcmp.eq.f32.partialorder %v7186, 8.507059e+37
  %v7188 = vand.u32 %v6596, 2147483648
  %v7189 = vor.u32 1.1754944e-38, %v7188
  %v7190 = vsel %vm7187, %v7189, %v7185
  %v7191 = vmul.f32 1.0, %v7190
  %v7192 = vrcp.pop %v6597
  %v7193 = vmul.f32 %v6597, %v7192
  %v7194 = vsub.f32 1.0, %v7193
  %v7195 = vmul.f32 %v7192, %v7194
  %v7196 = vadd.f32 %v7192, %v7195
  %vm7197 = vweird.f32 %v6597
  %vm7198 = vweird.f32 %v7192
  %vm7199 = vmor %vm7197, %vm7198
  %v7200 = vsel %vm7199, %v7192, %v7196
  %v7201 = vand.u32 2147483647, %v6597
  %vm7202 = vcmp.eq.f32.partialorder %v7201, 8.507059e+37
  %v7203 = vand.u32 %v6597, 2147483648
  %v7204 = vor.u32 1.1754944e-38, %v7203
  %v7205 = vsel %vm7202, %v7204, %v7200
  %v7206 = vmul.f32 1.0, %v7205
  %v7207 = vrcp.pop %v6598
  %v7208 = vmul.f32 %v6598, %v7207
  %v7209 = vsub.f32 1.0, %v7208
  %v7210 = vmul.f32 %v7207, %v7209
  %v7211 = vadd.f32 %v7207, %v7210
  %vm7212 = vweird.f32 %v6598
  %vm7213 = vweird.f32 %v7207
  %vm7214 = vmor %vm7212, %vm7213
  %v7215 = vsel %vm7214, %v7207, %v7211
  %v7216 = vand.u32 2147483647, %v6598
  %vm7217 = vcmp.eq.f32.partialorder %v7216, 8.507059e+37
  %v7218 = vand.u32 %v6598, 2147483648
  %v7219 = vor.u32 1.1754944e-38, %v7218
  %v7220 = vsel %vm7217, %v7219, %v7215
  %v7221 = vmul.f32 1.0, %v7220
  %v7222 = vrcp.pop %v6599
  %v7223 = vmul.f32 %v6599, %v7222
  %v7224 = vsub.f32 1.0, %v7223
  %v7225 = vmul.f32 %v7222, %v7224
  %v7226 = vadd.f32 %v7222, %v7225
  %vm7227 = vweird.f32 %v6599
  %vm7228 = vweird.f32 %v7222
  %vm7229 = vmor %vm7227, %vm7228
  %v7230 = vsel %vm7229, %v7222, %v7226
  %v7231 = vand.u32 2147483647, %v6599
  %vm7232 = vcmp.eq.f32.partialorder %v7231, 8.507059e+37
  %v7233 = vand.u32 %v6599, 2147483648
  %v7234 = vor.u32 1.1754944e-38, %v7233
  %v7235 = vsel %vm7232, %v7234, %v7230
  %v7236 = vmul.f32 1.0, %v7235
  %v7237 = vrcp.pop %v6600
  %v7238 = vmul.f32 %v6600, %v7237
  %v7239 = vsub.f32 1.0, %v7238
  %v7240 = vmul.f32 %v7237, %v7239
  %v7241 = vadd.f32 %v7237, %v7240
  %vm7242 = vweird.f32 %v6600
  %vm7243 = vweird.f32 %v7237
  %vm7244 = vmor %vm7242, %vm7243
  %v7245 = vsel %vm7244, %v7237, %v7241
  %v7246 = vand.u32 2147483647, %v6600
  %vm7247 = vcmp.eq.f32.partialorder %v7246, 8.507059e+37
  %v7248 = vand.u32 %v6600, 2147483648
  %v7249 = vor.u32 1.1754944e-38, %v7248
  %v7250 = vsel %vm7247, %v7249, %v7245
  %v7251 = vmul.f32 1.0, %v7250
  %v7252 = vrcp.pop %v6601
  %v7253 = vmul.f32 %v6601, %v7252
  %v7254 = vsub.f32 1.0, %v7253
  %v7255 = vmul.f32 %v7252, %v7254
  %v7256 = vadd.f32 %v7252, %v7255
  %vm7257 = vweird.f32 %v6601
  %vm7258 = vweird.f32 %v7252
  %vm7259 = vmor %vm7257, %vm7258
  %v7260 = vsel %vm7259, %v7252, %v7256
  %v7261 = vand.u32 2147483647, %v6601
  %vm7262 = vcmp.eq.f32.partialorder %v7261, 8.507059e+37
  %v7263 = vand.u32 %v6601, 2147483648
  %v7264 = vor.u32 1.1754944e-38, %v7263
  %v7265 = vsel %vm7262, %v7264, %v7260
  %v7266 = vmul.f32 1.0, %v7265
  %v7267 = vrcp.pop %v6602
  %v7268 = vmul.f32 %v6602, %v7267
  %v7269 = vsub.f32 1.0, %v7268
  %v7270 = vmul.f32 %v7267, %v7269
  %v7271 = vadd.f32 %v7267, %v7270
  %vm7272 = vweird.f32 %v6602
  %vm7273 = vweird.f32 %v7267
  %vm7274 = vmor %vm7272, %vm7273
  %v7275 = vsel %vm7274, %v7267, %v7271
  %v7276 = vand.u32 2147483647, %v6602
  %vm7277 = vcmp.eq.f32.partialorder %v7276, 8.507059e+37
  %v7278 = vand.u32 %v6602, 2147483648
  %v7279 = vor.u32 1.1754944e-38, %v7278
  %v7280 = vsel %vm7277, %v7279, %v7275
  %v7281 = vmul.f32 1.0, %v7280
  %v7282 = vrcp.pop %v6603
  %v7283 = vmul.f32 %v6603, %v7282
  %v7284 = vsub.f32 1.0, %v7283
  %v7285 = vmul.f32 %v7282, %v7284
  %v7286 = vadd.f32 %v7282, %v7285
  %vm7287 = vweird.f32 %v6603
  %vm7288 = vweird.f32 %v7282
  %vm7289 = vmor %vm7287, %vm7288
  %v7290 = vsel %vm7289, %v7282, %v7286
  %v7291 = vand.u32 2147483647, %v6603
  %vm7292 = vcmp.eq.f32.partialorder %v7291, 8.507059e+37
  %v7293 = vand.u32 %v6603, 2147483648
  %v7294 = vor.u32 1.1754944e-38, %v7293
  %v7295 = vsel %vm7292, %v7294, %v7290
  %v7296 = vmul.f32 1.0, %v7295
  %v7297 = vrcp.pop %v6604
  %v7298 = vmul.f32 %v6604, %v7297
  %v7299 = vsub.f32 1.0, %v7298
  %v7300 = vmul.f32 %v7297, %v7299
  %v7301 = vadd.f32 %v7297, %v7300
  %vm7302 = vweird.f32 %v6604
  %vm7303 = vweird.f32 %v7297
  %vm7304 = vmor %vm7302, %vm7303
  %v7305 = vsel %vm7304, %v7297, %v7301
  %v7306 = vand.u32 2147483647, %v6604
  %vm7307 = vcmp.eq.f32.partialorder %v7306, 8.507059e+37
  %v7308 = vand.u32 %v6604, 2147483648
  %v7309 = vor.u32 1.1754944e-38, %v7308
  %v7310 = vsel %vm7307, %v7309, %v7305
  %v7311 = vmul.f32 1.0, %v7310
  %v7312 = vrcp.pop %v6605
  %v7313 = vmul.f32 %v6605, %v7312
  %v7314 = vsub.f32 1.0, %v7313
  %v7315 = vmul.f32 %v7312, %v7314
  %v7316 = vadd.f32 %v7312, %v7315
  %vm7317 = vweird.f32 %v6605
  %vm7318 = vweird.f32 %v7312
  %vm7319 = vmor %vm7317, %vm7318
  %v7320 = vsel %vm7319, %v7312, %v7316
  %v7321 = vand.u32 2147483647, %v6605
  %vm7322 = vcmp.eq.f32.partialorder %v7321, 8.507059e+37
  %v7323 = vand.u32 %v6605, 2147483648
  %v7324 = vor.u32 1.1754944e-38, %v7323
  %v7325 = vsel %vm7322, %v7324, %v7320
  %v7326 = vmul.f32 1.0, %v7325
  %v7327 = vrcp.pop %v6606
  %v7328 = vmul.f32 %v6606, %v7327
  %v7329 = vsub.f32 1.0, %v7328
  %v7330 = vmul.f32 %v7327, %v7329
  %v7331 = vadd.f32 %v7327, %v7330
  %vm7332 = vweird.f32 %v6606
  %vm7333 = vweird.f32 %v7327
  %vm7334 = vmor %vm7332, %vm7333
  %v7335 = vsel %vm7334, %v7327, %v7331
  %v7336 = vand.u32 2147483647, %v6606
  %vm7337 = vcmp.eq.f32.partialorder %v7336, 8.507059e+37
  %v7338 = vand.u32 %v6606, 2147483648
  %v7339 = vor.u32 1.1754944e-38, %v7338
  %v7340 = vsel %vm7337, %v7339, %v7335
  %v7341 = vmul.f32 1.0, %v7340
  %v7342 = vrcp.pop %v6607
  %v7343 = vmul.f32 %v6607, %v7342
  %v7344 = vsub.f32 1.0, %v7343
  %v7345 = vmul.f32 %v7342, %v7344
  %v7346 = vadd.f32 %v7342, %v7345
  %vm7347 = vweird.f32 %v6607
  %vm7348 = vweird.f32 %v7342
  %vm7349 = vmor %vm7347, %vm7348
  %v7350 = vsel %vm7349, %v7342, %v7346
  %v7351 = vand.u32 2147483647, %v6607
  %vm7352 = vcmp.eq.f32.partialorder %v7351, 8.507059e+37
  %v7353 = vand.u32 %v6607, 2147483648
  %v7354 = vor.u32 1.1754944e-38, %v7353
  %v7355 = vsel %vm7352, %v7354, %v7350
  %v7356 = vmul.f32 1.0, %v7355
  %v7357 = vrcp.pop %v6608
  %v7358 = vmul.f32 %v6608, %v7357
  %v7359 = vsub.f32 1.0, %v7358
  %v7360 = vmul.f32 %v7357, %v7359
  %v7361 = vadd.f32 %v7357, %v7360
  %vm7362 = vweird.f32 %v6608
  %vm7363 = vweird.f32 %v7357
  %vm7364 = vmor %vm7362, %vm7363
  %v7365 = vsel %vm7364, %v7357, %v7361
  %v7366 = vand.u32 2147483647, %v6608
  %vm7367 = vcmp.eq.f32.partialorder %v7366, 8.507059e+37
  %v7368 = vand.u32 %v6608, 2147483648
  %v7369 = vor.u32 1.1754944e-38, %v7368
  %v7370 = vsel %vm7367, %v7369, %v7365
  %v7371 = vmul.f32 1.0, %v7370
  %v7372 = vrcp.pop %v6609
  %v7373 = vmul.f32 %v6609, %v7372
  %v7374 = vsub.f32 1.0, %v7373
  %v7375 = vmul.f32 %v7372, %v7374
  %v7376 = vadd.f32 %v7372, %v7375
  %vm7377 = vweird.f32 %v6609
  %vm7378 = vweird.f32 %v7372
  %vm7379 = vmor %vm7377, %vm7378
  %v7380 = vsel %vm7379, %v7372, %v7376
  %v7381 = vand.u32 2147483647, %v6609
  %vm7382 = vcmp.eq.f32.partialorder %v7381, 8.507059e+37
  %v7383 = vand.u32 %v6609, 2147483648
  %v7384 = vor.u32 1.1754944e-38, %v7383
  %v7385 = vsel %vm7382, %v7384, %v7380
  %v7386 = vmul.f32 1.0, %v7385
  %v7387 = vrcp.pop %v6610
  %v7388 = vmul.f32 %v6610, %v7387
  %v7389 = vsub.f32 1.0, %v7388
  %v7390 = vmul.f32 %v7387, %v7389
  %v7391 = vadd.f32 %v7387, %v7390
  %vm7392 = vweird.f32 %v6610
  %vm7393 = vweird.f32 %v7387
  %vm7394 = vmor %vm7392, %vm7393
  %v7395 = vsel %vm7394, %v7387, %v7391
  %v7396 = vand.u32 2147483647, %v6610
  %vm7397 = vcmp.eq.f32.partialorder %v7396, 8.507059e+37
  %v7398 = vand.u32 %v6610, 2147483648
  %v7399 = vor.u32 1.1754944e-38, %v7398
  %v7400 = vsel %vm7397, %v7399, %v7395
  %v7401 = vmul.f32 1.0, %v7400
  %v7402 = vrcp.pop %v6611
  %v7403 = vmul.f32 %v6611, %v7402
  %v7404 = vsub.f32 1.0, %v7403
  %v7405 = vmul.f32 %v7402, %v7404
  %v7406 = vadd.f32 %v7402, %v7405
  %vm7407 = vweird.f32 %v6611
  %vm7408 = vweird.f32 %v7402
  %vm7409 = vmor %vm7407, %vm7408
  %v7410 = vsel %vm7409, %v7402, %v7406
  %v7411 = vand.u32 2147483647, %v6611
  %vm7412 = vcmp.eq.f32.partialorder %v7411, 8.507059e+37
  %v7413 = vand.u32 %v6611, 2147483648
  %v7414 = vor.u32 1.1754944e-38, %v7413
  %v7415 = vsel %vm7412, %v7414, %v7410
  %v7416 = vmul.f32 1.0, %v7415
  %v7417 = vrcp.pop %v6612
  %v7418 = vmul.f32 %v6612, %v7417
  %v7419 = vsub.f32 1.0, %v7418
  %v7420 = vmul.f32 %v7417, %v7419
  %v7421 = vadd.f32 %v7417, %v7420
  %vm7422 = vweird.f32 %v6612
  %vm7423 = vweird.f32 %v7417
  %vm7424 = vmor %vm7422, %vm7423
  %v7425 = vsel %vm7424, %v7417, %v7421
  %v7426 = vand.u32 2147483647, %v6612
  %vm7427 = vcmp.eq.f32.partialorder %v7426, 8.507059e+37
  %v7428 = vand.u32 %v6612, 2147483648
  %v7429 = vor.u32 1.1754944e-38, %v7428
  %v7430 = vsel %vm7427, %v7429, %v7425
  %v7431 = vmul.f32 1.0, %v7430
  %v7432 = vrcp.pop %v6613
  %v7433 = vmul.f32 %v6613, %v7432
  %v7434 = vsub.f32 1.0, %v7433
  %v7435 = vmul.f32 %v7432, %v7434
  %v7436 = vadd.f32 %v7432, %v7435
  %vm7437 = vweird.f32 %v6613
  %vm7438 = vweird.f32 %v7432
  %vm7439 = vmor %vm7437, %vm7438
  %v7440 = vsel %vm7439, %v7432, %v7436
  %v7441 = vand.u32 2147483647, %v6613
  %vm7442 = vcmp.eq.f32.partialorder %v7441, 8.507059e+37
  %v7443 = vand.u32 %v6613, 2147483648
  %v7444 = vor.u32 1.1754944e-38, %v7443
  %v7445 = vsel %vm7442, %v7444, %v7440
  %v7446 = vmul.f32 1.0, %v7445
  %v7447 = vrcp.pop %v6614
  %v7448 = vmul.f32 %v6614, %v7447
  %v7449 = vsub.f32 1.0, %v7448
  %v7450 = vmul.f32 %v7447, %v7449
  %v7451 = vadd.f32 %v7447, %v7450
  %vm7452 = vweird.f32 %v6614
  %vm7453 = vweird.f32 %v7447
  %vm7454 = vmor %vm7452, %vm7453
  %v7455 = vsel %vm7454, %v7447, %v7451
  %v7456 = vand.u32 2147483647, %v6614
  %vm7457 = vcmp.eq.f32.partialorder %v7456, 8.507059e+37
  %v7458 = vand.u32 %v6614, 2147483648
  %v7459 = vor.u32 1.1754944e-38, %v7458
  %v7460 = vsel %vm7457, %v7459, %v7455
  %v7461 = vmul.f32 1.0, %v7460
  %v7462 = vrcp.pop %v6615
  %v7463 = vmul.f32 %v6615, %v7462
  %v7464 = vsub.f32 1.0, %v7463
  %v7465 = vmul.f32 %v7462, %v7464
  %v7466 = vadd.f32 %v7462, %v7465
  %vm7467 = vweird.f32 %v6615
  %vm7468 = vweird.f32 %v7462
  %vm7469 = vmor %vm7467, %vm7468
  %v7470 = vsel %vm7469, %v7462, %v7466
  %v7471 = vand.u32 2147483647, %v6615
  %vm7472 = vcmp.eq.f32.partialorder %v7471, 8.507059e+37
  %v7473 = vand.u32 %v6615, 2147483648
  %v7474 = vor.u32 1.1754944e-38, %v7473
  %v7475 = vsel %vm7472, %v7474, %v7470
  %v7476 = vmul.f32 1.0, %v7475
  %v7477 = vrcp.pop %v6616
  %v7478 = vmul.f32 %v6616, %v7477
  %v7479 = vsub.f32 1.0, %v7478
  %v7480 = vmul.f32 %v7477, %v7479
  %v7481 = vadd.f32 %v7477, %v7480
  %vm7482 = vweird.f32 %v6616
  %vm7483 = vweird.f32 %v7477
  %vm7484 = vmor %vm7482, %vm7483
  %v7485 = vsel %vm7484, %v7477, %v7481
  %v7486 = vand.u32 2147483647, %v6616
  %vm7487 = vcmp.eq.f32.partialorder %v7486, 8.507059e+37
  %v7488 = vand.u32 %v6616, 2147483648
  %v7489 = vor.u32 1.1754944e-38, %v7488
  %v7490 = vsel %vm7487, %v7489, %v7485
  %v7491 = vmul.f32 1.0, %v7490
  %v7492 = vrcp.pop %v6617
  %v7493 = vmul.f32 %v6617, %v7492
  %v7494 = vsub.f32 1.0, %v7493
  %v7495 = vmul.f32 %v7492, %v7494
  %v7496 = vadd.f32 %v7492, %v7495
  %vm7497 = vweird.f32 %v6617
  %vm7498 = vweird.f32 %v7492
  %vm7499 = vmor %vm7497, %vm7498
  %v7500 = vsel %vm7499, %v7492, %v7496
  %v7501 = vand.u32 2147483647, %v6617
  %vm7502 = vcmp.eq.f32.partialorder %v7501, 8.507059e+37
  %v7503 = vand.u32 %v6617, 2147483648
  %v7504 = vor.u32 1.1754944e-38, %v7503
  %v7505 = vsel %vm7502, %v7504, %v7500
  %v7506 = vmul.f32 1.0, %v7505
  %v7507 = vrcp.pop %v6618
  %v7508 = vmul.f32 %v6618, %v7507
  %v7509 = vsub.f32 1.0, %v7508
  %v7510 = vmul.f32 %v7507, %v7509
  %v7511 = vadd.f32 %v7507, %v7510
  %vm7512 = vweird.f32 %v6618
  %vm7513 = vweird.f32 %v7507
  %vm7514 = vmor %vm7512, %vm7513
  %v7515 = vsel %vm7514, %v7507, %v7511
  %v7516 = vand.u32 2147483647, %v6618
  %vm7517 = vcmp.eq.f32.partialorder %v7516, 8.507059e+37
  %v7518 = vand.u32 %v6618, 2147483648
  %v7519 = vor.u32 1.1754944e-38, %v7518
  %v7520 = vsel %vm7517, %v7519, %v7515
  %v7521 = vmul.f32 1.0, %v7520
  %v7522 = vrcp.pop %v6619
  %v7523 = vmul.f32 %v6619, %v7522
  %v7524 = vsub.f32 1.0, %v7523
  %v7525 = vmul.f32 %v7522, %v7524
  %v7526 = vadd.f32 %v7522, %v7525
  %vm7527 = vweird.f32 %v6619
  %vm7528 = vweird.f32 %v7522
  %vm7529 = vmor %vm7527, %vm7528
  %v7530 = vsel %vm7529, %v7522, %v7526
  %v7531 = vand.u32 2147483647, %v6619
  %vm7532 = vcmp.eq.f32.partialorder %v7531, 8.507059e+37
  %v7533 = vand.u32 %v6619, 2147483648
  %v7534 = vor.u32 1.1754944e-38, %v7533
  %v7535 = vsel %vm7532, %v7534, %v7530
  %v7536 = vmul.f32 1.0, %v7535
  %v7537 = vrcp.pop %v6620
  %v7538 = vmul.f32 %v6620, %v7537
  %v7539 = vsub.f32 1.0, %v7538
  %v7540 = vmul.f32 %v7537, %v7539
  %v7541 = vadd.f32 %v7537, %v7540
  %vm7542 = vweird.f32 %v6620
  %vm7543 = vweird.f32 %v7537
  %vm7544 = vmor %vm7542, %vm7543
  %v7545 = vsel %vm7544, %v7537, %v7541
  %v7546 = vand.u32 2147483647, %v6620
  %vm7547 = vcmp.eq.f32.partialorder %v7546, 8.507059e+37
  %v7548 = vand.u32 %v6620, 2147483648
  %v7549 = vor.u32 1.1754944e-38, %v7548
  %v7550 = vsel %vm7547, %v7549, %v7545
  %v7551 = vmul.f32 1.0, %v7550
  %v7552 = vrcp.pop %v6621
  %v7553 = vmul.f32 %v6621, %v7552
  %v7554 = vsub.f32 1.0, %v7553
  %v7555 = vmul.f32 %v7552, %v7554
  %v7556 = vadd.f32 %v7552, %v7555
  %vm7557 = vweird.f32 %v6621
  %vm7558 = vweird.f32 %v7552
  %vm7559 = vmor %vm7557, %vm7558
  %v7560 = vsel %vm7559, %v7552, %v7556
  %v7561 = vand.u32 2147483647, %v6621
  %vm7562 = vcmp.eq.f32.partialorder %v7561, 8.507059e+37
  %v7563 = vand.u32 %v6621, 2147483648
  %v7564 = vor.u32 1.1754944e-38, %v7563
  %v7565 = vsel %vm7562, %v7564, %v7560
  %v7566 = vmul.f32 1.0, %v7565
  %vm7567 = vcmask 23552
  %7568 = vst.msk [vmem:[%s4] sm:$0xff] %vm7567, %v6636
  %7569 = vst.msk [vmem:[%s4 + $0x8] sm:$0xff] %vm7567, %v6651
  %7570 = vst.msk [vmem:[%s4 + $0x10] sm:$0xff] %vm7567, %v6666
  %7571 = vst.msk [vmem:[%s4 + $0x18] sm:$0xff] %vm7567, %v6681
  %7572 = vst.msk [vmem:[%s4 + $0x20] sm:$0xff] %vm7567, %v6696
  %7573 = vst.msk [vmem:[%s4 + $0x28] sm:$0xff] %vm7567, %v6711
  %7574 = vst.msk [vmem:[%s4 + $0x30] sm:$0xff] %vm7567, %v6726
  %7575 = vst.msk [vmem:[%s4 + $0x38] sm:$0xff] %vm7567, %v6741
  %7576 = vst.msk [vmem:[%s4 + $0x40] sm:$0xff] %vm7567, %v6756
  %7577 = vst.msk [vmem:[%s4 + $0x48] sm:$0xff] %vm7567, %v6771
  %7578 = vst.msk [vmem:[%s4 + $0x50] sm:$0xff] %vm7567, %v6786
  %7579 = vst.msk [vmem:[%s4 + $0x58] sm:$0xff] %vm7567, %v6801
  %7580 = vst.msk [vmem:[%s4 + $0x60] sm:$0xff] %vm7567, %v6816
  %7581 = vst.msk [vmem:[%s4 + $0x68] sm:$0xff] %vm7567, %v6831
  %7582 = vst.msk [vmem:[%s4 + $0x70] sm:$0xff] %vm7567, %v6846
  %7583 = vst.msk [vmem:[%s4 + $0x78] sm:$0xff] %vm7567, %v6861
  %7584 = vst.msk [vmem:[%s4 + $0x80] sm:$0xff] %vm7567, %v6876
  %7585 = vst.msk [vmem:[%s4 + $0x88] sm:$0xff] %vm7567, %v6891
  %7586 = vst.msk [vmem:[%s4 + $0x90] sm:$0xff] %vm7567, %v6906
  %7587 = vst.msk [vmem:[%s4 + $0x98] sm:$0xff] %vm7567, %v6921
  %7588 = vst.msk [vmem:[%s4 + $0xa0] sm:$0xff] %vm7567, %v6936
  %7589 = vst.msk [vmem:[%s4 + $0xa8] sm:$0xff] %vm7567, %v6951
  %7590 = vst.msk [vmem:[%s4 + $0xb0] sm:$0xff] %vm7567, %v6966
  %7591 = vst.msk [vmem:[%s4 + $0xb8] sm:$0xff] %vm7567, %v6981
  %7592 = vst.msk [vmem:[%s4 + $0xc0] sm:$0xff] %vm7567, %v6996
  %7593 = vst.msk [vmem:[%s4 + $0xc8] sm:$0xff] %vm7567, %v7011
  %7594 = vst.msk [vmem:[%s4 + $0xd0] sm:$0xff] %vm7567, %v7026
  %7595 = vst.msk [vmem:[%s4 + $0xd8] sm:$0xff] %vm7567, %v7041
  %7596 = vst.msk [vmem:[%s4 + $0xe0] sm:$0xff] %vm7567, %v7056
  %7597 = vst.msk [vmem:[%s4 + $0xe8] sm:$0xff] %vm7567, %v7071
  %7598 = vst.msk [vmem:[%s4 + $0xf0] sm:$0xff] %vm7567, %v7086
  %7599 = vst.msk [vmem:[%s4 + $0xf8] sm:$0xff] %vm7567, %v7101
  %7600 = vst.msk [vmem:[%s4 + $0x100] sm:$0xff] %vm7567, %v7116
  %7601 = vst.msk [vmem:[%s4 + $0x108] sm:$0xff] %vm7567, %v7131
  %7602 = vst.msk [vmem:[%s4 + $0x110] sm:$0xff] %vm7567, %v7146
  %7603 = vst.msk [vmem:[%s4 + $0x118] sm:$0xff] %vm7567, %v7161
  %7604 = vst.msk [vmem:[%s4 + $0x120] sm:$0xff] %vm7567, %v7176
  %7605 = vst.msk [vmem:[%s4 + $0x128] sm:$0xff] %vm7567, %v7191
  %7606 = vst.msk [vmem:[%s4 + $0x130] sm:$0xff] %vm7567, %v7206
  %7607 = vst.msk [vmem:[%s4 + $0x138] sm:$0xff] %vm7567, %v7221
  %7608 = vst.msk [vmem:[%s4 + $0x140] sm:$0xff] %vm7567, %v7236
  %7609 = vst.msk [vmem:[%s4 + $0x148] sm:$0xff] %vm7567, %v7251
  %7610 = vst.msk [vmem:[%s4 + $0x150] sm:$0xff] %vm7567, %v7266
  %7611 = vst.msk [vmem:[%s4 + $0x158] sm:$0xff] %vm7567, %v7281
  %7612 = vst.msk [vmem:[%s4 + $0x160] sm:$0xff] %vm7567, %v7296
  %7613 = vst.msk [vmem:[%s4 + $0x168] sm:$0xff] %vm7567, %v7311
  %7614 = vst.msk [vmem:[%s4 + $0x170] sm:$0xff] %vm7567, %v7326
  %7615 = vst.msk [vmem:[%s4 + $0x178] sm:$0xff] %vm7567, %v7341
  %7616 = vst.msk [vmem:[%s4 + $0x180] sm:$0xff] %vm7567, %v7356
  %7617 = vst.msk [vmem:[%s4 + $0x188] sm:$0xff] %vm7567, %v7371
  %7618 = vst.msk [vmem:[%s4 + $0x190] sm:$0xff] %vm7567, %v7386
  %7619 = vst.msk [vmem:[%s4 + $0x198] sm:$0xff] %vm7567, %v7401
  %7620 = vst.msk [vmem:[%s4 + $0x1a0] sm:$0xff] %vm7567, %v7416
  %7621 = vst.msk [vmem:[%s4 + $0x1a8] sm:$0xff] %vm7567, %v7431
  %7622 = vst.msk [vmem:[%s4 + $0x1b0] sm:$0xff] %vm7567, %v7446
  %7623 = vst.msk [vmem:[%s4 + $0x1b8] sm:$0xff] %vm7567, %v7461
  %7624 = vst.msk [vmem:[%s4 + $0x1c0] sm:$0xff] %vm7567, %v7476
  %7625 = vst.msk [vmem:[%s4 + $0x1c8] sm:$0xff] %vm7567, %v7491
  %7626 = vst.msk [vmem:[%s4 + $0x1d0] sm:$0xff] %vm7567, %v7506
  %7627 = vst.msk [vmem:[%s4 + $0x1d8] sm:$0xff] %vm7567, %v7521
  %7628 = vst.msk [vmem:[%s4 + $0x1e0] sm:$0xff] %vm7567, %v7536
  %7629 = vst.msk [vmem:[%s4 + $0x1e8] sm:$0xff] %vm7567, %v7551
  %7630 = vst.msk [vmem:[%s4 + $0x1f0] sm:$0xff] %vm7567, %v7566
  %7694 = vrot.lane.b32.xlu0 %v4543, 3
  %v7695 = vpop.permute.xlu0 %7694
  %7696 = vrot.lane.b32.xlu0 %v4544, 3
  %v7697 = vpop.permute.xlu0 %7696
  %7698 = vrot.lane.b32.xlu0 %v4545, 3
  %v7699 = vpop.permute.xlu0 %7698
  %7700 = vrot.lane.b32.xlu0 %v4546, 3
  %v7701 = vpop.permute.xlu0 %7700
  %7702 = vrot.lane.b32.xlu0 %v4547, 3
  %v7703 = vpop.permute.xlu0 %7702
  %7704 = vrot.lane.b32.xlu0 %v4548, 3
  %v7705 = vpop.permute.xlu0 %7704
  %7706 = vrot.lane.b32.xlu0 %v4549, 3
  %v7707 = vpop.permute.xlu0 %7706
  %7708 = vrot.lane.b32.xlu0 %v4550, 3
  %v7709 = vpop.permute.xlu0 %7708
  %7710 = vrot.lane.b32.xlu0 %v4551, 3
  %v7711 = vpop.permute.xlu0 %7710
  %7712 = vrot.lane.b32.xlu0 %v4552, 3
  %v7713 = vpop.permute.xlu0 %7712
  %7714 = vrot.lane.b32.xlu0 %v4553, 3
  %v7715 = vpop.permute.xlu0 %7714
  %7716 = vrot.lane.b32.xlu0 %v4554, 3
  %v7717 = vpop.permute.xlu0 %7716
  %7718 = vrot.lane.b32.xlu0 %v4555, 3
  %v7719 = vpop.permute.xlu0 %7718
  %7720 = vrot.lane.b32.xlu0 %v4556, 3
  %v7721 = vpop.permute.xlu0 %7720
  %7722 = vrot.lane.b32.xlu0 %v4557, 3
  %v7723 = vpop.permute.xlu0 %7722
  %7724 = vrot.lane.b32.xlu0 %v4558, 3
  %v7725 = vpop.permute.xlu0 %7724
  %7726 = vrot.lane.b32.xlu0 %v4559, 3
  %v7727 = vpop.permute.xlu0 %7726
  %7728 = vrot.lane.b32.xlu0 %v4560, 3
  %v7729 = vpop.permute.xlu0 %7728
  %7730 = vrot.lane.b32.xlu0 %v4561, 3
  %v7731 = vpop.permute.xlu0 %7730
  %7732 = vrot.lane.b32.xlu0 %v4562, 3
  %v7733 = vpop.permute.xlu0 %7732
  %7734 = vrot.lane.b32.xlu0 %v4563, 3
  %v7735 = vpop.permute.xlu0 %7734
  %7736 = vrot.lane.b32.xlu0 %v4564, 3
  %v7737 = vpop.permute.xlu0 %7736
  %7738 = vrot.lane.b32.xlu0 %v4565, 3
  %v7739 = vpop.permute.xlu0 %7738
  %7740 = vrot.lane.b32.xlu0 %v4566, 3
  %v7741 = vpop.permute.xlu0 %7740
  %7742 = vrot.lane.b32.xlu0 %v4567, 3
  %v7743 = vpop.permute.xlu0 %7742
  %7744 = vrot.lane.b32.xlu0 %v4568, 3
  %v7745 = vpop.permute.xlu0 %7744
  %7746 = vrot.lane.b32.xlu0 %v4569, 3
  %v7747 = vpop.permute.xlu0 %7746
  %7748 = vrot.lane.b32.xlu0 %v4570, 3
  %v7749 = vpop.permute.xlu0 %7748
  %7750 = vrot.lane.b32.xlu0 %v4571, 3
  %v7751 = vpop.permute.xlu0 %7750
  %7752 = vrot.lane.b32.xlu0 %v4572, 3
  %v7753 = vpop.permute.xlu0 %7752
  %7754 = vrot.lane.b32.xlu0 %v4573, 3
  %v7755 = vpop.permute.xlu0 %7754
  %7756 = vrot.lane.b32.xlu0 %v4574, 3
  %v7757 = vpop.permute.xlu0 %7756
  %7758 = vrot.lane.b32.xlu0 %v4575, 3
  %v7759 = vpop.permute.xlu0 %7758
  %7760 = vrot.lane.b32.xlu0 %v4576, 3
  %v7761 = vpop.permute.xlu0 %7760
  %7762 = vrot.lane.b32.xlu0 %v4577, 3
  %v7763 = vpop.permute.xlu0 %7762
  %7764 = vrot.lane.b32.xlu0 %v4578, 3
  %v7765 = vpop.permute.xlu0 %7764
  %7766 = vrot.lane.b32.xlu0 %v4579, 3
  %v7767 = vpop.permute.xlu0 %7766
  %7768 = vrot.lane.b32.xlu0 %v4580, 3
  %v7769 = vpop.permute.xlu0 %7768
  %7770 = vrot.lane.b32.xlu0 %v4581, 3
  %v7771 = vpop.permute.xlu0 %7770
  %7772 = vrot.lane.b32.xlu0 %v4582, 3
  %v7773 = vpop.permute.xlu0 %7772
  %7774 = vrot.lane.b32.xlu0 %v4583, 3
  %v7775 = vpop.permute.xlu0 %7774
  %7776 = vrot.lane.b32.xlu0 %v4584, 3
  %v7777 = vpop.permute.xlu0 %7776
  %7778 = vrot.lane.b32.xlu0 %v4585, 3
  %v7779 = vpop.permute.xlu0 %7778
  %7780 = vrot.lane.b32.xlu0 %v4586, 3
  %v7781 = vpop.permute.xlu0 %7780
  %7782 = vrot.lane.b32.xlu0 %v4587, 3
  %v7783 = vpop.permute.xlu0 %7782
  %7784 = vrot.lane.b32.xlu0 %v4588, 3
  %v7785 = vpop.permute.xlu0 %7784
  %7786 = vrot.lane.b32.xlu0 %v4589, 3
  %v7787 = vpop.permute.xlu0 %7786
  %7788 = vrot.lane.b32.xlu0 %v4590, 3
  %v7789 = vpop.permute.xlu0 %7788
  %7790 = vrot.lane.b32.xlu0 %v4591, 3
  %v7791 = vpop.permute.xlu0 %7790
  %7792 = vrot.lane.b32.xlu0 %v4592, 3
  %v7793 = vpop.permute.xlu0 %7792
  %7794 = vrot.lane.b32.xlu0 %v4593, 3
  %v7795 = vpop.permute.xlu0 %7794
  %7796 = vrot.lane.b32.xlu0 %v4594, 3
  %v7797 = vpop.permute.xlu0 %7796
  %7798 = vrot.lane.b32.xlu0 %v4595, 3
  %v7799 = vpop.permute.xlu0 %7798
  %7800 = vrot.lane.b32.xlu0 %v4596, 3
  %v7801 = vpop.permute.xlu0 %7800
  %7802 = vrot.lane.b32.xlu0 %v4597, 3
  %v7803 = vpop.permute.xlu0 %7802
  %7804 = vrot.lane.b32.xlu0 %v4598, 3
  %v7805 = vpop.permute.xlu0 %7804
  %7806 = vrot.lane.b32.xlu0 %v4599, 3
  %v7807 = vpop.permute.xlu0 %7806
  %7808 = vrot.lane.b32.xlu0 %v4600, 3
  %v7809 = vpop.permute.xlu0 %7808
  %7810 = vrot.lane.b32.xlu0 %v4601, 3
  %v7811 = vpop.permute.xlu0 %7810
  %7812 = vrot.lane.b32.xlu0 %v4602, 3
  %v7813 = vpop.permute.xlu0 %7812
  %7814 = vrot.lane.b32.xlu0 %v4603, 3
  %v7815 = vpop.permute.xlu0 %7814
  %7816 = vrot.lane.b32.xlu0 %v4604, 3
  %v7817 = vpop.permute.xlu0 %7816
  %7818 = vrot.lane.b32.xlu0 %v4605, 3
  %v7819 = vpop.permute.xlu0 %7818
  %vm7883 = vcmask 31768
  %7884 = vst.msk [vmem:[%s4] sm:$0xff] %vm7883, %v7695
  %7885 = vst.msk [vmem:[%s4 + $0x8] sm:$0xff] %vm7883, %v7697
  %7886 = vst.msk [vmem:[%s4 + $0x10] sm:$0xff] %vm7883, %v7699
  %7887 = vst.msk [vmem:[%s4 + $0x18] sm:$0xff] %vm7883, %v7701
  %7888 = vst.msk [vmem:[%s4 + $0x20] sm:$0xff] %vm7883, %v7703
  %7889 = vst.msk [vmem:[%s4 + $0x28] sm:$0xff] %vm7883, %v7705
  %7890 = vst.msk [vmem:[%s4 + $0x30] sm:$0xff] %vm7883, %v7707
  %7891 = vst.msk [vmem:[%s4 + $0x38] sm:$0xff] %vm7883, %v7709
  %7892 = vst.msk [vmem:[%s4 + $0x40] sm:$0xff] %vm7883, %v7711
  %7893 = vst.msk [vmem:[%s4 + $0x48] sm:$0xff] %vm7883, %v7713
  %7894 = vst.msk [vmem:[%s4 + $0x50] sm:$0xff] %vm7883, %v7715
  %7895 = vst.msk [vmem:[%s4 + $0x58] sm:$0xff] %vm7883, %v7717
  %7896 = vst.msk [vmem:[%s4 + $0x60] sm:$0xff] %vm7883, %v7719
  %7897 = vst.msk [vmem:[%s4 + $0x68] sm:$0xff] %vm7883, %v7721
  %7898 = vst.msk [vmem:[%s4 + $0x70] sm:$0xff] %vm7883, %v7723
  %7899 = vst.msk [vmem:[%s4 + $0x78] sm:$0xff] %vm7883, %v7725
  %7900 = vst.msk [vmem:[%s4 + $0x80] sm:$0xff] %vm7883, %v7727
  %7901 = vst.msk [vmem:[%s4 + $0x88] sm:$0xff] %vm7883, %v7729
  %7902 = vst.msk [vmem:[%s4 + $0x90] sm:$0xff] %vm7883, %v7731
  %7903 = vst.msk [vmem:[%s4 + $0x98] sm:$0xff] %vm7883, %v7733
  %7904 = vst.msk [vmem:[%s4 + $0xa0] sm:$0xff] %vm7883, %v7735
  %7905 = vst.msk [vmem:[%s4 + $0xa8] sm:$0xff] %vm7883, %v7737
  %7906 = vst.msk [vmem:[%s4 + $0xb0] sm:$0xff] %vm7883, %v7739
  %7907 = vst.msk [vmem:[%s4 + $0xb8] sm:$0xff] %vm7883, %v7741
  %7908 = vst.msk [vmem:[%s4 + $0xc0] sm:$0xff] %vm7883, %v7743
  %7909 = vst.msk [vmem:[%s4 + $0xc8] sm:$0xff] %vm7883, %v7745
  %7910 = vst.msk [vmem:[%s4 + $0xd0] sm:$0xff] %vm7883, %v7747
  %7911 = vst.msk [vmem:[%s4 + $0xd8] sm:$0xff] %vm7883, %v7749
  %7912 = vst.msk [vmem:[%s4 + $0xe0] sm:$0xff] %vm7883, %v7751
  %7913 = vst.msk [vmem:[%s4 + $0xe8] sm:$0xff] %vm7883, %v7753
  %7914 = vst.msk [vmem:[%s4 + $0xf0] sm:$0xff] %vm7883, %v7755
  %7915 = vst.msk [vmem:[%s4 + $0xf8] sm:$0xff] %vm7883, %v7757
  %7916 = vst.msk [vmem:[%s4 + $0x100] sm:$0xff] %vm7883, %v7759
  %7917 = vst.msk [vmem:[%s4 + $0x108] sm:$0xff] %vm7883, %v7761
  %7918 = vst.msk [vmem:[%s4 + $0x110] sm:$0xff] %vm7883, %v7763
  %7919 = vst.msk [vmem:[%s4 + $0x118] sm:$0xff] %vm7883, %v7765
  %7920 = vst.msk [vmem:[%s4 + $0x120] sm:$0xff] %vm7883, %v7767
  %7921 = vst.msk [vmem:[%s4 + $0x128] sm:$0xff] %vm7883, %v7769
  %7922 = vst.msk [vmem:[%s4 + $0x130] sm:$0xff] %vm7883, %v7771
  %7923 = vst.msk [vmem:[%s4 + $0x138] sm:$0xff] %vm7883, %v7773
  %7924 = vst.msk [vmem:[%s4 + $0x140] sm:$0xff] %vm7883, %v7775
  %7925 = vst.msk [vmem:[%s4 + $0x148] sm:$0xff] %vm7883, %v7777
  %7926 = vst.msk [vmem:[%s4 + $0x150] sm:$0xff] %vm7883, %v7779
  %7927 = vst.msk [vmem:[%s4 + $0x158] sm:$0xff] %vm7883, %v7781
  %7928 = vst.msk [vmem:[%s4 + $0x160] sm:$0xff] %vm7883, %v7783
  %7929 = vst.msk [vmem:[%s4 + $0x168] sm:$0xff] %vm7883, %v7785
  %7930 = vst.msk [vmem:[%s4 + $0x170] sm:$0xff] %vm7883, %v7787
  %7931 = vst.msk [vmem:[%s4 + $0x178] sm:$0xff] %vm7883, %v7789
  %7932 = vst.msk [vmem:[%s4 + $0x180] sm:$0xff] %vm7883, %v7791
  %7933 = vst.msk [vmem:[%s4 + $0x188] sm:$0xff] %vm7883, %v7793
  %7934 = vst.msk [vmem:[%s4 + $0x190] sm:$0xff] %vm7883, %v7795
  %7935 = vst.msk [vmem:[%s4 + $0x198] sm:$0xff] %vm7883, %v7797
  %7936 = vst.msk [vmem:[%s4 + $0x1a0] sm:$0xff] %vm7883, %v7799
  %7937 = vst.msk [vmem:[%s4 + $0x1a8] sm:$0xff] %vm7883, %v7801
  %7938 = vst.msk [vmem:[%s4 + $0x1b0] sm:$0xff] %vm7883, %v7803
  %7939 = vst.msk [vmem:[%s4 + $0x1b8] sm:$0xff] %vm7883, %v7805
  %7940 = vst.msk [vmem:[%s4 + $0x1c0] sm:$0xff] %vm7883, %v7807
  %7941 = vst.msk [vmem:[%s4 + $0x1c8] sm:$0xff] %vm7883, %v7809
  %7942 = vst.msk [vmem:[%s4 + $0x1d0] sm:$0xff] %vm7883, %v7811
  %7943 = vst.msk [vmem:[%s4 + $0x1d8] sm:$0xff] %vm7883, %v7813
  %7944 = vst.msk [vmem:[%s4 + $0x1e0] sm:$0xff] %vm7883, %v7815
  %7945 = vst.msk [vmem:[%s4 + $0x1e8] sm:$0xff] %vm7883, %v7817
  %7946 = vst.msk [vmem:[%s4 + $0x1f0] sm:$0xff] %vm7883, %v7819
  // Predicated region
  $region18: #{tpu_custom_call.1} parent=0 // pred_check
    _
  $region19: #{tpu_custom_call.1} parent=0 // pred_check_branch
    %7948 = sbr.rel (0) target = $region21
  $region20: #{tpu_custom_call.1} parent=0 // pred_region
    _
  $region21: #{tpu_custom_call.1} parent=0 // pred_fallthru
    _
  // Predicated region
  $region22: #{tpu_custom_call.1} parent=0 // pred_check
    _
  $region23: #{tpu_custom_call.1} parent=0 // pred_check_branch
    %7950 = sbr.rel (0) target = $region25
  $region24: #{tpu_custom_call.1} parent=0 // pred_region
    _
  $region25: #{tpu_custom_call.1} parent=0 // pred_fallthru
    _

</llo_original>
